<compile_context>
chip_gen: v5e
topology: v5e:2x2
jax: 0.10.0
libtpu: 0.0.40
codegen_flags: <defaults>
</compile_context>

<pallas_src>
import functools

import jax
import jax.numpy as jnp
from jax.experimental import pallas as pl
from jax.experimental.pallas import tpu as pltpu


NT_PAD = 128          # topic axis padded to one full lane group (lane-dense softmax/store)
NEG_BIG = -1e30       # finite "minus infinity" for masked padded logits


def _linear(h_f32, w_ref, b_ref):
    """f32 activation -> bf16 operand -> MXU matmul with f32 accumulation -> + f32 bias."""
    return (
        jnp.dot(h_f32.astype(w_ref.dtype), w_ref[...],
                preferred_element_type=jnp.float32)
        + b_ref[...]
    )


def wae_forward_kernel(
    x_ref,
    we0_ref, be0_ref,
    we1_ref, be1_ref,
    we2_ref, be2_ref,
    wd0_ref, bd0_ref,
    wd1_ref, bd1_ref,
    xrec_ref, theta_ref,
    *, n_topic: int,
):
    x = x_ref[...]                                        # (TM, bow_dim) f32

    # ---- encoder ----
    h = jnp.maximum(_linear(x, we0_ref, be0_ref), 0.0)    # relu (i < last)
    h = jnp.maximum(_linear(h, we1_ref, be1_ref), 0.0)    # relu (i < last)
    z = _linear(h, we2_ref, be2_ref)                      # (TM, NT_PAD) logits, no nonlin

    # ---- softmax over the (padded) topic axis ----
    lane = jax.lax.broadcasted_iota(jnp.int32, z.shape, 1)
    z = jnp.where(lane < n_topic, z, NEG_BIG)             # padded lanes -> -1e30
    m = jnp.max(z, axis=-1, keepdims=True)
    e = jnp.exp(z - m)                                    # padded lanes underflow to exact 0
    denom = jnp.sum(e, axis=-1, keepdims=True)
    r = pl.reciprocal(denom, approx=True)                 # EUP vrcp (otherwise idle slot)
    r = r * (2.0 - denom * r)                             # one Newton step -> ~f32 accuracy
    theta = e * r                                         # (TM, NT_PAD); padded lanes == 0

    # ---- decoder ----
    h = jnp.maximum(_linear(theta, wd0_ref, bd0_ref), 0.0)  # relu (i < last)
    x_reconst = _linear(h, wd1_ref, bd1_ref)                # no nonlin after last layer

    xrec_ref[...] = x_reconst.astype(xrec_ref.dtype)
    theta_ref[...] = theta.astype(theta_ref.dtype)


def wae_forward(x, params, n_topic, *, tm=128):
    """x: (B, bow_dim) f32. params: kernel-ready params (bf16 weights, topic axis
    padded to NT_PAD). Returns (x_reconst (B, bow_dim) f32, theta (B, n_topic) f32)."""
    B, bow_dim = x.shape
    assert params["we2"].shape[1] == NT_PAD and params["wd0"].shape[0] == NT_PAD

    grid_m = pl.cdiv(B, tm)
    b_pad = grid_m * tm
    if b_pad != B:
        x = jnp.pad(x, ((0, b_pad - B), (0, 0)))          # zero rows are harmless

    args = (
        x,
        params["we0"], params["be0"],
        params["we1"], params["be1"],
        params["we2"], params["be2"],
        params["wd0"], params["bd0"],
        params["wd1"], params["bd1"],
    )

    def const_spec(a):
        # Constant block index: weights/biases are DMA'd once and stay VMEM-resident.
        return pl.BlockSpec(a.shape, lambda i: (0,) * a.ndim)

    in_specs = [pl.BlockSpec((tm, bow_dim), lambda i: (i, 0))] + [
        const_spec(a) for a in args[1:]
    ]
    out_specs = (
        pl.BlockSpec((tm, bow_dim), lambda i: (i, 0)),     # x_reconst tile
        pl.BlockSpec((tm, NT_PAD), lambda i: (i, 0)),      # lane-dense padded theta tile
    )
    out_shape = (
        jax.ShapeDtypeStruct((b_pad, bow_dim), jnp.float32),
        jax.ShapeDtypeStruct((b_pad, NT_PAD), jnp.float32),
    )

    # Rough VMEM budget: resident weights + double-buffered activation/output tiles.
    weight_bytes = sum(int(a.size) * a.dtype.itemsize for a in args[1:])
    tile_bytes = 2 * (tm * bow_dim * 4 + tm * bow_dim * 4 + tm * NT_PAD * 4)
    vmem_limit = int(min(max(weight_bytes + tile_bytes + (8 << 20), 16 << 20), 32 << 20))

    xrec, theta_pad = pl.pallas_call(
        functools.partial(wae_forward_kernel, n_topic=n_topic),
        out_shape=out_shape,
        grid=(grid_m,),
        in_specs=in_specs,
        out_specs=out_specs,
        compiler_params=pltpu.CompilerParams(
            dimension_semantics=("parallel",),             # megacore / v7x 2-TC sharding
            vmem_limit_bytes=vmem_limit,
        ),
    )(*args)

    return xrec[:B], theta_pad[:B, :n_topic]


def init_params(key, bow_dim, n_topic):
    """Deterministic init mimicking PyTorch nn.Linear default
    (uniform(-1/sqrt(fan_in), 1/sqrt(fan_in))). Weights stored as (in, out), f32."""
    encode_dims = [bow_dim, 1024, 512, n_topic]
    decode_dims = [n_topic, 512, bow_dim]
    params = {}
    keys = jax.random.split(key, 10)
    k = 0

    def linear(kw, kb, fan_in, fan_out):
        bound = 1.0 / jnp.sqrt(jnp.float32(fan_in))
        w = jax.random.uniform(kw, (fan_in, fan_out), jnp.float32, -bound, bound)
        b = jax.random.uniform(kb, (fan_out,), jnp.float32, -bound, bound)
        return w, b.reshape(1, fan_out)

    for i in range(len(encode_dims) - 1):
        w, b = linear(keys[k], keys[k + 1], encode_dims[i], encode_dims[i + 1])
        params[f"we{i}"], params[f"be{i}"] = w, b
        k += 2
    for i in range(len(decode_dims) - 1):
        w, b = linear(keys[k], keys[k + 1], decode_dims[i], decode_dims[i + 1])
        params[f"wd{i}"], params[f"bd{i}"] = w, b
        k += 2
    return params


def prepare_params(params_f32, n_topic):
    """Cast weights to bf16 (f32 biases) and zero-pad the topic axis to NT_PAD."""
    p = {}
    for name, v in params_f32.items():
        p[name] = v.astype(jnp.bfloat16) if name.startswith("w") else v
    pad_t = NT_PAD - n_topic
    p["we2"] = jnp.pad(p["we2"], ((0, 0), (0, pad_t)))
    p["be2"] = jnp.pad(p["be2"], ((0, 0), (0, pad_t)))
    p["wd0"] = jnp.pad(p["wd0"], ((0, pad_t), (0, 0)))
    return p


def wae_forward_ref(x, params_f32, n_topic):
    """Pure-JAX reference following the same bf16-operand / f32-accumulate path."""
    def lin(h, w, b):
        return jnp.dot(h.astype(jnp.bfloat16), w.astype(jnp.bfloat16),
                       preferred_element_type=jnp.float32) + b

    h = jnp.maximum(lin(x, params_f32["we0"], params_f32["be0"]), 0.0)
    h = jnp.maximum(lin(h, params_f32["we1"], params_f32["be1"]), 0.0)
    z = lin(h, params_f32["we2"], params_f32["be2"])
    theta = jax.nn.softmax(z, axis=1)
    h = jnp.maximum(lin(theta, params_f32["wd0"], params_f32["bd0"]), 0.0)
    x_reconst = lin(h, params_f32["wd1"], params_f32["bd1"])
    return x_reconst, theta


if __name__ == "__main__":
    BATCH = 256      # multiple of TM=128 -> grid of 2 batch tiles
    BOW_DIM = 512    # lane-aligned toy vocab
    N_TOPIC = 20

    key = jax.random.PRNGKey(0)
    k_params, k_x = jax.random.split(key)
    params_f32 = init_params(k_params, BOW_DIM, N_TOPIC)
    params = prepare_params(params_f32, N_TOPIC)

    # bag-of-words style non-negative input
    x = jax.random.uniform(k_x, (BATCH, BOW_DIM), jnp.float32, 0.0, 1.0)

    x_reconst, theta = wae_forward(x, params, N_TOPIC, tm=128)
    jax.block_until_ready((x_reconst, theta))

    # sanity checks against a pure-JAX reference on the same bf16 weight path
    xr_ref, th_ref = wae_forward_ref(x, params_f32, N_TOPIC)
    assert x_reconst.shape == (BATCH, BOW_DIM)
    assert theta.shape == (BATCH, N_TOPIC)
    assert bool(jnp.all(jnp.isfinite(x_reconst)))
    assert bool(jnp.allclose(jnp.sum(theta, axis=1), 1.0, atol=1e-3))
    assert bool(jnp.allclose(theta, th_ref, atol=2e-3, rtol=2e-3))
    assert bool(jnp.allclose(x_reconst, xr_ref, atol=2e-2, rtol=2e-2))

    print("KERNEL_OK")
</pallas_src>

<mosaic_0001>
module attributes {stable_mosaic.version = 11 : i64} {
  func.func @wae_forward_kernel(%arg0: i32, %arg1: memref<128x512xf32, #tpu.memory_space<vmem>>, %arg2: memref<512x1024xbf16, #tpu.memory_space<vmem>>, %arg3: memref<1x1024xf32, #tpu.memory_space<vmem>>, %arg4: memref<1024x512xbf16, #tpu.memory_space<vmem>>, %arg5: memref<1x512xf32, #tpu.memory_space<vmem>>, %arg6: memref<512x128xbf16, #tpu.memory_space<vmem>>, %arg7: memref<1x128xf32, #tpu.memory_space<vmem>>, %arg8: memref<128x512xbf16, #tpu.memory_space<vmem>>, %arg9: memref<1x512xf32, #tpu.memory_space<vmem>>, %arg10: memref<512x512xbf16, #tpu.memory_space<vmem>>, %arg11: memref<1x512xf32, #tpu.memory_space<vmem>>, %arg12: memref<128x512xf32, #tpu.memory_space<vmem>>, %arg13: memref<128x128xf32, #tpu.memory_space<vmem>>) attributes {dimension_semantics = [#tpu.dimension_semantics<parallel>], iteration_bounds = array<i64: 2>, scalar_prefetch = 0 : i64, scratch_operands = 0 : i64, tpu.core_type = #tpu.core_type<tc>, window_params = [{transform_indices = @transform_0, window_bounds = array<i64: 128, 512>}, {pipeline_mode = #tpu.pipeline_mode<synchronous>, transform_indices = @transform_1, window_bounds = array<i64: 512, 1024>}, {pipeline_mode = #tpu.pipeline_mode<synchronous>, transform_indices = @transform_2, window_bounds = array<i64: 1, 1024>}, {pipeline_mode = #tpu.pipeline_mode<synchronous>, transform_indices = @transform_3, window_bounds = array<i64: 1024, 512>}, {pipeline_mode = #tpu.pipeline_mode<synchronous>, transform_indices = @transform_4, window_bounds = array<i64: 1, 512>}, {pipeline_mode = #tpu.pipeline_mode<synchronous>, transform_indices = @transform_5, window_bounds = array<i64: 512, 128>}, {pipeline_mode = #tpu.pipeline_mode<synchronous>, transform_indices = @transform_6, window_bounds = array<i64: 1, 128>}, {pipeline_mode = #tpu.pipeline_mode<synchronous>, transform_indices = @transform_7, window_bounds = array<i64: 128, 512>}, {pipeline_mode = #tpu.pipeline_mode<synchronous>, transform_indices = @transform_8, window_bounds = array<i64: 1, 512>}, {pipeline_mode = #tpu.pipeline_mode<synchronous>, transform_indices = @transform_9, window_bounds = array<i64: 512, 512>}, {pipeline_mode = #tpu.pipeline_mode<synchronous>, transform_indices = @transform_10, window_bounds = array<i64: 1, 512>}, {transform_indices = @transform_11, window_bounds = array<i64: 128, 512>}, {transform_indices = @transform_12, window_bounds = array<i64: 128, 128>}]} {
    %c0 = arith.constant 0 : index
    %c0_0 = arith.constant 0 : index
    %0 = vector.load %arg1[%c0, %c0_0] : memref<128x512xf32, #tpu.memory_space<vmem>>, vector<128x512xf32>
    %1 = arith.truncf %0 : vector<128x512xf32> to vector<128x512xbf16>
    %c0_1 = arith.constant 0 : index
    %c0_2 = arith.constant 0 : index
    %2 = vector.load %arg2[%c0_1, %c0_2] : memref<512x1024xbf16, #tpu.memory_space<vmem>>, vector<512x1024xbf16>
    %cst = arith.constant dense<0.000000e+00> : vector<128x1024xf32>
    %3 = tpu.matmul %1, %2, %cst {dimension_numbers = #tpu.dot_dimension_numbers<[1], [0], [0], [1], [0, 0, 1, 1], [], []>} : vector<128x512xbf16>, vector<512x1024xbf16>, vector<128x1024xf32> -> vector<128x1024xf32>
    %c0_3 = arith.constant 0 : index
    %c0_4 = arith.constant 0 : index
    %4 = vector.load %arg3[%c0_3, %c0_4] : memref<1x1024xf32, #tpu.memory_space<vmem>>, vector<1x1024xf32>
    %5 = vector.broadcast %4 : vector<1x1024xf32> to vector<128x1024xf32>
    %6 = arith.addf %3, %5 : vector<128x1024xf32>
    %cst_5 = arith.constant 0.000000e+00 : f32
    %7 = vector.broadcast %cst_5 : f32 to vector<128x1024xf32>
    %8 = arith.maximumf %6, %7 : vector<128x1024xf32>
    %9 = arith.truncf %8 : vector<128x1024xf32> to vector<128x1024xbf16>
    %c0_6 = arith.constant 0 : index
    %c0_7 = arith.constant 0 : index
    %10 = vector.load %arg4[%c0_6, %c0_7] : memref<1024x512xbf16, #tpu.memory_space<vmem>>, vector<1024x512xbf16>
    %cst_8 = arith.constant dense<0.000000e+00> : vector<128x512xf32>
    %11 = tpu.matmul %9, %10, %cst_8 {dimension_numbers = #tpu.dot_dimension_numbers<[1], [0], [0], [1], [0, 0, 1, 1], [], []>} : vector<128x1024xbf16>, vector<1024x512xbf16>, vector<128x512xf32> -> vector<128x512xf32>
    %c0_9 = arith.constant 0 : index
    %c0_10 = arith.constant 0 : index
    %12 = vector.load %arg5[%c0_9, %c0_10] : memref<1x512xf32, #tpu.memory_space<vmem>>, vector<1x512xf32>
    %13 = vector.broadcast %12 : vector<1x512xf32> to vector<128x512xf32>
    %14 = arith.addf %11, %13 : vector<128x512xf32>
    %cst_11 = arith.constant 0.000000e+00 : f32
    %15 = vector.broadcast %cst_11 : f32 to vector<128x512xf32>
    %16 = arith.maximumf %14, %15 : vector<128x512xf32>
    %17 = arith.truncf %16 : vector<128x512xf32> to vector<128x512xbf16>
    %c0_12 = arith.constant 0 : index
    %c0_13 = arith.constant 0 : index
    %18 = vector.load %arg6[%c0_12, %c0_13] : memref<512x128xbf16, #tpu.memory_space<vmem>>, vector<512x128xbf16>
    %cst_14 = arith.constant dense<0.000000e+00> : vector<128x128xf32>
    %19 = tpu.matmul %17, %18, %cst_14 {dimension_numbers = #tpu.dot_dimension_numbers<[1], [0], [0], [1], [0, 0, 1, 1], [], []>} : vector<128x512xbf16>, vector<512x128xbf16>, vector<128x128xf32> -> vector<128x128xf32>
    %c0_15 = arith.constant 0 : index
    %c0_16 = arith.constant 0 : index
    %20 = vector.load %arg7[%c0_15, %c0_16] : memref<1x128xf32, #tpu.memory_space<vmem>>, vector<1x128xf32>
    %21 = vector.broadcast %20 : vector<1x128xf32> to vector<128x128xf32>
    %22 = arith.addf %19, %21 : vector<128x128xf32>
    %23 = tpu.iota {dimensions = array<i32: 1>} : vector<128x128xi32>
    %c20_i32 = arith.constant 20 : i32
    %24 = vector.broadcast %c20_i32 : i32 to vector<128x128xi32>
    %25 = arith.cmpi slt, %23, %24 : vector<128x128xi32>
    %cst_17 = arith.constant -1.000000e+30 : f32
    %26 = vector.broadcast %cst_17 : f32 to vector<128x128xf32>
    %27 = arith.select %25, %22, %26 : vector<128x128xi1>, vector<128x128xf32>
    %cst_18 = arith.constant dense<0xFF800000> : vector<128xf32>
    %28 = vector.multi_reduction <maximumf>, %27, %cst_18 [1] : vector<128x128xf32> to vector<128xf32>
    %29 = vector.shape_cast %28 : vector<128xf32> to vector<128x1xf32>
    %30 = vector.broadcast %29 : vector<128x1xf32> to vector<128x128xf32>
    %31 = arith.subf %27, %30 : vector<128x128xf32>
    %32 = math.exp %31 : vector<128x128xf32>
    %cst_19 = arith.constant dense<0.000000e+00> : vector<128xf32>
    %33 = vector.multi_reduction <add>, %32, %cst_19 [1] : vector<128x128xf32> to vector<128xf32>
    %34 = vector.shape_cast %33 : vector<128xf32> to vector<128x1xf32>
    %35 = tpu.reciprocal %34 {approx = true} : vector<128x1xf32> -> vector<128x1xf32>
    %36 = arith.mulf %34, %35 : vector<128x1xf32>
    %cst_20 = arith.constant 2.000000e+00 : f32
    %37 = vector.broadcast %cst_20 : f32 to vector<128x1xf32>
    %38 = arith.subf %37, %36 : vector<128x1xf32>
    %39 = arith.mulf %35, %38 : vector<128x1xf32>
    %40 = vector.broadcast %39 : vector<128x1xf32> to vector<128x128xf32>
    %41 = arith.mulf %32, %40 : vector<128x128xf32>
    %42 = arith.truncf %41 : vector<128x128xf32> to vector<128x128xbf16>
    %c0_21 = arith.constant 0 : index
    %c0_22 = arith.constant 0 : index
    %43 = vector.load %arg8[%c0_21, %c0_22] : memref<128x512xbf16, #tpu.memory_space<vmem>>, vector<128x512xbf16>
    %cst_23 = arith.constant dense<0.000000e+00> : vector<128x512xf32>
    %44 = tpu.matmul %42, %43, %cst_23 {dimension_numbers = #tpu.dot_dimension_numbers<[1], [0], [0], [1], [0, 0, 1, 1], [], []>} : vector<128x128xbf16>, vector<128x512xbf16>, vector<128x512xf32> -> vector<128x512xf32>
    %c0_24 = arith.constant 0 : index
    %c0_25 = arith.constant 0 : index
    %45 = vector.load %arg9[%c0_24, %c0_25] : memref<1x512xf32, #tpu.memory_space<vmem>>, vector<1x512xf32>
    %46 = vector.broadcast %45 : vector<1x512xf32> to vector<128x512xf32>
    %47 = arith.addf %44, %46 : vector<128x512xf32>
    %cst_26 = arith.constant 0.000000e+00 : f32
    %48 = vector.broadcast %cst_26 : f32 to vector<128x512xf32>
    %49 = arith.maximumf %47, %48 : vector<128x512xf32>
    %50 = arith.truncf %49 : vector<128x512xf32> to vector<128x512xbf16>
    %c0_27 = arith.constant 0 : index
    %c0_28 = arith.constant 0 : index
    %51 = vector.load %arg10[%c0_27, %c0_28] : memref<512x512xbf16, #tpu.memory_space<vmem>>, vector<512x512xbf16>
    %cst_29 = arith.constant dense<0.000000e+00> : vector<128x512xf32>
    %52 = tpu.matmul %50, %51, %cst_29 {dimension_numbers = #tpu.dot_dimension_numbers<[1], [0], [0], [1], [0, 0, 1, 1], [], []>} : vector<128x512xbf16>, vector<512x512xbf16>, vector<128x512xf32> -> vector<128x512xf32>
    %c0_30 = arith.constant 0 : index
    %c0_31 = arith.constant 0 : index
    %53 = vector.load %arg11[%c0_30, %c0_31] : memref<1x512xf32, #tpu.memory_space<vmem>>, vector<1x512xf32>
    %54 = vector.broadcast %53 : vector<1x512xf32> to vector<128x512xf32>
    %55 = arith.addf %52, %54 : vector<128x512xf32>
    %c0_32 = arith.constant 0 : index
    %c0_33 = arith.constant 0 : index
    %56 = vector.load %arg12[%c0_32, %c0_33] : memref<128x512xf32, #tpu.memory_space<vmem>>, vector<128x512xf32>
    tpu.vector_store %arg12[%c0_32, %c0_33], %55 {strides = array<i32>} : memref<128x512xf32, #tpu.memory_space<vmem>>, vector<128x512xf32>,
    %c0_34 = arith.constant 0 : index
    %c0_35 = arith.constant 0 : index
    %57 = vector.load %arg13[%c0_34, %c0_35] : memref<128x128xf32, #tpu.memory_space<vmem>>, vector<128x128xf32>
    tpu.vector_store %arg13[%c0_34, %c0_35], %41 {strides = array<i32>} : memref<128x128xf32, #tpu.memory_space<vmem>>, vector<128x128xf32>,
    return
  }
  func.func @transform_0(%arg0: i32) -> (i32, i32) {
    %c0_i32 = arith.constant 0 : i32
    %c0_i32_0 = arith.constant 0 : i32
    return %arg0, %c0_i32 : i32, i32
  }
  func.func @transform_1(%arg0: i32) -> (i32, i32) {
    %c0_i32 = arith.constant 0 : i32
    %c0_i32_0 = arith.constant 0 : i32
    %c0_i32_1 = arith.constant 0 : i32
    return %c0_i32, %c0_i32_0 : i32, i32
  }
  func.func @transform_2(%arg0: i32) -> (i32, i32) {
    %c0_i32 = arith.constant 0 : i32
    %c0_i32_0 = arith.constant 0 : i32
    %c0_i32_1 = arith.constant 0 : i32
    return %c0_i32, %c0_i32_0 : i32, i32
  }
  func.func @transform_3(%arg0: i32) -> (i32, i32) {
    %c0_i32 = arith.constant 0 : i32
    %c0_i32_0 = arith.constant 0 : i32
    %c0_i32_1 = arith.constant 0 : i32
    return %c0_i32, %c0_i32_0 : i32, i32
  }
  func.func @transform_4(%arg0: i32) -> (i32, i32) {
    %c0_i32 = arith.constant 0 : i32
    %c0_i32_0 = arith.constant 0 : i32
    %c0_i32_1 = arith.constant 0 : i32
    return %c0_i32, %c0_i32_0 : i32, i32
  }
  func.func @transform_5(%arg0: i32) -> (i32, i32) {
    %c0_i32 = arith.constant 0 : i32
    %c0_i32_0 = arith.constant 0 : i32
    %c0_i32_1 = arith.constant 0 : i32
    return %c0_i32, %c0_i32_0 : i32, i32
  }
  func.func @transform_6(%arg0: i32) -> (i32, i32) {
    %c0_i32 = arith.constant 0 : i32
    %c0_i32_0 = arith.constant 0 : i32
    %c0_i32_1 = arith.constant 0 : i32
    return %c0_i32, %c0_i32_0 : i32, i32
  }
  func.func @transform_7(%arg0: i32) -> (i32, i32) {
    %c0_i32 = arith.constant 0 : i32
    %c0_i32_0 = arith.constant 0 : i32
    %c0_i32_1 = arith.constant 0 : i32
    return %c0_i32, %c0_i32_0 : i32, i32
  }
  func.func @transform_8(%arg0: i32) -> (i32, i32) {
    %c0_i32 = arith.constant 0 : i32
    %c0_i32_0 = arith.constant 0 : i32
    %c0_i32_1 = arith.constant 0 : i32
    return %c0_i32, %c0_i32_0 : i32, i32
  }
  func.func @transform_9(%arg0: i32) -> (i32, i32) {
    %c0_i32 = arith.constant 0 : i32
    %c0_i32_0 = arith.constant 0 : i32
    %c0_i32_1 = arith.constant 0 : i32
    return %c0_i32, %c0_i32_0 : i32, i32
  }
  func.func @transform_10(%arg0: i32) -> (i32, i32) {
    %c0_i32 = arith.constant 0 : i32
    %c0_i32_0 = arith.constant 0 : i32
    %c0_i32_1 = arith.constant 0 : i32
    return %c0_i32, %c0_i32_0 : i32, i32
  }
  func.func @transform_11(%arg0: i32) -> (i32, i32) {
    %c0_i32 = arith.constant 0 : i32
    %c0_i32_0 = arith.constant 0 : i32
    return %arg0, %c0_i32 : i32, i32
  }
  func.func @transform_12(%arg0: i32) -> (i32, i32) {
    %c0_i32 = arith.constant 0 : i32
    %c0_i32_0 = arith.constant 0 : i32
    return %arg0, %c0_i32 : i32, i32
  }
}

</mosaic_0001>

<llo_original>
// kernel: tpu_custom_call.1
$region0: #{tpu_custom_call.1}
  #allocation0 [shape = 'u32[]', space=smem, size = 0x4, offset = 0x4, fixed_abs, tag = 'smem constant byte address 0x4 - core index']
  #allocation1 [shape = 'u32[72,128]{1,0:T(1,128)}', space=vmem, size = 0x9000, scoped, tag = 'internal scratch']
  %s0 = inlined_call_operand.hbm [shape: f32[256,512], index: 0, kind: input, shape index: {}]
  %s1 = inlined_call_operand.hbm [shape: bf16[512,1024], index: 1, kind: input, shape index: {}]
  %s2 = inlined_call_operand.hbm [shape: f32[1,1024], index: 2, kind: input, shape index: {}]
  %s3 = inlined_call_operand.hbm [shape: bf16[1024,512], index: 3, kind: input, shape index: {}]
  %s4 = inlined_call_operand.hbm [shape: f32[1,512], index: 4, kind: input, shape index: {}]
  %s5 = inlined_call_operand.hbm [shape: bf16[512,128], index: 5, kind: input, shape index: {}]
  %s6 = inlined_call_operand.hbm [shape: f32[1,128], index: 6, kind: input, shape index: {}]
  %s7 = inlined_call_operand.hbm [shape: bf16[128,512], index: 7, kind: input, shape index: {}]
  %s8 = inlined_call_operand.vmem [shape: f32[1,512], index: 8, kind: input, shape index: {}]
  %s9 = inlined_call_operand.hbm [shape: bf16[512,512], index: 9, kind: input, shape index: {}]
  %s10 = inlined_call_operand.vmem [shape: f32[1,512], index: 10, kind: input, shape index: {}]
  %s11 = inlined_call_operand.hbm [shape: f32[256,512], index: 11, kind: output, shape index: {0}]
  %s12 = inlined_call_operand.hbm [shape: f32[256,128], index: 12, kind: output, shape index: {1}]
  %13 = xla_tuple %s11, %s12
  %s14 = sld [smem:[#allocation0]]
  $region121: #{tpu_custom_call.1} parent=0
    _
  %s16 = ssub.s32 1, %s14
  %s17 = scalar_select 0, %s16, %s14
  $region1: #{tpu_custom_call.1} parent=0
    #allocation2 [shape = 'u8[524288]{0}', space=vmem, size = 0x80000, scoped, tag = 'input window, operand 0']
    #allocation3 [shape = 's32[2]{0}', space=sflag, size = 0x8, scoped, tag = 'scoped memory for tpu_custom_call.1']
    #allocation4 [shape = 's32[2]{0}', space=sflag, size = 0x8, scoped, tag = 'scoped memory for tpu_custom_call.1']
    #allocation5 [shape = 'u8[1048576]{0}', space=vmem, size = 0x100000, scoped, tag = 'input window, operand 1, single buffered']
    #allocation6 [shape = 's32[1]{0}', space=sflag, size = 0x4, scoped, tag = 'scoped memory for tpu_custom_call.1']
    #allocation7 [shape = 'u8[4096]{0}', space=vmem, size = 0x1000, scoped, tag = 'input window, operand 2, single buffered']
    #allocation8 [shape = 'u8[1048576]{0}', space=vmem, size = 0x100000, scoped, tag = 'input window, operand 3, single buffered']
    #allocation9 [shape = 's32[1]{0}', space=sflag, size = 0x4, scoped, tag = 'scoped memory for tpu_custom_call.1']
    #allocation10 [shape = 'u8[2048]{0}', space=vmem, size = 0x800, scoped, tag = 'input window, operand 4, single buffered']
    #allocation11 [shape = 'u8[131072]{0}', space=vmem, size = 0x20000, scoped, tag = 'input window, operand 5, single buffered']
    #allocation12 [shape = 's32[1]{0}', space=sflag, size = 0x4, scoped, tag = 'scoped memory for tpu_custom_call.1']
    #allocation13 [shape = 'u8[512]{0}', space=vmem, size = 0x400, scoped, tag = 'input window, operand 6, single buffered']
    #allocation14 [shape = 'u8[131072]{0}', space=vmem, size = 0x20000, scoped, tag = 'input window, operand 7, single buffered']
    #allocation15 [shape = 's32[1]{0}', space=sflag, size = 0x4, scoped, tag = 'scoped memory for tpu_custom_call.1']
    #allocation16 [shape = 'u8[524288]{0}', space=vmem, size = 0x80000, scoped, tag = 'input window, operand 9, single buffered']
    #allocation17 [shape = 'u8[524288]{0}', space=vmem, size = 0x80000, scoped, tag = 'output window, operand 0']
    #allocation18 [shape = 'u8[131072]{0}', space=vmem, size = 0x20000, scoped, tag = 'output window, operand 1']
    #allocation19 [shape = 's32[2]{0}', space=sflag, size = 0x8, scoped, tag = 'scoped memory for tpu_custom_call.1']
    %18 = vsyncpa [#allocation3], 0
    %s19 = scalar_lea.sflag [#allocation3], 1
    %20 = vsyncpa %s19, 0
    %21 = vsyncpa [#allocation6], 0
    %22 = vsyncpa [#allocation9], 0
    %23 = vsyncpa [#allocation12], 0
    %24 = vsyncpa [#allocation15], 0
    %25 = vsyncpa [#allocation4], 0
    %s26 = scalar_lea.sflag [#allocation4], 1
    %27 = vsyncpa %s26, 0
    %28 = vsyncpa [#allocation19], 0
    %s29 = scalar_lea.sflag [#allocation19], 1
    %30 = vsyncpa %s29, 0
    loop: start=0, step=1, limit=4
    $region2: #{tpu_custom_call.1} parent=1 // loop_pre_header
      _
    $region3: #{tpu_custom_call.1} parent=1 // loop_header
      %s32 = sphi 0, %s36
      %p33 = scmp.ge.s32.totalorder %s32, 4
      %s42 = sphi 0, %s44
      %s45 = sphi 0, %s42
      %s46 = sphi 0, %s45
      %s62 = sphi 0, %s46
      %s66 = sphi 0, %s66
      %s68 = sphi 0, %s66
      %s69 = sphi 0, %s68
      %s83 = sphi 0, %s69
      %s87 = sphi 0, %s87
      %s89 = sphi 0, %s87
      %s90 = sphi 0, %s89
      %s104 = sphi 0, %s90
      %s108 = sphi 0, %s108
      %s110 = sphi 0, %s108
      %s111 = sphi 0, %s110
      %s125 = sphi 0, %s111
      %s129 = sphi 0, %s129
      %s131 = sphi 0, %s129
      %s132 = sphi 0, %s131
      %s146 = sphi 0, %s132
      %s150 = sphi 0, %s150
      %s152 = sphi 0, %s150
      %s153 = sphi 0, %s152
      %s167 = sphi 0, %s153
      %s171 = sphi 0, %s171
      %s173 = sphi 0, %s171
      %s174 = sphi 0, %s173
      %s188 = sphi 0, %s174
      %s192 = sphi 0, %s192
      %s194 = sphi 0, %s192
      %s195 = sphi 0, %s194
      %s209 = sphi 0, %s195
      %s213 = sphi 0, %s213
      %s215 = sphi 0, %s213
      %s216 = sphi 0, %s215
      %s230 = sphi 0, %s216
      %s234 = sphi 0, %s234
      %s236 = sphi 0, %s234
      %s237 = sphi 0, %s236
      %s251 = sphi 0, %s237
      %s255 = sphi 0, %s255
      %s257 = sphi 0, %s255
      %s258 = sphi 0, %s257
      %s272 = sphi 0, %s258
      %s278 = sphi 0, %s280
      %s281 = sphi 0, %s278
      %s282 = sphi 0, %s281
      %s298 = sphi 0, %s282
      %s304 = sphi 0, %s306
      %s307 = sphi 0, %s304
      %s308 = sphi 0, %s307
      %s324 = sphi 0, %s308
    $region4: #{tpu_custom_call.1} parent=1 // loop_header_branch
      %35 = sbr.rel (%p33) target = $region8
    $region5: #{tpu_custom_call.1} parent=1 // loop_body
      %s37 = ssub.s32 %s32, 1
      %s38 = ssub.s32 %s32, 2
      %s39 = sadd.s32 %s32, 1
      %s40 = ssub.s32 %s32, %s39
      %p41 = scmp.eq.s32.totalorder %s40, 0
      %s43 = sadd.s32 %s42, 1
      %s44 = scalar_select %p41, %s42, %s43
      %p47 = pneg %p41
      %p48 = scmp.eq.s32.totalorder %s32, 1
      %p49 = por %p47, %p48
      %p50 = scmp.ne.s32.totalorder %s42, %s45
      %p51 = scmp.eq.s32.totalorder %s32, 0
      %p52 = por %p50, %p51
      %p53 = scmp.ne.s32.totalorder %s42, %s45
      %p54 = scmp.eq.s32.totalorder %s37, 1
      %p55 = por %p53, %p54
      %p56 = scmp.ne.s32.totalorder %s45, %s46
      %p57 = scmp.eq.s32.totalorder %s37, 0
      %p58 = por %p56, %p57
      %p59 = scmp.ne.s32.totalorder %s45, %s46
      %p60 = scmp.eq.s32.totalorder %s38, 1
      %p61 = por %p59, %p60
      %p63 = scmp.ne.s32.totalorder %s46, %s62
      %p64 = scmp.eq.s32.totalorder %s38, 0
      %p65 = por %p63, %p64
      %s67 = sadd.s32 %s66, 1
      %p70 = scmp.eq.s32.totalorder %s32, 1
      %p71 = scmp.ne.s32.totalorder %s66, %s68
      %p72 = scmp.eq.s32.totalorder %s32, 0
      %p73 = por %p71, %p72
      %p74 = scmp.ne.s32.totalorder %s66, %s68
      %p75 = scmp.eq.s32.totalorder %s37, 1
      %p76 = por %p74, %p75
      %p77 = scmp.ne.s32.totalorder %s68, %s69
      %p78 = scmp.eq.s32.totalorder %s37, 0
      %p79 = por %p77, %p78
      %p80 = scmp.ne.s32.totalorder %s68, %s69
      %p81 = scmp.eq.s32.totalorder %s38, 1
      %p82 = por %p80, %p81
      %p84 = scmp.ne.s32.totalorder %s69, %s83
      %p85 = scmp.eq.s32.totalorder %s38, 0
      %p86 = por %p84, %p85
      %s88 = sadd.s32 %s87, 1
      %p91 = scmp.eq.s32.totalorder %s32, 1
      %p92 = scmp.ne.s32.totalorder %s87, %s89
      %p93 = scmp.eq.s32.totalorder %s32, 0
      %p94 = por %p92, %p93
      %p95 = scmp.ne.s32.totalorder %s87, %s89
      %p96 = scmp.eq.s32.totalorder %s37, 1
      %p97 = por %p95, %p96
      %p98 = scmp.ne.s32.totalorder %s89, %s90
      %p99 = scmp.eq.s32.totalorder %s37, 0
      %p100 = por %p98, %p99
      %p101 = scmp.ne.s32.totalorder %s89, %s90
      %p102 = scmp.eq.s32.totalorder %s38, 1
      %p103 = por %p101, %p102
      %p105 = scmp.ne.s32.totalorder %s90, %s104
      %p106 = scmp.eq.s32.totalorder %s38, 0
      %p107 = por %p105, %p106
      %s109 = sadd.s32 %s108, 1
      %p112 = scmp.eq.s32.totalorder %s32, 1
      %p113 = scmp.ne.s32.totalorder %s108, %s110
      %p114 = scmp.eq.s32.totalorder %s32, 0
      %p115 = por %p113, %p114
      %p116 = scmp.ne.s32.totalorder %s108, %s110
      %p117 = scmp.eq.s32.totalorder %s37, 1
      %p118 = por %p116, %p117
      %p119 = scmp.ne.s32.totalorder %s110, %s111
      %p120 = scmp.eq.s32.totalorder %s37, 0
      %p121 = por %p119, %p120
      %p122 = scmp.ne.s32.totalorder %s110, %s111
      %p123 = scmp.eq.s32.totalorder %s38, 1
      %p124 = por %p122, %p123
      %p126 = scmp.ne.s32.totalorder %s111, %s125
      %p127 = scmp.eq.s32.totalorder %s38, 0
      %p128 = por %p126, %p127
      %s130 = sadd.s32 %s129, 1
      %p133 = scmp.eq.s32.totalorder %s32, 1
      %p134 = scmp.ne.s32.totalorder %s129, %s131
      %p135 = scmp.eq.s32.totalorder %s32, 0
      %p136 = por %p134, %p135
      %p137 = scmp.ne.s32.totalorder %s129, %s131
      %p138 = scmp.eq.s32.totalorder %s37, 1
      %p139 = por %p137, %p138
      %p140 = scmp.ne.s32.totalorder %s131, %s132
      %p141 = scmp.eq.s32.totalorder %s37, 0
      %p142 = por %p140, %p141
      %p143 = scmp.ne.s32.totalorder %s131, %s132
      %p144 = scmp.eq.s32.totalorder %s38, 1
      %p145 = por %p143, %p144
      %p147 = scmp.ne.s32.totalorder %s132, %s146
      %p148 = scmp.eq.s32.totalorder %s38, 0
      %p149 = por %p147, %p148
      %s151 = sadd.s32 %s150, 1
      %p154 = scmp.eq.s32.totalorder %s32, 1
      %p155 = scmp.ne.s32.totalorder %s150, %s152
      %p156 = scmp.eq.s32.totalorder %s32, 0
      %p157 = por %p155, %p156
      %p158 = scmp.ne.s32.totalorder %s150, %s152
      %p159 = scmp.eq.s32.totalorder %s37, 1
      %p160 = por %p158, %p159
      %p161 = scmp.ne.s32.totalorder %s152, %s153
      %p162 = scmp.eq.s32.totalorder %s37, 0
      %p163 = por %p161, %p162
      %p164 = scmp.ne.s32.totalorder %s152, %s153
      %p165 = scmp.eq.s32.totalorder %s38, 1
      %p166 = por %p164, %p165
      %p168 = scmp.ne.s32.totalorder %s153, %s167
      %p169 = scmp.eq.s32.totalorder %s38, 0
      %p170 = por %p168, %p169
      %s172 = sadd.s32 %s171, 1
      %p175 = scmp.eq.s32.totalorder %s32, 1
      %p176 = scmp.ne.s32.totalorder %s171, %s173
      %p177 = scmp.eq.s32.totalorder %s32, 0
      %p178 = por %p176, %p177
      %p179 = scmp.ne.s32.totalorder %s171, %s173
      %p180 = scmp.eq.s32.totalorder %s37, 1
      %p181 = por %p179, %p180
      %p182 = scmp.ne.s32.totalorder %s173, %s174
      %p183 = scmp.eq.s32.totalorder %s37, 0
      %p184 = por %p182, %p183
      %p185 = scmp.ne.s32.totalorder %s173, %s174
      %p186 = scmp.eq.s32.totalorder %s38, 1
      %p187 = por %p185, %p186
      %p189 = scmp.ne.s32.totalorder %s174, %s188
      %p190 = scmp.eq.s32.totalorder %s38, 0
      %p191 = por %p189, %p190
      %s193 = sadd.s32 %s192, 1
      %p196 = scmp.eq.s32.totalorder %s32, 1
      %p197 = scmp.ne.s32.totalorder %s192, %s194
      %p198 = scmp.eq.s32.totalorder %s32, 0
      %p199 = por %p197, %p198
      %p200 = scmp.ne.s32.totalorder %s192, %s194
      %p201 = scmp.eq.s32.totalorder %s37, 1
      %p202 = por %p200, %p201
      %p203 = scmp.ne.s32.totalorder %s194, %s195
      %p204 = scmp.eq.s32.totalorder %s37, 0
      %p205 = por %p203, %p204
      %p206 = scmp.ne.s32.totalorder %s194, %s195
      %p207 = scmp.eq.s32.totalorder %s38, 1
      %p208 = por %p206, %p207
      %p210 = scmp.ne.s32.totalorder %s195, %s209
      %p211 = scmp.eq.s32.totalorder %s38, 0
      %p212 = por %p210, %p211
      %s214 = sadd.s32 %s213, 1
      %p217 = scmp.eq.s32.totalorder %s32, 1
      %p218 = scmp.ne.s32.totalorder %s213, %s215
      %p219 = scmp.eq.s32.totalorder %s32, 0
      %p220 = por %p218, %p219
      %p221 = scmp.ne.s32.totalorder %s213, %s215
      %p222 = scmp.eq.s32.totalorder %s37, 1
      %p223 = por %p221, %p222
      %p224 = scmp.ne.s32.totalorder %s215, %s216
      %p225 = scmp.eq.s32.totalorder %s37, 0
      %p226 = por %p224, %p225
      %p227 = scmp.ne.s32.totalorder %s215, %s216
      %p228 = scmp.eq.s32.totalorder %s38, 1
      %p229 = por %p227, %p228
      %p231 = scmp.ne.s32.totalorder %s216, %s230
      %p232 = scmp.eq.s32.totalorder %s38, 0
      %p233 = por %p231, %p232
      %s235 = sadd.s32 %s234, 1
      %p238 = scmp.eq.s32.totalorder %s32, 1
      %p239 = scmp.ne.s32.totalorder %s234, %s236
      %p240 = scmp.eq.s32.totalorder %s32, 0
      %p241 = por %p239, %p240
      %p242 = scmp.ne.s32.totalorder %s234, %s236
      %p243 = scmp.eq.s32.totalorder %s37, 1
      %p244 = por %p242, %p243
      %p245 = scmp.ne.s32.totalorder %s236, %s237
      %p246 = scmp.eq.s32.totalorder %s37, 0
      %p247 = por %p245, %p246
      %p248 = scmp.ne.s32.totalorder %s236, %s237
      %p249 = scmp.eq.s32.totalorder %s38, 1
      %p250 = por %p248, %p249
      %p252 = scmp.ne.s32.totalorder %s237, %s251
      %p253 = scmp.eq.s32.totalorder %s38, 0
      %p254 = por %p252, %p253
      %s256 = sadd.s32 %s255, 1
      %p259 = scmp.eq.s32.totalorder %s32, 1
      %p260 = scmp.ne.s32.totalorder %s255, %s257
      %p261 = scmp.eq.s32.totalorder %s32, 0
      %p262 = por %p260, %p261
      %p263 = scmp.ne.s32.totalorder %s255, %s257
      %p264 = scmp.eq.s32.totalorder %s37, 1
      %p265 = por %p263, %p264
      %p266 = scmp.ne.s32.totalorder %s257, %s258
      %p267 = scmp.eq.s32.totalorder %s37, 0
      %p268 = por %p266, %p267
      %p269 = scmp.ne.s32.totalorder %s257, %s258
      %p270 = scmp.eq.s32.totalorder %s38, 1
      %p271 = por %p269, %p270
      %p273 = scmp.ne.s32.totalorder %s258, %s272
      %p274 = scmp.eq.s32.totalorder %s38, 0
      %p275 = por %p273, %p274
      %s276 = ssub.s32 %s32, %s39
      %p277 = scmp.eq.s32.totalorder %s276, 0
      %s279 = sadd.s32 %s278, 1
      %s280 = scalar_select %p277, %s278, %s279
      %p283 = pneg %p277
      %p284 = scmp.eq.s32.totalorder %s32, 1
      %p285 = por %p283, %p284
      %p286 = scmp.ne.s32.totalorder %s278, %s281
      %p287 = scmp.eq.s32.totalorder %s32, 0
      %p288 = por %p286, %p287
      %p289 = scmp.ne.s32.totalorder %s278, %s281
      %p290 = scmp.eq.s32.totalorder %s37, 1
      %p291 = por %p289, %p290
      %p292 = scmp.ne.s32.totalorder %s281, %s282
      %p293 = scmp.eq.s32.totalorder %s37, 0
      %p294 = por %p292, %p293
      %p295 = scmp.ne.s32.totalorder %s281, %s282
      %p296 = scmp.eq.s32.totalorder %s38, 1
      %p297 = por %p295, %p296
      %p299 = scmp.ne.s32.totalorder %s282, %s298
      %p300 = scmp.eq.s32.totalorder %s38, 0
      %p301 = por %p299, %p300
      %s302 = ssub.s32 %s32, %s39
      %p303 = scmp.eq.s32.totalorder %s302, 0
      %s305 = sadd.s32 %s304, 1
      %s306 = scalar_select %p303, %s304, %s305
      %p309 = pneg %p303
      %p310 = scmp.eq.s32.totalorder %s32, 1
      %p311 = por %p309, %p310
      %p312 = scmp.ne.s32.totalorder %s304, %s307
      %p313 = scmp.eq.s32.totalorder %s32, 0
      %p314 = por %p312, %p313
      %p315 = scmp.ne.s32.totalorder %s304, %s307
      %p316 = scmp.eq.s32.totalorder %s37, 1
      %p317 = por %p315, %p316
      %p318 = scmp.ne.s32.totalorder %s307, %s308
      %p319 = scmp.eq.s32.totalorder %s37, 0
      %p320 = por %p318, %p319
      %p321 = scmp.ne.s32.totalorder %s307, %s308
      %p322 = scmp.eq.s32.totalorder %s38, 1
      %p323 = por %p321, %p322
      %p325 = scmp.ne.s32.totalorder %s308, %s324
      %p326 = scmp.eq.s32.totalorder %s38, 0
      %p327 = por %p325, %p326
      %p328 = scmp.le.s32.totalorder 1, %s32
      %p329 = scmp.lt.s32.totalorder %s32, 3
      %p330 = pnand %p328, %p329
      %p331 = pneg %p330
      // Predicated region
      $region9: #{tpu_custom_call.1} parent=5 // pred_check
        _
      $region10: #{tpu_custom_call.1} parent=5 // pred_check_branch
        %333 = sbr.rel (%p330) target = $region12
      $region11: #{tpu_custom_call.1} parent=5 // pred_region
        %s334 = ssub.s32 %s32, 1
        // Predicated region
        $region13: #{tpu_custom_call.1} parent=11 // pred_check
          %p335 = pneg %p79
        $region14: #{tpu_custom_call.1} parent=11 // pred_check_branch
          %337 = sbr.rel (%p335) target = $region16
        $region15: #{tpu_custom_call.1} parent=11 // pred_region
          %339 = vsyncadd [#allocation6], 0
          %s340 = sshll.u32 %s1, 4
          %s341 = int_to_ptr.hbm [resolvable:$true] %s340
          %s342 = sshll.u32 [#allocation5], 4
          %s343 = int_to_ptr.vmem [resolvable:$true] %s342
          %348 = dma.hbm_to_vmem [thread:$0]  %s341, 32768, %s343, [#allocation6], 512, 512, 32
        $region16: #{tpu_custom_call.1} parent=11 // pred_fallthru
          _
        // Predicated region
        $region17: #{tpu_custom_call.1} parent=11 // pred_check
          %p349 = pneg %p100
        $region18: #{tpu_custom_call.1} parent=11 // pred_check_branch
          %351 = sbr.rel (%p349) target = $region20
        $region19: #{tpu_custom_call.1} parent=11 // pred_region
          %353 = vsyncadd [#allocation6], 0
          %s355 = sshll.u32 %s2, 4
          %s356 = int_to_ptr.hbm [resolvable:$true] %s355
          %s357 = sshll.u32 [#allocation7], 4
          %s358 = int_to_ptr.vmem [resolvable:$true] %s357
          %360 = dma.hbm_to_vmem [thread:$0]  %s356, 128, %s358, [#allocation6]
        $region20: #{tpu_custom_call.1} parent=11 // pred_fallthru
          _
        // Predicated region
        $region21: #{tpu_custom_call.1} parent=11 // pred_check
          %p361 = pneg %p121
        $region22: #{tpu_custom_call.1} parent=11 // pred_check_branch
          %363 = sbr.rel (%p361) target = $region24
        $region23: #{tpu_custom_call.1} parent=11 // pred_region
          %365 = vsyncadd [#allocation9], 0
          %s366 = sshll.u32 %s3, 4
          %s367 = int_to_ptr.hbm [resolvable:$true] %s366
          %s368 = sshll.u32 [#allocation8], 4
          %s369 = int_to_ptr.vmem [resolvable:$true] %s368
          %374 = dma.hbm_to_vmem [thread:$0]  %s367, 32768, %s369, [#allocation9], 256, 256, 16
        $region24: #{tpu_custom_call.1} parent=11 // pred_fallthru
          _
        // Predicated region
        $region25: #{tpu_custom_call.1} parent=11 // pred_check
          %p375 = pneg %p142
        $region26: #{tpu_custom_call.1} parent=11 // pred_check_branch
          %377 = sbr.rel (%p375) target = $region28
        $region27: #{tpu_custom_call.1} parent=11 // pred_region
          %379 = vsyncadd [#allocation9], 0
          %s381 = sshll.u32 %s4, 4
          %s382 = int_to_ptr.hbm [resolvable:$true] %s381
          %s383 = sshll.u32 [#allocation10], 4
          %s384 = int_to_ptr.vmem [resolvable:$true] %s383
          %386 = dma.hbm_to_vmem [thread:$0]  %s382, 64, %s384, [#allocation9]
        $region28: #{tpu_custom_call.1} parent=11 // pred_fallthru
          _
        // Predicated region
        $region29: #{tpu_custom_call.1} parent=11 // pred_check
          %p387 = pneg %p163
        $region30: #{tpu_custom_call.1} parent=11 // pred_check_branch
          %389 = sbr.rel (%p387) target = $region32
        $region31: #{tpu_custom_call.1} parent=11 // pred_region
          %391 = vsyncadd [#allocation12], 0
          %s392 = sshll.u32 %s5, 4
          %s393 = int_to_ptr.hbm [resolvable:$true] %s392
          %s394 = sshll.u32 [#allocation11], 4
          %s395 = int_to_ptr.vmem [resolvable:$true] %s394
          %400 = dma.hbm_to_vmem [thread:$0]  %s393, 4096, %s395, [#allocation12], 64, 64, 4
        $region32: #{tpu_custom_call.1} parent=11 // pred_fallthru
          _
        // Predicated region
        $region33: #{tpu_custom_call.1} parent=11 // pred_check
          %p401 = pneg %p184
        $region34: #{tpu_custom_call.1} parent=11 // pred_check_branch
          %403 = sbr.rel (%p401) target = $region36
        $region35: #{tpu_custom_call.1} parent=11 // pred_region
          %405 = vsyncadd [#allocation12], 0
          %s407 = sshll.u32 %s6, 4
          %s408 = int_to_ptr.hbm [resolvable:$true] %s407
          %s409 = sshll.u32 [#allocation13], 4
          %s410 = int_to_ptr.vmem [resolvable:$true] %s409
          %412 = dma.hbm_to_vmem [thread:$0]  %s408, 16, %s410, [#allocation12]
        $region36: #{tpu_custom_call.1} parent=11 // pred_fallthru
          _
        // Predicated region
        $region37: #{tpu_custom_call.1} parent=11 // pred_check
          %p413 = pneg %p205
        $region38: #{tpu_custom_call.1} parent=11 // pred_check_branch
          %415 = sbr.rel (%p413) target = $region40
        $region39: #{tpu_custom_call.1} parent=11 // pred_region
          %417 = vsyncadd [#allocation15], 0
          %s418 = sshll.u32 %s7, 4
          %s419 = int_to_ptr.hbm [resolvable:$true] %s418
          %s420 = sshll.u32 [#allocation14], 4
          %s421 = int_to_ptr.vmem [resolvable:$true] %s420
          %426 = dma.hbm_to_vmem [thread:$0]  %s419, 4096, %s421, [#allocation15], 256, 256, 16
        $region40: #{tpu_custom_call.1} parent=11 // pred_fallthru
          _
        // Predicated region
        $region41: #{tpu_custom_call.1} parent=11 // pred_check
          %p427 = pneg %p226
        $region42: #{tpu_custom_call.1} parent=11 // pred_check_branch
          %429 = sbr.rel (%p427) target = $region44
        $region43: #{tpu_custom_call.1} parent=11 // pred_region
          _
        $region44: #{tpu_custom_call.1} parent=11 // pred_fallthru
          _
        // Predicated region
        $region45: #{tpu_custom_call.1} parent=11 // pred_check
          %p430 = pneg %p247
        $region46: #{tpu_custom_call.1} parent=11 // pred_check_branch
          %432 = sbr.rel (%p430) target = $region48
        $region47: #{tpu_custom_call.1} parent=11 // pred_region
          %434 = vsyncadd [#allocation15], 0
          %s435 = sshll.u32 %s9, 4
          %s436 = int_to_ptr.hbm [resolvable:$true] %s435
          %s437 = sshll.u32 [#allocation16], 4
          %s438 = int_to_ptr.vmem [resolvable:$true] %s437
          %443 = dma.hbm_to_vmem [thread:$0]  %s436, 16384, %s438, [#allocation15], 256, 256, 16
        $region48: #{tpu_custom_call.1} parent=11 // pred_fallthru
          _
        // Predicated region
        $region49: #{tpu_custom_call.1} parent=11 // pred_check
          %p444 = pneg %p268
        $region50: #{tpu_custom_call.1} parent=11 // pred_check_branch
          %446 = sbr.rel (%p444) target = $region52
        $region51: #{tpu_custom_call.1} parent=11 // pred_region
          _
        $region52: #{tpu_custom_call.1} parent=11 // pred_fallthru
          _
      $region12: #{tpu_custom_call.1} parent=5 // pred_fallthru
        _
      %p447 = scmp.lt.s32.totalorder %s32, 2
      // Predicated region
      $region53: #{tpu_custom_call.1} parent=5 // pred_check
        %p448 = pneg %p447
      $region54: #{tpu_custom_call.1} parent=5 // pred_check_branch
        %450 = sbr.rel (%p448) target = $region56
      $region55: #{tpu_custom_call.1} parent=5 // pred_region
        // Predicated region
        $region57: #{tpu_custom_call.1} parent=55 // pred_check
          %p451 = pneg %p52
        $region58: #{tpu_custom_call.1} parent=55 // pred_check_branch
          %453 = sbr.rel (%p451) target = $region60
        $region59: #{tpu_custom_call.1} parent=55 // pred_region
          %s454 = sand.u32 %s42, 1
          %s455 = scalar_lea.sflag [#allocation3], %s454
          %s456 = sand.u32 %s42, 1
          %s457 = smul.addr %s456, 512
          %s458 = scalar_lea.vmem [#allocation2], %s457
          %s459 = smul.u32 16, %s32
          %461 = vsyncadd %s455, 0
          %s462 = smul.addr %s459, 4
          %s463 = smul.addr %s462, 8
          %s464 = scalar_lea.hbm %s0, %s463
          %s465 = sshll.u32 %s464, 4
          %s466 = int_to_ptr.hbm [resolvable:$true] %s465
          %s467 = sshll.u32 %s458, 4
          %s468 = int_to_ptr.vmem [resolvable:$true] %s467
          %473 = dma.hbm_to_vmem [thread:$0]  %s466, 8192, %s468, %s455, 512, 512, 32
        $region60: #{tpu_custom_call.1} parent=55 // pred_fallthru
          _
      $region56: #{tpu_custom_call.1} parent=5 // pred_fallthru
        _
      %p474 = scmp.le.s32.totalorder 1, %s32
      %p475 = scmp.lt.s32.totalorder %s32, 3
      %p476 = pnand %p474, %p475
      %p477 = pneg %p476
      // Predicated region
      $region61: #{tpu_custom_call.1} parent=5 // pred_check
        _
      $region62: #{tpu_custom_call.1} parent=5 // pred_check_branch
        %479 = sbr.rel (%p476) target = $region64
      $region63: #{tpu_custom_call.1} parent=5 // pred_region
        %s480 = ssub.s32 %s32, 1
        %s481 = sand.u32 %s45, 1
        %s482 = scalar_lea.sflag [#allocation3], %s481
        %s483 = sand.u32 %s45, 1
        %s484 = smul.addr %s483, 512
        %s485 = scalar_lea.vmem [#allocation2], %s484
        // Predicated region
        $region65: #{tpu_custom_call.1} parent=63 // pred_check
          %p486 = pneg %p58
        $region66: #{tpu_custom_call.1} parent=63 // pred_check_branch
          %488 = sbr.rel (%p486) target = $region68
        $region67: #{tpu_custom_call.1} parent=63 // pred_region
          %490 = dma.done %s482, 8192
        $region68: #{tpu_custom_call.1} parent=63 // pred_fallthru
          _
        // Predicated region
        $region69: #{tpu_custom_call.1} parent=63 // pred_check
          %p491 = pneg %p79
        $region70: #{tpu_custom_call.1} parent=63 // pred_check_branch
          %493 = sbr.rel (%p491) target = $region72
        $region71: #{tpu_custom_call.1} parent=63 // pred_region
          %495 = dma.done [#allocation6], 32768
        $region72: #{tpu_custom_call.1} parent=63 // pred_fallthru
          _
        // Predicated region
        $region73: #{tpu_custom_call.1} parent=63 // pred_check
          %p496 = pneg %p100
        $region74: #{tpu_custom_call.1} parent=63 // pred_check_branch
          %498 = sbr.rel (%p496) target = $region76
        $region75: #{tpu_custom_call.1} parent=63 // pred_region
          %500 = dma.done [#allocation6], 128
        $region76: #{tpu_custom_call.1} parent=63 // pred_fallthru
          _
        // Predicated region
        $region77: #{tpu_custom_call.1} parent=63 // pred_check
          %p501 = pneg %p121
        $region78: #{tpu_custom_call.1} parent=63 // pred_check_branch
          %503 = sbr.rel (%p501) target = $region80
        $region79: #{tpu_custom_call.1} parent=63 // pred_region
          %505 = dma.done [#allocation9], 32768
        $region80: #{tpu_custom_call.1} parent=63 // pred_fallthru
          _
        // Predicated region
        $region81: #{tpu_custom_call.1} parent=63 // pred_check
          %p506 = pneg %p142
        $region82: #{tpu_custom_call.1} parent=63 // pred_check_branch
          %508 = sbr.rel (%p506) target = $region84
        $region83: #{tpu_custom_call.1} parent=63 // pred_region
          %510 = dma.done [#allocation9], 64
        $region84: #{tpu_custom_call.1} parent=63 // pred_fallthru
          _
        // Predicated region
        $region85: #{tpu_custom_call.1} parent=63 // pred_check
          %p511 = pneg %p163
        $region86: #{tpu_custom_call.1} parent=63 // pred_check_branch
          %513 = sbr.rel (%p511) target = $region88
        $region87: #{tpu_custom_call.1} parent=63 // pred_region
          %515 = dma.done [#allocation12], 4096
        $region88: #{tpu_custom_call.1} parent=63 // pred_fallthru
          _
        // Predicated region
        $region89: #{tpu_custom_call.1} parent=63 // pred_check
          %p516 = pneg %p184
        $region90: #{tpu_custom_call.1} parent=63 // pred_check_branch
          %518 = sbr.rel (%p516) target = $region92
        $region91: #{tpu_custom_call.1} parent=63 // pred_region
          %520 = dma.done [#allocation12], 16
        $region92: #{tpu_custom_call.1} parent=63 // pred_fallthru
          _
        // Predicated region
        $region93: #{tpu_custom_call.1} parent=63 // pred_check
          %p521 = pneg %p205
        $region94: #{tpu_custom_call.1} parent=63 // pred_check_branch
          %523 = sbr.rel (%p521) target = $region96
        $region95: #{tpu_custom_call.1} parent=63 // pred_region
          %525 = dma.done [#allocation15], 4096
        $region96: #{tpu_custom_call.1} parent=63 // pred_fallthru
          _
        // Predicated region
        $region97: #{tpu_custom_call.1} parent=63 // pred_check
          %p526 = pneg %p247
        $region98: #{tpu_custom_call.1} parent=63 // pred_check_branch
          %528 = sbr.rel (%p526) target = $region100
        $region99: #{tpu_custom_call.1} parent=63 // pred_region
          %530 = dma.done [#allocation15], 16384
        $region100: #{tpu_custom_call.1} parent=63 // pred_fallthru
          _
        %s531 = sand.u32 %s45, 1
        %s532 = scalar_lea.sflag [#allocation3], %s531
        %s533 = sand.u32 %s45, 1
        %s534 = smul.addr %s533, 512
        %s535 = scalar_lea.vmem [#allocation2], %s534
        %p536 = pneg %p58
        %p537 = pneg %p55
        %p538 = pneg %p79
        %p539 = pneg %p76
        %p540 = pneg %p100
        %p541 = pneg %p97
        %p542 = pneg %p121
        %p543 = pneg %p118
        %p544 = pneg %p142
        %p545 = pneg %p139
        %p546 = pneg %p163
        %p547 = pneg %p160
        %p548 = pneg %p184
        %p549 = pneg %p181
        %p550 = pneg %p205
        %p551 = pneg %p202
        %p552 = pneg %p226
        %p553 = pneg %p223
        %p554 = pneg %p247
        %p555 = pneg %p244
        %p556 = pneg %p268
        %p557 = pneg %p265
        %p558 = pneg %p294
        %p559 = pneg %p291
        %s560 = sand.u32 %s281, 1
        %s561 = scalar_lea.sflag [#allocation4], %s560
        %s562 = sand.u32 %s281, 1
        %s563 = smul.addr %s562, 512
        %s564 = scalar_lea.vmem [#allocation17], %s563
        %p565 = pneg %p320
        %p566 = pneg %p317
        %s567 = sand.u32 %s307, 1
        %s568 = scalar_lea.sflag [#allocation19], %s567
        %s569 = sand.u32 %s307, 1
        %s570 = smul.addr %s569, 128
        %s571 = scalar_lea.vmem [#allocation18], %s570
        %s572 = smul.u32 16, %s37
        %s573 = smul.u32 16, %s37
        %s574 = smul.u32 16, %s37
        %v575 = vld [vmem:[%s485] sm:$0xff]
        %v576 = vld [vmem:[%s485 + $0x8] sm:$0xff]
        %v577 = vld [vmem:[%s485 + $0x10] sm:$0xff]
        %v578 = vld [vmem:[%s485 + $0x18] sm:$0xff]
        %v579 = vld [vmem:[%s485 + $0x20] sm:$0xff]
        %v580 = vld [vmem:[%s485 + $0x28] sm:$0xff]
        %v581 = vld [vmem:[%s485 + $0x30] sm:$0xff]
        %v582 = vld [vmem:[%s485 + $0x38] sm:$0xff]
        %v583 = vld [vmem:[%s485 + $0x40] sm:$0xff]
        %v584 = vld [vmem:[%s485 + $0x48] sm:$0xff]
        %v585 = vld [vmem:[%s485 + $0x50] sm:$0xff]
        %v586 = vld [vmem:[%s485 + $0x58] sm:$0xff]
        %v587 = vld [vmem:[%s485 + $0x60] sm:$0xff]
        %v588 = vld [vmem:[%s485 + $0x68] sm:$0xff]
        %v589 = vld [vmem:[%s485 + $0x70] sm:$0xff]
        %v590 = vld [vmem:[%s485 + $0x78] sm:$0xff]
        %v591 = vld [vmem:[%s485 + $0x80] sm:$0xff]
        %v592 = vld [vmem:[%s485 + $0x88] sm:$0xff]
        %v593 = vld [vmem:[%s485 + $0x90] sm:$0xff]
        %v594 = vld [vmem:[%s485 + $0x98] sm:$0xff]
        %v595 = vld [vmem:[%s485 + $0xa0] sm:$0xff]
        %v596 = vld [vmem:[%s485 + $0xa8] sm:$0xff]
        %v597 = vld [vmem:[%s485 + $0xb0] sm:$0xff]
        %v598 = vld [vmem:[%s485 + $0xb8] sm:$0xff]
        %v599 = vld [vmem:[%s485 + $0xc0] sm:$0xff]
        %v600 = vld [vmem:[%s485 + $0xc8] sm:$0xff]
        %v601 = vld [vmem:[%s485 + $0xd0] sm:$0xff]
        %v602 = vld [vmem:[%s485 + $0xd8] sm:$0xff]
        %v603 = vld [vmem:[%s485 + $0xe0] sm:$0xff]
        %v604 = vld [vmem:[%s485 + $0xe8] sm:$0xff]
        %v605 = vld [vmem:[%s485 + $0xf0] sm:$0xff]
        %v606 = vld [vmem:[%s485 + $0xf8] sm:$0xff]
        %v607 = vld [vmem:[%s485 + $0x100] sm:$0xff]
        %v608 = vld [vmem:[%s485 + $0x108] sm:$0xff]
        %v609 = vld [vmem:[%s485 + $0x110] sm:$0xff]
        %v610 = vld [vmem:[%s485 + $0x118] sm:$0xff]
        %v611 = vld [vmem:[%s485 + $0x120] sm:$0xff]
        %v612 = vld [vmem:[%s485 + $0x128] sm:$0xff]
        %v613 = vld [vmem:[%s485 + $0x130] sm:$0xff]
        %v614 = vld [vmem:[%s485 + $0x138] sm:$0xff]
        %v615 = vld [vmem:[%s485 + $0x140] sm:$0xff]
        %v616 = vld [vmem:[%s485 + $0x148] sm:$0xff]
        %v617 = vld [vmem:[%s485 + $0x150] sm:$0xff]
        %v618 = vld [vmem:[%s485 + $0x158] sm:$0xff]
        %v619 = vld [vmem:[%s485 + $0x160] sm:$0xff]
        %v620 = vld [vmem:[%s485 + $0x168] sm:$0xff]
        %v621 = vld [vmem:[%s485 + $0x170] sm:$0xff]
        %v622 = vld [vmem:[%s485 + $0x178] sm:$0xff]
        %v623 = vld [vmem:[%s485 + $0x180] sm:$0xff]
        %v624 = vld [vmem:[%s485 + $0x188] sm:$0xff]
        %v625 = vld [vmem:[%s485 + $0x190] sm:$0xff]
        %v626 = vld [vmem:[%s485 + $0x198] sm:$0xff]
        %v627 = vld [vmem:[%s485 + $0x1a0] sm:$0xff]
        %v628 = vld [vmem:[%s485 + $0x1a8] sm:$0xff]
        %v629 = vld [vmem:[%s485 + $0x1b0] sm:$0xff]
        %v630 = vld [vmem:[%s485 + $0x1b8] sm:$0xff]
        %v631 = vld [vmem:[%s485 + $0x1c0] sm:$0xff]
        %v632 = vld [vmem:[%s485 + $0x1c8] sm:$0xff]
        %v633 = vld [vmem:[%s485 + $0x1d0] sm:$0xff]
        %v634 = vld [vmem:[%s485 + $0x1d8] sm:$0xff]
        %v635 = vld [vmem:[%s485 + $0x1e0] sm:$0xff]
        %v636 = vld [vmem:[%s485 + $0x1e8] sm:$0xff]
        %v637 = vld [vmem:[%s485 + $0x1f0] sm:$0xff]
        %v638 = vld [vmem:[%s485 + $0x1f8] sm:$0xff]
        %v639 = vpack.c.bf16 %v579, %v575
        %v640 = vpack.c.bf16 %v580, %v576
        %v641 = vpack.c.bf16 %v581, %v577
        %v642 = vpack.c.bf16 %v582, %v578
        %v643 = vpack.c.bf16 %v587, %v583
        %v644 = vpack.c.bf16 %v588, %v584
        %v645 = vpack.c.bf16 %v589, %v585
        %v646 = vpack.c.bf16 %v590, %v586
        %v647 = vpack.c.bf16 %v595, %v591
        %v648 = vpack.c.bf16 %v596, %v592
        %v649 = vpack.c.bf16 %v597, %v593
        %v650 = vpack.c.bf16 %v598, %v594
        %v651 = vpack.c.bf16 %v603, %v599
        %v652 = vpack.c.bf16 %v604, %v600
        %v653 = vpack.c.bf16 %v605, %v601
        %v654 = vpack.c.bf16 %v606, %v602
        %v655 = vpack.c.bf16 %v611, %v607
        %v656 = vpack.c.bf16 %v612, %v608
        %v657 = vpack.c.bf16 %v613, %v609
        %v658 = vpack.c.bf16 %v614, %v610
        %v659 = vpack.c.bf16 %v619, %v615
        %v660 = vpack.c.bf16 %v620, %v616
        %v661 = vpack.c.bf16 %v621, %v617
        %v662 = vpack.c.bf16 %v622, %v618
        %v663 = vpack.c.bf16 %v627, %v623
        %v664 = vpack.c.bf16 %v628, %v624
        %v665 = vpack.c.bf16 %v629, %v625
        %v666 = vpack.c.bf16 %v630, %v626
        %v667 = vpack.c.bf16 %v635, %v631
        %v668 = vpack.c.bf16 %v636, %v632
        %v669 = vpack.c.bf16 %v637, %v633
        %v670 = vpack.c.bf16 %v638, %v634
        %v671 = vld [vmem:[#allocation5] sm:$0xff]
        %v672 = vld [vmem:[#allocation5 + $0x8] sm:$0xff]
        %v673 = vld [vmem:[#allocation5 + $0x10] sm:$0xff]
        %v674 = vld [vmem:[#allocation5 + $0x18] sm:$0xff]
        %v675 = vld [vmem:[#allocation5 + $0x20] sm:$0xff]
        %v676 = vld [vmem:[#allocation5 + $0x28] sm:$0xff]
        %v677 = vld [vmem:[#allocation5 + $0x30] sm:$0xff]
        %v678 = vld [vmem:[#allocation5 + $0x38] sm:$0xff]
        %v679 = vld [vmem:[#allocation5 + $0x40] sm:$0xff]
        %v680 = vld [vmem:[#allocation5 + $0x48] sm:$0xff]
        %v681 = vld [vmem:[#allocation5 + $0x50] sm:$0xff]
        %v682 = vld [vmem:[#allocation5 + $0x58] sm:$0xff]
        %v683 = vld [vmem:[#allocation5 + $0x60] sm:$0xff]
        %v684 = vld [vmem:[#allocation5 + $0x68] sm:$0xff]
        %v685 = vld [vmem:[#allocation5 + $0x70] sm:$0xff]
        %v686 = vld [vmem:[#allocation5 + $0x78] sm:$0xff]
        %v687 = vld [vmem:[#allocation5 + $0x80] sm:$0xff]
        %v688 = vld [vmem:[#allocation5 + $0x88] sm:$0xff]
        %v689 = vld [vmem:[#allocation5 + $0x90] sm:$0xff]
        %v690 = vld [vmem:[#allocation5 + $0x98] sm:$0xff]
        %v691 = vld [vmem:[#allocation5 + $0xa0] sm:$0xff]
        %v692 = vld [vmem:[#allocation5 + $0xa8] sm:$0xff]
        %v693 = vld [vmem:[#allocation5 + $0xb0] sm:$0xff]
        %v694 = vld [vmem:[#allocation5 + $0xb8] sm:$0xff]
        %v695 = vld [vmem:[#allocation5 + $0xc0] sm:$0xff]
        %v696 = vld [vmem:[#allocation5 + $0xc8] sm:$0xff]
        %v697 = vld [vmem:[#allocation5 + $0xd0] sm:$0xff]
        %v698 = vld [vmem:[#allocation5 + $0xd8] sm:$0xff]
        %v699 = vld [vmem:[#allocation5 + $0xe0] sm:$0xff]
        %v700 = vld [vmem:[#allocation5 + $0xe8] sm:$0xff]
        %v701 = vld [vmem:[#allocation5 + $0xf0] sm:$0xff]
        %v702 = vld [vmem:[#allocation5 + $0xf8] sm:$0xff]
        %v703 = vld [vmem:[#allocation5 + $0x100] sm:$0xff]
        %v704 = vld [vmem:[#allocation5 + $0x108] sm:$0xff]
        %v705 = vld [vmem:[#allocation5 + $0x110] sm:$0xff]
        %v706 = vld [vmem:[#allocation5 + $0x118] sm:$0xff]
        %v707 = vld [vmem:[#allocation5 + $0x120] sm:$0xff]
        %v708 = vld [vmem:[#allocation5 + $0x128] sm:$0xff]
        %v709 = vld [vmem:[#allocation5 + $0x130] sm:$0xff]
        %v710 = vld [vmem:[#allocation5 + $0x138] sm:$0xff]
        %v711 = vld [vmem:[#allocation5 + $0x140] sm:$0xff]
        %v712 = vld [vmem:[#allocation5 + $0x148] sm:$0xff]
        %v713 = vld [vmem:[#allocation5 + $0x150] sm:$0xff]
        %v714 = vld [vmem:[#allocation5 + $0x158] sm:$0xff]
        %v715 = vld [vmem:[#allocation5 + $0x160] sm:$0xff]
        %v716 = vld [vmem:[#allocation5 + $0x168] sm:$0xff]
        %v717 = vld [vmem:[#allocation5 + $0x170] sm:$0xff]
        %v718 = vld [vmem:[#allocation5 + $0x178] sm:$0xff]
        %v719 = vld [vmem:[#allocation5 + $0x180] sm:$0xff]
        %v720 = vld [vmem:[#allocation5 + $0x188] sm:$0xff]
        %v721 = vld [vmem:[#allocation5 + $0x190] sm:$0xff]
        %v722 = vld [vmem:[#allocation5 + $0x198] sm:$0xff]
        %v723 = vld [vmem:[#allocation5 + $0x1a0] sm:$0xff]
        %v724 = vld [vmem:[#allocation5 + $0x1a8] sm:$0xff]
        %v725 = vld [vmem:[#allocation5 + $0x1b0] sm:$0xff]
        %v726 = vld [vmem:[#allocation5 + $0x1b8] sm:$0xff]
        %v727 = vld [vmem:[#allocation5 + $0x1c0] sm:$0xff]
        %v728 = vld [vmem:[#allocation5 + $0x1c8] sm:$0xff]
        %v729 = vld [vmem:[#allocation5 + $0x1d0] sm:$0xff]
        %v730 = vld [vmem:[#allocation5 + $0x1d8] sm:$0xff]
        %v731 = vld [vmem:[#allocation5 + $0x1e0] sm:$0xff]
        %v732 = vld [vmem:[#allocation5 + $0x1e8] sm:$0xff]
        %v733 = vld [vmem:[#allocation5 + $0x1f0] sm:$0xff]
        %v734 = vld [vmem:[#allocation5 + $0x1f8] sm:$0xff]
        %v735 = vld [vmem:[#allocation5 + $0x200] sm:$0xff]
        %v736 = vld [vmem:[#allocation5 + $0x208] sm:$0xff]
        %v737 = vld [vmem:[#allocation5 + $0x210] sm:$0xff]
        %v738 = vld [vmem:[#allocation5 + $0x218] sm:$0xff]
        %v739 = vld [vmem:[#allocation5 + $0x220] sm:$0xff]
        %v740 = vld [vmem:[#allocation5 + $0x228] sm:$0xff]
        %v741 = vld [vmem:[#allocation5 + $0x230] sm:$0xff]
        %v742 = vld [vmem:[#allocation5 + $0x238] sm:$0xff]
        %v743 = vld [vmem:[#allocation5 + $0x240] sm:$0xff]
        %v744 = vld [vmem:[#allocation5 + $0x248] sm:$0xff]
        %v745 = vld [vmem:[#allocation5 + $0x250] sm:$0xff]
        %v746 = vld [vmem:[#allocation5 + $0x258] sm:$0xff]
        %v747 = vld [vmem:[#allocation5 + $0x260] sm:$0xff]
        %v748 = vld [vmem:[#allocation5 + $0x268] sm:$0xff]
        %v749 = vld [vmem:[#allocation5 + $0x270] sm:$0xff]
        %v750 = vld [vmem:[#allocation5 + $0x278] sm:$0xff]
        %v751 = vld [vmem:[#allocation5 + $0x280] sm:$0xff]
        %v752 = vld [vmem:[#allocation5 + $0x288] sm:$0xff]
        %v753 = vld [vmem:[#allocation5 + $0x290] sm:$0xff]
        %v754 = vld [vmem:[#allocation5 + $0x298] sm:$0xff]
        %v755 = vld [vmem:[#allocation5 + $0x2a0] sm:$0xff]
        %v756 = vld [vmem:[#allocation5 + $0x2a8] sm:$0xff]
        %v757 = vld [vmem:[#allocation5 + $0x2b0] sm:$0xff]
        %v758 = vld [vmem:[#allocation5 + $0x2b8] sm:$0xff]
        %v759 = vld [vmem:[#allocation5 + $0x2c0] sm:$0xff]
        %v760 = vld [vmem:[#allocation5 + $0x2c8] sm:$0xff]
        %v761 = vld [vmem:[#allocation5 + $0x2d0] sm:$0xff]
        %v762 = vld [vmem:[#allocation5 + $0x2d8] sm:$0xff]
        %v763 = vld [vmem:[#allocation5 + $0x2e0] sm:$0xff]
        %v764 = vld [vmem:[#allocation5 + $0x2e8] sm:$0xff]
        %v765 = vld [vmem:[#allocation5 + $0x2f0] sm:$0xff]
        %v766 = vld [vmem:[#allocation5 + $0x2f8] sm:$0xff]
        %v767 = vld [vmem:[#allocation5 + $0x300] sm:$0xff]
        %v768 = vld [vmem:[#allocation5 + $0x308] sm:$0xff]
        %v769 = vld [vmem:[#allocation5 + $0x310] sm:$0xff]
        %v770 = vld [vmem:[#allocation5 + $0x318] sm:$0xff]
        %v771 = vld [vmem:[#allocation5 + $0x320] sm:$0xff]
        %v772 = vld [vmem:[#allocation5 + $0x328] sm:$0xff]
        %v773 = vld [vmem:[#allocation5 + $0x330] sm:$0xff]
        %v774 = vld [vmem:[#allocation5 + $0x338] sm:$0xff]
        %v775 = vld [vmem:[#allocation5 + $0x340] sm:$0xff]
        %v776 = vld [vmem:[#allocation5 + $0x348] sm:$0xff]
        %v777 = vld [vmem:[#allocation5 + $0x350] sm:$0xff]
        %v778 = vld [vmem:[#allocation5 + $0x358] sm:$0xff]
        %v779 = vld [vmem:[#allocation5 + $0x360] sm:$0xff]
        %v780 = vld [vmem:[#allocation5 + $0x368] sm:$0xff]
        %v781 = vld [vmem:[#allocation5 + $0x370] sm:$0xff]
        %v782 = vld [vmem:[#allocation5 + $0x378] sm:$0xff]
        %v783 = vld [vmem:[#allocation5 + $0x380] sm:$0xff]
        %v784 = vld [vmem:[#allocation5 + $0x388] sm:$0xff]
        %v785 = vld [vmem:[#allocation5 + $0x390] sm:$0xff]
        %v786 = vld [vmem:[#allocation5 + $0x398] sm:$0xff]
        %v787 = vld [vmem:[#allocation5 + $0x3a0] sm:$0xff]
        %v788 = vld [vmem:[#allocation5 + $0x3a8] sm:$0xff]
        %v789 = vld [vmem:[#allocation5 + $0x3b0] sm:$0xff]
        %v790 = vld [vmem:[#allocation5 + $0x3b8] sm:$0xff]
        %v791 = vld [vmem:[#allocation5 + $0x3c0] sm:$0xff]
        %v792 = vld [vmem:[#allocation5 + $0x3c8] sm:$0xff]
        %v793 = vld [vmem:[#allocation5 + $0x3d0] sm:$0xff]
        %v794 = vld [vmem:[#allocation5 + $0x3d8] sm:$0xff]
        %v795 = vld [vmem:[#allocation5 + $0x3e0] sm:$0xff]
        %v796 = vld [vmem:[#allocation5 + $0x3e8] sm:$0xff]
        %v797 = vld [vmem:[#allocation5 + $0x3f0] sm:$0xff]
        %v798 = vld [vmem:[#allocation5 + $0x3f8] sm:$0xff]
        %v799 = vld [vmem:[#allocation5 + $0x400] sm:$0xff]
        %v800 = vld [vmem:[#allocation5 + $0x408] sm:$0xff]
        %v801 = vld [vmem:[#allocation5 + $0x410] sm:$0xff]
        %v802 = vld [vmem:[#allocation5 + $0x418] sm:$0xff]
        %v803 = vld [vmem:[#allocation5 + $0x420] sm:$0xff]
        %v804 = vld [vmem:[#allocation5 + $0x428] sm:$0xff]
        %v805 = vld [vmem:[#allocation5 + $0x430] sm:$0xff]
        %v806 = vld [vmem:[#allocation5 + $0x438] sm:$0xff]
        %v807 = vld [vmem:[#allocation5 + $0x440] sm:$0xff]
        %v808 = vld [vmem:[#allocation5 + $0x448] sm:$0xff]
        %v809 = vld [vmem:[#allocation5 + $0x450] sm:$0xff]
        %v810 = vld [vmem:[#allocation5 + $0x458] sm:$0xff]
        %v811 = vld [vmem:[#allocation5 + $0x460] sm:$0xff]
        %v812 = vld [vmem:[#allocation5 + $0x468] sm:$0xff]
        %v813 = vld [vmem:[#allocation5 + $0x470] sm:$0xff]
        %v814 = vld [vmem:[#allocation5 + $0x478] sm:$0xff]
        %v815 = vld [vmem:[#allocation5 + $0x480] sm:$0xff]
        %v816 = vld [vmem:[#allocation5 + $0x488] sm:$0xff]
        %v817 = vld [vmem:[#allocation5 + $0x490] sm:$0xff]
        %v818 = vld [vmem:[#allocation5 + $0x498] sm:$0xff]
        %v819 = vld [vmem:[#allocation5 + $0x4a0] sm:$0xff]
        %v820 = vld [vmem:[#allocation5 + $0x4a8] sm:$0xff]
        %v821 = vld [vmem:[#allocation5 + $0x4b0] sm:$0xff]
        %v822 = vld [vmem:[#allocation5 + $0x4b8] sm:$0xff]
        %v823 = vld [vmem:[#allocation5 + $0x4c0] sm:$0xff]
        %v824 = vld [vmem:[#allocation5 + $0x4c8] sm:$0xff]
        %v825 = vld [vmem:[#allocation5 + $0x4d0] sm:$0xff]
        %v826 = vld [vmem:[#allocation5 + $0x4d8] sm:$0xff]
        %v827 = vld [vmem:[#allocation5 + $0x4e0] sm:$0xff]
        %v828 = vld [vmem:[#allocation5 + $0x4e8] sm:$0xff]
        %v829 = vld [vmem:[#allocation5 + $0x4f0] sm:$0xff]
        %v830 = vld [vmem:[#allocation5 + $0x4f8] sm:$0xff]
        %v831 = vld [vmem:[#allocation5 + $0x500] sm:$0xff]
        %v832 = vld [vmem:[#allocation5 + $0x508] sm:$0xff]
        %v833 = vld [vmem:[#allocation5 + $0x510] sm:$0xff]
        %v834 = vld [vmem:[#allocation5 + $0x518] sm:$0xff]
        %v835 = vld [vmem:[#allocation5 + $0x520] sm:$0xff]
        %v836 = vld [vmem:[#allocation5 + $0x528] sm:$0xff]
        %v837 = vld [vmem:[#allocation5 + $0x530] sm:$0xff]
        %v838 = vld [vmem:[#allocation5 + $0x538] sm:$0xff]
        %v839 = vld [vmem:[#allocation5 + $0x540] sm:$0xff]
        %v840 = vld [vmem:[#allocation5 + $0x548] sm:$0xff]
        %v841 = vld [vmem:[#allocation5 + $0x550] sm:$0xff]
        %v842 = vld [vmem:[#allocation5 + $0x558] sm:$0xff]
        %v843 = vld [vmem:[#allocation5 + $0x560] sm:$0xff]
        %v844 = vld [vmem:[#allocation5 + $0x568] sm:$0xff]
        %v845 = vld [vmem:[#allocation5 + $0x570] sm:$0xff]
        %v846 = vld [vmem:[#allocation5 + $0x578] sm:$0xff]
        %v847 = vld [vmem:[#allocation5 + $0x580] sm:$0xff]
        %v848 = vld [vmem:[#allocation5 + $0x588] sm:$0xff]
        %v849 = vld [vmem:[#allocation5 + $0x590] sm:$0xff]
        %v850 = vld [vmem:[#allocation5 + $0x598] sm:$0xff]
        %v851 = vld [vmem:[#allocation5 + $0x5a0] sm:$0xff]
        %v852 = vld [vmem:[#allocation5 + $0x5a8] sm:$0xff]
        %v853 = vld [vmem:[#allocation5 + $0x5b0] sm:$0xff]
        %v854 = vld [vmem:[#allocation5 + $0x5b8] sm:$0xff]
        %v855 = vld [vmem:[#allocation5 + $0x5c0] sm:$0xff]
        %v856 = vld [vmem:[#allocation5 + $0x5c8] sm:$0xff]
        %v857 = vld [vmem:[#allocation5 + $0x5d0] sm:$0xff]
        %v858 = vld [vmem:[#allocation5 + $0x5d8] sm:$0xff]
        %v859 = vld [vmem:[#allocation5 + $0x5e0] sm:$0xff]
        %v860 = vld [vmem:[#allocation5 + $0x5e8] sm:$0xff]
        %v861 = vld [vmem:[#allocation5 + $0x5f0] sm:$0xff]
        %v862 = vld [vmem:[#allocation5 + $0x5f8] sm:$0xff]
        %v863 = vld [vmem:[#allocation5 + $0x600] sm:$0xff]
        %v864 = vld [vmem:[#allocation5 + $0x608] sm:$0xff]
        %v865 = vld [vmem:[#allocation5 + $0x610] sm:$0xff]
        %v866 = vld [vmem:[#allocation5 + $0x618] sm:$0xff]
        %v867 = vld [vmem:[#allocation5 + $0x620] sm:$0xff]
        %v868 = vld [vmem:[#allocation5 + $0x628] sm:$0xff]
        %v869 = vld [vmem:[#allocation5 + $0x630] sm:$0xff]
        %v870 = vld [vmem:[#allocation5 + $0x638] sm:$0xff]
        %v871 = vld [vmem:[#allocation5 + $0x640] sm:$0xff]
        %v872 = vld [vmem:[#allocation5 + $0x648] sm:$0xff]
        %v873 = vld [vmem:[#allocation5 + $0x650] sm:$0xff]
        %v874 = vld [vmem:[#allocation5 + $0x658] sm:$0xff]
        %v875 = vld [vmem:[#allocation5 + $0x660] sm:$0xff]
        %v876 = vld [vmem:[#allocation5 + $0x668] sm:$0xff]
        %v877 = vld [vmem:[#allocation5 + $0x670] sm:$0xff]
        %v878 = vld [vmem:[#allocation5 + $0x678] sm:$0xff]
        %v879 = vld [vmem:[#allocation5 + $0x680] sm:$0xff]
        %v880 = vld [vmem:[#allocation5 + $0x688] sm:$0xff]
        %v881 = vld [vmem:[#allocation5 + $0x690] sm:$0xff]
        %v882 = vld [vmem:[#allocation5 + $0x698] sm:$0xff]
        %v883 = vld [vmem:[#allocation5 + $0x6a0] sm:$0xff]
        %v884 = vld [vmem:[#allocation5 + $0x6a8] sm:$0xff]
        %v885 = vld [vmem:[#allocation5 + $0x6b0] sm:$0xff]
        %v886 = vld [vmem:[#allocation5 + $0x6b8] sm:$0xff]
        %v887 = vld [vmem:[#allocation5 + $0x6c0] sm:$0xff]
        %v888 = vld [vmem:[#allocation5 + $0x6c8] sm:$0xff]
        %v889 = vld [vmem:[#allocation5 + $0x6d0] sm:$0xff]
        %v890 = vld [vmem:[#allocation5 + $0x6d8] sm:$0xff]
        %v891 = vld [vmem:[#allocation5 + $0x6e0] sm:$0xff]
        %v892 = vld [vmem:[#allocation5 + $0x6e8] sm:$0xff]
        %v893 = vld [vmem:[#allocation5 + $0x6f0] sm:$0xff]
        %v894 = vld [vmem:[#allocation5 + $0x6f8] sm:$0xff]
        %v895 = vld [vmem:[#allocation5 + $0x700] sm:$0xff]
        %v896 = vld [vmem:[#allocation5 + $0x708] sm:$0xff]
        %v897 = vld [vmem:[#allocation5 + $0x710] sm:$0xff]
        %v898 = vld [vmem:[#allocation5 + $0x718] sm:$0xff]
        %v899 = vld [vmem:[#allocation5 + $0x720] sm:$0xff]
        %v900 = vld [vmem:[#allocation5 + $0x728] sm:$0xff]
        %v901 = vld [vmem:[#allocation5 + $0x730] sm:$0xff]
        %v902 = vld [vmem:[#allocation5 + $0x738] sm:$0xff]
        %v903 = vld [vmem:[#allocation5 + $0x740] sm:$0xff]
        %v904 = vld [vmem:[#allocation5 + $0x748] sm:$0xff]
        %v905 = vld [vmem:[#allocation5 + $0x750] sm:$0xff]
        %v906 = vld [vmem:[#allocation5 + $0x758] sm:$0xff]
        %v907 = vld [vmem:[#allocation5 + $0x760] sm:$0xff]
        %v908 = vld [vmem:[#allocation5 + $0x768] sm:$0xff]
        %v909 = vld [vmem:[#allocation5 + $0x770] sm:$0xff]
        %v910 = vld [vmem:[#allocation5 + $0x778] sm:$0xff]
        %v911 = vld [vmem:[#allocation5 + $0x780] sm:$0xff]
        %v912 = vld [vmem:[#allocation5 + $0x788] sm:$0xff]
        %v913 = vld [vmem:[#allocation5 + $0x790] sm:$0xff]
        %v914 = vld [vmem:[#allocation5 + $0x798] sm:$0xff]
        %v915 = vld [vmem:[#allocation5 + $0x7a0] sm:$0xff]
        %v916 = vld [vmem:[#allocation5 + $0x7a8] sm:$0xff]
        %v917 = vld [vmem:[#allocation5 + $0x7b0] sm:$0xff]
        %v918 = vld [vmem:[#allocation5 + $0x7b8] sm:$0xff]
        %v919 = vld [vmem:[#allocation5 + $0x7c0] sm:$0xff]
        %v920 = vld [vmem:[#allocation5 + $0x7c8] sm:$0xff]
        %v921 = vld [vmem:[#allocation5 + $0x7d0] sm:$0xff]
        %v922 = vld [vmem:[#allocation5 + $0x7d8] sm:$0xff]
        %v923 = vld [vmem:[#allocation5 + $0x7e0] sm:$0xff]
        %v924 = vld [vmem:[#allocation5 + $0x7e8] sm:$0xff]
        %v925 = vld [vmem:[#allocation5 + $0x7f0] sm:$0xff]
        %v926 = vld [vmem:[#allocation5 + $0x7f8] sm:$0xff]
        %v927 = vld [vmem:[#allocation7] sm:$0xff]
        %v929 = vperm.slane %v927, 0
        %v930 = vperm.slane %v927, 1
        %v931 = vperm.slane %v927, 2
        %v932 = vperm.slane %v927, 3
        %v933 = vperm.slane %v927, 4
        %v934 = vperm.slane %v927, 5
        %v935 = vperm.slane %v927, 6
        %v936 = vperm.slane %v927, 7
        %v1201 = vunpack.c.l.b16 %v671
        %v1202 = vunpack.c.h.b16 %v671
        %v1203 = vunpack.c.l.b16 %v672
        %v1204 = vunpack.c.h.b16 %v672
        %v1205 = vunpack.c.l.b16 %v673
        %v1206 = vunpack.c.h.b16 %v673
        %v1207 = vunpack.c.l.b16 %v674
        %v1208 = vunpack.c.h.b16 %v674
        %v1209 = vunpack.c.l.b16 %v675
        %v1210 = vunpack.c.h.b16 %v675
        %v1211 = vunpack.c.l.b16 %v676
        %v1212 = vunpack.c.h.b16 %v676
        %v1213 = vunpack.c.l.b16 %v677
        %v1214 = vunpack.c.h.b16 %v677
        %v1215 = vunpack.c.l.b16 %v678
        %v1216 = vunpack.c.h.b16 %v678
        %v1217 = vunpack.c.l.b16 %v679
        %v1218 = vunpack.c.h.b16 %v679
        %v1219 = vunpack.c.l.b16 %v680
        %v1220 = vunpack.c.h.b16 %v680
        %v1221 = vunpack.c.l.b16 %v681
        %v1222 = vunpack.c.h.b16 %v681
        %v1223 = vunpack.c.l.b16 %v682
        %v1224 = vunpack.c.h.b16 %v682
        %v1225 = vunpack.c.l.b16 %v683
        %v1226 = vunpack.c.h.b16 %v683
        %v1227 = vunpack.c.l.b16 %v684
        %v1228 = vunpack.c.h.b16 %v684
        %v1229 = vunpack.c.l.b16 %v685
        %v1230 = vunpack.c.h.b16 %v685
        %v1231 = vunpack.c.l.b16 %v686
        %v1232 = vunpack.c.h.b16 %v686
        %v1233 = vunpack.c.l.b16 %v687
        %v1234 = vunpack.c.h.b16 %v687
        %v1235 = vunpack.c.l.b16 %v688
        %v1236 = vunpack.c.h.b16 %v688
        %v1237 = vunpack.c.l.b16 %v689
        %v1238 = vunpack.c.h.b16 %v689
        %v1239 = vunpack.c.l.b16 %v690
        %v1240 = vunpack.c.h.b16 %v690
        %v1241 = vunpack.c.l.b16 %v691
        %v1242 = vunpack.c.h.b16 %v691
        %v1243 = vunpack.c.l.b16 %v692
        %v1244 = vunpack.c.h.b16 %v692
        %v1245 = vunpack.c.l.b16 %v693
        %v1246 = vunpack.c.h.b16 %v693
        %v1247 = vunpack.c.l.b16 %v694
        %v1248 = vunpack.c.h.b16 %v694
        %v1249 = vunpack.c.l.b16 %v695
        %v1250 = vunpack.c.h.b16 %v695
        %v1251 = vunpack.c.l.b16 %v696
        %v1252 = vunpack.c.h.b16 %v696
        %v1253 = vunpack.c.l.b16 %v697
        %v1254 = vunpack.c.h.b16 %v697
        %v1255 = vunpack.c.l.b16 %v698
        %v1256 = vunpack.c.h.b16 %v698
        %v1257 = vunpack.c.l.b16 %v699
        %v1258 = vunpack.c.h.b16 %v699
        %v1259 = vunpack.c.l.b16 %v700
        %v1260 = vunpack.c.h.b16 %v700
        %v1261 = vunpack.c.l.b16 %v701
        %v1262 = vunpack.c.h.b16 %v701
        %v1263 = vunpack.c.l.b16 %v702
        %v1264 = vunpack.c.h.b16 %v702
        %v1265 = vunpack.c.l.b16 %v703
        %v1266 = vunpack.c.h.b16 %v703
        %v1267 = vunpack.c.l.b16 %v704
        %v1268 = vunpack.c.h.b16 %v704
        %v1269 = vunpack.c.l.b16 %v705
        %v1270 = vunpack.c.h.b16 %v705
        %v1271 = vunpack.c.l.b16 %v706
        %v1272 = vunpack.c.h.b16 %v706
        %v1273 = vunpack.c.l.b16 %v707
        %v1274 = vunpack.c.h.b16 %v707
        %v1275 = vunpack.c.l.b16 %v708
        %v1276 = vunpack.c.h.b16 %v708
        %v1277 = vunpack.c.l.b16 %v709
        %v1278 = vunpack.c.h.b16 %v709
        %v1279 = vunpack.c.l.b16 %v710
        %v1280 = vunpack.c.h.b16 %v710
        %v1281 = vunpack.c.l.b16 %v711
        %v1282 = vunpack.c.h.b16 %v711
        %v1283 = vunpack.c.l.b16 %v712
        %v1284 = vunpack.c.h.b16 %v712
        %v1285 = vunpack.c.l.b16 %v713
        %v1286 = vunpack.c.h.b16 %v713
        %v1287 = vunpack.c.l.b16 %v714
        %v1288 = vunpack.c.h.b16 %v714
        %v1289 = vunpack.c.l.b16 %v715
        %v1290 = vunpack.c.h.b16 %v715
        %v1291 = vunpack.c.l.b16 %v716
        %v1292 = vunpack.c.h.b16 %v716
        %v1293 = vunpack.c.l.b16 %v717
        %v1294 = vunpack.c.h.b16 %v717
        %v1295 = vunpack.c.l.b16 %v718
        %v1296 = vunpack.c.h.b16 %v718
        %v1297 = vunpack.c.l.b16 %v719
        %v1298 = vunpack.c.h.b16 %v719
        %v1299 = vunpack.c.l.b16 %v720
        %v1300 = vunpack.c.h.b16 %v720
        %v1301 = vunpack.c.l.b16 %v721
        %v1302 = vunpack.c.h.b16 %v721
        %v1303 = vunpack.c.l.b16 %v722
        %v1304 = vunpack.c.h.b16 %v722
        %v1305 = vunpack.c.l.b16 %v723
        %v1306 = vunpack.c.h.b16 %v723
        %v1307 = vunpack.c.l.b16 %v724
        %v1308 = vunpack.c.h.b16 %v724
        %v1309 = vunpack.c.l.b16 %v725
        %v1310 = vunpack.c.h.b16 %v725
        %v1311 = vunpack.c.l.b16 %v726
        %v1312 = vunpack.c.h.b16 %v726
        %v1313 = vunpack.c.l.b16 %v727
        %v1314 = vunpack.c.h.b16 %v727
        %v1315 = vunpack.c.l.b16 %v728
        %v1316 = vunpack.c.h.b16 %v728
        %v1317 = vunpack.c.l.b16 %v729
        %v1318 = vunpack.c.h.b16 %v729
        %v1319 = vunpack.c.l.b16 %v730
        %v1320 = vunpack.c.h.b16 %v730
        %v1321 = vunpack.c.l.b16 %v731
        %v1322 = vunpack.c.h.b16 %v731
        %v1323 = vunpack.c.l.b16 %v732
        %v1324 = vunpack.c.h.b16 %v732
        %v1325 = vunpack.c.l.b16 %v733
        %v1326 = vunpack.c.h.b16 %v733
        %v1327 = vunpack.c.l.b16 %v734
        %v1328 = vunpack.c.h.b16 %v734
        %v1329 = vunpack.c.l.b16 %v735
        %v1330 = vunpack.c.h.b16 %v735
        %v1331 = vunpack.c.l.b16 %v736
        %v1332 = vunpack.c.h.b16 %v736
        %v1333 = vunpack.c.l.b16 %v737
        %v1334 = vunpack.c.h.b16 %v737
        %v1335 = vunpack.c.l.b16 %v738
        %v1336 = vunpack.c.h.b16 %v738
        %v1337 = vunpack.c.l.b16 %v739
        %v1338 = vunpack.c.h.b16 %v739
        %v1339 = vunpack.c.l.b16 %v740
        %v1340 = vunpack.c.h.b16 %v740
        %v1341 = vunpack.c.l.b16 %v741
        %v1342 = vunpack.c.h.b16 %v741
        %v1343 = vunpack.c.l.b16 %v742
        %v1344 = vunpack.c.h.b16 %v742
        %v1345 = vunpack.c.l.b16 %v743
        %v1346 = vunpack.c.h.b16 %v743
        %v1347 = vunpack.c.l.b16 %v744
        %v1348 = vunpack.c.h.b16 %v744
        %v1349 = vunpack.c.l.b16 %v745
        %v1350 = vunpack.c.h.b16 %v745
        %v1351 = vunpack.c.l.b16 %v746
        %v1352 = vunpack.c.h.b16 %v746
        %v1353 = vunpack.c.l.b16 %v747
        %v1354 = vunpack.c.h.b16 %v747
        %v1355 = vunpack.c.l.b16 %v748
        %v1356 = vunpack.c.h.b16 %v748
        %v1357 = vunpack.c.l.b16 %v749
        %v1358 = vunpack.c.h.b16 %v749
        %v1359 = vunpack.c.l.b16 %v750
        %v1360 = vunpack.c.h.b16 %v750
        %v1361 = vunpack.c.l.b16 %v751
        %v1362 = vunpack.c.h.b16 %v751
        %v1363 = vunpack.c.l.b16 %v752
        %v1364 = vunpack.c.h.b16 %v752
        %v1365 = vunpack.c.l.b16 %v753
        %v1366 = vunpack.c.h.b16 %v753
        %v1367 = vunpack.c.l.b16 %v754
        %v1368 = vunpack.c.h.b16 %v754
        %v1369 = vunpack.c.l.b16 %v755
        %v1370 = vunpack.c.h.b16 %v755
        %v1371 = vunpack.c.l.b16 %v756
        %v1372 = vunpack.c.h.b16 %v756
        %v1373 = vunpack.c.l.b16 %v757
        %v1374 = vunpack.c.h.b16 %v757
        %v1375 = vunpack.c.l.b16 %v758
        %v1376 = vunpack.c.h.b16 %v758
        %v1377 = vunpack.c.l.b16 %v759
        %v1378 = vunpack.c.h.b16 %v759
        %v1379 = vunpack.c.l.b16 %v760
        %v1380 = vunpack.c.h.b16 %v760
        %v1381 = vunpack.c.l.b16 %v761
        %v1382 = vunpack.c.h.b16 %v761
        %v1383 = vunpack.c.l.b16 %v762
        %v1384 = vunpack.c.h.b16 %v762
        %v1385 = vunpack.c.l.b16 %v763
        %v1386 = vunpack.c.h.b16 %v763
        %v1387 = vunpack.c.l.b16 %v764
        %v1388 = vunpack.c.h.b16 %v764
        %v1389 = vunpack.c.l.b16 %v765
        %v1390 = vunpack.c.h.b16 %v765
        %v1391 = vunpack.c.l.b16 %v766
        %v1392 = vunpack.c.h.b16 %v766
        %v1393 = vunpack.c.l.b16 %v767
        %v1394 = vunpack.c.h.b16 %v767
        %v1395 = vunpack.c.l.b16 %v768
        %v1396 = vunpack.c.h.b16 %v768
        %v1397 = vunpack.c.l.b16 %v769
        %v1398 = vunpack.c.h.b16 %v769
        %v1399 = vunpack.c.l.b16 %v770
        %v1400 = vunpack.c.h.b16 %v770
        %v1401 = vunpack.c.l.b16 %v771
        %v1402 = vunpack.c.h.b16 %v771
        %v1403 = vunpack.c.l.b16 %v772
        %v1404 = vunpack.c.h.b16 %v772
        %v1405 = vunpack.c.l.b16 %v773
        %v1406 = vunpack.c.h.b16 %v773
        %v1407 = vunpack.c.l.b16 %v774
        %v1408 = vunpack.c.h.b16 %v774
        %v1409 = vunpack.c.l.b16 %v775
        %v1410 = vunpack.c.h.b16 %v775
        %v1411 = vunpack.c.l.b16 %v776
        %v1412 = vunpack.c.h.b16 %v776
        %v1413 = vunpack.c.l.b16 %v777
        %v1414 = vunpack.c.h.b16 %v777
        %v1415 = vunpack.c.l.b16 %v778
        %v1416 = vunpack.c.h.b16 %v778
        %v1417 = vunpack.c.l.b16 %v779
        %v1418 = vunpack.c.h.b16 %v779
        %v1419 = vunpack.c.l.b16 %v780
        %v1420 = vunpack.c.h.b16 %v780
        %v1421 = vunpack.c.l.b16 %v781
        %v1422 = vunpack.c.h.b16 %v781
        %v1423 = vunpack.c.l.b16 %v782
        %v1424 = vunpack.c.h.b16 %v782
        %v1425 = vunpack.c.l.b16 %v783
        %v1426 = vunpack.c.h.b16 %v783
        %v1427 = vunpack.c.l.b16 %v784
        %v1428 = vunpack.c.h.b16 %v784
        %v1429 = vunpack.c.l.b16 %v785
        %v1430 = vunpack.c.h.b16 %v785
        %v1431 = vunpack.c.l.b16 %v786
        %v1432 = vunpack.c.h.b16 %v786
        %v1433 = vunpack.c.l.b16 %v787
        %v1434 = vunpack.c.h.b16 %v787
        %v1435 = vunpack.c.l.b16 %v788
        %v1436 = vunpack.c.h.b16 %v788
        %v1437 = vunpack.c.l.b16 %v789
        %v1438 = vunpack.c.h.b16 %v789
        %v1439 = vunpack.c.l.b16 %v790
        %v1440 = vunpack.c.h.b16 %v790
        %v1441 = vunpack.c.l.b16 %v791
        %v1442 = vunpack.c.h.b16 %v791
        %v1443 = vunpack.c.l.b16 %v792
        %v1444 = vunpack.c.h.b16 %v792
        %v1445 = vunpack.c.l.b16 %v793
        %v1446 = vunpack.c.h.b16 %v793
        %v1447 = vunpack.c.l.b16 %v794
        %v1448 = vunpack.c.h.b16 %v794
        %v1449 = vunpack.c.l.b16 %v795
        %v1450 = vunpack.c.h.b16 %v795
        %v1451 = vunpack.c.l.b16 %v796
        %v1452 = vunpack.c.h.b16 %v796
        %v1453 = vunpack.c.l.b16 %v797
        %v1454 = vunpack.c.h.b16 %v797
        %v1455 = vunpack.c.l.b16 %v798
        %v1456 = vunpack.c.h.b16 %v798
        %v1457 = vunpack.c.l.b16 %v799
        %v1458 = vunpack.c.h.b16 %v799
        %v1459 = vunpack.c.l.b16 %v800
        %v1460 = vunpack.c.h.b16 %v800
        %v1461 = vunpack.c.l.b16 %v801
        %v1462 = vunpack.c.h.b16 %v801
        %v1463 = vunpack.c.l.b16 %v802
        %v1464 = vunpack.c.h.b16 %v802
        %v1465 = vunpack.c.l.b16 %v803
        %v1466 = vunpack.c.h.b16 %v803
        %v1467 = vunpack.c.l.b16 %v804
        %v1468 = vunpack.c.h.b16 %v804
        %v1469 = vunpack.c.l.b16 %v805
        %v1470 = vunpack.c.h.b16 %v805
        %v1471 = vunpack.c.l.b16 %v806
        %v1472 = vunpack.c.h.b16 %v806
        %v1473 = vunpack.c.l.b16 %v807
        %v1474 = vunpack.c.h.b16 %v807
        %v1475 = vunpack.c.l.b16 %v808
        %v1476 = vunpack.c.h.b16 %v808
        %v1477 = vunpack.c.l.b16 %v809
        %v1478 = vunpack.c.h.b16 %v809
        %v1479 = vunpack.c.l.b16 %v810
        %v1480 = vunpack.c.h.b16 %v810
        %v1481 = vunpack.c.l.b16 %v811
        %v1482 = vunpack.c.h.b16 %v811
        %v1483 = vunpack.c.l.b16 %v812
        %v1484 = vunpack.c.h.b16 %v812
        %v1485 = vunpack.c.l.b16 %v813
        %v1486 = vunpack.c.h.b16 %v813
        %v1487 = vunpack.c.l.b16 %v814
        %v1488 = vunpack.c.h.b16 %v814
        %v1489 = vunpack.c.l.b16 %v815
        %v1490 = vunpack.c.h.b16 %v815
        %v1491 = vunpack.c.l.b16 %v816
        %v1492 = vunpack.c.h.b16 %v816
        %v1493 = vunpack.c.l.b16 %v817
        %v1494 = vunpack.c.h.b16 %v817
        %v1495 = vunpack.c.l.b16 %v818
        %v1496 = vunpack.c.h.b16 %v818
        %v1497 = vunpack.c.l.b16 %v819
        %v1498 = vunpack.c.h.b16 %v819
        %v1499 = vunpack.c.l.b16 %v820
        %v1500 = vunpack.c.h.b16 %v820
        %v1501 = vunpack.c.l.b16 %v821
        %v1502 = vunpack.c.h.b16 %v821
        %v1503 = vunpack.c.l.b16 %v822
        %v1504 = vunpack.c.h.b16 %v822
        %v1505 = vunpack.c.l.b16 %v823
        %v1506 = vunpack.c.h.b16 %v823
        %v1507 = vunpack.c.l.b16 %v824
        %v1508 = vunpack.c.h.b16 %v824
        %v1509 = vunpack.c.l.b16 %v825
        %v1510 = vunpack.c.h.b16 %v825
        %v1511 = vunpack.c.l.b16 %v826
        %v1512 = vunpack.c.h.b16 %v826
        %v1513 = vunpack.c.l.b16 %v827
        %v1514 = vunpack.c.h.b16 %v827
        %v1515 = vunpack.c.l.b16 %v828
        %v1516 = vunpack.c.h.b16 %v828
        %v1517 = vunpack.c.l.b16 %v829
        %v1518 = vunpack.c.h.b16 %v829
        %v1519 = vunpack.c.l.b16 %v830
        %v1520 = vunpack.c.h.b16 %v830
        %v1521 = vunpack.c.l.b16 %v831
        %v1522 = vunpack.c.h.b16 %v831
        %v1523 = vunpack.c.l.b16 %v832
        %v1524 = vunpack.c.h.b16 %v832
        %v1525 = vunpack.c.l.b16 %v833
        %v1526 = vunpack.c.h.b16 %v833
        %v1527 = vunpack.c.l.b16 %v834
        %v1528 = vunpack.c.h.b16 %v834
        %v1529 = vunpack.c.l.b16 %v835
        %v1530 = vunpack.c.h.b16 %v835
        %v1531 = vunpack.c.l.b16 %v836
        %v1532 = vunpack.c.h.b16 %v836
        %v1533 = vunpack.c.l.b16 %v837
        %v1534 = vunpack.c.h.b16 %v837
        %v1535 = vunpack.c.l.b16 %v838
        %v1536 = vunpack.c.h.b16 %v838
        %v1537 = vunpack.c.l.b16 %v839
        %v1538 = vunpack.c.h.b16 %v839
        %v1539 = vunpack.c.l.b16 %v840
        %v1540 = vunpack.c.h.b16 %v840
        %v1541 = vunpack.c.l.b16 %v841
        %v1542 = vunpack.c.h.b16 %v841
        %v1543 = vunpack.c.l.b16 %v842
        %v1544 = vunpack.c.h.b16 %v842
        %v1545 = vunpack.c.l.b16 %v843
        %v1546 = vunpack.c.h.b16 %v843
        %v1547 = vunpack.c.l.b16 %v844
        %v1548 = vunpack.c.h.b16 %v844
        %v1549 = vunpack.c.l.b16 %v845
        %v1550 = vunpack.c.h.b16 %v845
        %v1551 = vunpack.c.l.b16 %v846
        %v1552 = vunpack.c.h.b16 %v846
        %v1553 = vunpack.c.l.b16 %v847
        %v1554 = vunpack.c.h.b16 %v847
        %v1555 = vunpack.c.l.b16 %v848
        %v1556 = vunpack.c.h.b16 %v848
        %v1557 = vunpack.c.l.b16 %v849
        %v1558 = vunpack.c.h.b16 %v849
        %v1559 = vunpack.c.l.b16 %v850
        %v1560 = vunpack.c.h.b16 %v850
        %v1561 = vunpack.c.l.b16 %v851
        %v1562 = vunpack.c.h.b16 %v851
        %v1563 = vunpack.c.l.b16 %v852
        %v1564 = vunpack.c.h.b16 %v852
        %v1565 = vunpack.c.l.b16 %v853
        %v1566 = vunpack.c.h.b16 %v853
        %v1567 = vunpack.c.l.b16 %v854
        %v1568 = vunpack.c.h.b16 %v854
        %v1569 = vunpack.c.l.b16 %v855
        %v1570 = vunpack.c.h.b16 %v855
        %v1571 = vunpack.c.l.b16 %v856
        %v1572 = vunpack.c.h.b16 %v856
        %v1573 = vunpack.c.l.b16 %v857
        %v1574 = vunpack.c.h.b16 %v857
        %v1575 = vunpack.c.l.b16 %v858
        %v1576 = vunpack.c.h.b16 %v858
        %v1577 = vunpack.c.l.b16 %v859
        %v1578 = vunpack.c.h.b16 %v859
        %v1579 = vunpack.c.l.b16 %v860
        %v1580 = vunpack.c.h.b16 %v860
        %v1581 = vunpack.c.l.b16 %v861
        %v1582 = vunpack.c.h.b16 %v861
        %v1583 = vunpack.c.l.b16 %v862
        %v1584 = vunpack.c.h.b16 %v862
        %v1585 = vunpack.c.l.b16 %v863
        %v1586 = vunpack.c.h.b16 %v863
        %v1587 = vunpack.c.l.b16 %v864
        %v1588 = vunpack.c.h.b16 %v864
        %v1589 = vunpack.c.l.b16 %v865
        %v1590 = vunpack.c.h.b16 %v865
        %v1591 = vunpack.c.l.b16 %v866
        %v1592 = vunpack.c.h.b16 %v866
        %v1593 = vunpack.c.l.b16 %v867
        %v1594 = vunpack.c.h.b16 %v867
        %v1595 = vunpack.c.l.b16 %v868
        %v1596 = vunpack.c.h.b16 %v868
        %v1597 = vunpack.c.l.b16 %v869
        %v1598 = vunpack.c.h.b16 %v869
        %v1599 = vunpack.c.l.b16 %v870
        %v1600 = vunpack.c.h.b16 %v870
        %v1601 = vunpack.c.l.b16 %v871
        %v1602 = vunpack.c.h.b16 %v871
        %v1603 = vunpack.c.l.b16 %v872
        %v1604 = vunpack.c.h.b16 %v872
        %v1605 = vunpack.c.l.b16 %v873
        %v1606 = vunpack.c.h.b16 %v873
        %v1607 = vunpack.c.l.b16 %v874
        %v1608 = vunpack.c.h.b16 %v874
        %v1609 = vunpack.c.l.b16 %v875
        %v1610 = vunpack.c.h.b16 %v875
        %v1611 = vunpack.c.l.b16 %v876
        %v1612 = vunpack.c.h.b16 %v876
        %v1613 = vunpack.c.l.b16 %v877
        %v1614 = vunpack.c.h.b16 %v877
        %v1615 = vunpack.c.l.b16 %v878
        %v1616 = vunpack.c.h.b16 %v878
        %v1617 = vunpack.c.l.b16 %v879
        %v1618 = vunpack.c.h.b16 %v879
        %v1619 = vunpack.c.l.b16 %v880
        %v1620 = vunpack.c.h.b16 %v880
        %v1621 = vunpack.c.l.b16 %v881
        %v1622 = vunpack.c.h.b16 %v881
        %v1623 = vunpack.c.l.b16 %v882
        %v1624 = vunpack.c.h.b16 %v882
        %v1625 = vunpack.c.l.b16 %v883
        %v1626 = vunpack.c.h.b16 %v883
        %v1627 = vunpack.c.l.b16 %v884
        %v1628 = vunpack.c.h.b16 %v884
        %v1629 = vunpack.c.l.b16 %v885
        %v1630 = vunpack.c.h.b16 %v885
        %v1631 = vunpack.c.l.b16 %v886
        %v1632 = vunpack.c.h.b16 %v886
        %v1633 = vunpack.c.l.b16 %v887
        %v1634 = vunpack.c.h.b16 %v887
        %v1635 = vunpack.c.l.b16 %v888
        %v1636 = vunpack.c.h.b16 %v888
        %v1637 = vunpack.c.l.b16 %v889
        %v1638 = vunpack.c.h.b16 %v889
        %v1639 = vunpack.c.l.b16 %v890
        %v1640 = vunpack.c.h.b16 %v890
        %v1641 = vunpack.c.l.b16 %v891
        %v1642 = vunpack.c.h.b16 %v891
        %v1643 = vunpack.c.l.b16 %v892
        %v1644 = vunpack.c.h.b16 %v892
        %v1645 = vunpack.c.l.b16 %v893
        %v1646 = vunpack.c.h.b16 %v893
        %v1647 = vunpack.c.l.b16 %v894
        %v1648 = vunpack.c.h.b16 %v894
        %v1649 = vunpack.c.l.b16 %v895
        %v1650 = vunpack.c.h.b16 %v895
        %v1651 = vunpack.c.l.b16 %v896
        %v1652 = vunpack.c.h.b16 %v896
        %v1653 = vunpack.c.l.b16 %v897
        %v1654 = vunpack.c.h.b16 %v897
        %v1655 = vunpack.c.l.b16 %v898
        %v1656 = vunpack.c.h.b16 %v898
        %v1657 = vunpack.c.l.b16 %v899
        %v1658 = vunpack.c.h.b16 %v899
        %v1659 = vunpack.c.l.b16 %v900
        %v1660 = vunpack.c.h.b16 %v900
        %v1661 = vunpack.c.l.b16 %v901
        %v1662 = vunpack.c.h.b16 %v901
        %v1663 = vunpack.c.l.b16 %v902
        %v1664 = vunpack.c.h.b16 %v902
        %v1665 = vunpack.c.l.b16 %v903
        %v1666 = vunpack.c.h.b16 %v903
        %v1667 = vunpack.c.l.b16 %v904
        %v1668 = vunpack.c.h.b16 %v904
        %v1669 = vunpack.c.l.b16 %v905
        %v1670 = vunpack.c.h.b16 %v905
        %v1671 = vunpack.c.l.b16 %v906
        %v1672 = vunpack.c.h.b16 %v906
        %v1673 = vunpack.c.l.b16 %v907
        %v1674 = vunpack.c.h.b16 %v907
        %v1675 = vunpack.c.l.b16 %v908
        %v1676 = vunpack.c.h.b16 %v908
        %v1677 = vunpack.c.l.b16 %v909
        %v1678 = vunpack.c.h.b16 %v909
        %v1679 = vunpack.c.l.b16 %v910
        %v1680 = vunpack.c.h.b16 %v910
        %v1681 = vunpack.c.l.b16 %v911
        %v1682 = vunpack.c.h.b16 %v911
        %v1683 = vunpack.c.l.b16 %v912
        %v1684 = vunpack.c.h.b16 %v912
        %v1685 = vunpack.c.l.b16 %v913
        %v1686 = vunpack.c.h.b16 %v913
        %v1687 = vunpack.c.l.b16 %v914
        %v1688 = vunpack.c.h.b16 %v914
        %v1689 = vunpack.c.l.b16 %v915
        %v1690 = vunpack.c.h.b16 %v915
        %v1691 = vunpack.c.l.b16 %v916
        %v1692 = vunpack.c.h.b16 %v916
        %v1693 = vunpack.c.l.b16 %v917
        %v1694 = vunpack.c.h.b16 %v917
        %v1695 = vunpack.c.l.b16 %v918
        %v1696 = vunpack.c.h.b16 %v918
        %v1697 = vunpack.c.l.b16 %v919
        %v1698 = vunpack.c.h.b16 %v919
        %v1699 = vunpack.c.l.b16 %v920
        %v1700 = vunpack.c.h.b16 %v920
        %v1701 = vunpack.c.l.b16 %v921
        %v1702 = vunpack.c.h.b16 %v921
        %v1703 = vunpack.c.l.b16 %v922
        %v1704 = vunpack.c.h.b16 %v922
        %v1705 = vunpack.c.l.b16 %v923
        %v1706 = vunpack.c.h.b16 %v923
        %v1707 = vunpack.c.l.b16 %v924
        %v1708 = vunpack.c.h.b16 %v924
        %v1709 = vunpack.c.l.b16 %v925
        %v1710 = vunpack.c.h.b16 %v925
        %v1711 = vunpack.c.l.b16 %v926
        %v1712 = vunpack.c.h.b16 %v926
        %v1713 = vpack.c.b16 %v1209, %v1201
        %v1714 = vpack.c.b16 %v1210, %v1202
        %v1715 = vpack.c.b16 %v1211, %v1203
        %v1716 = vpack.c.b16 %v1212, %v1204
        %v1717 = vpack.c.b16 %v1213, %v1205
        %v1718 = vpack.c.b16 %v1214, %v1206
        %v1719 = vpack.c.b16 %v1215, %v1207
        %v1720 = vpack.c.b16 %v1216, %v1208
        %v1721 = vpack.c.b16 %v1225, %v1217
        %v1722 = vpack.c.b16 %v1226, %v1218
        %v1723 = vpack.c.b16 %v1227, %v1219
        %v1724 = vpack.c.b16 %v1228, %v1220
        %v1725 = vpack.c.b16 %v1229, %v1221
        %v1726 = vpack.c.b16 %v1230, %v1222
        %v1727 = vpack.c.b16 %v1231, %v1223
        %v1728 = vpack.c.b16 %v1232, %v1224
        %v1729 = vpack.c.b16 %v1241, %v1233
        %v1730 = vpack.c.b16 %v1242, %v1234
        %v1731 = vpack.c.b16 %v1243, %v1235
        %v1732 = vpack.c.b16 %v1244, %v1236
        %v1733 = vpack.c.b16 %v1245, %v1237
        %v1734 = vpack.c.b16 %v1246, %v1238
        %v1735 = vpack.c.b16 %v1247, %v1239
        %v1736 = vpack.c.b16 %v1248, %v1240
        %v1737 = vpack.c.b16 %v1257, %v1249
        %v1738 = vpack.c.b16 %v1258, %v1250
        %v1739 = vpack.c.b16 %v1259, %v1251
        %v1740 = vpack.c.b16 %v1260, %v1252
        %v1741 = vpack.c.b16 %v1261, %v1253
        %v1742 = vpack.c.b16 %v1262, %v1254
        %v1743 = vpack.c.b16 %v1263, %v1255
        %v1744 = vpack.c.b16 %v1264, %v1256
        %v1745 = vpack.c.b16 %v1273, %v1265
        %v1746 = vpack.c.b16 %v1274, %v1266
        %v1747 = vpack.c.b16 %v1275, %v1267
        %v1748 = vpack.c.b16 %v1276, %v1268
        %v1749 = vpack.c.b16 %v1277, %v1269
        %v1750 = vpack.c.b16 %v1278, %v1270
        %v1751 = vpack.c.b16 %v1279, %v1271
        %v1752 = vpack.c.b16 %v1280, %v1272
        %v1753 = vpack.c.b16 %v1289, %v1281
        %v1754 = vpack.c.b16 %v1290, %v1282
        %v1755 = vpack.c.b16 %v1291, %v1283
        %v1756 = vpack.c.b16 %v1292, %v1284
        %v1757 = vpack.c.b16 %v1293, %v1285
        %v1758 = vpack.c.b16 %v1294, %v1286
        %v1759 = vpack.c.b16 %v1295, %v1287
        %v1760 = vpack.c.b16 %v1296, %v1288
        %v1761 = vpack.c.b16 %v1305, %v1297
        %v1762 = vpack.c.b16 %v1306, %v1298
        %v1763 = vpack.c.b16 %v1307, %v1299
        %v1764 = vpack.c.b16 %v1308, %v1300
        %v1765 = vpack.c.b16 %v1309, %v1301
        %v1766 = vpack.c.b16 %v1310, %v1302
        %v1767 = vpack.c.b16 %v1311, %v1303
        %v1768 = vpack.c.b16 %v1312, %v1304
        %v1769 = vpack.c.b16 %v1321, %v1313
        %v1770 = vpack.c.b16 %v1322, %v1314
        %v1771 = vpack.c.b16 %v1323, %v1315
        %v1772 = vpack.c.b16 %v1324, %v1316
        %v1773 = vpack.c.b16 %v1325, %v1317
        %v1774 = vpack.c.b16 %v1326, %v1318
        %v1775 = vpack.c.b16 %v1327, %v1319
        %v1776 = vpack.c.b16 %v1328, %v1320
        %v1777 = vpack.c.b16 %v1337, %v1329
        %v1778 = vpack.c.b16 %v1338, %v1330
        %v1779 = vpack.c.b16 %v1339, %v1331
        %v1780 = vpack.c.b16 %v1340, %v1332
        %v1781 = vpack.c.b16 %v1341, %v1333
        %v1782 = vpack.c.b16 %v1342, %v1334
        %v1783 = vpack.c.b16 %v1343, %v1335
        %v1784 = vpack.c.b16 %v1344, %v1336
        %v1785 = vpack.c.b16 %v1353, %v1345
        %v1786 = vpack.c.b16 %v1354, %v1346
        %v1787 = vpack.c.b16 %v1355, %v1347
        %v1788 = vpack.c.b16 %v1356, %v1348
        %v1789 = vpack.c.b16 %v1357, %v1349
        %v1790 = vpack.c.b16 %v1358, %v1350
        %v1791 = vpack.c.b16 %v1359, %v1351
        %v1792 = vpack.c.b16 %v1360, %v1352
        %v1793 = vpack.c.b16 %v1369, %v1361
        %v1794 = vpack.c.b16 %v1370, %v1362
        %v1795 = vpack.c.b16 %v1371, %v1363
        %v1796 = vpack.c.b16 %v1372, %v1364
        %v1797 = vpack.c.b16 %v1373, %v1365
        %v1798 = vpack.c.b16 %v1374, %v1366
        %v1799 = vpack.c.b16 %v1375, %v1367
        %v1800 = vpack.c.b16 %v1376, %v1368
        %v1801 = vpack.c.b16 %v1385, %v1377
        %v1802 = vpack.c.b16 %v1386, %v1378
        %v1803 = vpack.c.b16 %v1387, %v1379
        %v1804 = vpack.c.b16 %v1388, %v1380
        %v1805 = vpack.c.b16 %v1389, %v1381
        %v1806 = vpack.c.b16 %v1390, %v1382
        %v1807 = vpack.c.b16 %v1391, %v1383
        %v1808 = vpack.c.b16 %v1392, %v1384
        %v1809 = vpack.c.b16 %v1401, %v1393
        %v1810 = vpack.c.b16 %v1402, %v1394
        %v1811 = vpack.c.b16 %v1403, %v1395
        %v1812 = vpack.c.b16 %v1404, %v1396
        %v1813 = vpack.c.b16 %v1405, %v1397
        %v1814 = vpack.c.b16 %v1406, %v1398
        %v1815 = vpack.c.b16 %v1407, %v1399
        %v1816 = vpack.c.b16 %v1408, %v1400
        %v1817 = vpack.c.b16 %v1417, %v1409
        %v1818 = vpack.c.b16 %v1418, %v1410
        %v1819 = vpack.c.b16 %v1419, %v1411
        %v1820 = vpack.c.b16 %v1420, %v1412
        %v1821 = vpack.c.b16 %v1421, %v1413
        %v1822 = vpack.c.b16 %v1422, %v1414
        %v1823 = vpack.c.b16 %v1423, %v1415
        %v1824 = vpack.c.b16 %v1424, %v1416
        %v1825 = vpack.c.b16 %v1433, %v1425
        %v1826 = vpack.c.b16 %v1434, %v1426
        %v1827 = vpack.c.b16 %v1435, %v1427
        %v1828 = vpack.c.b16 %v1436, %v1428
        %v1829 = vpack.c.b16 %v1437, %v1429
        %v1830 = vpack.c.b16 %v1438, %v1430
        %v1831 = vpack.c.b16 %v1439, %v1431
        %v1832 = vpack.c.b16 %v1440, %v1432
        %v1833 = vpack.c.b16 %v1449, %v1441
        %v1834 = vpack.c.b16 %v1450, %v1442
        %v1835 = vpack.c.b16 %v1451, %v1443
        %v1836 = vpack.c.b16 %v1452, %v1444
        %v1837 = vpack.c.b16 %v1453, %v1445
        %v1838 = vpack.c.b16 %v1454, %v1446
        %v1839 = vpack.c.b16 %v1455, %v1447
        %v1840 = vpack.c.b16 %v1456, %v1448
        %v1841 = vpack.c.b16 %v1465, %v1457
        %v1842 = vpack.c.b16 %v1466, %v1458
        %v1843 = vpack.c.b16 %v1467, %v1459
        %v1844 = vpack.c.b16 %v1468, %v1460
        %v1845 = vpack.c.b16 %v1469, %v1461
        %v1846 = vpack.c.b16 %v1470, %v1462
        %v1847 = vpack.c.b16 %v1471, %v1463
        %v1848 = vpack.c.b16 %v1472, %v1464
        %v1849 = vpack.c.b16 %v1481, %v1473
        %v1850 = vpack.c.b16 %v1482, %v1474
        %v1851 = vpack.c.b16 %v1483, %v1475
        %v1852 = vpack.c.b16 %v1484, %v1476
        %v1853 = vpack.c.b16 %v1485, %v1477
        %v1854 = vpack.c.b16 %v1486, %v1478
        %v1855 = vpack.c.b16 %v1487, %v1479
        %v1856 = vpack.c.b16 %v1488, %v1480
        %v1857 = vpack.c.b16 %v1497, %v1489
        %v1858 = vpack.c.b16 %v1498, %v1490
        %v1859 = vpack.c.b16 %v1499, %v1491
        %v1860 = vpack.c.b16 %v1500, %v1492
        %v1861 = vpack.c.b16 %v1501, %v1493
        %v1862 = vpack.c.b16 %v1502, %v1494
        %v1863 = vpack.c.b16 %v1503, %v1495
        %v1864 = vpack.c.b16 %v1504, %v1496
        %v1865 = vpack.c.b16 %v1513, %v1505
        %v1866 = vpack.c.b16 %v1514, %v1506
        %v1867 = vpack.c.b16 %v1515, %v1507
        %v1868 = vpack.c.b16 %v1516, %v1508
        %v1869 = vpack.c.b16 %v1517, %v1509
        %v1870 = vpack.c.b16 %v1518, %v1510
        %v1871 = vpack.c.b16 %v1519, %v1511
        %v1872 = vpack.c.b16 %v1520, %v1512
        %v1873 = vpack.c.b16 %v1529, %v1521
        %v1874 = vpack.c.b16 %v1530, %v1522
        %v1875 = vpack.c.b16 %v1531, %v1523
        %v1876 = vpack.c.b16 %v1532, %v1524
        %v1877 = vpack.c.b16 %v1533, %v1525
        %v1878 = vpack.c.b16 %v1534, %v1526
        %v1879 = vpack.c.b16 %v1535, %v1527
        %v1880 = vpack.c.b16 %v1536, %v1528
        %v1881 = vpack.c.b16 %v1545, %v1537
        %v1882 = vpack.c.b16 %v1546, %v1538
        %v1883 = vpack.c.b16 %v1547, %v1539
        %v1884 = vpack.c.b16 %v1548, %v1540
        %v1885 = vpack.c.b16 %v1549, %v1541
        %v1886 = vpack.c.b16 %v1550, %v1542
        %v1887 = vpack.c.b16 %v1551, %v1543
        %v1888 = vpack.c.b16 %v1552, %v1544
        %v1889 = vpack.c.b16 %v1561, %v1553
        %v1890 = vpack.c.b16 %v1562, %v1554
        %v1891 = vpack.c.b16 %v1563, %v1555
        %v1892 = vpack.c.b16 %v1564, %v1556
        %v1893 = vpack.c.b16 %v1565, %v1557
        %v1894 = vpack.c.b16 %v1566, %v1558
        %v1895 = vpack.c.b16 %v1567, %v1559
        %v1896 = vpack.c.b16 %v1568, %v1560
        %v1897 = vpack.c.b16 %v1577, %v1569
        %v1898 = vpack.c.b16 %v1578, %v1570
        %v1899 = vpack.c.b16 %v1579, %v1571
        %v1900 = vpack.c.b16 %v1580, %v1572
        %v1901 = vpack.c.b16 %v1581, %v1573
        %v1902 = vpack.c.b16 %v1582, %v1574
        %v1903 = vpack.c.b16 %v1583, %v1575
        %v1904 = vpack.c.b16 %v1584, %v1576
        %v1905 = vpack.c.b16 %v1593, %v1585
        %v1906 = vpack.c.b16 %v1594, %v1586
        %v1907 = vpack.c.b16 %v1595, %v1587
        %v1908 = vpack.c.b16 %v1596, %v1588
        %v1909 = vpack.c.b16 %v1597, %v1589
        %v1910 = vpack.c.b16 %v1598, %v1590
        %v1911 = vpack.c.b16 %v1599, %v1591
        %v1912 = vpack.c.b16 %v1600, %v1592
        %v1913 = vpack.c.b16 %v1609, %v1601
        %v1914 = vpack.c.b16 %v1610, %v1602
        %v1915 = vpack.c.b16 %v1611, %v1603
        %v1916 = vpack.c.b16 %v1612, %v1604
        %v1917 = vpack.c.b16 %v1613, %v1605
        %v1918 = vpack.c.b16 %v1614, %v1606
        %v1919 = vpack.c.b16 %v1615, %v1607
        %v1920 = vpack.c.b16 %v1616, %v1608
        %v1921 = vpack.c.b16 %v1625, %v1617
        %v1922 = vpack.c.b16 %v1626, %v1618
        %v1923 = vpack.c.b16 %v1627, %v1619
        %v1924 = vpack.c.b16 %v1628, %v1620
        %v1925 = vpack.c.b16 %v1629, %v1621
        %v1926 = vpack.c.b16 %v1630, %v1622
        %v1927 = vpack.c.b16 %v1631, %v1623
        %v1928 = vpack.c.b16 %v1632, %v1624
        %v1929 = vpack.c.b16 %v1641, %v1633
        %v1930 = vpack.c.b16 %v1642, %v1634
        %v1931 = vpack.c.b16 %v1643, %v1635
        %v1932 = vpack.c.b16 %v1644, %v1636
        %v1933 = vpack.c.b16 %v1645, %v1637
        %v1934 = vpack.c.b16 %v1646, %v1638
        %v1935 = vpack.c.b16 %v1647, %v1639
        %v1936 = vpack.c.b16 %v1648, %v1640
        %v1937 = vpack.c.b16 %v1657, %v1649
        %v1938 = vpack.c.b16 %v1658, %v1650
        %v1939 = vpack.c.b16 %v1659, %v1651
        %v1940 = vpack.c.b16 %v1660, %v1652
        %v1941 = vpack.c.b16 %v1661, %v1653
        %v1942 = vpack.c.b16 %v1662, %v1654
        %v1943 = vpack.c.b16 %v1663, %v1655
        %v1944 = vpack.c.b16 %v1664, %v1656
        %v1945 = vpack.c.b16 %v1673, %v1665
        %v1946 = vpack.c.b16 %v1674, %v1666
        %v1947 = vpack.c.b16 %v1675, %v1667
        %v1948 = vpack.c.b16 %v1676, %v1668
        %v1949 = vpack.c.b16 %v1677, %v1669
        %v1950 = vpack.c.b16 %v1678, %v1670
        %v1951 = vpack.c.b16 %v1679, %v1671
        %v1952 = vpack.c.b16 %v1680, %v1672
        %v1953 = vpack.c.b16 %v1689, %v1681
        %v1954 = vpack.c.b16 %v1690, %v1682
        %v1955 = vpack.c.b16 %v1691, %v1683
        %v1956 = vpack.c.b16 %v1692, %v1684
        %v1957 = vpack.c.b16 %v1693, %v1685
        %v1958 = vpack.c.b16 %v1694, %v1686
        %v1959 = vpack.c.b16 %v1695, %v1687
        %v1960 = vpack.c.b16 %v1696, %v1688
        %v1961 = vpack.c.b16 %v1705, %v1697
        %v1962 = vpack.c.b16 %v1706, %v1698
        %v1963 = vpack.c.b16 %v1707, %v1699
        %v1964 = vpack.c.b16 %v1708, %v1700
        %v1965 = vpack.c.b16 %v1709, %v1701
        %v1966 = vpack.c.b16 %v1710, %v1702
        %v1967 = vpack.c.b16 %v1711, %v1703
        %v1968 = vpack.c.b16 %v1712, %v1704
        %2225 = vmatpush.bf16.msra.mxu0 %v1769
        %2226 = vmatpush.bf16.msra.mxu0 %v1761
        %2227 = vmatpush.bf16.msra.mxu0 %v1753
        %2228 = vmatpush.bf16.msra.mxu0 %v1745
        %2229 = vmatpush.bf16.msra.mxu0 %v1737
        %2230 = vmatpush.bf16.msra.mxu0 %v1729
        %2231 = vmatpush.bf16.msra.mxu0 %v1721
        %2232 = vmatpush.bf16.msra.mxu0 %v1713
        %2233 = vmatmul.bf16.gmra.mxu0 %v639
        %v2234 = vpop.f32.mrf.mxu0
        %v2235 = vadd.f32 %v929, %v2234
        %v2236 = vpop.f32.mrf.mxu0
        %v2237 = vadd.f32 %v929, %v2236
        %2238 = vmatmul.bf16.gmra.mxu0 %v643
        %v2239 = vpop.f32.mrf.mxu0
        %v2240 = vadd.f32 %v929, %v2239
        %v2241 = vpop.f32.mrf.mxu0
        %v2242 = vadd.f32 %v929, %v2241
        %2243 = vmatmul.bf16.gmra.mxu0 %v647
        %v2244 = vpop.f32.mrf.mxu0
        %v2245 = vadd.f32 %v929, %v2244
        %v2246 = vpop.f32.mrf.mxu0
        %v2247 = vadd.f32 %v929, %v2246
        %2248 = vmatmul.bf16.gmra.mxu0 %v651
        %v2249 = vpop.f32.mrf.mxu0
        %v2250 = vadd.f32 %v929, %v2249
        %v2251 = vpop.f32.mrf.mxu0
        %v2252 = vadd.f32 %v929, %v2251
        %2253 = vmatmul.bf16.gmra.mxu0 %v655
        %v2254 = vpop.f32.mrf.mxu0
        %v2255 = vadd.f32 %v929, %v2254
        %v2256 = vpop.f32.mrf.mxu0
        %v2257 = vadd.f32 %v929, %v2256
        %2258 = vmatmul.bf16.gmra.mxu0 %v659
        %v2259 = vpop.f32.mrf.mxu0
        %v2260 = vadd.f32 %v929, %v2259
        %v2261 = vpop.f32.mrf.mxu0
        %v2262 = vadd.f32 %v929, %v2261
        %2263 = vmatmul.bf16.gmra.mxu0 %v663
        %v2264 = vpop.f32.mrf.mxu0
        %v2265 = vadd.f32 %v929, %v2264
        %v2266 = vpop.f32.mrf.mxu0
        %v2267 = vadd.f32 %v929, %v2266
        %2268 = vmatmul.bf16.gmra.mxu0 %v667
        %v2269 = vpop.f32.mrf.mxu0
        %v2270 = vadd.f32 %v929, %v2269
        %v2271 = vpop.f32.mrf.mxu0
        %v2272 = vadd.f32 %v929, %v2271
        %2273 = vdwg.mxu0
        %2274 = vmatpush.bf16.msra.mxu0 %v1833
        %2275 = vmatpush.bf16.msra.mxu0 %v1825
        %2276 = vmatpush.bf16.msra.mxu0 %v1817
        %2277 = vmatpush.bf16.msra.mxu0 %v1809
        %2278 = vmatpush.bf16.msra.mxu0 %v1801
        %2279 = vmatpush.bf16.msra.mxu0 %v1793
        %2280 = vmatpush.bf16.msra.mxu0 %v1785
        %2281 = vmatpush.bf16.msra.mxu0 %v1777
        %2282 = vmatmul.bf16.gmra.mxu0 %v640
        %v2283 = vpop.f32.mrf.mxu0
        %v2284 = vadd.f32 %v2235, %v2283
        %v2285 = vpop.f32.mrf.mxu0
        %v2286 = vadd.f32 %v2237, %v2285
        %2287 = vmatmul.bf16.gmra.mxu0 %v644
        %v2288 = vpop.f32.mrf.mxu0
        %v2289 = vadd.f32 %v2240, %v2288
        %v2290 = vpop.f32.mrf.mxu0
        %v2291 = vadd.f32 %v2242, %v2290
        %2292 = vmatmul.bf16.gmra.mxu0 %v648
        %v2293 = vpop.f32.mrf.mxu0
        %v2294 = vadd.f32 %v2245, %v2293
        %v2295 = vpop.f32.mrf.mxu0
        %v2296 = vadd.f32 %v2247, %v2295
        %2297 = vmatmul.bf16.gmra.mxu0 %v652
        %v2298 = vpop.f32.mrf.mxu0
        %v2299 = vadd.f32 %v2250, %v2298
        %v2300 = vpop.f32.mrf.mxu0
        %v2301 = vadd.f32 %v2252, %v2300
        %2302 = vmatmul.bf16.gmra.mxu0 %v656
        %v2303 = vpop.f32.mrf.mxu0
        %v2304 = vadd.f32 %v2255, %v2303
        %v2305 = vpop.f32.mrf.mxu0
        %v2306 = vadd.f32 %v2257, %v2305
        %2307 = vmatmul.bf16.gmra.mxu0 %v660
        %v2308 = vpop.f32.mrf.mxu0
        %v2309 = vadd.f32 %v2260, %v2308
        %v2310 = vpop.f32.mrf.mxu0
        %v2311 = vadd.f32 %v2262, %v2310
        %2312 = vmatmul.bf16.gmra.mxu0 %v664
        %v2313 = vpop.f32.mrf.mxu0
        %v2314 = vadd.f32 %v2265, %v2313
        %v2315 = vpop.f32.mrf.mxu0
        %v2316 = vadd.f32 %v2267, %v2315
        %2317 = vmatmul.bf16.gmra.mxu0 %v668
        %v2318 = vpop.f32.mrf.mxu0
        %v2319 = vadd.f32 %v2270, %v2318
        %v2320 = vpop.f32.mrf.mxu0
        %v2321 = vadd.f32 %v2272, %v2320
        %2322 = vdwg.mxu0
        %2323 = vmatpush.bf16.msra.mxu0 %v1897
        %2324 = vmatpush.bf16.msra.mxu0 %v1889
        %2325 = vmatpush.bf16.msra.mxu0 %v1881
        %2326 = vmatpush.bf16.msra.mxu0 %v1873
        %2327 = vmatpush.bf16.msra.mxu0 %v1865
        %2328 = vmatpush.bf16.msra.mxu0 %v1857
        %2329 = vmatpush.bf16.msra.mxu0 %v1849
        %2330 = vmatpush.bf16.msra.mxu0 %v1841
        %2331 = vmatmul.bf16.gmra.mxu0 %v641
        %v2332 = vpop.f32.mrf.mxu0
        %v2333 = vadd.f32 %v2284, %v2332
        %v2334 = vpop.f32.mrf.mxu0
        %v2335 = vadd.f32 %v2286, %v2334
        %2336 = vmatmul.bf16.gmra.mxu0 %v645
        %v2337 = vpop.f32.mrf.mxu0
        %v2338 = vadd.f32 %v2289, %v2337
        %v2339 = vpop.f32.mrf.mxu0
        %v2340 = vadd.f32 %v2291, %v2339
        %2341 = vmatmul.bf16.gmra.mxu0 %v649
        %v2342 = vpop.f32.mrf.mxu0
        %v2343 = vadd.f32 %v2294, %v2342
        %v2344 = vpop.f32.mrf.mxu0
        %v2345 = vadd.f32 %v2296, %v2344
        %2346 = vmatmul.bf16.gmra.mxu0 %v653
        %v2347 = vpop.f32.mrf.mxu0
        %v2348 = vadd.f32 %v2299, %v2347
        %v2349 = vpop.f32.mrf.mxu0
        %v2350 = vadd.f32 %v2301, %v2349
        %2351 = vmatmul.bf16.gmra.mxu0 %v657
        %v2352 = vpop.f32.mrf.mxu0
        %v2353 = vadd.f32 %v2304, %v2352
        %v2354 = vpop.f32.mrf.mxu0
        %v2355 = vadd.f32 %v2306, %v2354
        %2356 = vmatmul.bf16.gmra.mxu0 %v661
        %v2357 = vpop.f32.mrf.mxu0
        %v2358 = vadd.f32 %v2309, %v2357
        %v2359 = vpop.f32.mrf.mxu0
        %v2360 = vadd.f32 %v2311, %v2359
        %2361 = vmatmul.bf16.gmra.mxu0 %v665
        %v2362 = vpop.f32.mrf.mxu0
        %v2363 = vadd.f32 %v2314, %v2362
        %v2364 = vpop.f32.mrf.mxu0
        %v2365 = vadd.f32 %v2316, %v2364
        %2366 = vmatmul.bf16.gmra.mxu0 %v669
        %v2367 = vpop.f32.mrf.mxu0
        %v2368 = vadd.f32 %v2319, %v2367
        %v2369 = vpop.f32.mrf.mxu0
        %v2370 = vadd.f32 %v2321, %v2369
        %2371 = vdwg.mxu0
        %2372 = vmatpush.bf16.msra.mxu0 %v1961
        %2373 = vmatpush.bf16.msra.mxu0 %v1953
        %2374 = vmatpush.bf16.msra.mxu0 %v1945
        %2375 = vmatpush.bf16.msra.mxu0 %v1937
        %2376 = vmatpush.bf16.msra.mxu0 %v1929
        %2377 = vmatpush.bf16.msra.mxu0 %v1921
        %2378 = vmatpush.bf16.msra.mxu0 %v1913
        %2379 = vmatpush.bf16.msra.mxu0 %v1905
        %2380 = vmatmul.bf16.gmra.mxu0 %v642
        %v2381 = vpop.f32.mrf.mxu0
        %v2382 = vadd.f32 %v2333, %v2381
        %v2383 = vpop.f32.mrf.mxu0
        %v2384 = vadd.f32 %v2335, %v2383
        %2385 = vmatmul.bf16.gmra.mxu0 %v646
        %v2386 = vpop.f32.mrf.mxu0
        %v2387 = vadd.f32 %v2338, %v2386
        %v2388 = vpop.f32.mrf.mxu0
        %v2389 = vadd.f32 %v2340, %v2388
        %2390 = vmatmul.bf16.gmra.mxu0 %v650
        %v2391 = vpop.f32.mrf.mxu0
        %v2392 = vadd.f32 %v2343, %v2391
        %v2393 = vpop.f32.mrf.mxu0
        %v2394 = vadd.f32 %v2345, %v2393
        %2395 = vmatmul.bf16.gmra.mxu0 %v654
        %v2396 = vpop.f32.mrf.mxu0
        %v2397 = vadd.f32 %v2348, %v2396
        %v2398 = vpop.f32.mrf.mxu0
        %v2399 = vadd.f32 %v2350, %v2398
        %2400 = vmatmul.bf16.gmra.mxu0 %v658
        %v2401 = vpop.f32.mrf.mxu0
        %v2402 = vadd.f32 %v2353, %v2401
        %v2403 = vpop.f32.mrf.mxu0
        %v2404 = vadd.f32 %v2355, %v2403
        %2405 = vmatmul.bf16.gmra.mxu0 %v662
        %v2406 = vpop.f32.mrf.mxu0
        %v2407 = vadd.f32 %v2358, %v2406
        %v2408 = vpop.f32.mrf.mxu0
        %v2409 = vadd.f32 %v2360, %v2408
        %2410 = vmatmul.bf16.gmra.mxu0 %v666
        %v2411 = vpop.f32.mrf.mxu0
        %v2412 = vadd.f32 %v2363, %v2411
        %v2413 = vpop.f32.mrf.mxu0
        %v2414 = vadd.f32 %v2365, %v2413
        %2415 = vmatmul.bf16.gmra.mxu0 %v670
        %v2416 = vpop.f32.mrf.mxu0
        %v2417 = vadd.f32 %v2368, %v2416
        %v2418 = vpop.f32.mrf.mxu0
        %v2419 = vadd.f32 %v2370, %v2418
        %2420 = vdwg.mxu0
        %2421 = vmatpush.bf16.msra.mxu0 %v1770
        %2422 = vmatpush.bf16.msra.mxu0 %v1762
        %2423 = vmatpush.bf16.msra.mxu0 %v1754
        %2424 = vmatpush.bf16.msra.mxu0 %v1746
        %2425 = vmatpush.bf16.msra.mxu0 %v1738
        %2426 = vmatpush.bf16.msra.mxu0 %v1730
        %2427 = vmatpush.bf16.msra.mxu0 %v1722
        %2428 = vmatpush.bf16.msra.mxu0 %v1714
        %2429 = vmatmul.bf16.gmra.mxu0 %v639
        %v2430 = vpop.f32.mrf.mxu0
        %v2431 = vadd.f32 %v930, %v2430
        %v2432 = vpop.f32.mrf.mxu0
        %v2433 = vadd.f32 %v930, %v2432
        %2434 = vmatmul.bf16.gmra.mxu0 %v643
        %v2435 = vpop.f32.mrf.mxu0
        %v2436 = vadd.f32 %v930, %v2435
        %v2437 = vpop.f32.mrf.mxu0
        %v2438 = vadd.f32 %v930, %v2437
        %2439 = vmatmul.bf16.gmra.mxu0 %v647
        %v2440 = vpop.f32.mrf.mxu0
        %v2441 = vadd.f32 %v930, %v2440
        %v2442 = vpop.f32.mrf.mxu0
        %v2443 = vadd.f32 %v930, %v2442
        %2444 = vmatmul.bf16.gmra.mxu0 %v651
        %v2445 = vpop.f32.mrf.mxu0
        %v2446 = vadd.f32 %v930, %v2445
        %v2447 = vpop.f32.mrf.mxu0
        %v2448 = vadd.f32 %v930, %v2447
        %2449 = vmatmul.bf16.gmra.mxu0 %v655
        %v2450 = vpop.f32.mrf.mxu0
        %v2451 = vadd.f32 %v930, %v2450
        %v2452 = vpop.f32.mrf.mxu0
        %v2453 = vadd.f32 %v930, %v2452
        %2454 = vmatmul.bf16.gmra.mxu0 %v659
        %v2455 = vpop.f32.mrf.mxu0
        %v2456 = vadd.f32 %v930, %v2455
        %v2457 = vpop.f32.mrf.mxu0
        %v2458 = vadd.f32 %v930, %v2457
        %2459 = vmatmul.bf16.gmra.mxu0 %v663
        %v2460 = vpop.f32.mrf.mxu0
        %v2461 = vadd.f32 %v930, %v2460
        %v2462 = vpop.f32.mrf.mxu0
        %v2463 = vadd.f32 %v930, %v2462
        %2464 = vmatmul.bf16.gmra.mxu0 %v667
        %v2465 = vpop.f32.mrf.mxu0
        %v2466 = vadd.f32 %v930, %v2465
        %v2467 = vpop.f32.mrf.mxu0
        %v2468 = vadd.f32 %v930, %v2467
        %2469 = vdwg.mxu0
        %2470 = vmatpush.bf16.msra.mxu0 %v1834
        %2471 = vmatpush.bf16.msra.mxu0 %v1826
        %2472 = vmatpush.bf16.msra.mxu0 %v1818
        %2473 = vmatpush.bf16.msra.mxu0 %v1810
        %2474 = vmatpush.bf16.msra.mxu0 %v1802
        %2475 = vmatpush.bf16.msra.mxu0 %v1794
        %2476 = vmatpush.bf16.msra.mxu0 %v1786
        %2477 = vmatpush.bf16.msra.mxu0 %v1778
        %2478 = vmatmul.bf16.gmra.mxu0 %v640
        %v2479 = vpop.f32.mrf.mxu0
        %v2480 = vadd.f32 %v2431, %v2479
        %v2481 = vpop.f32.mrf.mxu0
        %v2482 = vadd.f32 %v2433, %v2481
        %2483 = vmatmul.bf16.gmra.mxu0 %v644
        %v2484 = vpop.f32.mrf.mxu0
        %v2485 = vadd.f32 %v2436, %v2484
        %v2486 = vpop.f32.mrf.mxu0
        %v2487 = vadd.f32 %v2438, %v2486
        %2488 = vmatmul.bf16.gmra.mxu0 %v648
        %v2489 = vpop.f32.mrf.mxu0
        %v2490 = vadd.f32 %v2441, %v2489
        %v2491 = vpop.f32.mrf.mxu0
        %v2492 = vadd.f32 %v2443, %v2491
        %2493 = vmatmul.bf16.gmra.mxu0 %v652
        %v2494 = vpop.f32.mrf.mxu0
        %v2495 = vadd.f32 %v2446, %v2494
        %v2496 = vpop.f32.mrf.mxu0
        %v2497 = vadd.f32 %v2448, %v2496
        %2498 = vmatmul.bf16.gmra.mxu0 %v656
        %v2499 = vpop.f32.mrf.mxu0
        %v2500 = vadd.f32 %v2451, %v2499
        %v2501 = vpop.f32.mrf.mxu0
        %v2502 = vadd.f32 %v2453, %v2501
        %2503 = vmatmul.bf16.gmra.mxu0 %v660
        %v2504 = vpop.f32.mrf.mxu0
        %v2505 = vadd.f32 %v2456, %v2504
        %v2506 = vpop.f32.mrf.mxu0
        %v2507 = vadd.f32 %v2458, %v2506
        %2508 = vmatmul.bf16.gmra.mxu0 %v664
        %v2509 = vpop.f32.mrf.mxu0
        %v2510 = vadd.f32 %v2461, %v2509
        %v2511 = vpop.f32.mrf.mxu0
        %v2512 = vadd.f32 %v2463, %v2511
        %2513 = vmatmul.bf16.gmra.mxu0 %v668
        %v2514 = vpop.f32.mrf.mxu0
        %v2515 = vadd.f32 %v2466, %v2514
        %v2516 = vpop.f32.mrf.mxu0
        %v2517 = vadd.f32 %v2468, %v2516
        %2518 = vdwg.mxu0
        %2519 = vmatpush.bf16.msra.mxu0 %v1898
        %2520 = vmatpush.bf16.msra.mxu0 %v1890
        %2521 = vmatpush.bf16.msra.mxu0 %v1882
        %2522 = vmatpush.bf16.msra.mxu0 %v1874
        %2523 = vmatpush.bf16.msra.mxu0 %v1866
        %2524 = vmatpush.bf16.msra.mxu0 %v1858
        %2525 = vmatpush.bf16.msra.mxu0 %v1850
        %2526 = vmatpush.bf16.msra.mxu0 %v1842
        %2527 = vmatmul.bf16.gmra.mxu0 %v641
        %v2528 = vpop.f32.mrf.mxu0
        %v2529 = vadd.f32 %v2480, %v2528
        %v2530 = vpop.f32.mrf.mxu0
        %v2531 = vadd.f32 %v2482, %v2530
        %2532 = vmatmul.bf16.gmra.mxu0 %v645
        %v2533 = vpop.f32.mrf.mxu0
        %v2534 = vadd.f32 %v2485, %v2533
        %v2535 = vpop.f32.mrf.mxu0
        %v2536 = vadd.f32 %v2487, %v2535
        %2537 = vmatmul.bf16.gmra.mxu0 %v649
        %v2538 = vpop.f32.mrf.mxu0
        %v2539 = vadd.f32 %v2490, %v2538
        %v2540 = vpop.f32.mrf.mxu0
        %v2541 = vadd.f32 %v2492, %v2540
        %2542 = vmatmul.bf16.gmra.mxu0 %v653
        %v2543 = vpop.f32.mrf.mxu0
        %v2544 = vadd.f32 %v2495, %v2543
        %v2545 = vpop.f32.mrf.mxu0
        %v2546 = vadd.f32 %v2497, %v2545
        %2547 = vmatmul.bf16.gmra.mxu0 %v657
        %v2548 = vpop.f32.mrf.mxu0
        %v2549 = vadd.f32 %v2500, %v2548
        %v2550 = vpop.f32.mrf.mxu0
        %v2551 = vadd.f32 %v2502, %v2550
        %2552 = vmatmul.bf16.gmra.mxu0 %v661
        %v2553 = vpop.f32.mrf.mxu0
        %v2554 = vadd.f32 %v2505, %v2553
        %v2555 = vpop.f32.mrf.mxu0
        %v2556 = vadd.f32 %v2507, %v2555
        %2557 = vmatmul.bf16.gmra.mxu0 %v665
        %v2558 = vpop.f32.mrf.mxu0
        %v2559 = vadd.f32 %v2510, %v2558
        %v2560 = vpop.f32.mrf.mxu0
        %v2561 = vadd.f32 %v2512, %v2560
        %2562 = vmatmul.bf16.gmra.mxu0 %v669
        %v2563 = vpop.f32.mrf.mxu0
        %v2564 = vadd.f32 %v2515, %v2563
        %v2565 = vpop.f32.mrf.mxu0
        %v2566 = vadd.f32 %v2517, %v2565
        %2567 = vdwg.mxu0
        %2568 = vmatpush.bf16.msra.mxu0 %v1962
        %2569 = vmatpush.bf16.msra.mxu0 %v1954
        %2570 = vmatpush.bf16.msra.mxu0 %v1946
        %2571 = vmatpush.bf16.msra.mxu0 %v1938
        %2572 = vmatpush.bf16.msra.mxu0 %v1930
        %2573 = vmatpush.bf16.msra.mxu0 %v1922
        %2574 = vmatpush.bf16.msra.mxu0 %v1914
        %2575 = vmatpush.bf16.msra.mxu0 %v1906
        %2576 = vmatmul.bf16.gmra.mxu0 %v642
        %v2577 = vpop.f32.mrf.mxu0
        %v2578 = vadd.f32 %v2529, %v2577
        %v2579 = vpop.f32.mrf.mxu0
        %v2580 = vadd.f32 %v2531, %v2579
        %2581 = vmatmul.bf16.gmra.mxu0 %v646
        %v2582 = vpop.f32.mrf.mxu0
        %v2583 = vadd.f32 %v2534, %v2582
        %v2584 = vpop.f32.mrf.mxu0
        %v2585 = vadd.f32 %v2536, %v2584
        %2586 = vmatmul.bf16.gmra.mxu0 %v650
        %v2587 = vpop.f32.mrf.mxu0
        %v2588 = vadd.f32 %v2539, %v2587
        %v2589 = vpop.f32.mrf.mxu0
        %v2590 = vadd.f32 %v2541, %v2589
        %2591 = vmatmul.bf16.gmra.mxu0 %v654
        %v2592 = vpop.f32.mrf.mxu0
        %v2593 = vadd.f32 %v2544, %v2592
        %v2594 = vpop.f32.mrf.mxu0
        %v2595 = vadd.f32 %v2546, %v2594
        %2596 = vmatmul.bf16.gmra.mxu0 %v658
        %v2597 = vpop.f32.mrf.mxu0
        %v2598 = vadd.f32 %v2549, %v2597
        %v2599 = vpop.f32.mrf.mxu0
        %v2600 = vadd.f32 %v2551, %v2599
        %2601 = vmatmul.bf16.gmra.mxu0 %v662
        %v2602 = vpop.f32.mrf.mxu0
        %v2603 = vadd.f32 %v2554, %v2602
        %v2604 = vpop.f32.mrf.mxu0
        %v2605 = vadd.f32 %v2556, %v2604
        %2606 = vmatmul.bf16.gmra.mxu0 %v666
        %v2607 = vpop.f32.mrf.mxu0
        %v2608 = vadd.f32 %v2559, %v2607
        %v2609 = vpop.f32.mrf.mxu0
        %v2610 = vadd.f32 %v2561, %v2609
        %2611 = vmatmul.bf16.gmra.mxu0 %v670
        %v2612 = vpop.f32.mrf.mxu0
        %v2613 = vadd.f32 %v2564, %v2612
        %v2614 = vpop.f32.mrf.mxu0
        %v2615 = vadd.f32 %v2566, %v2614
        %2616 = vdwg.mxu0
        %2617 = vmatpush.bf16.msra.mxu0 %v1771
        %2618 = vmatpush.bf16.msra.mxu0 %v1763
        %2619 = vmatpush.bf16.msra.mxu0 %v1755
        %2620 = vmatpush.bf16.msra.mxu0 %v1747
        %2621 = vmatpush.bf16.msra.mxu0 %v1739
        %2622 = vmatpush.bf16.msra.mxu0 %v1731
        %2623 = vmatpush.bf16.msra.mxu0 %v1723
        %2624 = vmatpush.bf16.msra.mxu0 %v1715
        %2625 = vmatmul.bf16.gmra.mxu0 %v639
        %v2626 = vpop.f32.mrf.mxu0
        %v2627 = vadd.f32 %v931, %v2626
        %v2628 = vpop.f32.mrf.mxu0
        %v2629 = vadd.f32 %v931, %v2628
        %2630 = vmatmul.bf16.gmra.mxu0 %v643
        %v2631 = vpop.f32.mrf.mxu0
        %v2632 = vadd.f32 %v931, %v2631
        %v2633 = vpop.f32.mrf.mxu0
        %v2634 = vadd.f32 %v931, %v2633
        %2635 = vmatmul.bf16.gmra.mxu0 %v647
        %v2636 = vpop.f32.mrf.mxu0
        %v2637 = vadd.f32 %v931, %v2636
        %v2638 = vpop.f32.mrf.mxu0
        %v2639 = vadd.f32 %v931, %v2638
        %2640 = vmatmul.bf16.gmra.mxu0 %v651
        %v2641 = vpop.f32.mrf.mxu0
        %v2642 = vadd.f32 %v931, %v2641
        %v2643 = vpop.f32.mrf.mxu0
        %v2644 = vadd.f32 %v931, %v2643
        %2645 = vmatmul.bf16.gmra.mxu0 %v655
        %v2646 = vpop.f32.mrf.mxu0
        %v2647 = vadd.f32 %v931, %v2646
        %v2648 = vpop.f32.mrf.mxu0
        %v2649 = vadd.f32 %v931, %v2648
        %2650 = vmatmul.bf16.gmra.mxu0 %v659
        %v2651 = vpop.f32.mrf.mxu0
        %v2652 = vadd.f32 %v931, %v2651
        %v2653 = vpop.f32.mrf.mxu0
        %v2654 = vadd.f32 %v931, %v2653
        %2655 = vmatmul.bf16.gmra.mxu0 %v663
        %v2656 = vpop.f32.mrf.mxu0
        %v2657 = vadd.f32 %v931, %v2656
        %v2658 = vpop.f32.mrf.mxu0
        %v2659 = vadd.f32 %v931, %v2658
        %2660 = vmatmul.bf16.gmra.mxu0 %v667
        %v2661 = vpop.f32.mrf.mxu0
        %v2662 = vadd.f32 %v931, %v2661
        %v2663 = vpop.f32.mrf.mxu0
        %v2664 = vadd.f32 %v931, %v2663
        %2665 = vdwg.mxu0
        %2666 = vmatpush.bf16.msra.mxu0 %v1835
        %2667 = vmatpush.bf16.msra.mxu0 %v1827
        %2668 = vmatpush.bf16.msra.mxu0 %v1819
        %2669 = vmatpush.bf16.msra.mxu0 %v1811
        %2670 = vmatpush.bf16.msra.mxu0 %v1803
        %2671 = vmatpush.bf16.msra.mxu0 %v1795
        %2672 = vmatpush.bf16.msra.mxu0 %v1787
        %2673 = vmatpush.bf16.msra.mxu0 %v1779
        %2674 = vmatmul.bf16.gmra.mxu0 %v640
        %v2675 = vpop.f32.mrf.mxu0
        %v2676 = vadd.f32 %v2627, %v2675
        %v2677 = vpop.f32.mrf.mxu0
        %v2678 = vadd.f32 %v2629, %v2677
        %2679 = vmatmul.bf16.gmra.mxu0 %v644
        %v2680 = vpop.f32.mrf.mxu0
        %v2681 = vadd.f32 %v2632, %v2680
        %v2682 = vpop.f32.mrf.mxu0
        %v2683 = vadd.f32 %v2634, %v2682
        %2684 = vmatmul.bf16.gmra.mxu0 %v648
        %v2685 = vpop.f32.mrf.mxu0
        %v2686 = vadd.f32 %v2637, %v2685
        %v2687 = vpop.f32.mrf.mxu0
        %v2688 = vadd.f32 %v2639, %v2687
        %2689 = vmatmul.bf16.gmra.mxu0 %v652
        %v2690 = vpop.f32.mrf.mxu0
        %v2691 = vadd.f32 %v2642, %v2690
        %v2692 = vpop.f32.mrf.mxu0
        %v2693 = vadd.f32 %v2644, %v2692
        %2694 = vmatmul.bf16.gmra.mxu0 %v656
        %v2695 = vpop.f32.mrf.mxu0
        %v2696 = vadd.f32 %v2647, %v2695
        %v2697 = vpop.f32.mrf.mxu0
        %v2698 = vadd.f32 %v2649, %v2697
        %2699 = vmatmul.bf16.gmra.mxu0 %v660
        %v2700 = vpop.f32.mrf.mxu0
        %v2701 = vadd.f32 %v2652, %v2700
        %v2702 = vpop.f32.mrf.mxu0
        %v2703 = vadd.f32 %v2654, %v2702
        %2704 = vmatmul.bf16.gmra.mxu0 %v664
        %v2705 = vpop.f32.mrf.mxu0
        %v2706 = vadd.f32 %v2657, %v2705
        %v2707 = vpop.f32.mrf.mxu0
        %v2708 = vadd.f32 %v2659, %v2707
        %2709 = vmatmul.bf16.gmra.mxu0 %v668
        %v2710 = vpop.f32.mrf.mxu0
        %v2711 = vadd.f32 %v2662, %v2710
        %v2712 = vpop.f32.mrf.mxu0
        %v2713 = vadd.f32 %v2664, %v2712
        %2714 = vdwg.mxu0
        %2715 = vmatpush.bf16.msra.mxu0 %v1899
        %2716 = vmatpush.bf16.msra.mxu0 %v1891
        %2717 = vmatpush.bf16.msra.mxu0 %v1883
        %2718 = vmatpush.bf16.msra.mxu0 %v1875
        %2719 = vmatpush.bf16.msra.mxu0 %v1867
        %2720 = vmatpush.bf16.msra.mxu0 %v1859
        %2721 = vmatpush.bf16.msra.mxu0 %v1851
        %2722 = vmatpush.bf16.msra.mxu0 %v1843
        %2723 = vmatmul.bf16.gmra.mxu0 %v641
        %v2724 = vpop.f32.mrf.mxu0
        %v2725 = vadd.f32 %v2676, %v2724
        %v2726 = vpop.f32.mrf.mxu0
        %v2727 = vadd.f32 %v2678, %v2726
        %2728 = vmatmul.bf16.gmra.mxu0 %v645
        %v2729 = vpop.f32.mrf.mxu0
        %v2730 = vadd.f32 %v2681, %v2729
        %v2731 = vpop.f32.mrf.mxu0
        %v2732 = vadd.f32 %v2683, %v2731
        %2733 = vmatmul.bf16.gmra.mxu0 %v649
        %v2734 = vpop.f32.mrf.mxu0
        %v2735 = vadd.f32 %v2686, %v2734
        %v2736 = vpop.f32.mrf.mxu0
        %v2737 = vadd.f32 %v2688, %v2736
        %2738 = vmatmul.bf16.gmra.mxu0 %v653
        %v2739 = vpop.f32.mrf.mxu0
        %v2740 = vadd.f32 %v2691, %v2739
        %v2741 = vpop.f32.mrf.mxu0
        %v2742 = vadd.f32 %v2693, %v2741
        %2743 = vmatmul.bf16.gmra.mxu0 %v657
        %v2744 = vpop.f32.mrf.mxu0
        %v2745 = vadd.f32 %v2696, %v2744
        %v2746 = vpop.f32.mrf.mxu0
        %v2747 = vadd.f32 %v2698, %v2746
        %2748 = vmatmul.bf16.gmra.mxu0 %v661
        %v2749 = vpop.f32.mrf.mxu0
        %v2750 = vadd.f32 %v2701, %v2749
        %v2751 = vpop.f32.mrf.mxu0
        %v2752 = vadd.f32 %v2703, %v2751
        %2753 = vmatmul.bf16.gmra.mxu0 %v665
        %v2754 = vpop.f32.mrf.mxu0
        %v2755 = vadd.f32 %v2706, %v2754
        %v2756 = vpop.f32.mrf.mxu0
        %v2757 = vadd.f32 %v2708, %v2756
        %2758 = vmatmul.bf16.gmra.mxu0 %v669
        %v2759 = vpop.f32.mrf.mxu0
        %v2760 = vadd.f32 %v2711, %v2759
        %v2761 = vpop.f32.mrf.mxu0
        %v2762 = vadd.f32 %v2713, %v2761
        %2763 = vdwg.mxu0
        %2764 = vmatpush.bf16.msra.mxu0 %v1963
        %2765 = vmatpush.bf16.msra.mxu0 %v1955
        %2766 = vmatpush.bf16.msra.mxu0 %v1947
        %2767 = vmatpush.bf16.msra.mxu0 %v1939
        %2768 = vmatpush.bf16.msra.mxu0 %v1931
        %2769 = vmatpush.bf16.msra.mxu0 %v1923
        %2770 = vmatpush.bf16.msra.mxu0 %v1915
        %2771 = vmatpush.bf16.msra.mxu0 %v1907
        %2772 = vmatmul.bf16.gmra.mxu0 %v642
        %v2773 = vpop.f32.mrf.mxu0
        %v2774 = vadd.f32 %v2725, %v2773
        %v2775 = vpop.f32.mrf.mxu0
        %v2776 = vadd.f32 %v2727, %v2775
        %2777 = vmatmul.bf16.gmra.mxu0 %v646
        %v2778 = vpop.f32.mrf.mxu0
        %v2779 = vadd.f32 %v2730, %v2778
        %v2780 = vpop.f32.mrf.mxu0
        %v2781 = vadd.f32 %v2732, %v2780
        %2782 = vmatmul.bf16.gmra.mxu0 %v650
        %v2783 = vpop.f32.mrf.mxu0
        %v2784 = vadd.f32 %v2735, %v2783
        %v2785 = vpop.f32.mrf.mxu0
        %v2786 = vadd.f32 %v2737, %v2785
        %2787 = vmatmul.bf16.gmra.mxu0 %v654
        %v2788 = vpop.f32.mrf.mxu0
        %v2789 = vadd.f32 %v2740, %v2788
        %v2790 = vpop.f32.mrf.mxu0
        %v2791 = vadd.f32 %v2742, %v2790
        %2792 = vmatmul.bf16.gmra.mxu0 %v658
        %v2793 = vpop.f32.mrf.mxu0
        %v2794 = vadd.f32 %v2745, %v2793
        %v2795 = vpop.f32.mrf.mxu0
        %v2796 = vadd.f32 %v2747, %v2795
        %2797 = vmatmul.bf16.gmra.mxu0 %v662
        %v2798 = vpop.f32.mrf.mxu0
        %v2799 = vadd.f32 %v2750, %v2798
        %v2800 = vpop.f32.mrf.mxu0
        %v2801 = vadd.f32 %v2752, %v2800
        %2802 = vmatmul.bf16.gmra.mxu0 %v666
        %v2803 = vpop.f32.mrf.mxu0
        %v2804 = vadd.f32 %v2755, %v2803
        %v2805 = vpop.f32.mrf.mxu0
        %v2806 = vadd.f32 %v2757, %v2805
        %2807 = vmatmul.bf16.gmra.mxu0 %v670
        %v2808 = vpop.f32.mrf.mxu0
        %v2809 = vadd.f32 %v2760, %v2808
        %v2810 = vpop.f32.mrf.mxu0
        %v2811 = vadd.f32 %v2762, %v2810
        %2812 = vdwg.mxu0
        %2813 = vmatpush.bf16.msra.mxu0 %v1772
        %2814 = vmatpush.bf16.msra.mxu0 %v1764
        %2815 = vmatpush.bf16.msra.mxu0 %v1756
        %2816 = vmatpush.bf16.msra.mxu0 %v1748
        %2817 = vmatpush.bf16.msra.mxu0 %v1740
        %2818 = vmatpush.bf16.msra.mxu0 %v1732
        %2819 = vmatpush.bf16.msra.mxu0 %v1724
        %2820 = vmatpush.bf16.msra.mxu0 %v1716
        %2821 = vmatmul.bf16.gmra.mxu0 %v639
        %v2822 = vpop.f32.mrf.mxu0
        %v2823 = vadd.f32 %v932, %v2822
        %v2824 = vpop.f32.mrf.mxu0
        %v2825 = vadd.f32 %v932, %v2824
        %2826 = vmatmul.bf16.gmra.mxu0 %v643
        %v2827 = vpop.f32.mrf.mxu0
        %v2828 = vadd.f32 %v932, %v2827
        %v2829 = vpop.f32.mrf.mxu0
        %v2830 = vadd.f32 %v932, %v2829
        %2831 = vmatmul.bf16.gmra.mxu0 %v647
        %v2832 = vpop.f32.mrf.mxu0
        %v2833 = vadd.f32 %v932, %v2832
        %v2834 = vpop.f32.mrf.mxu0
        %v2835 = vadd.f32 %v932, %v2834
        %2836 = vmatmul.bf16.gmra.mxu0 %v651
        %v2837 = vpop.f32.mrf.mxu0
        %v2838 = vadd.f32 %v932, %v2837
        %v2839 = vpop.f32.mrf.mxu0
        %v2840 = vadd.f32 %v932, %v2839
        %2841 = vmatmul.bf16.gmra.mxu0 %v655
        %v2842 = vpop.f32.mrf.mxu0
        %v2843 = vadd.f32 %v932, %v2842
        %v2844 = vpop.f32.mrf.mxu0
        %v2845 = vadd.f32 %v932, %v2844
        %2846 = vmatmul.bf16.gmra.mxu0 %v659
        %v2847 = vpop.f32.mrf.mxu0
        %v2848 = vadd.f32 %v932, %v2847
        %v2849 = vpop.f32.mrf.mxu0
        %v2850 = vadd.f32 %v932, %v2849
        %2851 = vmatmul.bf16.gmra.mxu0 %v663
        %v2852 = vpop.f32.mrf.mxu0
        %v2853 = vadd.f32 %v932, %v2852
        %v2854 = vpop.f32.mrf.mxu0
        %v2855 = vadd.f32 %v932, %v2854
        %2856 = vmatmul.bf16.gmra.mxu0 %v667
        %v2857 = vpop.f32.mrf.mxu0
        %v2858 = vadd.f32 %v932, %v2857
        %v2859 = vpop.f32.mrf.mxu0
        %v2860 = vadd.f32 %v932, %v2859
        %2861 = vdwg.mxu0
        %2862 = vmatpush.bf16.msra.mxu0 %v1836
        %2863 = vmatpush.bf16.msra.mxu0 %v1828
        %2864 = vmatpush.bf16.msra.mxu0 %v1820
        %2865 = vmatpush.bf16.msra.mxu0 %v1812
        %2866 = vmatpush.bf16.msra.mxu0 %v1804
        %2867 = vmatpush.bf16.msra.mxu0 %v1796
        %2868 = vmatpush.bf16.msra.mxu0 %v1788
        %2869 = vmatpush.bf16.msra.mxu0 %v1780
        %2870 = vmatmul.bf16.gmra.mxu0 %v640
        %v2871 = vpop.f32.mrf.mxu0
        %v2872 = vadd.f32 %v2823, %v2871
        %v2873 = vpop.f32.mrf.mxu0
        %v2874 = vadd.f32 %v2825, %v2873
        %2875 = vmatmul.bf16.gmra.mxu0 %v644
        %v2876 = vpop.f32.mrf.mxu0
        %v2877 = vadd.f32 %v2828, %v2876
        %v2878 = vpop.f32.mrf.mxu0
        %v2879 = vadd.f32 %v2830, %v2878
        %2880 = vmatmul.bf16.gmra.mxu0 %v648
        %v2881 = vpop.f32.mrf.mxu0
        %v2882 = vadd.f32 %v2833, %v2881
        %v2883 = vpop.f32.mrf.mxu0
        %v2884 = vadd.f32 %v2835, %v2883
        %2885 = vmatmul.bf16.gmra.mxu0 %v652
        %v2886 = vpop.f32.mrf.mxu0
        %v2887 = vadd.f32 %v2838, %v2886
        %v2888 = vpop.f32.mrf.mxu0
        %v2889 = vadd.f32 %v2840, %v2888
        %2890 = vmatmul.bf16.gmra.mxu0 %v656
        %v2891 = vpop.f32.mrf.mxu0
        %v2892 = vadd.f32 %v2843, %v2891
        %v2893 = vpop.f32.mrf.mxu0
        %v2894 = vadd.f32 %v2845, %v2893
        %2895 = vmatmul.bf16.gmra.mxu0 %v660
        %v2896 = vpop.f32.mrf.mxu0
        %v2897 = vadd.f32 %v2848, %v2896
        %v2898 = vpop.f32.mrf.mxu0
        %v2899 = vadd.f32 %v2850, %v2898
        %2900 = vmatmul.bf16.gmra.mxu0 %v664
        %v2901 = vpop.f32.mrf.mxu0
        %v2902 = vadd.f32 %v2853, %v2901
        %v2903 = vpop.f32.mrf.mxu0
        %v2904 = vadd.f32 %v2855, %v2903
        %2905 = vmatmul.bf16.gmra.mxu0 %v668
        %v2906 = vpop.f32.mrf.mxu0
        %v2907 = vadd.f32 %v2858, %v2906
        %v2908 = vpop.f32.mrf.mxu0
        %v2909 = vadd.f32 %v2860, %v2908
        %2910 = vdwg.mxu0
        %2911 = vmatpush.bf16.msra.mxu0 %v1900
        %2912 = vmatpush.bf16.msra.mxu0 %v1892
        %2913 = vmatpush.bf16.msra.mxu0 %v1884
        %2914 = vmatpush.bf16.msra.mxu0 %v1876
        %2915 = vmatpush.bf16.msra.mxu0 %v1868
        %2916 = vmatpush.bf16.msra.mxu0 %v1860
        %2917 = vmatpush.bf16.msra.mxu0 %v1852
        %2918 = vmatpush.bf16.msra.mxu0 %v1844
        %2919 = vmatmul.bf16.gmra.mxu0 %v641
        %v2920 = vpop.f32.mrf.mxu0
        %v2921 = vadd.f32 %v2872, %v2920
        %v2922 = vpop.f32.mrf.mxu0
        %v2923 = vadd.f32 %v2874, %v2922
        %2924 = vmatmul.bf16.gmra.mxu0 %v645
        %v2925 = vpop.f32.mrf.mxu0
        %v2926 = vadd.f32 %v2877, %v2925
        %v2927 = vpop.f32.mrf.mxu0
        %v2928 = vadd.f32 %v2879, %v2927
        %2929 = vmatmul.bf16.gmra.mxu0 %v649
        %v2930 = vpop.f32.mrf.mxu0
        %v2931 = vadd.f32 %v2882, %v2930
        %v2932 = vpop.f32.mrf.mxu0
        %v2933 = vadd.f32 %v2884, %v2932
        %2934 = vmatmul.bf16.gmra.mxu0 %v653
        %v2935 = vpop.f32.mrf.mxu0
        %v2936 = vadd.f32 %v2887, %v2935
        %v2937 = vpop.f32.mrf.mxu0
        %v2938 = vadd.f32 %v2889, %v2937
        %2939 = vmatmul.bf16.gmra.mxu0 %v657
        %v2940 = vpop.f32.mrf.mxu0
        %v2941 = vadd.f32 %v2892, %v2940
        %v2942 = vpop.f32.mrf.mxu0
        %v2943 = vadd.f32 %v2894, %v2942
        %2944 = vmatmul.bf16.gmra.mxu0 %v661
        %v2945 = vpop.f32.mrf.mxu0
        %v2946 = vadd.f32 %v2897, %v2945
        %v2947 = vpop.f32.mrf.mxu0
        %v2948 = vadd.f32 %v2899, %v2947
        %2949 = vmatmul.bf16.gmra.mxu0 %v665
        %v2950 = vpop.f32.mrf.mxu0
        %v2951 = vadd.f32 %v2902, %v2950
        %v2952 = vpop.f32.mrf.mxu0
        %v2953 = vadd.f32 %v2904, %v2952
        %2954 = vmatmul.bf16.gmra.mxu0 %v669
        %v2955 = vpop.f32.mrf.mxu0
        %v2956 = vadd.f32 %v2907, %v2955
        %v2957 = vpop.f32.mrf.mxu0
        %v2958 = vadd.f32 %v2909, %v2957
        %2959 = vdwg.mxu0
        %2960 = vmatpush.bf16.msra.mxu0 %v1964
        %2961 = vmatpush.bf16.msra.mxu0 %v1956
        %2962 = vmatpush.bf16.msra.mxu0 %v1948
        %2963 = vmatpush.bf16.msra.mxu0 %v1940
        %2964 = vmatpush.bf16.msra.mxu0 %v1932
        %2965 = vmatpush.bf16.msra.mxu0 %v1924
        %2966 = vmatpush.bf16.msra.mxu0 %v1916
        %2967 = vmatpush.bf16.msra.mxu0 %v1908
        %2968 = vmatmul.bf16.gmra.mxu0 %v642
        %v2969 = vpop.f32.mrf.mxu0
        %v2970 = vadd.f32 %v2921, %v2969
        %v2971 = vpop.f32.mrf.mxu0
        %v2972 = vadd.f32 %v2923, %v2971
        %2973 = vmatmul.bf16.gmra.mxu0 %v646
        %v2974 = vpop.f32.mrf.mxu0
        %v2975 = vadd.f32 %v2926, %v2974
        %v2976 = vpop.f32.mrf.mxu0
        %v2977 = vadd.f32 %v2928, %v2976
        %2978 = vmatmul.bf16.gmra.mxu0 %v650
        %v2979 = vpop.f32.mrf.mxu0
        %v2980 = vadd.f32 %v2931, %v2979
        %v2981 = vpop.f32.mrf.mxu0
        %v2982 = vadd.f32 %v2933, %v2981
        %2983 = vmatmul.bf16.gmra.mxu0 %v654
        %v2984 = vpop.f32.mrf.mxu0
        %v2985 = vadd.f32 %v2936, %v2984
        %v2986 = vpop.f32.mrf.mxu0
        %v2987 = vadd.f32 %v2938, %v2986
        %2988 = vmatmul.bf16.gmra.mxu0 %v658
        %v2989 = vpop.f32.mrf.mxu0
        %v2990 = vadd.f32 %v2941, %v2989
        %v2991 = vpop.f32.mrf.mxu0
        %v2992 = vadd.f32 %v2943, %v2991
        %2993 = vmatmul.bf16.gmra.mxu0 %v662
        %v2994 = vpop.f32.mrf.mxu0
        %v2995 = vadd.f32 %v2946, %v2994
        %v2996 = vpop.f32.mrf.mxu0
        %v2997 = vadd.f32 %v2948, %v2996
        %2998 = vmatmul.bf16.gmra.mxu0 %v666
        %v2999 = vpop.f32.mrf.mxu0
        %v3000 = vadd.f32 %v2951, %v2999
        %v3001 = vpop.f32.mrf.mxu0
        %v3002 = vadd.f32 %v2953, %v3001
        %3003 = vmatmul.bf16.gmra.mxu0 %v670
        %v3004 = vpop.f32.mrf.mxu0
        %v3005 = vadd.f32 %v2956, %v3004
        %v3006 = vpop.f32.mrf.mxu0
        %v3007 = vadd.f32 %v2958, %v3006
        %3008 = vdwg.mxu0
        %3009 = vmatpush.bf16.msra.mxu0 %v1773
        %3010 = vmatpush.bf16.msra.mxu0 %v1765
        %3011 = vmatpush.bf16.msra.mxu0 %v1757
        %3012 = vmatpush.bf16.msra.mxu0 %v1749
        %3013 = vmatpush.bf16.msra.mxu0 %v1741
        %3014 = vmatpush.bf16.msra.mxu0 %v1733
        %3015 = vmatpush.bf16.msra.mxu0 %v1725
        %3016 = vmatpush.bf16.msra.mxu0 %v1717
        %3017 = vmatmul.bf16.gmra.mxu0 %v639
        %v3018 = vpop.f32.mrf.mxu0
        %v3019 = vadd.f32 %v933, %v3018
        %v3020 = vpop.f32.mrf.mxu0
        %v3021 = vadd.f32 %v933, %v3020
        %3022 = vmatmul.bf16.gmra.mxu0 %v643
        %v3023 = vpop.f32.mrf.mxu0
        %v3024 = vadd.f32 %v933, %v3023
        %v3025 = vpop.f32.mrf.mxu0
        %v3026 = vadd.f32 %v933, %v3025
        %3027 = vmatmul.bf16.gmra.mxu0 %v647
        %v3028 = vpop.f32.mrf.mxu0
        %v3029 = vadd.f32 %v933, %v3028
        %v3030 = vpop.f32.mrf.mxu0
        %v3031 = vadd.f32 %v933, %v3030
        %3032 = vmatmul.bf16.gmra.mxu0 %v651
        %v3033 = vpop.f32.mrf.mxu0
        %v3034 = vadd.f32 %v933, %v3033
        %v3035 = vpop.f32.mrf.mxu0
        %v3036 = vadd.f32 %v933, %v3035
        %3037 = vmatmul.bf16.gmra.mxu0 %v655
        %v3038 = vpop.f32.mrf.mxu0
        %v3039 = vadd.f32 %v933, %v3038
        %v3040 = vpop.f32.mrf.mxu0
        %v3041 = vadd.f32 %v933, %v3040
        %3042 = vmatmul.bf16.gmra.mxu0 %v659
        %v3043 = vpop.f32.mrf.mxu0
        %v3044 = vadd.f32 %v933, %v3043
        %v3045 = vpop.f32.mrf.mxu0
        %v3046 = vadd.f32 %v933, %v3045
        %3047 = vmatmul.bf16.gmra.mxu0 %v663
        %v3048 = vpop.f32.mrf.mxu0
        %v3049 = vadd.f32 %v933, %v3048
        %v3050 = vpop.f32.mrf.mxu0
        %v3051 = vadd.f32 %v933, %v3050
        %3052 = vmatmul.bf16.gmra.mxu0 %v667
        %v3053 = vpop.f32.mrf.mxu0
        %v3054 = vadd.f32 %v933, %v3053
        %v3055 = vpop.f32.mrf.mxu0
        %v3056 = vadd.f32 %v933, %v3055
        %3057 = vdwg.mxu0
        %3058 = vmatpush.bf16.msra.mxu0 %v1837
        %3059 = vmatpush.bf16.msra.mxu0 %v1829
        %3060 = vmatpush.bf16.msra.mxu0 %v1821
        %3061 = vmatpush.bf16.msra.mxu0 %v1813
        %3062 = vmatpush.bf16.msra.mxu0 %v1805
        %3063 = vmatpush.bf16.msra.mxu0 %v1797
        %3064 = vmatpush.bf16.msra.mxu0 %v1789
        %3065 = vmatpush.bf16.msra.mxu0 %v1781
        %3066 = vmatmul.bf16.gmra.mxu0 %v640
        %v3067 = vpop.f32.mrf.mxu0
        %v3068 = vadd.f32 %v3019, %v3067
        %v3069 = vpop.f32.mrf.mxu0
        %v3070 = vadd.f32 %v3021, %v3069
        %3071 = vmatmul.bf16.gmra.mxu0 %v644
        %v3072 = vpop.f32.mrf.mxu0
        %v3073 = vadd.f32 %v3024, %v3072
        %v3074 = vpop.f32.mrf.mxu0
        %v3075 = vadd.f32 %v3026, %v3074
        %3076 = vmatmul.bf16.gmra.mxu0 %v648
        %v3077 = vpop.f32.mrf.mxu0
        %v3078 = vadd.f32 %v3029, %v3077
        %v3079 = vpop.f32.mrf.mxu0
        %v3080 = vadd.f32 %v3031, %v3079
        %3081 = vmatmul.bf16.gmra.mxu0 %v652
        %v3082 = vpop.f32.mrf.mxu0
        %v3083 = vadd.f32 %v3034, %v3082
        %v3084 = vpop.f32.mrf.mxu0
        %v3085 = vadd.f32 %v3036, %v3084
        %3086 = vmatmul.bf16.gmra.mxu0 %v656
        %v3087 = vpop.f32.mrf.mxu0
        %v3088 = vadd.f32 %v3039, %v3087
        %v3089 = vpop.f32.mrf.mxu0
        %v3090 = vadd.f32 %v3041, %v3089
        %3091 = vmatmul.bf16.gmra.mxu0 %v660
        %v3092 = vpop.f32.mrf.mxu0
        %v3093 = vadd.f32 %v3044, %v3092
        %v3094 = vpop.f32.mrf.mxu0
        %v3095 = vadd.f32 %v3046, %v3094
        %3096 = vmatmul.bf16.gmra.mxu0 %v664
        %v3097 = vpop.f32.mrf.mxu0
        %v3098 = vadd.f32 %v3049, %v3097
        %v3099 = vpop.f32.mrf.mxu0
        %v3100 = vadd.f32 %v3051, %v3099
        %3101 = vmatmul.bf16.gmra.mxu0 %v668
        %v3102 = vpop.f32.mrf.mxu0
        %v3103 = vadd.f32 %v3054, %v3102
        %v3104 = vpop.f32.mrf.mxu0
        %v3105 = vadd.f32 %v3056, %v3104
        %3106 = vdwg.mxu0
        %3107 = vmatpush.bf16.msra.mxu0 %v1901
        %3108 = vmatpush.bf16.msra.mxu0 %v1893
        %3109 = vmatpush.bf16.msra.mxu0 %v1885
        %3110 = vmatpush.bf16.msra.mxu0 %v1877
        %3111 = vmatpush.bf16.msra.mxu0 %v1869
        %3112 = vmatpush.bf16.msra.mxu0 %v1861
        %3113 = vmatpush.bf16.msra.mxu0 %v1853
        %3114 = vmatpush.bf16.msra.mxu0 %v1845
        %3115 = vmatmul.bf16.gmra.mxu0 %v641
        %v3116 = vpop.f32.mrf.mxu0
        %v3117 = vadd.f32 %v3068, %v3116
        %v3118 = vpop.f32.mrf.mxu0
        %v3119 = vadd.f32 %v3070, %v3118
        %3120 = vmatmul.bf16.gmra.mxu0 %v645
        %v3121 = vpop.f32.mrf.mxu0
        %v3122 = vadd.f32 %v3073, %v3121
        %v3123 = vpop.f32.mrf.mxu0
        %v3124 = vadd.f32 %v3075, %v3123
        %3125 = vmatmul.bf16.gmra.mxu0 %v649
        %v3126 = vpop.f32.mrf.mxu0
        %v3127 = vadd.f32 %v3078, %v3126
        %v3128 = vpop.f32.mrf.mxu0
        %v3129 = vadd.f32 %v3080, %v3128
        %3130 = vmatmul.bf16.gmra.mxu0 %v653
        %v3131 = vpop.f32.mrf.mxu0
        %v3132 = vadd.f32 %v3083, %v3131
        %v3133 = vpop.f32.mrf.mxu0
        %v3134 = vadd.f32 %v3085, %v3133
        %3135 = vmatmul.bf16.gmra.mxu0 %v657
        %v3136 = vpop.f32.mrf.mxu0
        %v3137 = vadd.f32 %v3088, %v3136
        %v3138 = vpop.f32.mrf.mxu0
        %v3139 = vadd.f32 %v3090, %v3138
        %3140 = vmatmul.bf16.gmra.mxu0 %v661
        %v3141 = vpop.f32.mrf.mxu0
        %v3142 = vadd.f32 %v3093, %v3141
        %v3143 = vpop.f32.mrf.mxu0
        %v3144 = vadd.f32 %v3095, %v3143
        %3145 = vmatmul.bf16.gmra.mxu0 %v665
        %v3146 = vpop.f32.mrf.mxu0
        %v3147 = vadd.f32 %v3098, %v3146
        %v3148 = vpop.f32.mrf.mxu0
        %v3149 = vadd.f32 %v3100, %v3148
        %3150 = vmatmul.bf16.gmra.mxu0 %v669
        %v3151 = vpop.f32.mrf.mxu0
        %v3152 = vadd.f32 %v3103, %v3151
        %v3153 = vpop.f32.mrf.mxu0
        %v3154 = vadd.f32 %v3105, %v3153
        %3155 = vdwg.mxu0
        %3156 = vmatpush.bf16.msra.mxu0 %v1965
        %3157 = vmatpush.bf16.msra.mxu0 %v1957
        %3158 = vmatpush.bf16.msra.mxu0 %v1949
        %3159 = vmatpush.bf16.msra.mxu0 %v1941
        %3160 = vmatpush.bf16.msra.mxu0 %v1933
        %3161 = vmatpush.bf16.msra.mxu0 %v1925
        %3162 = vmatpush.bf16.msra.mxu0 %v1917
        %3163 = vmatpush.bf16.msra.mxu0 %v1909
        %3164 = vmatmul.bf16.gmra.mxu0 %v642
        %v3165 = vpop.f32.mrf.mxu0
        %v3166 = vadd.f32 %v3117, %v3165
        %v3167 = vpop.f32.mrf.mxu0
        %v3168 = vadd.f32 %v3119, %v3167
        %3169 = vmatmul.bf16.gmra.mxu0 %v646
        %v3170 = vpop.f32.mrf.mxu0
        %v3171 = vadd.f32 %v3122, %v3170
        %v3172 = vpop.f32.mrf.mxu0
        %v3173 = vadd.f32 %v3124, %v3172
        %3174 = vmatmul.bf16.gmra.mxu0 %v650
        %v3175 = vpop.f32.mrf.mxu0
        %v3176 = vadd.f32 %v3127, %v3175
        %v3177 = vpop.f32.mrf.mxu0
        %v3178 = vadd.f32 %v3129, %v3177
        %3179 = vmatmul.bf16.gmra.mxu0 %v654
        %v3180 = vpop.f32.mrf.mxu0
        %v3181 = vadd.f32 %v3132, %v3180
        %v3182 = vpop.f32.mrf.mxu0
        %v3183 = vadd.f32 %v3134, %v3182
        %3184 = vmatmul.bf16.gmra.mxu0 %v658
        %v3185 = vpop.f32.mrf.mxu0
        %v3186 = vadd.f32 %v3137, %v3185
        %v3187 = vpop.f32.mrf.mxu0
        %v3188 = vadd.f32 %v3139, %v3187
        %3189 = vmatmul.bf16.gmra.mxu0 %v662
        %v3190 = vpop.f32.mrf.mxu0
        %v3191 = vadd.f32 %v3142, %v3190
        %v3192 = vpop.f32.mrf.mxu0
        %v3193 = vadd.f32 %v3144, %v3192
        %3194 = vmatmul.bf16.gmra.mxu0 %v666
        %v3195 = vpop.f32.mrf.mxu0
        %v3196 = vadd.f32 %v3147, %v3195
        %v3197 = vpop.f32.mrf.mxu0
        %v3198 = vadd.f32 %v3149, %v3197
        %3199 = vmatmul.bf16.gmra.mxu0 %v670
        %v3200 = vpop.f32.mrf.mxu0
        %v3201 = vadd.f32 %v3152, %v3200
        %v3202 = vpop.f32.mrf.mxu0
        %v3203 = vadd.f32 %v3154, %v3202
        %3204 = vdwg.mxu0
        %3205 = vmatpush.bf16.msra.mxu0 %v1774
        %3206 = vmatpush.bf16.msra.mxu0 %v1766
        %3207 = vmatpush.bf16.msra.mxu0 %v1758
        %3208 = vmatpush.bf16.msra.mxu0 %v1750
        %3209 = vmatpush.bf16.msra.mxu0 %v1742
        %3210 = vmatpush.bf16.msra.mxu0 %v1734
        %3211 = vmatpush.bf16.msra.mxu0 %v1726
        %3212 = vmatpush.bf16.msra.mxu0 %v1718
        %3213 = vmatmul.bf16.gmra.mxu0 %v639
        %v3214 = vpop.f32.mrf.mxu0
        %v3215 = vadd.f32 %v934, %v3214
        %v3216 = vpop.f32.mrf.mxu0
        %v3217 = vadd.f32 %v934, %v3216
        %3218 = vmatmul.bf16.gmra.mxu0 %v643
        %v3219 = vpop.f32.mrf.mxu0
        %v3220 = vadd.f32 %v934, %v3219
        %v3221 = vpop.f32.mrf.mxu0
        %v3222 = vadd.f32 %v934, %v3221
        %3223 = vmatmul.bf16.gmra.mxu0 %v647
        %v3224 = vpop.f32.mrf.mxu0
        %v3225 = vadd.f32 %v934, %v3224
        %v3226 = vpop.f32.mrf.mxu0
        %v3227 = vadd.f32 %v934, %v3226
        %3228 = vmatmul.bf16.gmra.mxu0 %v651
        %v3229 = vpop.f32.mrf.mxu0
        %v3230 = vadd.f32 %v934, %v3229
        %v3231 = vpop.f32.mrf.mxu0
        %v3232 = vadd.f32 %v934, %v3231
        %3233 = vmatmul.bf16.gmra.mxu0 %v655
        %v3234 = vpop.f32.mrf.mxu0
        %v3235 = vadd.f32 %v934, %v3234
        %v3236 = vpop.f32.mrf.mxu0
        %v3237 = vadd.f32 %v934, %v3236
        %3238 = vmatmul.bf16.gmra.mxu0 %v659
        %v3239 = vpop.f32.mrf.mxu0
        %v3240 = vadd.f32 %v934, %v3239
        %v3241 = vpop.f32.mrf.mxu0
        %v3242 = vadd.f32 %v934, %v3241
        %3243 = vmatmul.bf16.gmra.mxu0 %v663
        %v3244 = vpop.f32.mrf.mxu0
        %v3245 = vadd.f32 %v934, %v3244
        %v3246 = vpop.f32.mrf.mxu0
        %v3247 = vadd.f32 %v934, %v3246
        %3248 = vmatmul.bf16.gmra.mxu0 %v667
        %v3249 = vpop.f32.mrf.mxu0
        %v3250 = vadd.f32 %v934, %v3249
        %v3251 = vpop.f32.mrf.mxu0
        %v3252 = vadd.f32 %v934, %v3251
        %3253 = vdwg.mxu0
        %3254 = vmatpush.bf16.msra.mxu0 %v1838
        %3255 = vmatpush.bf16.msra.mxu0 %v1830
        %3256 = vmatpush.bf16.msra.mxu0 %v1822
        %3257 = vmatpush.bf16.msra.mxu0 %v1814
        %3258 = vmatpush.bf16.msra.mxu0 %v1806
        %3259 = vmatpush.bf16.msra.mxu0 %v1798
        %3260 = vmatpush.bf16.msra.mxu0 %v1790
        %3261 = vmatpush.bf16.msra.mxu0 %v1782
        %3262 = vmatmul.bf16.gmra.mxu0 %v640
        %v3263 = vpop.f32.mrf.mxu0
        %v3264 = vadd.f32 %v3215, %v3263
        %v3265 = vpop.f32.mrf.mxu0
        %v3266 = vadd.f32 %v3217, %v3265
        %3267 = vmatmul.bf16.gmra.mxu0 %v644
        %v3268 = vpop.f32.mrf.mxu0
        %v3269 = vadd.f32 %v3220, %v3268
        %v3270 = vpop.f32.mrf.mxu0
        %v3271 = vadd.f32 %v3222, %v3270
        %3272 = vmatmul.bf16.gmra.mxu0 %v648
        %v3273 = vpop.f32.mrf.mxu0
        %v3274 = vadd.f32 %v3225, %v3273
        %v3275 = vpop.f32.mrf.mxu0
        %v3276 = vadd.f32 %v3227, %v3275
        %3277 = vmatmul.bf16.gmra.mxu0 %v652
        %v3278 = vpop.f32.mrf.mxu0
        %v3279 = vadd.f32 %v3230, %v3278
        %v3280 = vpop.f32.mrf.mxu0
        %v3281 = vadd.f32 %v3232, %v3280
        %3282 = vmatmul.bf16.gmra.mxu0 %v656
        %v3283 = vpop.f32.mrf.mxu0
        %v3284 = vadd.f32 %v3235, %v3283
        %v3285 = vpop.f32.mrf.mxu0
        %v3286 = vadd.f32 %v3237, %v3285
        %3287 = vmatmul.bf16.gmra.mxu0 %v660
        %v3288 = vpop.f32.mrf.mxu0
        %v3289 = vadd.f32 %v3240, %v3288
        %v3290 = vpop.f32.mrf.mxu0
        %v3291 = vadd.f32 %v3242, %v3290
        %3292 = vmatmul.bf16.gmra.mxu0 %v664
        %v3293 = vpop.f32.mrf.mxu0
        %v3294 = vadd.f32 %v3245, %v3293
        %v3295 = vpop.f32.mrf.mxu0
        %v3296 = vadd.f32 %v3247, %v3295
        %3297 = vmatmul.bf16.gmra.mxu0 %v668
        %v3298 = vpop.f32.mrf.mxu0
        %v3299 = vadd.f32 %v3250, %v3298
        %v3300 = vpop.f32.mrf.mxu0
        %v3301 = vadd.f32 %v3252, %v3300
        %3302 = vdwg.mxu0
        %3303 = vmatpush.bf16.msra.mxu0 %v1902
        %3304 = vmatpush.bf16.msra.mxu0 %v1894
        %3305 = vmatpush.bf16.msra.mxu0 %v1886
        %3306 = vmatpush.bf16.msra.mxu0 %v1878
        %3307 = vmatpush.bf16.msra.mxu0 %v1870
        %3308 = vmatpush.bf16.msra.mxu0 %v1862
        %3309 = vmatpush.bf16.msra.mxu0 %v1854
        %3310 = vmatpush.bf16.msra.mxu0 %v1846
        %3311 = vmatmul.bf16.gmra.mxu0 %v641
        %v3312 = vpop.f32.mrf.mxu0
        %v3313 = vadd.f32 %v3264, %v3312
        %v3314 = vpop.f32.mrf.mxu0
        %v3315 = vadd.f32 %v3266, %v3314
        %3316 = vmatmul.bf16.gmra.mxu0 %v645
        %v3317 = vpop.f32.mrf.mxu0
        %v3318 = vadd.f32 %v3269, %v3317
        %v3319 = vpop.f32.mrf.mxu0
        %v3320 = vadd.f32 %v3271, %v3319
        %3321 = vmatmul.bf16.gmra.mxu0 %v649
        %v3322 = vpop.f32.mrf.mxu0
        %v3323 = vadd.f32 %v3274, %v3322
        %v3324 = vpop.f32.mrf.mxu0
        %v3325 = vadd.f32 %v3276, %v3324
        %3326 = vmatmul.bf16.gmra.mxu0 %v653
        %v3327 = vpop.f32.mrf.mxu0
        %v3328 = vadd.f32 %v3279, %v3327
        %v3329 = vpop.f32.mrf.mxu0
        %v3330 = vadd.f32 %v3281, %v3329
        %3331 = vmatmul.bf16.gmra.mxu0 %v657
        %v3332 = vpop.f32.mrf.mxu0
        %v3333 = vadd.f32 %v3284, %v3332
        %v3334 = vpop.f32.mrf.mxu0
        %v3335 = vadd.f32 %v3286, %v3334
        %3336 = vmatmul.bf16.gmra.mxu0 %v661
        %v3337 = vpop.f32.mrf.mxu0
        %v3338 = vadd.f32 %v3289, %v3337
        %v3339 = vpop.f32.mrf.mxu0
        %v3340 = vadd.f32 %v3291, %v3339
        %3341 = vmatmul.bf16.gmra.mxu0 %v665
        %v3342 = vpop.f32.mrf.mxu0
        %v3343 = vadd.f32 %v3294, %v3342
        %v3344 = vpop.f32.mrf.mxu0
        %v3345 = vadd.f32 %v3296, %v3344
        %3346 = vmatmul.bf16.gmra.mxu0 %v669
        %v3347 = vpop.f32.mrf.mxu0
        %v3348 = vadd.f32 %v3299, %v3347
        %v3349 = vpop.f32.mrf.mxu0
        %v3350 = vadd.f32 %v3301, %v3349
        %3351 = vdwg.mxu0
        %3352 = vmatpush.bf16.msra.mxu0 %v1966
        %3353 = vmatpush.bf16.msra.mxu0 %v1958
        %3354 = vmatpush.bf16.msra.mxu0 %v1950
        %3355 = vmatpush.bf16.msra.mxu0 %v1942
        %3356 = vmatpush.bf16.msra.mxu0 %v1934
        %3357 = vmatpush.bf16.msra.mxu0 %v1926
        %3358 = vmatpush.bf16.msra.mxu0 %v1918
        %3359 = vmatpush.bf16.msra.mxu0 %v1910
        %3360 = vmatmul.bf16.gmra.mxu0 %v642
        %v3361 = vpop.f32.mrf.mxu0
        %v3362 = vadd.f32 %v3313, %v3361
        %v3363 = vpop.f32.mrf.mxu0
        %v3364 = vadd.f32 %v3315, %v3363
        %3365 = vmatmul.bf16.gmra.mxu0 %v646
        %v3366 = vpop.f32.mrf.mxu0
        %v3367 = vadd.f32 %v3318, %v3366
        %v3368 = vpop.f32.mrf.mxu0
        %v3369 = vadd.f32 %v3320, %v3368
        %3370 = vmatmul.bf16.gmra.mxu0 %v650
        %v3371 = vpop.f32.mrf.mxu0
        %v3372 = vadd.f32 %v3323, %v3371
        %v3373 = vpop.f32.mrf.mxu0
        %v3374 = vadd.f32 %v3325, %v3373
        %3375 = vmatmul.bf16.gmra.mxu0 %v654
        %v3376 = vpop.f32.mrf.mxu0
        %v3377 = vadd.f32 %v3328, %v3376
        %v3378 = vpop.f32.mrf.mxu0
        %v3379 = vadd.f32 %v3330, %v3378
        %3380 = vmatmul.bf16.gmra.mxu0 %v658
        %v3381 = vpop.f32.mrf.mxu0
        %v3382 = vadd.f32 %v3333, %v3381
        %v3383 = vpop.f32.mrf.mxu0
        %v3384 = vadd.f32 %v3335, %v3383
        %3385 = vmatmul.bf16.gmra.mxu0 %v662
        %v3386 = vpop.f32.mrf.mxu0
        %v3387 = vadd.f32 %v3338, %v3386
        %v3388 = vpop.f32.mrf.mxu0
        %v3389 = vadd.f32 %v3340, %v3388
        %3390 = vmatmul.bf16.gmra.mxu0 %v666
        %v3391 = vpop.f32.mrf.mxu0
        %v3392 = vadd.f32 %v3343, %v3391
        %v3393 = vpop.f32.mrf.mxu0
        %v3394 = vadd.f32 %v3345, %v3393
        %3395 = vmatmul.bf16.gmra.mxu0 %v670
        %v3396 = vpop.f32.mrf.mxu0
        %v3397 = vadd.f32 %v3348, %v3396
        %v3398 = vpop.f32.mrf.mxu0
        %v3399 = vadd.f32 %v3350, %v3398
        %3400 = vdwg.mxu0
        %3401 = vmatpush.bf16.msra.mxu0 %v1775
        %3402 = vmatpush.bf16.msra.mxu0 %v1767
        %3403 = vmatpush.bf16.msra.mxu0 %v1759
        %3404 = vmatpush.bf16.msra.mxu0 %v1751
        %3405 = vmatpush.bf16.msra.mxu0 %v1743
        %3406 = vmatpush.bf16.msra.mxu0 %v1735
        %3407 = vmatpush.bf16.msra.mxu0 %v1727
        %3408 = vmatpush.bf16.msra.mxu0 %v1719
        %3409 = vmatmul.bf16.gmra.mxu0 %v639
        %v3410 = vpop.f32.mrf.mxu0
        %v3411 = vadd.f32 %v935, %v3410
        %v3412 = vpop.f32.mrf.mxu0
        %v3413 = vadd.f32 %v935, %v3412
        %3414 = vmatmul.bf16.gmra.mxu0 %v643
        %v3415 = vpop.f32.mrf.mxu0
        %v3416 = vadd.f32 %v935, %v3415
        %v3417 = vpop.f32.mrf.mxu0
        %v3418 = vadd.f32 %v935, %v3417
        %3419 = vmatmul.bf16.gmra.mxu0 %v647
        %v3420 = vpop.f32.mrf.mxu0
        %v3421 = vadd.f32 %v935, %v3420
        %v3422 = vpop.f32.mrf.mxu0
        %v3423 = vadd.f32 %v935, %v3422
        %3424 = vmatmul.bf16.gmra.mxu0 %v651
        %v3425 = vpop.f32.mrf.mxu0
        %v3426 = vadd.f32 %v935, %v3425
        %v3427 = vpop.f32.mrf.mxu0
        %v3428 = vadd.f32 %v935, %v3427
        %3429 = vmatmul.bf16.gmra.mxu0 %v655
        %v3430 = vpop.f32.mrf.mxu0
        %v3431 = vadd.f32 %v935, %v3430
        %v3432 = vpop.f32.mrf.mxu0
        %v3433 = vadd.f32 %v935, %v3432
        %3434 = vmatmul.bf16.gmra.mxu0 %v659
        %v3435 = vpop.f32.mrf.mxu0
        %v3436 = vadd.f32 %v935, %v3435
        %v3437 = vpop.f32.mrf.mxu0
        %v3438 = vadd.f32 %v935, %v3437
        %3439 = vmatmul.bf16.gmra.mxu0 %v663
        %v3440 = vpop.f32.mrf.mxu0
        %v3441 = vadd.f32 %v935, %v3440
        %v3442 = vpop.f32.mrf.mxu0
        %v3443 = vadd.f32 %v935, %v3442
        %3444 = vmatmul.bf16.gmra.mxu0 %v667
        %v3445 = vpop.f32.mrf.mxu0
        %v3446 = vadd.f32 %v935, %v3445
        %v3447 = vpop.f32.mrf.mxu0
        %v3448 = vadd.f32 %v935, %v3447
        %3449 = vdwg.mxu0
        %3450 = vmatpush.bf16.msra.mxu0 %v1839
        %3451 = vmatpush.bf16.msra.mxu0 %v1831
        %3452 = vmatpush.bf16.msra.mxu0 %v1823
        %3453 = vmatpush.bf16.msra.mxu0 %v1815
        %3454 = vmatpush.bf16.msra.mxu0 %v1807
        %3455 = vmatpush.bf16.msra.mxu0 %v1799
        %3456 = vmatpush.bf16.msra.mxu0 %v1791
        %3457 = vmatpush.bf16.msra.mxu0 %v1783
        %3458 = vmatmul.bf16.gmra.mxu0 %v640
        %v3459 = vpop.f32.mrf.mxu0
        %v3460 = vadd.f32 %v3411, %v3459
        %v3461 = vpop.f32.mrf.mxu0
        %v3462 = vadd.f32 %v3413, %v3461
        %3463 = vmatmul.bf16.gmra.mxu0 %v644
        %v3464 = vpop.f32.mrf.mxu0
        %v3465 = vadd.f32 %v3416, %v3464
        %v3466 = vpop.f32.mrf.mxu0
        %v3467 = vadd.f32 %v3418, %v3466
        %3468 = vmatmul.bf16.gmra.mxu0 %v648
        %v3469 = vpop.f32.mrf.mxu0
        %v3470 = vadd.f32 %v3421, %v3469
        %v3471 = vpop.f32.mrf.mxu0
        %v3472 = vadd.f32 %v3423, %v3471
        %3473 = vmatmul.bf16.gmra.mxu0 %v652
        %v3474 = vpop.f32.mrf.mxu0
        %v3475 = vadd.f32 %v3426, %v3474
        %v3476 = vpop.f32.mrf.mxu0
        %v3477 = vadd.f32 %v3428, %v3476
        %3478 = vmatmul.bf16.gmra.mxu0 %v656
        %v3479 = vpop.f32.mrf.mxu0
        %v3480 = vadd.f32 %v3431, %v3479
        %v3481 = vpop.f32.mrf.mxu0
        %v3482 = vadd.f32 %v3433, %v3481
        %3483 = vmatmul.bf16.gmra.mxu0 %v660
        %v3484 = vpop.f32.mrf.mxu0
        %v3485 = vadd.f32 %v3436, %v3484
        %v3486 = vpop.f32.mrf.mxu0
        %v3487 = vadd.f32 %v3438, %v3486
        %3488 = vmatmul.bf16.gmra.mxu0 %v664
        %v3489 = vpop.f32.mrf.mxu0
        %v3490 = vadd.f32 %v3441, %v3489
        %v3491 = vpop.f32.mrf.mxu0
        %v3492 = vadd.f32 %v3443, %v3491
        %3493 = vmatmul.bf16.gmra.mxu0 %v668
        %v3494 = vpop.f32.mrf.mxu0
        %v3495 = vadd.f32 %v3446, %v3494
        %v3496 = vpop.f32.mrf.mxu0
        %v3497 = vadd.f32 %v3448, %v3496
        %3498 = vdwg.mxu0
        %3499 = vmatpush.bf16.msra.mxu0 %v1903
        %3500 = vmatpush.bf16.msra.mxu0 %v1895
        %3501 = vmatpush.bf16.msra.mxu0 %v1887
        %3502 = vmatpush.bf16.msra.mxu0 %v1879
        %3503 = vmatpush.bf16.msra.mxu0 %v1871
        %3504 = vmatpush.bf16.msra.mxu0 %v1863
        %3505 = vmatpush.bf16.msra.mxu0 %v1855
        %3506 = vmatpush.bf16.msra.mxu0 %v1847
        %3507 = vmatmul.bf16.gmra.mxu0 %v641
        %v3508 = vpop.f32.mrf.mxu0
        %v3509 = vadd.f32 %v3460, %v3508
        %v3510 = vpop.f32.mrf.mxu0
        %v3511 = vadd.f32 %v3462, %v3510
        %3512 = vmatmul.bf16.gmra.mxu0 %v645
        %v3513 = vpop.f32.mrf.mxu0
        %v3514 = vadd.f32 %v3465, %v3513
        %v3515 = vpop.f32.mrf.mxu0
        %v3516 = vadd.f32 %v3467, %v3515
        %3517 = vmatmul.bf16.gmra.mxu0 %v649
        %v3518 = vpop.f32.mrf.mxu0
        %v3519 = vadd.f32 %v3470, %v3518
        %v3520 = vpop.f32.mrf.mxu0
        %v3521 = vadd.f32 %v3472, %v3520
        %3522 = vmatmul.bf16.gmra.mxu0 %v653
        %v3523 = vpop.f32.mrf.mxu0
        %v3524 = vadd.f32 %v3475, %v3523
        %v3525 = vpop.f32.mrf.mxu0
        %v3526 = vadd.f32 %v3477, %v3525
        %3527 = vmatmul.bf16.gmra.mxu0 %v657
        %v3528 = vpop.f32.mrf.mxu0
        %v3529 = vadd.f32 %v3480, %v3528
        %v3530 = vpop.f32.mrf.mxu0
        %v3531 = vadd.f32 %v3482, %v3530
        %3532 = vmatmul.bf16.gmra.mxu0 %v661
        %v3533 = vpop.f32.mrf.mxu0
        %v3534 = vadd.f32 %v3485, %v3533
        %v3535 = vpop.f32.mrf.mxu0
        %v3536 = vadd.f32 %v3487, %v3535
        %3537 = vmatmul.bf16.gmra.mxu0 %v665
        %v3538 = vpop.f32.mrf.mxu0
        %v3539 = vadd.f32 %v3490, %v3538
        %v3540 = vpop.f32.mrf.mxu0
        %v3541 = vadd.f32 %v3492, %v3540
        %3542 = vmatmul.bf16.gmra.mxu0 %v669
        %v3543 = vpop.f32.mrf.mxu0
        %v3544 = vadd.f32 %v3495, %v3543
        %v3545 = vpop.f32.mrf.mxu0
        %v3546 = vadd.f32 %v3497, %v3545
        %3547 = vdwg.mxu0
        %3548 = vmatpush.bf16.msra.mxu0 %v1967
        %3549 = vmatpush.bf16.msra.mxu0 %v1959
        %3550 = vmatpush.bf16.msra.mxu0 %v1951
        %3551 = vmatpush.bf16.msra.mxu0 %v1943
        %3552 = vmatpush.bf16.msra.mxu0 %v1935
        %3553 = vmatpush.bf16.msra.mxu0 %v1927
        %3554 = vmatpush.bf16.msra.mxu0 %v1919
        %3555 = vmatpush.bf16.msra.mxu0 %v1911
        %3556 = vmatmul.bf16.gmra.mxu0 %v642
        %v3557 = vpop.f32.mrf.mxu0
        %v3558 = vadd.f32 %v3509, %v3557
        %v3559 = vpop.f32.mrf.mxu0
        %v3560 = vadd.f32 %v3511, %v3559
        %3561 = vmatmul.bf16.gmra.mxu0 %v646
        %v3562 = vpop.f32.mrf.mxu0
        %v3563 = vadd.f32 %v3514, %v3562
        %v3564 = vpop.f32.mrf.mxu0
        %v3565 = vadd.f32 %v3516, %v3564
        %3566 = vmatmul.bf16.gmra.mxu0 %v650
        %v3567 = vpop.f32.mrf.mxu0
        %v3568 = vadd.f32 %v3519, %v3567
        %v3569 = vpop.f32.mrf.mxu0
        %v3570 = vadd.f32 %v3521, %v3569
        %3571 = vmatmul.bf16.gmra.mxu0 %v654
        %v3572 = vpop.f32.mrf.mxu0
        %v3573 = vadd.f32 %v3524, %v3572
        %v3574 = vpop.f32.mrf.mxu0
        %v3575 = vadd.f32 %v3526, %v3574
        %3576 = vmatmul.bf16.gmra.mxu0 %v658
        %v3577 = vpop.f32.mrf.mxu0
        %v3578 = vadd.f32 %v3529, %v3577
        %v3579 = vpop.f32.mrf.mxu0
        %v3580 = vadd.f32 %v3531, %v3579
        %3581 = vmatmul.bf16.gmra.mxu0 %v662
        %v3582 = vpop.f32.mrf.mxu0
        %v3583 = vadd.f32 %v3534, %v3582
        %v3584 = vpop.f32.mrf.mxu0
        %v3585 = vadd.f32 %v3536, %v3584
        %3586 = vmatmul.bf16.gmra.mxu0 %v666
        %v3587 = vpop.f32.mrf.mxu0
        %v3588 = vadd.f32 %v3539, %v3587
        %v3589 = vpop.f32.mrf.mxu0
        %v3590 = vadd.f32 %v3541, %v3589
        %3591 = vmatmul.bf16.gmra.mxu0 %v670
        %v3592 = vpop.f32.mrf.mxu0
        %v3593 = vadd.f32 %v3544, %v3592
        %v3594 = vpop.f32.mrf.mxu0
        %v3595 = vadd.f32 %v3546, %v3594
        %3596 = vdwg.mxu0
        %3597 = vmatpush.bf16.msra.mxu0 %v1776
        %3598 = vmatpush.bf16.msra.mxu0 %v1768
        %3599 = vmatpush.bf16.msra.mxu0 %v1760
        %3600 = vmatpush.bf16.msra.mxu0 %v1752
        %3601 = vmatpush.bf16.msra.mxu0 %v1744
        %3602 = vmatpush.bf16.msra.mxu0 %v1736
        %3603 = vmatpush.bf16.msra.mxu0 %v1728
        %3604 = vmatpush.bf16.msra.mxu0 %v1720
        %3605 = vmatmul.bf16.gmra.mxu0 %v639
        %v3606 = vpop.f32.mrf.mxu0
        %v3607 = vadd.f32 %v936, %v3606
        %v3608 = vpop.f32.mrf.mxu0
        %v3609 = vadd.f32 %v936, %v3608
        %3610 = vmatmul.bf16.gmra.mxu0 %v643
        %v3611 = vpop.f32.mrf.mxu0
        %v3612 = vadd.f32 %v936, %v3611
        %v3613 = vpop.f32.mrf.mxu0
        %v3614 = vadd.f32 %v936, %v3613
        %3615 = vmatmul.bf16.gmra.mxu0 %v647
        %v3616 = vpop.f32.mrf.mxu0
        %v3617 = vadd.f32 %v936, %v3616
        %v3618 = vpop.f32.mrf.mxu0
        %v3619 = vadd.f32 %v936, %v3618
        %3620 = vmatmul.bf16.gmra.mxu0 %v651
        %v3621 = vpop.f32.mrf.mxu0
        %v3622 = vadd.f32 %v936, %v3621
        %v3623 = vpop.f32.mrf.mxu0
        %v3624 = vadd.f32 %v936, %v3623
        %3625 = vmatmul.bf16.gmra.mxu0 %v655
        %v3626 = vpop.f32.mrf.mxu0
        %v3627 = vadd.f32 %v936, %v3626
        %v3628 = vpop.f32.mrf.mxu0
        %v3629 = vadd.f32 %v936, %v3628
        %3630 = vmatmul.bf16.gmra.mxu0 %v659
        %v3631 = vpop.f32.mrf.mxu0
        %v3632 = vadd.f32 %v936, %v3631
        %v3633 = vpop.f32.mrf.mxu0
        %v3634 = vadd.f32 %v936, %v3633
        %3635 = vmatmul.bf16.gmra.mxu0 %v663
        %v3636 = vpop.f32.mrf.mxu0
        %v3637 = vadd.f32 %v936, %v3636
        %v3638 = vpop.f32.mrf.mxu0
        %v3639 = vadd.f32 %v936, %v3638
        %3640 = vmatmul.bf16.gmra.mxu0 %v667
        %v3641 = vpop.f32.mrf.mxu0
        %v3642 = vadd.f32 %v936, %v3641
        %v3643 = vpop.f32.mrf.mxu0
        %v3644 = vadd.f32 %v936, %v3643
        %3645 = vdwg.mxu0
        %3646 = vmatpush.bf16.msra.mxu0 %v1840
        %3647 = vmatpush.bf16.msra.mxu0 %v1832
        %3648 = vmatpush.bf16.msra.mxu0 %v1824
        %3649 = vmatpush.bf16.msra.mxu0 %v1816
        %3650 = vmatpush.bf16.msra.mxu0 %v1808
        %3651 = vmatpush.bf16.msra.mxu0 %v1800
        %3652 = vmatpush.bf16.msra.mxu0 %v1792
        %3653 = vmatpush.bf16.msra.mxu0 %v1784
        %3654 = vmatmul.bf16.gmra.mxu0 %v640
        %v3655 = vpop.f32.mrf.mxu0
        %v3656 = vadd.f32 %v3607, %v3655
        %v3657 = vpop.f32.mrf.mxu0
        %v3658 = vadd.f32 %v3609, %v3657
        %3659 = vmatmul.bf16.gmra.mxu0 %v644
        %v3660 = vpop.f32.mrf.mxu0
        %v3661 = vadd.f32 %v3612, %v3660
        %v3662 = vpop.f32.mrf.mxu0
        %v3663 = vadd.f32 %v3614, %v3662
        %3664 = vmatmul.bf16.gmra.mxu0 %v648
        %v3665 = vpop.f32.mrf.mxu0
        %v3666 = vadd.f32 %v3617, %v3665
        %v3667 = vpop.f32.mrf.mxu0
        %v3668 = vadd.f32 %v3619, %v3667
        %3669 = vmatmul.bf16.gmra.mxu0 %v652
        %v3670 = vpop.f32.mrf.mxu0
        %v3671 = vadd.f32 %v3622, %v3670
        %v3672 = vpop.f32.mrf.mxu0
        %v3673 = vadd.f32 %v3624, %v3672
        %3674 = vmatmul.bf16.gmra.mxu0 %v656
        %v3675 = vpop.f32.mrf.mxu0
        %v3676 = vadd.f32 %v3627, %v3675
        %v3677 = vpop.f32.mrf.mxu0
        %v3678 = vadd.f32 %v3629, %v3677
        %3679 = vmatmul.bf16.gmra.mxu0 %v660
        %v3680 = vpop.f32.mrf.mxu0
        %v3681 = vadd.f32 %v3632, %v3680
        %v3682 = vpop.f32.mrf.mxu0
        %v3683 = vadd.f32 %v3634, %v3682
        %3684 = vmatmul.bf16.gmra.mxu0 %v664
        %v3685 = vpop.f32.mrf.mxu0
        %v3686 = vadd.f32 %v3637, %v3685
        %v3687 = vpop.f32.mrf.mxu0
        %v3688 = vadd.f32 %v3639, %v3687
        %3689 = vmatmul.bf16.gmra.mxu0 %v668
        %v3690 = vpop.f32.mrf.mxu0
        %v3691 = vadd.f32 %v3642, %v3690
        %v3692 = vpop.f32.mrf.mxu0
        %v3693 = vadd.f32 %v3644, %v3692
        %3694 = vdwg.mxu0
        %3695 = vmatpush.bf16.msra.mxu0 %v1904
        %3696 = vmatpush.bf16.msra.mxu0 %v1896
        %3697 = vmatpush.bf16.msra.mxu0 %v1888
        %3698 = vmatpush.bf16.msra.mxu0 %v1880
        %3699 = vmatpush.bf16.msra.mxu0 %v1872
        %3700 = vmatpush.bf16.msra.mxu0 %v1864
        %3701 = vmatpush.bf16.msra.mxu0 %v1856
        %3702 = vmatpush.bf16.msra.mxu0 %v1848
        %3703 = vmatmul.bf16.gmra.mxu0 %v641
        %v3704 = vpop.f32.mrf.mxu0
        %v3705 = vadd.f32 %v3656, %v3704
        %v3706 = vpop.f32.mrf.mxu0
        %v3707 = vadd.f32 %v3658, %v3706
        %3708 = vmatmul.bf16.gmra.mxu0 %v645
        %v3709 = vpop.f32.mrf.mxu0
        %v3710 = vadd.f32 %v3661, %v3709
        %v3711 = vpop.f32.mrf.mxu0
        %v3712 = vadd.f32 %v3663, %v3711
        %3713 = vmatmul.bf16.gmra.mxu0 %v649
        %v3714 = vpop.f32.mrf.mxu0
        %v3715 = vadd.f32 %v3666, %v3714
        %v3716 = vpop.f32.mrf.mxu0
        %v3717 = vadd.f32 %v3668, %v3716
        %3718 = vmatmul.bf16.gmra.mxu0 %v653
        %v3719 = vpop.f32.mrf.mxu0
        %v3720 = vadd.f32 %v3671, %v3719
        %v3721 = vpop.f32.mrf.mxu0
        %v3722 = vadd.f32 %v3673, %v3721
        %3723 = vmatmul.bf16.gmra.mxu0 %v657
        %v3724 = vpop.f32.mrf.mxu0
        %v3725 = vadd.f32 %v3676, %v3724
        %v3726 = vpop.f32.mrf.mxu0
        %v3727 = vadd.f32 %v3678, %v3726
        %3728 = vmatmul.bf16.gmra.mxu0 %v661
        %v3729 = vpop.f32.mrf.mxu0
        %v3730 = vadd.f32 %v3681, %v3729
        %v3731 = vpop.f32.mrf.mxu0
        %v3732 = vadd.f32 %v3683, %v3731
        %3733 = vmatmul.bf16.gmra.mxu0 %v665
        %v3734 = vpop.f32.mrf.mxu0
        %v3735 = vadd.f32 %v3686, %v3734
        %v3736 = vpop.f32.mrf.mxu0
        %v3737 = vadd.f32 %v3688, %v3736
        %3738 = vmatmul.bf16.gmra.mxu0 %v669
        %v3739 = vpop.f32.mrf.mxu0
        %v3740 = vadd.f32 %v3691, %v3739
        %v3741 = vpop.f32.mrf.mxu0
        %v3742 = vadd.f32 %v3693, %v3741
        %3743 = vdwg.mxu0
        %3744 = vmatpush.bf16.msra.mxu0 %v1968
        %3745 = vmatpush.bf16.msra.mxu0 %v1960
        %3746 = vmatpush.bf16.msra.mxu0 %v1952
        %3747 = vmatpush.bf16.msra.mxu0 %v1944
        %3748 = vmatpush.bf16.msra.mxu0 %v1936
        %3749 = vmatpush.bf16.msra.mxu0 %v1928
        %3750 = vmatpush.bf16.msra.mxu0 %v1920
        %3751 = vmatpush.bf16.msra.mxu0 %v1912
        %3752 = vmatmul.bf16.gmra.mxu0 %v642
        %v3753 = vpop.f32.mrf.mxu0
        %v3754 = vadd.f32 %v3705, %v3753
        %v3755 = vpop.f32.mrf.mxu0
        %v3756 = vadd.f32 %v3707, %v3755
        %3757 = vmatmul.bf16.gmra.mxu0 %v646
        %v3758 = vpop.f32.mrf.mxu0
        %v3759 = vadd.f32 %v3710, %v3758
        %v3760 = vpop.f32.mrf.mxu0
        %v3761 = vadd.f32 %v3712, %v3760
        %3762 = vmatmul.bf16.gmra.mxu0 %v650
        %v3763 = vpop.f32.mrf.mxu0
        %v3764 = vadd.f32 %v3715, %v3763
        %v3765 = vpop.f32.mrf.mxu0
        %v3766 = vadd.f32 %v3717, %v3765
        %3767 = vmatmul.bf16.gmra.mxu0 %v654
        %v3768 = vpop.f32.mrf.mxu0
        %v3769 = vadd.f32 %v3720, %v3768
        %v3770 = vpop.f32.mrf.mxu0
        %v3771 = vadd.f32 %v3722, %v3770
        %3772 = vmatmul.bf16.gmra.mxu0 %v658
        %v3773 = vpop.f32.mrf.mxu0
        %v3774 = vadd.f32 %v3725, %v3773
        %v3775 = vpop.f32.mrf.mxu0
        %v3776 = vadd.f32 %v3727, %v3775
        %3777 = vmatmul.bf16.gmra.mxu0 %v662
        %v3778 = vpop.f32.mrf.mxu0
        %v3779 = vadd.f32 %v3730, %v3778
        %v3780 = vpop.f32.mrf.mxu0
        %v3781 = vadd.f32 %v3732, %v3780
        %3782 = vmatmul.bf16.gmra.mxu0 %v666
        %v3783 = vpop.f32.mrf.mxu0
        %v3784 = vadd.f32 %v3735, %v3783
        %v3785 = vpop.f32.mrf.mxu0
        %v3786 = vadd.f32 %v3737, %v3785
        %3787 = vmatmul.bf16.gmra.mxu0 %v670
        %v3788 = vpop.f32.mrf.mxu0
        %v3789 = vadd.f32 %v3740, %v3788
        %v3790 = vpop.f32.mrf.mxu0
        %v3791 = vadd.f32 %v3742, %v3790
        %3792 = vdwg.mxu0
        %v3793 = vmax.f32 %v2382, 0.0
        %v3794 = vmax.f32 %v2578, 0.0
        %v3795 = vmax.f32 %v2774, 0.0
        %v3796 = vmax.f32 %v2970, 0.0
        %v3797 = vmax.f32 %v3166, 0.0
        %v3798 = vmax.f32 %v3362, 0.0
        %v3799 = vmax.f32 %v3558, 0.0
        %v3800 = vmax.f32 %v3754, 0.0
        %v3801 = vmax.f32 %v2384, 0.0
        %v3802 = vmax.f32 %v2580, 0.0
        %v3803 = vmax.f32 %v2776, 0.0
        %v3804 = vmax.f32 %v2972, 0.0
        %v3805 = vmax.f32 %v3168, 0.0
        %v3806 = vmax.f32 %v3364, 0.0
        %v3807 = vmax.f32 %v3560, 0.0
        %v3808 = vmax.f32 %v3756, 0.0
        %v3809 = vmax.f32 %v2387, 0.0
        %v3810 = vmax.f32 %v2583, 0.0
        %v3811 = vmax.f32 %v2779, 0.0
        %v3812 = vmax.f32 %v2975, 0.0
        %v3813 = vmax.f32 %v3171, 0.0
        %v3814 = vmax.f32 %v3367, 0.0
        %v3815 = vmax.f32 %v3563, 0.0
        %v3816 = vmax.f32 %v3759, 0.0
        %v3817 = vmax.f32 %v2389, 0.0
        %v3818 = vmax.f32 %v2585, 0.0
        %v3819 = vmax.f32 %v2781, 0.0
        %v3820 = vmax.f32 %v2977, 0.0
        %v3821 = vmax.f32 %v3173, 0.0
        %v3822 = vmax.f32 %v3369, 0.0
        %v3823 = vmax.f32 %v3565, 0.0
        %v3824 = vmax.f32 %v3761, 0.0
        %v3825 = vmax.f32 %v2392, 0.0
        %v3826 = vmax.f32 %v2588, 0.0
        %v3827 = vmax.f32 %v2784, 0.0
        %v3828 = vmax.f32 %v2980, 0.0
        %v3829 = vmax.f32 %v3176, 0.0
        %v3830 = vmax.f32 %v3372, 0.0
        %v3831 = vmax.f32 %v3568, 0.0
        %v3832 = vmax.f32 %v3764, 0.0
        %v3833 = vmax.f32 %v2394, 0.0
        %v3834 = vmax.f32 %v2590, 0.0
        %v3835 = vmax.f32 %v2786, 0.0
        %v3836 = vmax.f32 %v2982, 0.0
        %v3837 = vmax.f32 %v3178, 0.0
        %v3838 = vmax.f32 %v3374, 0.0
        %v3839 = vmax.f32 %v3570, 0.0
        %v3840 = vmax.f32 %v3766, 0.0
        %v3841 = vmax.f32 %v2397, 0.0
        %v3842 = vmax.f32 %v2593, 0.0
        %v3843 = vmax.f32 %v2789, 0.0
        %v3844 = vmax.f32 %v2985, 0.0
        %v3845 = vmax.f32 %v3181, 0.0
        %v3846 = vmax.f32 %v3377, 0.0
        %v3847 = vmax.f32 %v3573, 0.0
        %v3848 = vmax.f32 %v3769, 0.0
        %v3849 = vmax.f32 %v2399, 0.0
        %v3850 = vmax.f32 %v2595, 0.0
        %v3851 = vmax.f32 %v2791, 0.0
        %v3852 = vmax.f32 %v2987, 0.0
        %v3853 = vmax.f32 %v3183, 0.0
        %v3854 = vmax.f32 %v3379, 0.0
        %v3855 = vmax.f32 %v3575, 0.0
        %v3856 = vmax.f32 %v3771, 0.0
        %v3857 = vmax.f32 %v2402, 0.0
        %v3858 = vmax.f32 %v2598, 0.0
        %v3859 = vmax.f32 %v2794, 0.0
        %v3860 = vmax.f32 %v2990, 0.0
        %v3861 = vmax.f32 %v3186, 0.0
        %v3862 = vmax.f32 %v3382, 0.0
        %v3863 = vmax.f32 %v3578, 0.0
        %v3864 = vmax.f32 %v3774, 0.0
        %v3865 = vmax.f32 %v2404, 0.0
        %v3866 = vmax.f32 %v2600, 0.0
        %v3867 = vmax.f32 %v2796, 0.0
        %v3868 = vmax.f32 %v2992, 0.0
        %v3869 = vmax.f32 %v3188, 0.0
        %v3870 = vmax.f32 %v3384, 0.0
        %v3871 = vmax.f32 %v3580, 0.0
        %v3872 = vmax.f32 %v3776, 0.0
        %v3873 = vmax.f32 %v2407, 0.0
        %v3874 = vmax.f32 %v2603, 0.0
        %v3875 = vmax.f32 %v2799, 0.0
        %v3876 = vmax.f32 %v2995, 0.0
        %v3877 = vmax.f32 %v3191, 0.0
        %v3878 = vmax.f32 %v3387, 0.0
        %v3879 = vmax.f32 %v3583, 0.0
        %v3880 = vmax.f32 %v3779, 0.0
        %v3881 = vmax.f32 %v2409, 0.0
        %v3882 = vmax.f32 %v2605, 0.0
        %v3883 = vmax.f32 %v2801, 0.0
        %v3884 = vmax.f32 %v2997, 0.0
        %v3885 = vmax.f32 %v3193, 0.0
        %v3886 = vmax.f32 %v3389, 0.0
        %v3887 = vmax.f32 %v3585, 0.0
        %v3888 = vmax.f32 %v3781, 0.0
        %v3889 = vmax.f32 %v2412, 0.0
        %v3890 = vmax.f32 %v2608, 0.0
        %v3891 = vmax.f32 %v2804, 0.0
        %v3892 = vmax.f32 %v3000, 0.0
        %v3893 = vmax.f32 %v3196, 0.0
        %v3894 = vmax.f32 %v3392, 0.0
        %v3895 = vmax.f32 %v3588, 0.0
        %v3896 = vmax.f32 %v3784, 0.0
        %v3897 = vmax.f32 %v2414, 0.0
        %v3898 = vmax.f32 %v2610, 0.0
        %v3899 = vmax.f32 %v2806, 0.0
        %v3900 = vmax.f32 %v3002, 0.0
        %v3901 = vmax.f32 %v3198, 0.0
        %v3902 = vmax.f32 %v3394, 0.0
        %v3903 = vmax.f32 %v3590, 0.0
        %v3904 = vmax.f32 %v3786, 0.0
        %v3905 = vmax.f32 %v2417, 0.0
        %v3906 = vmax.f32 %v2613, 0.0
        %v3907 = vmax.f32 %v2809, 0.0
        %v3908 = vmax.f32 %v3005, 0.0
        %v3909 = vmax.f32 %v3201, 0.0
        %v3910 = vmax.f32 %v3397, 0.0
        %v3911 = vmax.f32 %v3593, 0.0
        %v3912 = vmax.f32 %v3789, 0.0
        %v3913 = vmax.f32 %v2419, 0.0
        %v3914 = vmax.f32 %v2615, 0.0
        %v3915 = vmax.f32 %v2811, 0.0
        %v3916 = vmax.f32 %v3007, 0.0
        %v3917 = vmax.f32 %v3203, 0.0
        %v3918 = vmax.f32 %v3399, 0.0
        %v3919 = vmax.f32 %v3595, 0.0
        %v3920 = vmax.f32 %v3791, 0.0
        %v3921 = vpack.c.bf16 %v3801, %v3793
        %v3922 = vpack.c.bf16 %v3802, %v3794
        %v3923 = vpack.c.bf16 %v3803, %v3795
        %v3924 = vpack.c.bf16 %v3804, %v3796
        %v3925 = vpack.c.bf16 %v3805, %v3797
        %v3926 = vpack.c.bf16 %v3806, %v3798
        %v3927 = vpack.c.bf16 %v3807, %v3799
        %v3928 = vpack.c.bf16 %v3808, %v3800
        %v3929 = vpack.c.bf16 %v3817, %v3809
        %v3930 = vpack.c.bf16 %v3818, %v3810
        %v3931 = vpack.c.bf16 %v3819, %v3811
        %v3932 = vpack.c.bf16 %v3820, %v3812
        %v3933 = vpack.c.bf16 %v3821, %v3813
        %v3934 = vpack.c.bf16 %v3822, %v3814
        %v3935 = vpack.c.bf16 %v3823, %v3815
        %v3936 = vpack.c.bf16 %v3824, %v3816
        %v3937 = vpack.c.bf16 %v3833, %v3825
        %v3938 = vpack.c.bf16 %v3834, %v3826
        %v3939 = vpack.c.bf16 %v3835, %v3827
        %v3940 = vpack.c.bf16 %v3836, %v3828
        %v3941 = vpack.c.bf16 %v3837, %v3829
        %v3942 = vpack.c.bf16 %v3838, %v3830
        %v3943 = vpack.c.bf16 %v3839, %v3831
        %v3944 = vpack.c.bf16 %v3840, %v3832
        %v3945 = vpack.c.bf16 %v3849, %v3841
        %v3946 = vpack.c.bf16 %v3850, %v3842
        %v3947 = vpack.c.bf16 %v3851, %v3843
        %v3948 = vpack.c.bf16 %v3852, %v3844
        %v3949 = vpack.c.bf16 %v3853, %v3845
        %v3950 = vpack.c.bf16 %v3854, %v3846
        %v3951 = vpack.c.bf16 %v3855, %v3847
        %v3952 = vpack.c.bf16 %v3856, %v3848
        %v3953 = vpack.c.bf16 %v3865, %v3857
        %v3954 = vpack.c.bf16 %v3866, %v3858
        %v3955 = vpack.c.bf16 %v3867, %v3859
        %v3956 = vpack.c.bf16 %v3868, %v3860
        %v3957 = vpack.c.bf16 %v3869, %v3861
        %v3958 = vpack.c.bf16 %v3870, %v3862
        %v3959 = vpack.c.bf16 %v3871, %v3863
        %v3960 = vpack.c.bf16 %v3872, %v3864
        %v3961 = vpack.c.bf16 %v3881, %v3873
        %v3962 = vpack.c.bf16 %v3882, %v3874
        %v3963 = vpack.c.bf16 %v3883, %v3875
        %v3964 = vpack.c.bf16 %v3884, %v3876
        %v3965 = vpack.c.bf16 %v3885, %v3877
        %v3966 = vpack.c.bf16 %v3886, %v3878
        %v3967 = vpack.c.bf16 %v3887, %v3879
        %v3968 = vpack.c.bf16 %v3888, %v3880
        %v3969 = vpack.c.bf16 %v3897, %v3889
        %v3970 = vpack.c.bf16 %v3898, %v3890
        %v3971 = vpack.c.bf16 %v3899, %v3891
        %v3972 = vpack.c.bf16 %v3900, %v3892
        %v3973 = vpack.c.bf16 %v3901, %v3893
        %v3974 = vpack.c.bf16 %v3902, %v3894
        %v3975 = vpack.c.bf16 %v3903, %v3895
        %v3976 = vpack.c.bf16 %v3904, %v3896
        %v3977 = vpack.c.bf16 %v3913, %v3905
        %v3978 = vpack.c.bf16 %v3914, %v3906
        %v3979 = vpack.c.bf16 %v3915, %v3907
        %v3980 = vpack.c.bf16 %v3916, %v3908
        %v3981 = vpack.c.bf16 %v3917, %v3909
        %v3982 = vpack.c.bf16 %v3918, %v3910
        %v3983 = vpack.c.bf16 %v3919, %v3911
        %v3984 = vpack.c.bf16 %v3920, %v3912
        %v3985 = vld [vmem:[#allocation8] sm:$0xff]
        %v3986 = vld [vmem:[#allocation8 + $0x8] sm:$0xff]
        %v3987 = vld [vmem:[#allocation8 + $0x10] sm:$0xff]
        %v3988 = vld [vmem:[#allocation8 + $0x18] sm:$0xff]
        %v3989 = vld [vmem:[#allocation8 + $0x20] sm:$0xff]
        %v3990 = vld [vmem:[#allocation8 + $0x28] sm:$0xff]
        %v3991 = vld [vmem:[#allocation8 + $0x30] sm:$0xff]
        %v3992 = vld [vmem:[#allocation8 + $0x38] sm:$0xff]
        %v3993 = vld [vmem:[#allocation8 + $0x40] sm:$0xff]
        %v3994 = vld [vmem:[#allocation8 + $0x48] sm:$0xff]
        %v3995 = vld [vmem:[#allocation8 + $0x50] sm:$0xff]
        %v3996 = vld [vmem:[#allocation8 + $0x58] sm:$0xff]
        %v3997 = vld [vmem:[#allocation8 + $0x60] sm:$0xff]
        %v3998 = vld [vmem:[#allocation8 + $0x68] sm:$0xff]
        %v3999 = vld [vmem:[#allocation8 + $0x70] sm:$0xff]
        %v4000 = vld [vmem:[#allocation8 + $0x78] sm:$0xff]
        %v4001 = vld [vmem:[#allocation8 + $0x80] sm:$0xff]
        %v4002 = vld [vmem:[#allocation8 + $0x88] sm:$0xff]
        %v4003 = vld [vmem:[#allocation8 + $0x90] sm:$0xff]
        %v4004 = vld [vmem:[#allocation8 + $0x98] sm:$0xff]
        %v4005 = vld [vmem:[#allocation8 + $0xa0] sm:$0xff]
        %v4006 = vld [vmem:[#allocation8 + $0xa8] sm:$0xff]
        %v4007 = vld [vmem:[#allocation8 + $0xb0] sm:$0xff]
        %v4008 = vld [vmem:[#allocation8 + $0xb8] sm:$0xff]
        %v4009 = vld [vmem:[#allocation8 + $0xc0] sm:$0xff]
        %v4010 = vld [vmem:[#allocation8 + $0xc8] sm:$0xff]
        %v4011 = vld [vmem:[#allocation8 + $0xd0] sm:$0xff]
        %v4012 = vld [vmem:[#allocation8 + $0xd8] sm:$0xff]
        %v4013 = vld [vmem:[#allocation8 + $0xe0] sm:$0xff]
        %v4014 = vld [vmem:[#allocation8 + $0xe8] sm:$0xff]
        %v4015 = vld [vmem:[#allocation8 + $0xf0] sm:$0xff]
        %v4016 = vld [vmem:[#allocation8 + $0xf8] sm:$0xff]
        %v4017 = vld [vmem:[#allocation8 + $0x100] sm:$0xff]
        %v4018 = vld [vmem:[#allocation8 + $0x108] sm:$0xff]
        %v4019 = vld [vmem:[#allocation8 + $0x110] sm:$0xff]
        %v4020 = vld [vmem:[#allocation8 + $0x118] sm:$0xff]
        %v4021 = vld [vmem:[#allocation8 + $0x120] sm:$0xff]
        %v4022 = vld [vmem:[#allocation8 + $0x128] sm:$0xff]
        %v4023 = vld [vmem:[#allocation8 + $0x130] sm:$0xff]
        %v4024 = vld [vmem:[#allocation8 + $0x138] sm:$0xff]
        %v4025 = vld [vmem:[#allocation8 + $0x140] sm:$0xff]
        %v4026 = vld [vmem:[#allocation8 + $0x148] sm:$0xff]
        %v4027 = vld [vmem:[#allocation8 + $0x150] sm:$0xff]
        %v4028 = vld [vmem:[#allocation8 + $0x158] sm:$0xff]
        %v4029 = vld [vmem:[#allocation8 + $0x160] sm:$0xff]
        %v4030 = vld [vmem:[#allocation8 + $0x168] sm:$0xff]
        %v4031 = vld [vmem:[#allocation8 + $0x170] sm:$0xff]
        %v4032 = vld [vmem:[#allocation8 + $0x178] sm:$0xff]
        %v4033 = vld [vmem:[#allocation8 + $0x180] sm:$0xff]
        %v4034 = vld [vmem:[#allocation8 + $0x188] sm:$0xff]
        %v4035 = vld [vmem:[#allocation8 + $0x190] sm:$0xff]
        %v4036 = vld [vmem:[#allocation8 + $0x198] sm:$0xff]
        %v4037 = vld [vmem:[#allocation8 + $0x1a0] sm:$0xff]
        %v4038 = vld [vmem:[#allocation8 + $0x1a8] sm:$0xff]
        %v4039 = vld [vmem:[#allocation8 + $0x1b0] sm:$0xff]
        %v4040 = vld [vmem:[#allocation8 + $0x1b8] sm:$0xff]
        %v4041 = vld [vmem:[#allocation8 + $0x1c0] sm:$0xff]
        %v4042 = vld [vmem:[#allocation8 + $0x1c8] sm:$0xff]
        %v4043 = vld [vmem:[#allocation8 + $0x1d0] sm:$0xff]
        %v4044 = vld [vmem:[#allocation8 + $0x1d8] sm:$0xff]
        %v4045 = vld [vmem:[#allocation8 + $0x1e0] sm:$0xff]
        %v4046 = vld [vmem:[#allocation8 + $0x1e8] sm:$0xff]
        %v4047 = vld [vmem:[#allocation8 + $0x1f0] sm:$0xff]
        %v4048 = vld [vmem:[#allocation8 + $0x1f8] sm:$0xff]
        %v4049 = vld [vmem:[#allocation8 + $0x200] sm:$0xff]
        %v4050 = vld [vmem:[#allocation8 + $0x208] sm:$0xff]
        %v4051 = vld [vmem:[#allocation8 + $0x210] sm:$0xff]
        %v4052 = vld [vmem:[#allocation8 + $0x218] sm:$0xff]
        %v4053 = vld [vmem:[#allocation8 + $0x220] sm:$0xff]
        %v4054 = vld [vmem:[#allocation8 + $0x228] sm:$0xff]
        %v4055 = vld [vmem:[#allocation8 + $0x230] sm:$0xff]
        %v4056 = vld [vmem:[#allocation8 + $0x238] sm:$0xff]
        %v4057 = vld [vmem:[#allocation8 + $0x240] sm:$0xff]
        %v4058 = vld [vmem:[#allocation8 + $0x248] sm:$0xff]
        %v4059 = vld [vmem:[#allocation8 + $0x250] sm:$0xff]
        %v4060 = vld [vmem:[#allocation8 + $0x258] sm:$0xff]
        %v4061 = vld [vmem:[#allocation8 + $0x260] sm:$0xff]
        %v4062 = vld [vmem:[#allocation8 + $0x268] sm:$0xff]
        %v4063 = vld [vmem:[#allocation8 + $0x270] sm:$0xff]
        %v4064 = vld [vmem:[#allocation8 + $0x278] sm:$0xff]
        %v4065 = vld [vmem:[#allocation8 + $0x280] sm:$0xff]
        %v4066 = vld [vmem:[#allocation8 + $0x288] sm:$0xff]
        %v4067 = vld [vmem:[#allocation8 + $0x290] sm:$0xff]
        %v4068 = vld [vmem:[#allocation8 + $0x298] sm:$0xff]
        %v4069 = vld [vmem:[#allocation8 + $0x2a0] sm:$0xff]
        %v4070 = vld [vmem:[#allocation8 + $0x2a8] sm:$0xff]
        %v4071 = vld [vmem:[#allocation8 + $0x2b0] sm:$0xff]
        %v4072 = vld [vmem:[#allocation8 + $0x2b8] sm:$0xff]
        %v4073 = vld [vmem:[#allocation8 + $0x2c0] sm:$0xff]
        %v4074 = vld [vmem:[#allocation8 + $0x2c8] sm:$0xff]
        %v4075 = vld [vmem:[#allocation8 + $0x2d0] sm:$0xff]
        %v4076 = vld [vmem:[#allocation8 + $0x2d8] sm:$0xff]
        %v4077 = vld [vmem:[#allocation8 + $0x2e0] sm:$0xff]
        %v4078 = vld [vmem:[#allocation8 + $0x2e8] sm:$0xff]
        %v4079 = vld [vmem:[#allocation8 + $0x2f0] sm:$0xff]
        %v4080 = vld [vmem:[#allocation8 + $0x2f8] sm:$0xff]
        %v4081 = vld [vmem:[#allocation8 + $0x300] sm:$0xff]
        %v4082 = vld [vmem:[#allocation8 + $0x308] sm:$0xff]
        %v4083 = vld [vmem:[#allocation8 + $0x310] sm:$0xff]
        %v4084 = vld [vmem:[#allocation8 + $0x318] sm:$0xff]
        %v4085 = vld [vmem:[#allocation8 + $0x320] sm:$0xff]
        %v4086 = vld [vmem:[#allocation8 + $0x328] sm:$0xff]
        %v4087 = vld [vmem:[#allocation8 + $0x330] sm:$0xff]
        %v4088 = vld [vmem:[#allocation8 + $0x338] sm:$0xff]
        %v4089 = vld [vmem:[#allocation8 + $0x340] sm:$0xff]
        %v4090 = vld [vmem:[#allocation8 + $0x348] sm:$0xff]
        %v4091 = vld [vmem:[#allocation8 + $0x350] sm:$0xff]
        %v4092 = vld [vmem:[#allocation8 + $0x358] sm:$0xff]
        %v4093 = vld [vmem:[#allocation8 + $0x360] sm:$0xff]
        %v4094 = vld [vmem:[#allocation8 + $0x368] sm:$0xff]
        %v4095 = vld [vmem:[#allocation8 + $0x370] sm:$0xff]
        %v4096 = vld [vmem:[#allocation8 + $0x378] sm:$0xff]
        %v4097 = vld [vmem:[#allocation8 + $0x380] sm:$0xff]
        %v4098 = vld [vmem:[#allocation8 + $0x388] sm:$0xff]
        %v4099 = vld [vmem:[#allocation8 + $0x390] sm:$0xff]
        %v4100 = vld [vmem:[#allocation8 + $0x398] sm:$0xff]
        %v4101 = vld [vmem:[#allocation8 + $0x3a0] sm:$0xff]
        %v4102 = vld [vmem:[#allocation8 + $0x3a8] sm:$0xff]
        %v4103 = vld [vmem:[#allocation8 + $0x3b0] sm:$0xff]
        %v4104 = vld [vmem:[#allocation8 + $0x3b8] sm:$0xff]
        %v4105 = vld [vmem:[#allocation8 + $0x3c0] sm:$0xff]
        %v4106 = vld [vmem:[#allocation8 + $0x3c8] sm:$0xff]
        %v4107 = vld [vmem:[#allocation8 + $0x3d0] sm:$0xff]
        %v4108 = vld [vmem:[#allocation8 + $0x3d8] sm:$0xff]
        %v4109 = vld [vmem:[#allocation8 + $0x3e0] sm:$0xff]
        %v4110 = vld [vmem:[#allocation8 + $0x3e8] sm:$0xff]
        %v4111 = vld [vmem:[#allocation8 + $0x3f0] sm:$0xff]
        %v4112 = vld [vmem:[#allocation8 + $0x3f8] sm:$0xff]
        %v4113 = vld [vmem:[#allocation8 + $0x400] sm:$0xff]
        %v4114 = vld [vmem:[#allocation8 + $0x408] sm:$0xff]
        %v4115 = vld [vmem:[#allocation8 + $0x410] sm:$0xff]
        %v4116 = vld [vmem:[#allocation8 + $0x418] sm:$0xff]
        %v4117 = vld [vmem:[#allocation8 + $0x420] sm:$0xff]
        %v4118 = vld [vmem:[#allocation8 + $0x428] sm:$0xff]
        %v4119 = vld [vmem:[#allocation8 + $0x430] sm:$0xff]
        %v4120 = vld [vmem:[#allocation8 + $0x438] sm:$0xff]
        %v4121 = vld [vmem:[#allocation8 + $0x440] sm:$0xff]
        %v4122 = vld [vmem:[#allocation8 + $0x448] sm:$0xff]
        %v4123 = vld [vmem:[#allocation8 + $0x450] sm:$0xff]
        %v4124 = vld [vmem:[#allocation8 + $0x458] sm:$0xff]
        %v4125 = vld [vmem:[#allocation8 + $0x460] sm:$0xff]
        %v4126 = vld [vmem:[#allocation8 + $0x468] sm:$0xff]
        %v4127 = vld [vmem:[#allocation8 + $0x470] sm:$0xff]
        %v4128 = vld [vmem:[#allocation8 + $0x478] sm:$0xff]
        %v4129 = vld [vmem:[#allocation8 + $0x480] sm:$0xff]
        %v4130 = vld [vmem:[#allocation8 + $0x488] sm:$0xff]
        %v4131 = vld [vmem:[#allocation8 + $0x490] sm:$0xff]
        %v4132 = vld [vmem:[#allocation8 + $0x498] sm:$0xff]
        %v4133 = vld [vmem:[#allocation8 + $0x4a0] sm:$0xff]
        %v4134 = vld [vmem:[#allocation8 + $0x4a8] sm:$0xff]
        %v4135 = vld [vmem:[#allocation8 + $0x4b0] sm:$0xff]
        %v4136 = vld [vmem:[#allocation8 + $0x4b8] sm:$0xff]
        %v4137 = vld [vmem:[#allocation8 + $0x4c0] sm:$0xff]
        %v4138 = vld [vmem:[#allocation8 + $0x4c8] sm:$0xff]
        %v4139 = vld [vmem:[#allocation8 + $0x4d0] sm:$0xff]
        %v4140 = vld [vmem:[#allocation8 + $0x4d8] sm:$0xff]
        %v4141 = vld [vmem:[#allocation8 + $0x4e0] sm:$0xff]
        %v4142 = vld [vmem:[#allocation8 + $0x4e8] sm:$0xff]
        %v4143 = vld [vmem:[#allocation8 + $0x4f0] sm:$0xff]
        %v4144 = vld [vmem:[#allocation8 + $0x4f8] sm:$0xff]
        %v4145 = vld [vmem:[#allocation8 + $0x500] sm:$0xff]
        %v4146 = vld [vmem:[#allocation8 + $0x508] sm:$0xff]
        %v4147 = vld [vmem:[#allocation8 + $0x510] sm:$0xff]
        %v4148 = vld [vmem:[#allocation8 + $0x518] sm:$0xff]
        %v4149 = vld [vmem:[#allocation8 + $0x520] sm:$0xff]
        %v4150 = vld [vmem:[#allocation8 + $0x528] sm:$0xff]
        %v4151 = vld [vmem:[#allocation8 + $0x530] sm:$0xff]
        %v4152 = vld [vmem:[#allocation8 + $0x538] sm:$0xff]
        %v4153 = vld [vmem:[#allocation8 + $0x540] sm:$0xff]
        %v4154 = vld [vmem:[#allocation8 + $0x548] sm:$0xff]
        %v4155 = vld [vmem:[#allocation8 + $0x550] sm:$0xff]
        %v4156 = vld [vmem:[#allocation8 + $0x558] sm:$0xff]
        %v4157 = vld [vmem:[#allocation8 + $0x560] sm:$0xff]
        %v4158 = vld [vmem:[#allocation8 + $0x568] sm:$0xff]
        %v4159 = vld [vmem:[#allocation8 + $0x570] sm:$0xff]
        %v4160 = vld [vmem:[#allocation8 + $0x578] sm:$0xff]
        %v4161 = vld [vmem:[#allocation8 + $0x580] sm:$0xff]
        %v4162 = vld [vmem:[#allocation8 + $0x588] sm:$0xff]
        %v4163 = vld [vmem:[#allocation8 + $0x590] sm:$0xff]
        %v4164 = vld [vmem:[#allocation8 + $0x598] sm:$0xff]
        %v4165 = vld [vmem:[#allocation8 + $0x5a0] sm:$0xff]
        %v4166 = vld [vmem:[#allocation8 + $0x5a8] sm:$0xff]
        %v4167 = vld [vmem:[#allocation8 + $0x5b0] sm:$0xff]
        %v4168 = vld [vmem:[#allocation8 + $0x5b8] sm:$0xff]
        %v4169 = vld [vmem:[#allocation8 + $0x5c0] sm:$0xff]
        %v4170 = vld [vmem:[#allocation8 + $0x5c8] sm:$0xff]
        %v4171 = vld [vmem:[#allocation8 + $0x5d0] sm:$0xff]
        %v4172 = vld [vmem:[#allocation8 + $0x5d8] sm:$0xff]
        %v4173 = vld [vmem:[#allocation8 + $0x5e0] sm:$0xff]
        %v4174 = vld [vmem:[#allocation8 + $0x5e8] sm:$0xff]
        %v4175 = vld [vmem:[#allocation8 + $0x5f0] sm:$0xff]
        %v4176 = vld [vmem:[#allocation8 + $0x5f8] sm:$0xff]
        %v4177 = vld [vmem:[#allocation8 + $0x600] sm:$0xff]
        %v4178 = vld [vmem:[#allocation8 + $0x608] sm:$0xff]
        %v4179 = vld [vmem:[#allocation8 + $0x610] sm:$0xff]
        %v4180 = vld [vmem:[#allocation8 + $0x618] sm:$0xff]
        %v4181 = vld [vmem:[#allocation8 + $0x620] sm:$0xff]
        %v4182 = vld [vmem:[#allocation8 + $0x628] sm:$0xff]
        %v4183 = vld [vmem:[#allocation8 + $0x630] sm:$0xff]
        %v4184 = vld [vmem:[#allocation8 + $0x638] sm:$0xff]
        %v4185 = vld [vmem:[#allocation8 + $0x640] sm:$0xff]
        %v4186 = vld [vmem:[#allocation8 + $0x648] sm:$0xff]
        %v4187 = vld [vmem:[#allocation8 + $0x650] sm:$0xff]
        %v4188 = vld [vmem:[#allocation8 + $0x658] sm:$0xff]
        %v4189 = vld [vmem:[#allocation8 + $0x660] sm:$0xff]
        %v4190 = vld [vmem:[#allocation8 + $0x668] sm:$0xff]
        %v4191 = vld [vmem:[#allocation8 + $0x670] sm:$0xff]
        %v4192 = vld [vmem:[#allocation8 + $0x678] sm:$0xff]
        %v4193 = vld [vmem:[#allocation8 + $0x680] sm:$0xff]
        %v4194 = vld [vmem:[#allocation8 + $0x688] sm:$0xff]
        %v4195 = vld [vmem:[#allocation8 + $0x690] sm:$0xff]
        %v4196 = vld [vmem:[#allocation8 + $0x698] sm:$0xff]
        %v4197 = vld [vmem:[#allocation8 + $0x6a0] sm:$0xff]
        %v4198 = vld [vmem:[#allocation8 + $0x6a8] sm:$0xff]
        %v4199 = vld [vmem:[#allocation8 + $0x6b0] sm:$0xff]
        %v4200 = vld [vmem:[#allocation8 + $0x6b8] sm:$0xff]
        %v4201 = vld [vmem:[#allocation8 + $0x6c0] sm:$0xff]
        %v4202 = vld [vmem:[#allocation8 + $0x6c8] sm:$0xff]
        %v4203 = vld [vmem:[#allocation8 + $0x6d0] sm:$0xff]
        %v4204 = vld [vmem:[#allocation8 + $0x6d8] sm:$0xff]
        %v4205 = vld [vmem:[#allocation8 + $0x6e0] sm:$0xff]
        %v4206 = vld [vmem:[#allocation8 + $0x6e8] sm:$0xff]
        %v4207 = vld [vmem:[#allocation8 + $0x6f0] sm:$0xff]
        %v4208 = vld [vmem:[#allocation8 + $0x6f8] sm:$0xff]
        %v4209 = vld [vmem:[#allocation8 + $0x700] sm:$0xff]
        %v4210 = vld [vmem:[#allocation8 + $0x708] sm:$0xff]
        %v4211 = vld [vmem:[#allocation8 + $0x710] sm:$0xff]
        %v4212 = vld [vmem:[#allocation8 + $0x718] sm:$0xff]
        %v4213 = vld [vmem:[#allocation8 + $0x720] sm:$0xff]
        %v4214 = vld [vmem:[#allocation8 + $0x728] sm:$0xff]
        %v4215 = vld [vmem:[#allocation8 + $0x730] sm:$0xff]
        %v4216 = vld [vmem:[#allocation8 + $0x738] sm:$0xff]
        %v4217 = vld [vmem:[#allocation8 + $0x740] sm:$0xff]
        %v4218 = vld [vmem:[#allocation8 + $0x748] sm:$0xff]
        %v4219 = vld [vmem:[#allocation8 + $0x750] sm:$0xff]
        %v4220 = vld [vmem:[#allocation8 + $0x758] sm:$0xff]
        %v4221 = vld [vmem:[#allocation8 + $0x760] sm:$0xff]
        %v4222 = vld [vmem:[#allocation8 + $0x768] sm:$0xff]
        %v4223 = vld [vmem:[#allocation8 + $0x770] sm:$0xff]
        %v4224 = vld [vmem:[#allocation8 + $0x778] sm:$0xff]
        %v4225 = vld [vmem:[#allocation8 + $0x780] sm:$0xff]
        %v4226 = vld [vmem:[#allocation8 + $0x788] sm:$0xff]
        %v4227 = vld [vmem:[#allocation8 + $0x790] sm:$0xff]
        %v4228 = vld [vmem:[#allocation8 + $0x798] sm:$0xff]
        %v4229 = vld [vmem:[#allocation8 + $0x7a0] sm:$0xff]
        %v4230 = vld [vmem:[#allocation8 + $0x7a8] sm:$0xff]
        %v4231 = vld [vmem:[#allocation8 + $0x7b0] sm:$0xff]
        %v4232 = vld [vmem:[#allocation8 + $0x7b8] sm:$0xff]
        %v4233 = vld [vmem:[#allocation8 + $0x7c0] sm:$0xff]
        %v4234 = vld [vmem:[#allocation8 + $0x7c8] sm:$0xff]
        %v4235 = vld [vmem:[#allocation8 + $0x7d0] sm:$0xff]
        %v4236 = vld [vmem:[#allocation8 + $0x7d8] sm:$0xff]
        %v4237 = vld [vmem:[#allocation8 + $0x7e0] sm:$0xff]
        %v4238 = vld [vmem:[#allocation8 + $0x7e8] sm:$0xff]
        %v4239 = vld [vmem:[#allocation8 + $0x7f0] sm:$0xff]
        %v4240 = vld [vmem:[#allocation8 + $0x7f8] sm:$0xff]
        %v4241 = vld [vmem:[#allocation10] sm:$0xf]
        %v4243 = vperm.slane %v4241, 0
        %v4244 = vperm.slane %v4241, 1
        %v4245 = vperm.slane %v4241, 2
        %v4246 = vperm.slane %v4241, 3
        %v4507 = vunpack.c.l.b16 %v3985
        %v4508 = vunpack.c.h.b16 %v3985
        %v4509 = vunpack.c.l.b16 %v3986
        %v4510 = vunpack.c.h.b16 %v3986
        %v4511 = vunpack.c.l.b16 %v3987
        %v4512 = vunpack.c.h.b16 %v3987
        %v4513 = vunpack.c.l.b16 %v3988
        %v4514 = vunpack.c.h.b16 %v3988
        %v4515 = vunpack.c.l.b16 %v3989
        %v4516 = vunpack.c.h.b16 %v3989
        %v4517 = vunpack.c.l.b16 %v3990
        %v4518 = vunpack.c.h.b16 %v3990
        %v4519 = vunpack.c.l.b16 %v3991
        %v4520 = vunpack.c.h.b16 %v3991
        %v4521 = vunpack.c.l.b16 %v3992
        %v4522 = vunpack.c.h.b16 %v3992
        %v4523 = vunpack.c.l.b16 %v3993
        %v4524 = vunpack.c.h.b16 %v3993
        %v4525 = vunpack.c.l.b16 %v3994
        %v4526 = vunpack.c.h.b16 %v3994
        %v4527 = vunpack.c.l.b16 %v3995
        %v4528 = vunpack.c.h.b16 %v3995
        %v4529 = vunpack.c.l.b16 %v3996
        %v4530 = vunpack.c.h.b16 %v3996
        %v4531 = vunpack.c.l.b16 %v3997
        %v4532 = vunpack.c.h.b16 %v3997
        %v4533 = vunpack.c.l.b16 %v3998
        %v4534 = vunpack.c.h.b16 %v3998
        %v4535 = vunpack.c.l.b16 %v3999
        %v4536 = vunpack.c.h.b16 %v3999
        %v4537 = vunpack.c.l.b16 %v4000
        %v4538 = vunpack.c.h.b16 %v4000
        %v4539 = vunpack.c.l.b16 %v4001
        %v4540 = vunpack.c.h.b16 %v4001
        %v4541 = vunpack.c.l.b16 %v4002
        %v4542 = vunpack.c.h.b16 %v4002
        %v4543 = vunpack.c.l.b16 %v4003
        %v4544 = vunpack.c.h.b16 %v4003
        %v4545 = vunpack.c.l.b16 %v4004
        %v4546 = vunpack.c.h.b16 %v4004
        %v4547 = vunpack.c.l.b16 %v4005
        %v4548 = vunpack.c.h.b16 %v4005
        %v4549 = vunpack.c.l.b16 %v4006
        %v4550 = vunpack.c.h.b16 %v4006
        %v4551 = vunpack.c.l.b16 %v4007
        %v4552 = vunpack.c.h.b16 %v4007
        %v4553 = vunpack.c.l.b16 %v4008
        %v4554 = vunpack.c.h.b16 %v4008
        %v4555 = vunpack.c.l.b16 %v4009
        %v4556 = vunpack.c.h.b16 %v4009
        %v4557 = vunpack.c.l.b16 %v4010
        %v4558 = vunpack.c.h.b16 %v4010
        %v4559 = vunpack.c.l.b16 %v4011
        %v4560 = vunpack.c.h.b16 %v4011
        %v4561 = vunpack.c.l.b16 %v4012
        %v4562 = vunpack.c.h.b16 %v4012
        %v4563 = vunpack.c.l.b16 %v4013
        %v4564 = vunpack.c.h.b16 %v4013
        %v4565 = vunpack.c.l.b16 %v4014
        %v4566 = vunpack.c.h.b16 %v4014
        %v4567 = vunpack.c.l.b16 %v4015
        %v4568 = vunpack.c.h.b16 %v4015
        %v4569 = vunpack.c.l.b16 %v4016
        %v4570 = vunpack.c.h.b16 %v4016
        %v4571 = vunpack.c.l.b16 %v4017
        %v4572 = vunpack.c.h.b16 %v4017
        %v4573 = vunpack.c.l.b16 %v4018
        %v4574 = vunpack.c.h.b16 %v4018
        %v4575 = vunpack.c.l.b16 %v4019
        %v4576 = vunpack.c.h.b16 %v4019
        %v4577 = vunpack.c.l.b16 %v4020
        %v4578 = vunpack.c.h.b16 %v4020
        %v4579 = vunpack.c.l.b16 %v4021
        %v4580 = vunpack.c.h.b16 %v4021
        %v4581 = vunpack.c.l.b16 %v4022
        %v4582 = vunpack.c.h.b16 %v4022
        %v4583 = vunpack.c.l.b16 %v4023
        %v4584 = vunpack.c.h.b16 %v4023
        %v4585 = vunpack.c.l.b16 %v4024
        %v4586 = vunpack.c.h.b16 %v4024
        %v4587 = vunpack.c.l.b16 %v4025
        %v4588 = vunpack.c.h.b16 %v4025
        %v4589 = vunpack.c.l.b16 %v4026
        %v4590 = vunpack.c.h.b16 %v4026
        %v4591 = vunpack.c.l.b16 %v4027
        %v4592 = vunpack.c.h.b16 %v4027
        %v4593 = vunpack.c.l.b16 %v4028
        %v4594 = vunpack.c.h.b16 %v4028
        %v4595 = vunpack.c.l.b16 %v4029
        %v4596 = vunpack.c.h.b16 %v4029
        %v4597 = vunpack.c.l.b16 %v4030
        %v4598 = vunpack.c.h.b16 %v4030
        %v4599 = vunpack.c.l.b16 %v4031
        %v4600 = vunpack.c.h.b16 %v4031
        %v4601 = vunpack.c.l.b16 %v4032
        %v4602 = vunpack.c.h.b16 %v4032
        %v4603 = vunpack.c.l.b16 %v4033
        %v4604 = vunpack.c.h.b16 %v4033
        %v4605 = vunpack.c.l.b16 %v4034
        %v4606 = vunpack.c.h.b16 %v4034
        %v4607 = vunpack.c.l.b16 %v4035
        %v4608 = vunpack.c.h.b16 %v4035
        %v4609 = vunpack.c.l.b16 %v4036
        %v4610 = vunpack.c.h.b16 %v4036
        %v4611 = vunpack.c.l.b16 %v4037
        %v4612 = vunpack.c.h.b16 %v4037
        %v4613 = vunpack.c.l.b16 %v4038
        %v4614 = vunpack.c.h.b16 %v4038
        %v4615 = vunpack.c.l.b16 %v4039
        %v4616 = vunpack.c.h.b16 %v4039
        %v4617 = vunpack.c.l.b16 %v4040
        %v4618 = vunpack.c.h.b16 %v4040
        %v4619 = vunpack.c.l.b16 %v4041
        %v4620 = vunpack.c.h.b16 %v4041
        %v4621 = vunpack.c.l.b16 %v4042
        %v4622 = vunpack.c.h.b16 %v4042
        %v4623 = vunpack.c.l.b16 %v4043
        %v4624 = vunpack.c.h.b16 %v4043
        %v4625 = vunpack.c.l.b16 %v4044
        %v4626 = vunpack.c.h.b16 %v4044
        %v4627 = vunpack.c.l.b16 %v4045
        %v4628 = vunpack.c.h.b16 %v4045
        %v4629 = vunpack.c.l.b16 %v4046
        %v4630 = vunpack.c.h.b16 %v4046
        %v4631 = vunpack.c.l.b16 %v4047
        %v4632 = vunpack.c.h.b16 %v4047
        %v4633 = vunpack.c.l.b16 %v4048
        %v4634 = vunpack.c.h.b16 %v4048
        %v4635 = vunpack.c.l.b16 %v4049
        %v4636 = vunpack.c.h.b16 %v4049
        %v4637 = vunpack.c.l.b16 %v4050
        %v4638 = vunpack.c.h.b16 %v4050
        %v4639 = vunpack.c.l.b16 %v4051
        %v4640 = vunpack.c.h.b16 %v4051
        %v4641 = vunpack.c.l.b16 %v4052
        %v4642 = vunpack.c.h.b16 %v4052
        %v4643 = vunpack.c.l.b16 %v4053
        %v4644 = vunpack.c.h.b16 %v4053
        %v4645 = vunpack.c.l.b16 %v4054
        %v4646 = vunpack.c.h.b16 %v4054
        %v4647 = vunpack.c.l.b16 %v4055
        %v4648 = vunpack.c.h.b16 %v4055
        %v4649 = vunpack.c.l.b16 %v4056
        %v4650 = vunpack.c.h.b16 %v4056
        %v4651 = vunpack.c.l.b16 %v4057
        %v4652 = vunpack.c.h.b16 %v4057
        %v4653 = vunpack.c.l.b16 %v4058
        %v4654 = vunpack.c.h.b16 %v4058
        %v4655 = vunpack.c.l.b16 %v4059
        %v4656 = vunpack.c.h.b16 %v4059
        %v4657 = vunpack.c.l.b16 %v4060
        %v4658 = vunpack.c.h.b16 %v4060
        %v4659 = vunpack.c.l.b16 %v4061
        %v4660 = vunpack.c.h.b16 %v4061
        %v4661 = vunpack.c.l.b16 %v4062
        %v4662 = vunpack.c.h.b16 %v4062
        %v4663 = vunpack.c.l.b16 %v4063
        %v4664 = vunpack.c.h.b16 %v4063
        %v4665 = vunpack.c.l.b16 %v4064
        %v4666 = vunpack.c.h.b16 %v4064
        %v4667 = vunpack.c.l.b16 %v4065
        %v4668 = vunpack.c.h.b16 %v4065
        %v4669 = vunpack.c.l.b16 %v4066
        %v4670 = vunpack.c.h.b16 %v4066
        %v4671 = vunpack.c.l.b16 %v4067
        %v4672 = vunpack.c.h.b16 %v4067
        %v4673 = vunpack.c.l.b16 %v4068
        %v4674 = vunpack.c.h.b16 %v4068
        %v4675 = vunpack.c.l.b16 %v4069
        %v4676 = vunpack.c.h.b16 %v4069
        %v4677 = vunpack.c.l.b16 %v4070
        %v4678 = vunpack.c.h.b16 %v4070
        %v4679 = vunpack.c.l.b16 %v4071
        %v4680 = vunpack.c.h.b16 %v4071
        %v4681 = vunpack.c.l.b16 %v4072
        %v4682 = vunpack.c.h.b16 %v4072
        %v4683 = vunpack.c.l.b16 %v4073
        %v4684 = vunpack.c.h.b16 %v4073
        %v4685 = vunpack.c.l.b16 %v4074
        %v4686 = vunpack.c.h.b16 %v4074
        %v4687 = vunpack.c.l.b16 %v4075
        %v4688 = vunpack.c.h.b16 %v4075
        %v4689 = vunpack.c.l.b16 %v4076
        %v4690 = vunpack.c.h.b16 %v4076
        %v4691 = vunpack.c.l.b16 %v4077
        %v4692 = vunpack.c.h.b16 %v4077
        %v4693 = vunpack.c.l.b16 %v4078
        %v4694 = vunpack.c.h.b16 %v4078
        %v4695 = vunpack.c.l.b16 %v4079
        %v4696 = vunpack.c.h.b16 %v4079
        %v4697 = vunpack.c.l.b16 %v4080
        %v4698 = vunpack.c.h.b16 %v4080
        %v4699 = vunpack.c.l.b16 %v4081
        %v4700 = vunpack.c.h.b16 %v4081
        %v4701 = vunpack.c.l.b16 %v4082
        %v4702 = vunpack.c.h.b16 %v4082
        %v4703 = vunpack.c.l.b16 %v4083
        %v4704 = vunpack.c.h.b16 %v4083
        %v4705 = vunpack.c.l.b16 %v4084
        %v4706 = vunpack.c.h.b16 %v4084
        %v4707 = vunpack.c.l.b16 %v4085
        %v4708 = vunpack.c.h.b16 %v4085
        %v4709 = vunpack.c.l.b16 %v4086
        %v4710 = vunpack.c.h.b16 %v4086
        %v4711 = vunpack.c.l.b16 %v4087
        %v4712 = vunpack.c.h.b16 %v4087
        %v4713 = vunpack.c.l.b16 %v4088
        %v4714 = vunpack.c.h.b16 %v4088
        %v4715 = vunpack.c.l.b16 %v4089
        %v4716 = vunpack.c.h.b16 %v4089
        %v4717 = vunpack.c.l.b16 %v4090
        %v4718 = vunpack.c.h.b16 %v4090
        %v4719 = vunpack.c.l.b16 %v4091
        %v4720 = vunpack.c.h.b16 %v4091
        %v4721 = vunpack.c.l.b16 %v4092
        %v4722 = vunpack.c.h.b16 %v4092
        %v4723 = vunpack.c.l.b16 %v4093
        %v4724 = vunpack.c.h.b16 %v4093
        %v4725 = vunpack.c.l.b16 %v4094
        %v4726 = vunpack.c.h.b16 %v4094
        %v4727 = vunpack.c.l.b16 %v4095
        %v4728 = vunpack.c.h.b16 %v4095
        %v4729 = vunpack.c.l.b16 %v4096
        %v4730 = vunpack.c.h.b16 %v4096
        %v4731 = vunpack.c.l.b16 %v4097
        %v4732 = vunpack.c.h.b16 %v4097
        %v4733 = vunpack.c.l.b16 %v4098
        %v4734 = vunpack.c.h.b16 %v4098
        %v4735 = vunpack.c.l.b16 %v4099
        %v4736 = vunpack.c.h.b16 %v4099
        %v4737 = vunpack.c.l.b16 %v4100
        %v4738 = vunpack.c.h.b16 %v4100
        %v4739 = vunpack.c.l.b16 %v4101
        %v4740 = vunpack.c.h.b16 %v4101
        %v4741 = vunpack.c.l.b16 %v4102
        %v4742 = vunpack.c.h.b16 %v4102
        %v4743 = vunpack.c.l.b16 %v4103
        %v4744 = vunpack.c.h.b16 %v4103
        %v4745 = vunpack.c.l.b16 %v4104
        %v4746 = vunpack.c.h.b16 %v4104
        %v4747 = vunpack.c.l.b16 %v4105
        %v4748 = vunpack.c.h.b16 %v4105
        %v4749 = vunpack.c.l.b16 %v4106
        %v4750 = vunpack.c.h.b16 %v4106
        %v4751 = vunpack.c.l.b16 %v4107
        %v4752 = vunpack.c.h.b16 %v4107
        %v4753 = vunpack.c.l.b16 %v4108
        %v4754 = vunpack.c.h.b16 %v4108
        %v4755 = vunpack.c.l.b16 %v4109
        %v4756 = vunpack.c.h.b16 %v4109
        %v4757 = vunpack.c.l.b16 %v4110
        %v4758 = vunpack.c.h.b16 %v4110
        %v4759 = vunpack.c.l.b16 %v4111
        %v4760 = vunpack.c.h.b16 %v4111
        %v4761 = vunpack.c.l.b16 %v4112
        %v4762 = vunpack.c.h.b16 %v4112
        %v4763 = vunpack.c.l.b16 %v4113
        %v4764 = vunpack.c.h.b16 %v4113
        %v4765 = vunpack.c.l.b16 %v4114
        %v4766 = vunpack.c.h.b16 %v4114
        %v4767 = vunpack.c.l.b16 %v4115
        %v4768 = vunpack.c.h.b16 %v4115
        %v4769 = vunpack.c.l.b16 %v4116
        %v4770 = vunpack.c.h.b16 %v4116
        %v4771 = vunpack.c.l.b16 %v4117
        %v4772 = vunpack.c.h.b16 %v4117
        %v4773 = vunpack.c.l.b16 %v4118
        %v4774 = vunpack.c.h.b16 %v4118
        %v4775 = vunpack.c.l.b16 %v4119
        %v4776 = vunpack.c.h.b16 %v4119
        %v4777 = vunpack.c.l.b16 %v4120
        %v4778 = vunpack.c.h.b16 %v4120
        %v4779 = vunpack.c.l.b16 %v4121
        %v4780 = vunpack.c.h.b16 %v4121
        %v4781 = vunpack.c.l.b16 %v4122
        %v4782 = vunpack.c.h.b16 %v4122
        %v4783 = vunpack.c.l.b16 %v4123
        %v4784 = vunpack.c.h.b16 %v4123
        %v4785 = vunpack.c.l.b16 %v4124
        %v4786 = vunpack.c.h.b16 %v4124
        %v4787 = vunpack.c.l.b16 %v4125
        %v4788 = vunpack.c.h.b16 %v4125
        %v4789 = vunpack.c.l.b16 %v4126
        %v4790 = vunpack.c.h.b16 %v4126
        %v4791 = vunpack.c.l.b16 %v4127
        %v4792 = vunpack.c.h.b16 %v4127
        %v4793 = vunpack.c.l.b16 %v4128
        %v4794 = vunpack.c.h.b16 %v4128
        %v4795 = vunpack.c.l.b16 %v4129
        %v4796 = vunpack.c.h.b16 %v4129
        %v4797 = vunpack.c.l.b16 %v4130
        %v4798 = vunpack.c.h.b16 %v4130
        %v4799 = vunpack.c.l.b16 %v4131
        %v4800 = vunpack.c.h.b16 %v4131
        %v4801 = vunpack.c.l.b16 %v4132
        %v4802 = vunpack.c.h.b16 %v4132
        %v4803 = vunpack.c.l.b16 %v4133
        %v4804 = vunpack.c.h.b16 %v4133
        %v4805 = vunpack.c.l.b16 %v4134
        %v4806 = vunpack.c.h.b16 %v4134
        %v4807 = vunpack.c.l.b16 %v4135
        %v4808 = vunpack.c.h.b16 %v4135
        %v4809 = vunpack.c.l.b16 %v4136
        %v4810 = vunpack.c.h.b16 %v4136
        %v4811 = vunpack.c.l.b16 %v4137
        %v4812 = vunpack.c.h.b16 %v4137
        %v4813 = vunpack.c.l.b16 %v4138
        %v4814 = vunpack.c.h.b16 %v4138
        %v4815 = vunpack.c.l.b16 %v4139
        %v4816 = vunpack.c.h.b16 %v4139
        %v4817 = vunpack.c.l.b16 %v4140
        %v4818 = vunpack.c.h.b16 %v4140
        %v4819 = vunpack.c.l.b16 %v4141
        %v4820 = vunpack.c.h.b16 %v4141
        %v4821 = vunpack.c.l.b16 %v4142
        %v4822 = vunpack.c.h.b16 %v4142
        %v4823 = vunpack.c.l.b16 %v4143
        %v4824 = vunpack.c.h.b16 %v4143
        %v4825 = vunpack.c.l.b16 %v4144
        %v4826 = vunpack.c.h.b16 %v4144
        %v4827 = vunpack.c.l.b16 %v4145
        %v4828 = vunpack.c.h.b16 %v4145
        %v4829 = vunpack.c.l.b16 %v4146
        %v4830 = vunpack.c.h.b16 %v4146
        %v4831 = vunpack.c.l.b16 %v4147
        %v4832 = vunpack.c.h.b16 %v4147
        %v4833 = vunpack.c.l.b16 %v4148
        %v4834 = vunpack.c.h.b16 %v4148
        %v4835 = vunpack.c.l.b16 %v4149
        %v4836 = vunpack.c.h.b16 %v4149
        %v4837 = vunpack.c.l.b16 %v4150
        %v4838 = vunpack.c.h.b16 %v4150
        %v4839 = vunpack.c.l.b16 %v4151
        %v4840 = vunpack.c.h.b16 %v4151
        %v4841 = vunpack.c.l.b16 %v4152
        %v4842 = vunpack.c.h.b16 %v4152
        %v4843 = vunpack.c.l.b16 %v4153
        %v4844 = vunpack.c.h.b16 %v4153
        %v4845 = vunpack.c.l.b16 %v4154
        %v4846 = vunpack.c.h.b16 %v4154
        %v4847 = vunpack.c.l.b16 %v4155
        %v4848 = vunpack.c.h.b16 %v4155
        %v4849 = vunpack.c.l.b16 %v4156
        %v4850 = vunpack.c.h.b16 %v4156
        %v4851 = vunpack.c.l.b16 %v4157
        %v4852 = vunpack.c.h.b16 %v4157
        %v4853 = vunpack.c.l.b16 %v4158
        %v4854 = vunpack.c.h.b16 %v4158
        %v4855 = vunpack.c.l.b16 %v4159
        %v4856 = vunpack.c.h.b16 %v4159
        %v4857 = vunpack.c.l.b16 %v4160
        %v4858 = vunpack.c.h.b16 %v4160
        %v4859 = vunpack.c.l.b16 %v4161
        %v4860 = vunpack.c.h.b16 %v4161
        %v4861 = vunpack.c.l.b16 %v4162
        %v4862 = vunpack.c.h.b16 %v4162
        %v4863 = vunpack.c.l.b16 %v4163
        %v4864 = vunpack.c.h.b16 %v4163
        %v4865 = vunpack.c.l.b16 %v4164
        %v4866 = vunpack.c.h.b16 %v4164
        %v4867 = vunpack.c.l.b16 %v4165
        %v4868 = vunpack.c.h.b16 %v4165
        %v4869 = vunpack.c.l.b16 %v4166
        %v4870 = vunpack.c.h.b16 %v4166
        %v4871 = vunpack.c.l.b16 %v4167
        %v4872 = vunpack.c.h.b16 %v4167
        %v4873 = vunpack.c.l.b16 %v4168
        %v4874 = vunpack.c.h.b16 %v4168
        %v4875 = vunpack.c.l.b16 %v4169
        %v4876 = vunpack.c.h.b16 %v4169
        %v4877 = vunpack.c.l.b16 %v4170
        %v4878 = vunpack.c.h.b16 %v4170
        %v4879 = vunpack.c.l.b16 %v4171
        %v4880 = vunpack.c.h.b16 %v4171
        %v4881 = vunpack.c.l.b16 %v4172
        %v4882 = vunpack.c.h.b16 %v4172
        %v4883 = vunpack.c.l.b16 %v4173
        %v4884 = vunpack.c.h.b16 %v4173
        %v4885 = vunpack.c.l.b16 %v4174
        %v4886 = vunpack.c.h.b16 %v4174
        %v4887 = vunpack.c.l.b16 %v4175
        %v4888 = vunpack.c.h.b16 %v4175
        %v4889 = vunpack.c.l.b16 %v4176
        %v4890 = vunpack.c.h.b16 %v4176
        %v4891 = vunpack.c.l.b16 %v4177
        %v4892 = vunpack.c.h.b16 %v4177
        %v4893 = vunpack.c.l.b16 %v4178
        %v4894 = vunpack.c.h.b16 %v4178
        %v4895 = vunpack.c.l.b16 %v4179
        %v4896 = vunpack.c.h.b16 %v4179
        %v4897 = vunpack.c.l.b16 %v4180
        %v4898 = vunpack.c.h.b16 %v4180
        %v4899 = vunpack.c.l.b16 %v4181
        %v4900 = vunpack.c.h.b16 %v4181
        %v4901 = vunpack.c.l.b16 %v4182
        %v4902 = vunpack.c.h.b16 %v4182
        %v4903 = vunpack.c.l.b16 %v4183
        %v4904 = vunpack.c.h.b16 %v4183
        %v4905 = vunpack.c.l.b16 %v4184
        %v4906 = vunpack.c.h.b16 %v4184
        %v4907 = vunpack.c.l.b16 %v4185
        %v4908 = vunpack.c.h.b16 %v4185
        %v4909 = vunpack.c.l.b16 %v4186
        %v4910 = vunpack.c.h.b16 %v4186
        %v4911 = vunpack.c.l.b16 %v4187
        %v4912 = vunpack.c.h.b16 %v4187
        %v4913 = vunpack.c.l.b16 %v4188
        %v4914 = vunpack.c.h.b16 %v4188
        %v4915 = vunpack.c.l.b16 %v4189
        %v4916 = vunpack.c.h.b16 %v4189
        %v4917 = vunpack.c.l.b16 %v4190
        %v4918 = vunpack.c.h.b16 %v4190
        %v4919 = vunpack.c.l.b16 %v4191
        %v4920 = vunpack.c.h.b16 %v4191
        %v4921 = vunpack.c.l.b16 %v4192
        %v4922 = vunpack.c.h.b16 %v4192
        %v4923 = vunpack.c.l.b16 %v4193
        %v4924 = vunpack.c.h.b16 %v4193
        %v4925 = vunpack.c.l.b16 %v4194
        %v4926 = vunpack.c.h.b16 %v4194
        %v4927 = vunpack.c.l.b16 %v4195
        %v4928 = vunpack.c.h.b16 %v4195
        %v4929 = vunpack.c.l.b16 %v4196
        %v4930 = vunpack.c.h.b16 %v4196
        %v4931 = vunpack.c.l.b16 %v4197
        %v4932 = vunpack.c.h.b16 %v4197
        %v4933 = vunpack.c.l.b16 %v4198
        %v4934 = vunpack.c.h.b16 %v4198
        %v4935 = vunpack.c.l.b16 %v4199
        %v4936 = vunpack.c.h.b16 %v4199
        %v4937 = vunpack.c.l.b16 %v4200
        %v4938 = vunpack.c.h.b16 %v4200
        %v4939 = vunpack.c.l.b16 %v4201
        %v4940 = vunpack.c.h.b16 %v4201
        %v4941 = vunpack.c.l.b16 %v4202
        %v4942 = vunpack.c.h.b16 %v4202
        %v4943 = vunpack.c.l.b16 %v4203
        %v4944 = vunpack.c.h.b16 %v4203
        %v4945 = vunpack.c.l.b16 %v4204
        %v4946 = vunpack.c.h.b16 %v4204
        %v4947 = vunpack.c.l.b16 %v4205
        %v4948 = vunpack.c.h.b16 %v4205
        %v4949 = vunpack.c.l.b16 %v4206
        %v4950 = vunpack.c.h.b16 %v4206
        %v4951 = vunpack.c.l.b16 %v4207
        %v4952 = vunpack.c.h.b16 %v4207
        %v4953 = vunpack.c.l.b16 %v4208
        %v4954 = vunpack.c.h.b16 %v4208
        %v4955 = vunpack.c.l.b16 %v4209
        %v4956 = vunpack.c.h.b16 %v4209
        %v4957 = vunpack.c.l.b16 %v4210
        %v4958 = vunpack.c.h.b16 %v4210
        %v4959 = vunpack.c.l.b16 %v4211
        %v4960 = vunpack.c.h.b16 %v4211
        %v4961 = vunpack.c.l.b16 %v4212
        %v4962 = vunpack.c.h.b16 %v4212
        %v4963 = vunpack.c.l.b16 %v4213
        %v4964 = vunpack.c.h.b16 %v4213
        %v4965 = vunpack.c.l.b16 %v4214
        %v4966 = vunpack.c.h.b16 %v4214
        %v4967 = vunpack.c.l.b16 %v4215
        %v4968 = vunpack.c.h.b16 %v4215
        %v4969 = vunpack.c.l.b16 %v4216
        %v4970 = vunpack.c.h.b16 %v4216
        %v4971 = vunpack.c.l.b16 %v4217
        %v4972 = vunpack.c.h.b16 %v4217
        %v4973 = vunpack.c.l.b16 %v4218
        %v4974 = vunpack.c.h.b16 %v4218
        %v4975 = vunpack.c.l.b16 %v4219
        %v4976 = vunpack.c.h.b16 %v4219
        %v4977 = vunpack.c.l.b16 %v4220
        %v4978 = vunpack.c.h.b16 %v4220
        %v4979 = vunpack.c.l.b16 %v4221
        %v4980 = vunpack.c.h.b16 %v4221
        %v4981 = vunpack.c.l.b16 %v4222
        %v4982 = vunpack.c.h.b16 %v4222
        %v4983 = vunpack.c.l.b16 %v4223
        %v4984 = vunpack.c.h.b16 %v4223
        %v4985 = vunpack.c.l.b16 %v4224
        %v4986 = vunpack.c.h.b16 %v4224
        %v4987 = vunpack.c.l.b16 %v4225
        %v4988 = vunpack.c.h.b16 %v4225
        %v4989 = vunpack.c.l.b16 %v4226
        %v4990 = vunpack.c.h.b16 %v4226
        %v4991 = vunpack.c.l.b16 %v4227
        %v4992 = vunpack.c.h.b16 %v4227
        %v4993 = vunpack.c.l.b16 %v4228
        %v4994 = vunpack.c.h.b16 %v4228
        %v4995 = vunpack.c.l.b16 %v4229
        %v4996 = vunpack.c.h.b16 %v4229
        %v4997 = vunpack.c.l.b16 %v4230
        %v4998 = vunpack.c.h.b16 %v4230
        %v4999 = vunpack.c.l.b16 %v4231
        %v5000 = vunpack.c.h.b16 %v4231
        %v5001 = vunpack.c.l.b16 %v4232
        %v5002 = vunpack.c.h.b16 %v4232
        %v5003 = vunpack.c.l.b16 %v4233
        %v5004 = vunpack.c.h.b16 %v4233
        %v5005 = vunpack.c.l.b16 %v4234
        %v5006 = vunpack.c.h.b16 %v4234
        %v5007 = vunpack.c.l.b16 %v4235
        %v5008 = vunpack.c.h.b16 %v4235
        %v5009 = vunpack.c.l.b16 %v4236
        %v5010 = vunpack.c.h.b16 %v4236
        %v5011 = vunpack.c.l.b16 %v4237
        %v5012 = vunpack.c.h.b16 %v4237
        %v5013 = vunpack.c.l.b16 %v4238
        %v5014 = vunpack.c.h.b16 %v4238
        %v5015 = vunpack.c.l.b16 %v4239
        %v5016 = vunpack.c.h.b16 %v4239
        %v5017 = vunpack.c.l.b16 %v4240
        %v5018 = vunpack.c.h.b16 %v4240
        %v5019 = vpack.c.b16 %v4511, %v4507
        %v5020 = vpack.c.b16 %v4512, %v4508
        %v5021 = vpack.c.b16 %v4513, %v4509
        %v5022 = vpack.c.b16 %v4514, %v4510
        %v5023 = vpack.c.b16 %v4519, %v4515
        %v5024 = vpack.c.b16 %v4520, %v4516
        %v5025 = vpack.c.b16 %v4521, %v4517
        %v5026 = vpack.c.b16 %v4522, %v4518
        %v5027 = vpack.c.b16 %v4527, %v4523
        %v5028 = vpack.c.b16 %v4528, %v4524
        %v5029 = vpack.c.b16 %v4529, %v4525
        %v5030 = vpack.c.b16 %v4530, %v4526
        %v5031 = vpack.c.b16 %v4535, %v4531
        %v5032 = vpack.c.b16 %v4536, %v4532
        %v5033 = vpack.c.b16 %v4537, %v4533
        %v5034 = vpack.c.b16 %v4538, %v4534
        %v5035 = vpack.c.b16 %v4543, %v4539
        %v5036 = vpack.c.b16 %v4544, %v4540
        %v5037 = vpack.c.b16 %v4545, %v4541
        %v5038 = vpack.c.b16 %v4546, %v4542
        %v5039 = vpack.c.b16 %v4551, %v4547
        %v5040 = vpack.c.b16 %v4552, %v4548
        %v5041 = vpack.c.b16 %v4553, %v4549
        %v5042 = vpack.c.b16 %v4554, %v4550
        %v5043 = vpack.c.b16 %v4559, %v4555
        %v5044 = vpack.c.b16 %v4560, %v4556
        %v5045 = vpack.c.b16 %v4561, %v4557
        %v5046 = vpack.c.b16 %v4562, %v4558
        %v5047 = vpack.c.b16 %v4567, %v4563
        %v5048 = vpack.c.b16 %v4568, %v4564
        %v5049 = vpack.c.b16 %v4569, %v4565
        %v5050 = vpack.c.b16 %v4570, %v4566
        %v5051 = vpack.c.b16 %v4575, %v4571
        %v5052 = vpack.c.b16 %v4576, %v4572
        %v5053 = vpack.c.b16 %v4577, %v4573
        %v5054 = vpack.c.b16 %v4578, %v4574
        %v5055 = vpack.c.b16 %v4583, %v4579
        %v5056 = vpack.c.b16 %v4584, %v4580
        %v5057 = vpack.c.b16 %v4585, %v4581
        %v5058 = vpack.c.b16 %v4586, %v4582
        %v5059 = vpack.c.b16 %v4591, %v4587
        %v5060 = vpack.c.b16 %v4592, %v4588
        %v5061 = vpack.c.b16 %v4593, %v4589
        %v5062 = vpack.c.b16 %v4594, %v4590
        %v5063 = vpack.c.b16 %v4599, %v4595
        %v5064 = vpack.c.b16 %v4600, %v4596
        %v5065 = vpack.c.b16 %v4601, %v4597
        %v5066 = vpack.c.b16 %v4602, %v4598
        %v5067 = vpack.c.b16 %v4607, %v4603
        %v5068 = vpack.c.b16 %v4608, %v4604
        %v5069 = vpack.c.b16 %v4609, %v4605
        %v5070 = vpack.c.b16 %v4610, %v4606
        %v5071 = vpack.c.b16 %v4615, %v4611
        %v5072 = vpack.c.b16 %v4616, %v4612
        %v5073 = vpack.c.b16 %v4617, %v4613
        %v5074 = vpack.c.b16 %v4618, %v4614
        %v5075 = vpack.c.b16 %v4623, %v4619
        %v5076 = vpack.c.b16 %v4624, %v4620
        %v5077 = vpack.c.b16 %v4625, %v4621
        %v5078 = vpack.c.b16 %v4626, %v4622
        %v5079 = vpack.c.b16 %v4631, %v4627
        %v5080 = vpack.c.b16 %v4632, %v4628
        %v5081 = vpack.c.b16 %v4633, %v4629
        %v5082 = vpack.c.b16 %v4634, %v4630
        %v5083 = vpack.c.b16 %v4639, %v4635
        %v5084 = vpack.c.b16 %v4640, %v4636
        %v5085 = vpack.c.b16 %v4641, %v4637
        %v5086 = vpack.c.b16 %v4642, %v4638
        %v5087 = vpack.c.b16 %v4647, %v4643
        %v5088 = vpack.c.b16 %v4648, %v4644
        %v5089 = vpack.c.b16 %v4649, %v4645
        %v5090 = vpack.c.b16 %v4650, %v4646
        %v5091 = vpack.c.b16 %v4655, %v4651
        %v5092 = vpack.c.b16 %v4656, %v4652
        %v5093 = vpack.c.b16 %v4657, %v4653
        %v5094 = vpack.c.b16 %v4658, %v4654
        %v5095 = vpack.c.b16 %v4663, %v4659
        %v5096 = vpack.c.b16 %v4664, %v4660
        %v5097 = vpack.c.b16 %v4665, %v4661
        %v5098 = vpack.c.b16 %v4666, %v4662
        %v5099 = vpack.c.b16 %v4671, %v4667
        %v5100 = vpack.c.b16 %v4672, %v4668
        %v5101 = vpack.c.b16 %v4673, %v4669
        %v5102 = vpack.c.b16 %v4674, %v4670
        %v5103 = vpack.c.b16 %v4679, %v4675
        %v5104 = vpack.c.b16 %v4680, %v4676
        %v5105 = vpack.c.b16 %v4681, %v4677
        %v5106 = vpack.c.b16 %v4682, %v4678
        %v5107 = vpack.c.b16 %v4687, %v4683
        %v5108 = vpack.c.b16 %v4688, %v4684
        %v5109 = vpack.c.b16 %v4689, %v4685
        %v5110 = vpack.c.b16 %v4690, %v4686
        %v5111 = vpack.c.b16 %v4695, %v4691
        %v5112 = vpack.c.b16 %v4696, %v4692
        %v5113 = vpack.c.b16 %v4697, %v4693
        %v5114 = vpack.c.b16 %v4698, %v4694
        %v5115 = vpack.c.b16 %v4703, %v4699
        %v5116 = vpack.c.b16 %v4704, %v4700
        %v5117 = vpack.c.b16 %v4705, %v4701
        %v5118 = vpack.c.b16 %v4706, %v4702
        %v5119 = vpack.c.b16 %v4711, %v4707
        %v5120 = vpack.c.b16 %v4712, %v4708
        %v5121 = vpack.c.b16 %v4713, %v4709
        %v5122 = vpack.c.b16 %v4714, %v4710
        %v5123 = vpack.c.b16 %v4719, %v4715
        %v5124 = vpack.c.b16 %v4720, %v4716
        %v5125 = vpack.c.b16 %v4721, %v4717
        %v5126 = vpack.c.b16 %v4722, %v4718
        %v5127 = vpack.c.b16 %v4727, %v4723
        %v5128 = vpack.c.b16 %v4728, %v4724
        %v5129 = vpack.c.b16 %v4729, %v4725
        %v5130 = vpack.c.b16 %v4730, %v4726
        %v5131 = vpack.c.b16 %v4735, %v4731
        %v5132 = vpack.c.b16 %v4736, %v4732
        %v5133 = vpack.c.b16 %v4737, %v4733
        %v5134 = vpack.c.b16 %v4738, %v4734
        %v5135 = vpack.c.b16 %v4743, %v4739
        %v5136 = vpack.c.b16 %v4744, %v4740
        %v5137 = vpack.c.b16 %v4745, %v4741
        %v5138 = vpack.c.b16 %v4746, %v4742
        %v5139 = vpack.c.b16 %v4751, %v4747
        %v5140 = vpack.c.b16 %v4752, %v4748
        %v5141 = vpack.c.b16 %v4753, %v4749
        %v5142 = vpack.c.b16 %v4754, %v4750
        %v5143 = vpack.c.b16 %v4759, %v4755
        %v5144 = vpack.c.b16 %v4760, %v4756
        %v5145 = vpack.c.b16 %v4761, %v4757
        %v5146 = vpack.c.b16 %v4762, %v4758
        %v5147 = vpack.c.b16 %v4767, %v4763
        %v5148 = vpack.c.b16 %v4768, %v4764
        %v5149 = vpack.c.b16 %v4769, %v4765
        %v5150 = vpack.c.b16 %v4770, %v4766
        %v5151 = vpack.c.b16 %v4775, %v4771
        %v5152 = vpack.c.b16 %v4776, %v4772
        %v5153 = vpack.c.b16 %v4777, %v4773
        %v5154 = vpack.c.b16 %v4778, %v4774
        %v5155 = vpack.c.b16 %v4783, %v4779
        %v5156 = vpack.c.b16 %v4784, %v4780
        %v5157 = vpack.c.b16 %v4785, %v4781
        %v5158 = vpack.c.b16 %v4786, %v4782
        %v5159 = vpack.c.b16 %v4791, %v4787
        %v5160 = vpack.c.b16 %v4792, %v4788
        %v5161 = vpack.c.b16 %v4793, %v4789
        %v5162 = vpack.c.b16 %v4794, %v4790
        %v5163 = vpack.c.b16 %v4799, %v4795
        %v5164 = vpack.c.b16 %v4800, %v4796
        %v5165 = vpack.c.b16 %v4801, %v4797
        %v5166 = vpack.c.b16 %v4802, %v4798
        %v5167 = vpack.c.b16 %v4807, %v4803
        %v5168 = vpack.c.b16 %v4808, %v4804
        %v5169 = vpack.c.b16 %v4809, %v4805
        %v5170 = vpack.c.b16 %v4810, %v4806
        %v5171 = vpack.c.b16 %v4815, %v4811
        %v5172 = vpack.c.b16 %v4816, %v4812
        %v5173 = vpack.c.b16 %v4817, %v4813
        %v5174 = vpack.c.b16 %v4818, %v4814
        %v5175 = vpack.c.b16 %v4823, %v4819
        %v5176 = vpack.c.b16 %v4824, %v4820
        %v5177 = vpack.c.b16 %v4825, %v4821
        %v5178 = vpack.c.b16 %v4826, %v4822
        %v5179 = vpack.c.b16 %v4831, %v4827
        %v5180 = vpack.c.b16 %v4832, %v4828
        %v5181 = vpack.c.b16 %v4833, %v4829
        %v5182 = vpack.c.b16 %v4834, %v4830
        %v5183 = vpack.c.b16 %v4839, %v4835
        %v5184 = vpack.c.b16 %v4840, %v4836
        %v5185 = vpack.c.b16 %v4841, %v4837
        %v5186 = vpack.c.b16 %v4842, %v4838
        %v5187 = vpack.c.b16 %v4847, %v4843
        %v5188 = vpack.c.b16 %v4848, %v4844
        %v5189 = vpack.c.b16 %v4849, %v4845
        %v5190 = vpack.c.b16 %v4850, %v4846
        %v5191 = vpack.c.b16 %v4855, %v4851
        %v5192 = vpack.c.b16 %v4856, %v4852
        %v5193 = vpack.c.b16 %v4857, %v4853
        %v5194 = vpack.c.b16 %v4858, %v4854
        %v5195 = vpack.c.b16 %v4863, %v4859
        %v5196 = vpack.c.b16 %v4864, %v4860
        %v5197 = vpack.c.b16 %v4865, %v4861
        %v5198 = vpack.c.b16 %v4866, %v4862
        %v5199 = vpack.c.b16 %v4871, %v4867
        %v5200 = vpack.c.b16 %v4872, %v4868
        %v5201 = vpack.c.b16 %v4873, %v4869
        %v5202 = vpack.c.b16 %v4874, %v4870
        %v5203 = vpack.c.b16 %v4879, %v4875
        %v5204 = vpack.c.b16 %v4880, %v4876
        %v5205 = vpack.c.b16 %v4881, %v4877
        %v5206 = vpack.c.b16 %v4882, %v4878
        %v5207 = vpack.c.b16 %v4887, %v4883
        %v5208 = vpack.c.b16 %v4888, %v4884
        %v5209 = vpack.c.b16 %v4889, %v4885
        %v5210 = vpack.c.b16 %v4890, %v4886
        %v5211 = vpack.c.b16 %v4895, %v4891
        %v5212 = vpack.c.b16 %v4896, %v4892
        %v5213 = vpack.c.b16 %v4897, %v4893
        %v5214 = vpack.c.b16 %v4898, %v4894
        %v5215 = vpack.c.b16 %v4903, %v4899
        %v5216 = vpack.c.b16 %v4904, %v4900
        %v5217 = vpack.c.b16 %v4905, %v4901
        %v5218 = vpack.c.b16 %v4906, %v4902
        %v5219 = vpack.c.b16 %v4911, %v4907
        %v5220 = vpack.c.b16 %v4912, %v4908
        %v5221 = vpack.c.b16 %v4913, %v4909
        %v5222 = vpack.c.b16 %v4914, %v4910
        %v5223 = vpack.c.b16 %v4919, %v4915
        %v5224 = vpack.c.b16 %v4920, %v4916
        %v5225 = vpack.c.b16 %v4921, %v4917
        %v5226 = vpack.c.b16 %v4922, %v4918
        %v5227 = vpack.c.b16 %v4927, %v4923
        %v5228 = vpack.c.b16 %v4928, %v4924
        %v5229 = vpack.c.b16 %v4929, %v4925
        %v5230 = vpack.c.b16 %v4930, %v4926
        %v5231 = vpack.c.b16 %v4935, %v4931
        %v5232 = vpack.c.b16 %v4936, %v4932
        %v5233 = vpack.c.b16 %v4937, %v4933
        %v5234 = vpack.c.b16 %v4938, %v4934
        %v5235 = vpack.c.b16 %v4943, %v4939
        %v5236 = vpack.c.b16 %v4944, %v4940
        %v5237 = vpack.c.b16 %v4945, %v4941
        %v5238 = vpack.c.b16 %v4946, %v4942
        %v5239 = vpack.c.b16 %v4951, %v4947
        %v5240 = vpack.c.b16 %v4952, %v4948
        %v5241 = vpack.c.b16 %v4953, %v4949
        %v5242 = vpack.c.b16 %v4954, %v4950
        %v5243 = vpack.c.b16 %v4959, %v4955
        %v5244 = vpack.c.b16 %v4960, %v4956
        %v5245 = vpack.c.b16 %v4961, %v4957
        %v5246 = vpack.c.b16 %v4962, %v4958
        %v5247 = vpack.c.b16 %v4967, %v4963
        %v5248 = vpack.c.b16 %v4968, %v4964
        %v5249 = vpack.c.b16 %v4969, %v4965
        %v5250 = vpack.c.b16 %v4970, %v4966
        %v5251 = vpack.c.b16 %v4975, %v4971
        %v5252 = vpack.c.b16 %v4976, %v4972
        %v5253 = vpack.c.b16 %v4977, %v4973
        %v5254 = vpack.c.b16 %v4978, %v4974
        %v5255 = vpack.c.b16 %v4983, %v4979
        %v5256 = vpack.c.b16 %v4984, %v4980
        %v5257 = vpack.c.b16 %v4985, %v4981
        %v5258 = vpack.c.b16 %v4986, %v4982
        %v5259 = vpack.c.b16 %v4991, %v4987
        %v5260 = vpack.c.b16 %v4992, %v4988
        %v5261 = vpack.c.b16 %v4993, %v4989
        %v5262 = vpack.c.b16 %v4994, %v4990
        %v5263 = vpack.c.b16 %v4999, %v4995
        %v5264 = vpack.c.b16 %v5000, %v4996
        %v5265 = vpack.c.b16 %v5001, %v4997
        %v5266 = vpack.c.b16 %v5002, %v4998
        %v5267 = vpack.c.b16 %v5007, %v5003
        %v5268 = vpack.c.b16 %v5008, %v5004
        %v5269 = vpack.c.b16 %v5009, %v5005
        %v5270 = vpack.c.b16 %v5010, %v5006
        %v5271 = vpack.c.b16 %v5015, %v5011
        %v5272 = vpack.c.b16 %v5016, %v5012
        %v5273 = vpack.c.b16 %v5017, %v5013
        %v5274 = vpack.c.b16 %v5018, %v5014
        %5531 = vmatpush.bf16.msra.mxu0 %v5047
        %5532 = vmatpush.bf16.msra.mxu0 %v5043
        %5533 = vmatpush.bf16.msra.mxu0 %v5039
        %5534 = vmatpush.bf16.msra.mxu0 %v5035
        %5535 = vmatpush.bf16.msra.mxu0 %v5031
        %5536 = vmatpush.bf16.msra.mxu0 %v5027
        %5537 = vmatpush.bf16.msra.mxu0 %v5023
        %5538 = vmatpush.bf16.msra.mxu0 %v5019
        %5539 = vmatmul.bf16.gmra.mxu0 %v3921
        %v5540 = vpop.f32.mrf.mxu0
        %v5541 = vadd.f32 %v4243, %v5540
        %v5542 = vpop.f32.mrf.mxu0
        %v5543 = vadd.f32 %v4243, %v5542
        %5544 = vmatmul.bf16.gmra.mxu0 %v3929
        %v5545 = vpop.f32.mrf.mxu0
        %v5546 = vadd.f32 %v4243, %v5545
        %v5547 = vpop.f32.mrf.mxu0
        %v5548 = vadd.f32 %v4243, %v5547
        %5549 = vmatmul.bf16.gmra.mxu0 %v3937
        %v5550 = vpop.f32.mrf.mxu0
        %v5551 = vadd.f32 %v4243, %v5550
        %v5552 = vpop.f32.mrf.mxu0
        %v5553 = vadd.f32 %v4243, %v5552
        %5554 = vmatmul.bf16.gmra.mxu0 %v3945
        %v5555 = vpop.f32.mrf.mxu0
        %v5556 = vadd.f32 %v4243, %v5555
        %v5557 = vpop.f32.mrf.mxu0
        %v5558 = vadd.f32 %v4243, %v5557
        %5559 = vmatmul.bf16.gmra.mxu0 %v3953
        %v5560 = vpop.f32.mrf.mxu0
        %v5561 = vadd.f32 %v4243, %v5560
        %v5562 = vpop.f32.mrf.mxu0
        %v5563 = vadd.f32 %v4243, %v5562
        %5564 = vmatmul.bf16.gmra.mxu0 %v3961
        %v5565 = vpop.f32.mrf.mxu0
        %v5566 = vadd.f32 %v4243, %v5565
        %v5567 = vpop.f32.mrf.mxu0
        %v5568 = vadd.f32 %v4243, %v5567
        %5569 = vmatmul.bf16.gmra.mxu0 %v3969
        %v5570 = vpop.f32.mrf.mxu0
        %v5571 = vadd.f32 %v4243, %v5570
        %v5572 = vpop.f32.mrf.mxu0
        %v5573 = vadd.f32 %v4243, %v5572
        %5574 = vmatmul.bf16.gmra.mxu0 %v3977
        %v5575 = vpop.f32.mrf.mxu0
        %v5576 = vadd.f32 %v4243, %v5575
        %v5577 = vpop.f32.mrf.mxu0
        %v5578 = vadd.f32 %v4243, %v5577
        %5579 = vdwg.mxu0
        %5580 = vmatpush.bf16.msra.mxu0 %v5079
        %5581 = vmatpush.bf16.msra.mxu0 %v5075
        %5582 = vmatpush.bf16.msra.mxu0 %v5071
        %5583 = vmatpush.bf16.msra.mxu0 %v5067
        %5584 = vmatpush.bf16.msra.mxu0 %v5063
        %5585 = vmatpush.bf16.msra.mxu0 %v5059
        %5586 = vmatpush.bf16.msra.mxu0 %v5055
        %5587 = vmatpush.bf16.msra.mxu0 %v5051
        %5588 = vmatmul.bf16.gmra.mxu0 %v3922
        %v5589 = vpop.f32.mrf.mxu0
        %v5590 = vadd.f32 %v5541, %v5589
        %v5591 = vpop.f32.mrf.mxu0
        %v5592 = vadd.f32 %v5543, %v5591
        %5593 = vmatmul.bf16.gmra.mxu0 %v3930
        %v5594 = vpop.f32.mrf.mxu0
        %v5595 = vadd.f32 %v5546, %v5594
        %v5596 = vpop.f32.mrf.mxu0
        %v5597 = vadd.f32 %v5548, %v5596
        %5598 = vmatmul.bf16.gmra.mxu0 %v3938
        %v5599 = vpop.f32.mrf.mxu0
        %v5600 = vadd.f32 %v5551, %v5599
        %v5601 = vpop.f32.mrf.mxu0
        %v5602 = vadd.f32 %v5553, %v5601
        %5603 = vmatmul.bf16.gmra.mxu0 %v3946
        %v5604 = vpop.f32.mrf.mxu0
        %v5605 = vadd.f32 %v5556, %v5604
        %v5606 = vpop.f32.mrf.mxu0
        %v5607 = vadd.f32 %v5558, %v5606
        %5608 = vmatmul.bf16.gmra.mxu0 %v3954
        %v5609 = vpop.f32.mrf.mxu0
        %v5610 = vadd.f32 %v5561, %v5609
        %v5611 = vpop.f32.mrf.mxu0
        %v5612 = vadd.f32 %v5563, %v5611
        %5613 = vmatmul.bf16.gmra.mxu0 %v3962
        %v5614 = vpop.f32.mrf.mxu0
        %v5615 = vadd.f32 %v5566, %v5614
        %v5616 = vpop.f32.mrf.mxu0
        %v5617 = vadd.f32 %v5568, %v5616
        %5618 = vmatmul.bf16.gmra.mxu0 %v3970
        %v5619 = vpop.f32.mrf.mxu0
        %v5620 = vadd.f32 %v5571, %v5619
        %v5621 = vpop.f32.mrf.mxu0
        %v5622 = vadd.f32 %v5573, %v5621
        %5623 = vmatmul.bf16.gmra.mxu0 %v3978
        %v5624 = vpop.f32.mrf.mxu0
        %v5625 = vadd.f32 %v5576, %v5624
        %v5626 = vpop.f32.mrf.mxu0
        %v5627 = vadd.f32 %v5578, %v5626
        %5628 = vdwg.mxu0
        %5629 = vmatpush.bf16.msra.mxu0 %v5111
        %5630 = vmatpush.bf16.msra.mxu0 %v5107
        %5631 = vmatpush.bf16.msra.mxu0 %v5103
        %5632 = vmatpush.bf16.msra.mxu0 %v5099
        %5633 = vmatpush.bf16.msra.mxu0 %v5095
        %5634 = vmatpush.bf16.msra.mxu0 %v5091
        %5635 = vmatpush.bf16.msra.mxu0 %v5087
        %5636 = vmatpush.bf16.msra.mxu0 %v5083
        %5637 = vmatmul.bf16.gmra.mxu0 %v3923
        %v5638 = vpop.f32.mrf.mxu0
        %v5639 = vadd.f32 %v5590, %v5638
        %v5640 = vpop.f32.mrf.mxu0
        %v5641 = vadd.f32 %v5592, %v5640
        %5642 = vmatmul.bf16.gmra.mxu0 %v3931
        %v5643 = vpop.f32.mrf.mxu0
        %v5644 = vadd.f32 %v5595, %v5643
        %v5645 = vpop.f32.mrf.mxu0
        %v5646 = vadd.f32 %v5597, %v5645
        %5647 = vmatmul.bf16.gmra.mxu0 %v3939
        %v5648 = vpop.f32.mrf.mxu0
        %v5649 = vadd.f32 %v5600, %v5648
        %v5650 = vpop.f32.mrf.mxu0
        %v5651 = vadd.f32 %v5602, %v5650
        %5652 = vmatmul.bf16.gmra.mxu0 %v3947
        %v5653 = vpop.f32.mrf.mxu0
        %v5654 = vadd.f32 %v5605, %v5653
        %v5655 = vpop.f32.mrf.mxu0
        %v5656 = vadd.f32 %v5607, %v5655
        %5657 = vmatmul.bf16.gmra.mxu0 %v3955
        %v5658 = vpop.f32.mrf.mxu0
        %v5659 = vadd.f32 %v5610, %v5658
        %v5660 = vpop.f32.mrf.mxu0
        %v5661 = vadd.f32 %v5612, %v5660
        %5662 = vmatmul.bf16.gmra.mxu0 %v3963
        %v5663 = vpop.f32.mrf.mxu0
        %v5664 = vadd.f32 %v5615, %v5663
        %v5665 = vpop.f32.mrf.mxu0
        %v5666 = vadd.f32 %v5617, %v5665
        %5667 = vmatmul.bf16.gmra.mxu0 %v3971
        %v5668 = vpop.f32.mrf.mxu0
        %v5669 = vadd.f32 %v5620, %v5668
        %v5670 = vpop.f32.mrf.mxu0
        %v5671 = vadd.f32 %v5622, %v5670
        %5672 = vmatmul.bf16.gmra.mxu0 %v3979
        %v5673 = vpop.f32.mrf.mxu0
        %v5674 = vadd.f32 %v5625, %v5673
        %v5675 = vpop.f32.mrf.mxu0
        %v5676 = vadd.f32 %v5627, %v5675
        %5677 = vdwg.mxu0
        %5678 = vmatpush.bf16.msra.mxu0 %v5143
        %5679 = vmatpush.bf16.msra.mxu0 %v5139
        %5680 = vmatpush.bf16.msra.mxu0 %v5135
        %5681 = vmatpush.bf16.msra.mxu0 %v5131
        %5682 = vmatpush.bf16.msra.mxu0 %v5127
        %5683 = vmatpush.bf16.msra.mxu0 %v5123
        %5684 = vmatpush.bf16.msra.mxu0 %v5119
        %5685 = vmatpush.bf16.msra.mxu0 %v5115
        %5686 = vmatmul.bf16.gmra.mxu0 %v3924
        %v5687 = vpop.f32.mrf.mxu0
        %v5688 = vadd.f32 %v5639, %v5687
        %v5689 = vpop.f32.mrf.mxu0
        %v5690 = vadd.f32 %v5641, %v5689
        %5691 = vmatmul.bf16.gmra.mxu0 %v3932
        %v5692 = vpop.f32.mrf.mxu0
        %v5693 = vadd.f32 %v5644, %v5692
        %v5694 = vpop.f32.mrf.mxu0
        %v5695 = vadd.f32 %v5646, %v5694
        %5696 = vmatmul.bf16.gmra.mxu0 %v3940
        %v5697 = vpop.f32.mrf.mxu0
        %v5698 = vadd.f32 %v5649, %v5697
        %v5699 = vpop.f32.mrf.mxu0
        %v5700 = vadd.f32 %v5651, %v5699
        %5701 = vmatmul.bf16.gmra.mxu0 %v3948
        %v5702 = vpop.f32.mrf.mxu0
        %v5703 = vadd.f32 %v5654, %v5702
        %v5704 = vpop.f32.mrf.mxu0
        %v5705 = vadd.f32 %v5656, %v5704
        %5706 = vmatmul.bf16.gmra.mxu0 %v3956
        %v5707 = vpop.f32.mrf.mxu0
        %v5708 = vadd.f32 %v5659, %v5707
        %v5709 = vpop.f32.mrf.mxu0
        %v5710 = vadd.f32 %v5661, %v5709
        %5711 = vmatmul.bf16.gmra.mxu0 %v3964
        %v5712 = vpop.f32.mrf.mxu0
        %v5713 = vadd.f32 %v5664, %v5712
        %v5714 = vpop.f32.mrf.mxu0
        %v5715 = vadd.f32 %v5666, %v5714
        %5716 = vmatmul.bf16.gmra.mxu0 %v3972
        %v5717 = vpop.f32.mrf.mxu0
        %v5718 = vadd.f32 %v5669, %v5717
        %v5719 = vpop.f32.mrf.mxu0
        %v5720 = vadd.f32 %v5671, %v5719
        %5721 = vmatmul.bf16.gmra.mxu0 %v3980
        %v5722 = vpop.f32.mrf.mxu0
        %v5723 = vadd.f32 %v5674, %v5722
        %v5724 = vpop.f32.mrf.mxu0
        %v5725 = vadd.f32 %v5676, %v5724
        %5726 = vdwg.mxu0
        %5727 = vmatpush.bf16.msra.mxu0 %v5175
        %5728 = vmatpush.bf16.msra.mxu0 %v5171
        %5729 = vmatpush.bf16.msra.mxu0 %v5167
        %5730 = vmatpush.bf16.msra.mxu0 %v5163
        %5731 = vmatpush.bf16.msra.mxu0 %v5159
        %5732 = vmatpush.bf16.msra.mxu0 %v5155
        %5733 = vmatpush.bf16.msra.mxu0 %v5151
        %5734 = vmatpush.bf16.msra.mxu0 %v5147
        %5735 = vmatmul.bf16.gmra.mxu0 %v3925
        %v5736 = vpop.f32.mrf.mxu0
        %v5737 = vadd.f32 %v5688, %v5736
        %v5738 = vpop.f32.mrf.mxu0
        %v5739 = vadd.f32 %v5690, %v5738
        %5740 = vmatmul.bf16.gmra.mxu0 %v3933
        %v5741 = vpop.f32.mrf.mxu0
        %v5742 = vadd.f32 %v5693, %v5741
        %v5743 = vpop.f32.mrf.mxu0
        %v5744 = vadd.f32 %v5695, %v5743
        %5745 = vmatmul.bf16.gmra.mxu0 %v3941
        %v5746 = vpop.f32.mrf.mxu0
        %v5747 = vadd.f32 %v5698, %v5746
        %v5748 = vpop.f32.mrf.mxu0
        %v5749 = vadd.f32 %v5700, %v5748
        %5750 = vmatmul.bf16.gmra.mxu0 %v3949
        %v5751 = vpop.f32.mrf.mxu0
        %v5752 = vadd.f32 %v5703, %v5751
        %v5753 = vpop.f32.mrf.mxu0
        %v5754 = vadd.f32 %v5705, %v5753
        %5755 = vmatmul.bf16.gmra.mxu0 %v3957
        %v5756 = vpop.f32.mrf.mxu0
        %v5757 = vadd.f32 %v5708, %v5756
        %v5758 = vpop.f32.mrf.mxu0
        %v5759 = vadd.f32 %v5710, %v5758
        %5760 = vmatmul.bf16.gmra.mxu0 %v3965
        %v5761 = vpop.f32.mrf.mxu0
        %v5762 = vadd.f32 %v5713, %v5761
        %v5763 = vpop.f32.mrf.mxu0
        %v5764 = vadd.f32 %v5715, %v5763
        %5765 = vmatmul.bf16.gmra.mxu0 %v3973
        %v5766 = vpop.f32.mrf.mxu0
        %v5767 = vadd.f32 %v5718, %v5766
        %v5768 = vpop.f32.mrf.mxu0
        %v5769 = vadd.f32 %v5720, %v5768
        %5770 = vmatmul.bf16.gmra.mxu0 %v3981
        %v5771 = vpop.f32.mrf.mxu0
        %v5772 = vadd.f32 %v5723, %v5771
        %v5773 = vpop.f32.mrf.mxu0
        %v5774 = vadd.f32 %v5725, %v5773
        %5775 = vdwg.mxu0
        %5776 = vmatpush.bf16.msra.mxu0 %v5207
        %5777 = vmatpush.bf16.msra.mxu0 %v5203
        %5778 = vmatpush.bf16.msra.mxu0 %v5199
        %5779 = vmatpush.bf16.msra.mxu0 %v5195
        %5780 = vmatpush.bf16.msra.mxu0 %v5191
        %5781 = vmatpush.bf16.msra.mxu0 %v5187
        %5782 = vmatpush.bf16.msra.mxu0 %v5183
        %5783 = vmatpush.bf16.msra.mxu0 %v5179
        %5784 = vmatmul.bf16.gmra.mxu0 %v3926
        %v5785 = vpop.f32.mrf.mxu0
        %v5786 = vadd.f32 %v5737, %v5785
        %v5787 = vpop.f32.mrf.mxu0
        %v5788 = vadd.f32 %v5739, %v5787
        %5789 = vmatmul.bf16.gmra.mxu0 %v3934
        %v5790 = vpop.f32.mrf.mxu0
        %v5791 = vadd.f32 %v5742, %v5790
        %v5792 = vpop.f32.mrf.mxu0
        %v5793 = vadd.f32 %v5744, %v5792
        %5794 = vmatmul.bf16.gmra.mxu0 %v3942
        %v5795 = vpop.f32.mrf.mxu0
        %v5796 = vadd.f32 %v5747, %v5795
        %v5797 = vpop.f32.mrf.mxu0
        %v5798 = vadd.f32 %v5749, %v5797
        %5799 = vmatmul.bf16.gmra.mxu0 %v3950
        %v5800 = vpop.f32.mrf.mxu0
        %v5801 = vadd.f32 %v5752, %v5800
        %v5802 = vpop.f32.mrf.mxu0
        %v5803 = vadd.f32 %v5754, %v5802
        %5804 = vmatmul.bf16.gmra.mxu0 %v3958
        %v5805 = vpop.f32.mrf.mxu0
        %v5806 = vadd.f32 %v5757, %v5805
        %v5807 = vpop.f32.mrf.mxu0
        %v5808 = vadd.f32 %v5759, %v5807
        %5809 = vmatmul.bf16.gmra.mxu0 %v3966
        %v5810 = vpop.f32.mrf.mxu0
        %v5811 = vadd.f32 %v5762, %v5810
        %v5812 = vpop.f32.mrf.mxu0
        %v5813 = vadd.f32 %v5764, %v5812
        %5814 = vmatmul.bf16.gmra.mxu0 %v3974
        %v5815 = vpop.f32.mrf.mxu0
        %v5816 = vadd.f32 %v5767, %v5815
        %v5817 = vpop.f32.mrf.mxu0
        %v5818 = vadd.f32 %v5769, %v5817
        %5819 = vmatmul.bf16.gmra.mxu0 %v3982
        %v5820 = vpop.f32.mrf.mxu0
        %v5821 = vadd.f32 %v5772, %v5820
        %v5822 = vpop.f32.mrf.mxu0
        %v5823 = vadd.f32 %v5774, %v5822
        %5824 = vdwg.mxu0
        %5825 = vmatpush.bf16.msra.mxu0 %v5239
        %5826 = vmatpush.bf16.msra.mxu0 %v5235
        %5827 = vmatpush.bf16.msra.mxu0 %v5231
        %5828 = vmatpush.bf16.msra.mxu0 %v5227
        %5829 = vmatpush.bf16.msra.mxu0 %v5223
        %5830 = vmatpush.bf16.msra.mxu0 %v5219
        %5831 = vmatpush.bf16.msra.mxu0 %v5215
        %5832 = vmatpush.bf16.msra.mxu0 %v5211
        %5833 = vmatmul.bf16.gmra.mxu0 %v3927
        %v5834 = vpop.f32.mrf.mxu0
        %v5835 = vadd.f32 %v5786, %v5834
        %v5836 = vpop.f32.mrf.mxu0
        %v5837 = vadd.f32 %v5788, %v5836
        %5838 = vmatmul.bf16.gmra.mxu0 %v3935
        %v5839 = vpop.f32.mrf.mxu0
        %v5840 = vadd.f32 %v5791, %v5839
        %v5841 = vpop.f32.mrf.mxu0
        %v5842 = vadd.f32 %v5793, %v5841
        %5843 = vmatmul.bf16.gmra.mxu0 %v3943
        %v5844 = vpop.f32.mrf.mxu0
        %v5845 = vadd.f32 %v5796, %v5844
        %v5846 = vpop.f32.mrf.mxu0
        %v5847 = vadd.f32 %v5798, %v5846
        %5848 = vmatmul.bf16.gmra.mxu0 %v3951
        %v5849 = vpop.f32.mrf.mxu0
        %v5850 = vadd.f32 %v5801, %v5849
        %v5851 = vpop.f32.mrf.mxu0
        %v5852 = vadd.f32 %v5803, %v5851
        %5853 = vmatmul.bf16.gmra.mxu0 %v3959
        %v5854 = vpop.f32.mrf.mxu0
        %v5855 = vadd.f32 %v5806, %v5854
        %v5856 = vpop.f32.mrf.mxu0
        %v5857 = vadd.f32 %v5808, %v5856
        %5858 = vmatmul.bf16.gmra.mxu0 %v3967
        %v5859 = vpop.f32.mrf.mxu0
        %v5860 = vadd.f32 %v5811, %v5859
        %v5861 = vpop.f32.mrf.mxu0
        %v5862 = vadd.f32 %v5813, %v5861
        %5863 = vmatmul.bf16.gmra.mxu0 %v3975
        %v5864 = vpop.f32.mrf.mxu0
        %v5865 = vadd.f32 %v5816, %v5864
        %v5866 = vpop.f32.mrf.mxu0
        %v5867 = vadd.f32 %v5818, %v5866
        %5868 = vmatmul.bf16.gmra.mxu0 %v3983
        %v5869 = vpop.f32.mrf.mxu0
        %v5870 = vadd.f32 %v5821, %v5869
        %v5871 = vpop.f32.mrf.mxu0
        %v5872 = vadd.f32 %v5823, %v5871
        %5873 = vdwg.mxu0
        %5874 = vmatpush.bf16.msra.mxu0 %v5271
        %5875 = vmatpush.bf16.msra.mxu0 %v5267
        %5876 = vmatpush.bf16.msra.mxu0 %v5263
        %5877 = vmatpush.bf16.msra.mxu0 %v5259
        %5878 = vmatpush.bf16.msra.mxu0 %v5255
        %5879 = vmatpush.bf16.msra.mxu0 %v5251
        %5880 = vmatpush.bf16.msra.mxu0 %v5247
        %5881 = vmatpush.bf16.msra.mxu0 %v5243
        %5882 = vmatmul.bf16.gmra.mxu0 %v3928
        %v5883 = vpop.f32.mrf.mxu0
        %v5884 = vadd.f32 %v5835, %v5883
        %v5885 = vpop.f32.mrf.mxu0
        %v5886 = vadd.f32 %v5837, %v5885
        %5887 = vmatmul.bf16.gmra.mxu0 %v3936
        %v5888 = vpop.f32.mrf.mxu0
        %v5889 = vadd.f32 %v5840, %v5888
        %v5890 = vpop.f32.mrf.mxu0
        %v5891 = vadd.f32 %v5842, %v5890
        %5892 = vmatmul.bf16.gmra.mxu0 %v3944
        %v5893 = vpop.f32.mrf.mxu0
        %v5894 = vadd.f32 %v5845, %v5893
        %v5895 = vpop.f32.mrf.mxu0
        %v5896 = vadd.f32 %v5847, %v5895
        %5897 = vmatmul.bf16.gmra.mxu0 %v3952
        %v5898 = vpop.f32.mrf.mxu0
        %v5899 = vadd.f32 %v5850, %v5898
        %v5900 = vpop.f32.mrf.mxu0
        %v5901 = vadd.f32 %v5852, %v5900
        %5902 = vmatmul.bf16.gmra.mxu0 %v3960
        %v5903 = vpop.f32.mrf.mxu0
        %v5904 = vadd.f32 %v5855, %v5903
        %v5905 = vpop.f32.mrf.mxu0
        %v5906 = vadd.f32 %v5857, %v5905
        %5907 = vmatmul.bf16.gmra.mxu0 %v3968
        %v5908 = vpop.f32.mrf.mxu0
        %v5909 = vadd.f32 %v5860, %v5908
        %v5910 = vpop.f32.mrf.mxu0
        %v5911 = vadd.f32 %v5862, %v5910
        %5912 = vmatmul.bf16.gmra.mxu0 %v3976
        %v5913 = vpop.f32.mrf.mxu0
        %v5914 = vadd.f32 %v5865, %v5913
        %v5915 = vpop.f32.mrf.mxu0
        %v5916 = vadd.f32 %v5867, %v5915
        %5917 = vmatmul.bf16.gmra.mxu0 %v3984
        %v5918 = vpop.f32.mrf.mxu0
        %v5919 = vadd.f32 %v5870, %v5918
        %v5920 = vpop.f32.mrf.mxu0
        %v5921 = vadd.f32 %v5872, %v5920
        %5922 = vdwg.mxu0
        %5923 = vmatpush.bf16.msra.mxu0 %v5048
        %5924 = vmatpush.bf16.msra.mxu0 %v5044
        %5925 = vmatpush.bf16.msra.mxu0 %v5040
        %5926 = vmatpush.bf16.msra.mxu0 %v5036
        %5927 = vmatpush.bf16.msra.mxu0 %v5032
        %5928 = vmatpush.bf16.msra.mxu0 %v5028
        %5929 = vmatpush.bf16.msra.mxu0 %v5024
        %5930 = vmatpush.bf16.msra.mxu0 %v5020
        %5931 = vmatmul.bf16.gmra.mxu0 %v3921
        %v5932 = vpop.f32.mrf.mxu0
        %v5933 = vadd.f32 %v4244, %v5932
        %v5934 = vpop.f32.mrf.mxu0
        %v5935 = vadd.f32 %v4244, %v5934
        %5936 = vmatmul.bf16.gmra.mxu0 %v3929
        %v5937 = vpop.f32.mrf.mxu0
        %v5938 = vadd.f32 %v4244, %v5937
        %v5939 = vpop.f32.mrf.mxu0
        %v5940 = vadd.f32 %v4244, %v5939
        %5941 = vmatmul.bf16.gmra.mxu0 %v3937
        %v5942 = vpop.f32.mrf.mxu0
        %v5943 = vadd.f32 %v4244, %v5942
        %v5944 = vpop.f32.mrf.mxu0
        %v5945 = vadd.f32 %v4244, %v5944
        %5946 = vmatmul.bf16.gmra.mxu0 %v3945
        %v5947 = vpop.f32.mrf.mxu0
        %v5948 = vadd.f32 %v4244, %v5947
        %v5949 = vpop.f32.mrf.mxu0
        %v5950 = vadd.f32 %v4244, %v5949
        %5951 = vmatmul.bf16.gmra.mxu0 %v3953
        %v5952 = vpop.f32.mrf.mxu0
        %v5953 = vadd.f32 %v4244, %v5952
        %v5954 = vpop.f32.mrf.mxu0
        %v5955 = vadd.f32 %v4244, %v5954
        %5956 = vmatmul.bf16.gmra.mxu0 %v3961
        %v5957 = vpop.f32.mrf.mxu0
        %v5958 = vadd.f32 %v4244, %v5957
        %v5959 = vpop.f32.mrf.mxu0
        %v5960 = vadd.f32 %v4244, %v5959
        %5961 = vmatmul.bf16.gmra.mxu0 %v3969
        %v5962 = vpop.f32.mrf.mxu0
        %v5963 = vadd.f32 %v4244, %v5962
        %v5964 = vpop.f32.mrf.mxu0
        %v5965 = vadd.f32 %v4244, %v5964
        %5966 = vmatmul.bf16.gmra.mxu0 %v3977
        %v5967 = vpop.f32.mrf.mxu0
        %v5968 = vadd.f32 %v4244, %v5967
        %v5969 = vpop.f32.mrf.mxu0
        %v5970 = vadd.f32 %v4244, %v5969
        %5971 = vdwg.mxu0
        %5972 = vmatpush.bf16.msra.mxu0 %v5080
        %5973 = vmatpush.bf16.msra.mxu0 %v5076
        %5974 = vmatpush.bf16.msra.mxu0 %v5072
        %5975 = vmatpush.bf16.msra.mxu0 %v5068
        %5976 = vmatpush.bf16.msra.mxu0 %v5064
        %5977 = vmatpush.bf16.msra.mxu0 %v5060
        %5978 = vmatpush.bf16.msra.mxu0 %v5056
        %5979 = vmatpush.bf16.msra.mxu0 %v5052
        %5980 = vmatmul.bf16.gmra.mxu0 %v3922
        %v5981 = vpop.f32.mrf.mxu0
        %v5982 = vadd.f32 %v5933, %v5981
        %v5983 = vpop.f32.mrf.mxu0
        %v5984 = vadd.f32 %v5935, %v5983
        %5985 = vmatmul.bf16.gmra.mxu0 %v3930
        %v5986 = vpop.f32.mrf.mxu0
        %v5987 = vadd.f32 %v5938, %v5986
        %v5988 = vpop.f32.mrf.mxu0
        %v5989 = vadd.f32 %v5940, %v5988
        %5990 = vmatmul.bf16.gmra.mxu0 %v3938
        %v5991 = vpop.f32.mrf.mxu0
        %v5992 = vadd.f32 %v5943, %v5991
        %v5993 = vpop.f32.mrf.mxu0
        %v5994 = vadd.f32 %v5945, %v5993
        %5995 = vmatmul.bf16.gmra.mxu0 %v3946
        %v5996 = vpop.f32.mrf.mxu0
        %v5997 = vadd.f32 %v5948, %v5996
        %v5998 = vpop.f32.mrf.mxu0
        %v5999 = vadd.f32 %v5950, %v5998
        %6000 = vmatmul.bf16.gmra.mxu0 %v3954
        %v6001 = vpop.f32.mrf.mxu0
        %v6002 = vadd.f32 %v5953, %v6001
        %v6003 = vpop.f32.mrf.mxu0
        %v6004 = vadd.f32 %v5955, %v6003
        %6005 = vmatmul.bf16.gmra.mxu0 %v3962
        %v6006 = vpop.f32.mrf.mxu0
        %v6007 = vadd.f32 %v5958, %v6006
        %v6008 = vpop.f32.mrf.mxu0
        %v6009 = vadd.f32 %v5960, %v6008
        %6010 = vmatmul.bf16.gmra.mxu0 %v3970
        %v6011 = vpop.f32.mrf.mxu0
        %v6012 = vadd.f32 %v5963, %v6011
        %v6013 = vpop.f32.mrf.mxu0
        %v6014 = vadd.f32 %v5965, %v6013
        %6015 = vmatmul.bf16.gmra.mxu0 %v3978
        %v6016 = vpop.f32.mrf.mxu0
        %v6017 = vadd.f32 %v5968, %v6016
        %v6018 = vpop.f32.mrf.mxu0
        %v6019 = vadd.f32 %v5970, %v6018
        %6020 = vdwg.mxu0
        %6021 = vmatpush.bf16.msra.mxu0 %v5112
        %6022 = vmatpush.bf16.msra.mxu0 %v5108
        %6023 = vmatpush.bf16.msra.mxu0 %v5104
        %6024 = vmatpush.bf16.msra.mxu0 %v5100
        %6025 = vmatpush.bf16.msra.mxu0 %v5096
        %6026 = vmatpush.bf16.msra.mxu0 %v5092
        %6027 = vmatpush.bf16.msra.mxu0 %v5088
        %6028 = vmatpush.bf16.msra.mxu0 %v5084
        %6029 = vmatmul.bf16.gmra.mxu0 %v3923
        %v6030 = vpop.f32.mrf.mxu0
        %v6031 = vadd.f32 %v5982, %v6030
        %v6032 = vpop.f32.mrf.mxu0
        %v6033 = vadd.f32 %v5984, %v6032
        %6034 = vmatmul.bf16.gmra.mxu0 %v3931
        %v6035 = vpop.f32.mrf.mxu0
        %v6036 = vadd.f32 %v5987, %v6035
        %v6037 = vpop.f32.mrf.mxu0
        %v6038 = vadd.f32 %v5989, %v6037
        %6039 = vmatmul.bf16.gmra.mxu0 %v3939
        %v6040 = vpop.f32.mrf.mxu0
        %v6041 = vadd.f32 %v5992, %v6040
        %v6042 = vpop.f32.mrf.mxu0
        %v6043 = vadd.f32 %v5994, %v6042
        %6044 = vmatmul.bf16.gmra.mxu0 %v3947
        %v6045 = vpop.f32.mrf.mxu0
        %v6046 = vadd.f32 %v5997, %v6045
        %v6047 = vpop.f32.mrf.mxu0
        %v6048 = vadd.f32 %v5999, %v6047
        %6049 = vmatmul.bf16.gmra.mxu0 %v3955
        %v6050 = vpop.f32.mrf.mxu0
        %v6051 = vadd.f32 %v6002, %v6050
        %v6052 = vpop.f32.mrf.mxu0
        %v6053 = vadd.f32 %v6004, %v6052
        %6054 = vmatmul.bf16.gmra.mxu0 %v3963
        %v6055 = vpop.f32.mrf.mxu0
        %v6056 = vadd.f32 %v6007, %v6055
        %v6057 = vpop.f32.mrf.mxu0
        %v6058 = vadd.f32 %v6009, %v6057
        %6059 = vmatmul.bf16.gmra.mxu0 %v3971
        %v6060 = vpop.f32.mrf.mxu0
        %v6061 = vadd.f32 %v6012, %v6060
        %v6062 = vpop.f32.mrf.mxu0
        %v6063 = vadd.f32 %v6014, %v6062
        %6064 = vmatmul.bf16.gmra.mxu0 %v3979
        %v6065 = vpop.f32.mrf.mxu0
        %v6066 = vadd.f32 %v6017, %v6065
        %v6067 = vpop.f32.mrf.mxu0
        %v6068 = vadd.f32 %v6019, %v6067
        %6069 = vdwg.mxu0
        %6070 = vmatpush.bf16.msra.mxu0 %v5144
        %6071 = vmatpush.bf16.msra.mxu0 %v5140
        %6072 = vmatpush.bf16.msra.mxu0 %v5136
        %6073 = vmatpush.bf16.msra.mxu0 %v5132
        %6074 = vmatpush.bf16.msra.mxu0 %v5128
        %6075 = vmatpush.bf16.msra.mxu0 %v5124
        %6076 = vmatpush.bf16.msra.mxu0 %v5120
        %6077 = vmatpush.bf16.msra.mxu0 %v5116
        %6078 = vmatmul.bf16.gmra.mxu0 %v3924
        %v6079 = vpop.f32.mrf.mxu0
        %v6080 = vadd.f32 %v6031, %v6079
        %v6081 = vpop.f32.mrf.mxu0
        %v6082 = vadd.f32 %v6033, %v6081
        %6083 = vmatmul.bf16.gmra.mxu0 %v3932
        %v6084 = vpop.f32.mrf.mxu0
        %v6085 = vadd.f32 %v6036, %v6084
        %v6086 = vpop.f32.mrf.mxu0
        %v6087 = vadd.f32 %v6038, %v6086
        %6088 = vmatmul.bf16.gmra.mxu0 %v3940
        %v6089 = vpop.f32.mrf.mxu0
        %v6090 = vadd.f32 %v6041, %v6089
        %v6091 = vpop.f32.mrf.mxu0
        %v6092 = vadd.f32 %v6043, %v6091
        %6093 = vmatmul.bf16.gmra.mxu0 %v3948
        %v6094 = vpop.f32.mrf.mxu0
        %v6095 = vadd.f32 %v6046, %v6094
        %v6096 = vpop.f32.mrf.mxu0
        %v6097 = vadd.f32 %v6048, %v6096
        %6098 = vmatmul.bf16.gmra.mxu0 %v3956
        %v6099 = vpop.f32.mrf.mxu0
        %v6100 = vadd.f32 %v6051, %v6099
        %v6101 = vpop.f32.mrf.mxu0
        %v6102 = vadd.f32 %v6053, %v6101
        %6103 = vmatmul.bf16.gmra.mxu0 %v3964
        %v6104 = vpop.f32.mrf.mxu0
        %v6105 = vadd.f32 %v6056, %v6104
        %v6106 = vpop.f32.mrf.mxu0
        %v6107 = vadd.f32 %v6058, %v6106
        %6108 = vmatmul.bf16.gmra.mxu0 %v3972
        %v6109 = vpop.f32.mrf.mxu0
        %v6110 = vadd.f32 %v6061, %v6109
        %v6111 = vpop.f32.mrf.mxu0
        %v6112 = vadd.f32 %v6063, %v6111
        %6113 = vmatmul.bf16.gmra.mxu0 %v3980
        %v6114 = vpop.f32.mrf.mxu0
        %v6115 = vadd.f32 %v6066, %v6114
        %v6116 = vpop.f32.mrf.mxu0
        %v6117 = vadd.f32 %v6068, %v6116
        %6118 = vdwg.mxu0
        %6119 = vmatpush.bf16.msra.mxu0 %v5176
        %6120 = vmatpush.bf16.msra.mxu0 %v5172
        %6121 = vmatpush.bf16.msra.mxu0 %v5168
        %6122 = vmatpush.bf16.msra.mxu0 %v5164
        %6123 = vmatpush.bf16.msra.mxu0 %v5160
        %6124 = vmatpush.bf16.msra.mxu0 %v5156
        %6125 = vmatpush.bf16.msra.mxu0 %v5152
        %6126 = vmatpush.bf16.msra.mxu0 %v5148
        %6127 = vmatmul.bf16.gmra.mxu0 %v3925
        %v6128 = vpop.f32.mrf.mxu0
        %v6129 = vadd.f32 %v6080, %v6128
        %v6130 = vpop.f32.mrf.mxu0
        %v6131 = vadd.f32 %v6082, %v6130
        %6132 = vmatmul.bf16.gmra.mxu0 %v3933
        %v6133 = vpop.f32.mrf.mxu0
        %v6134 = vadd.f32 %v6085, %v6133
        %v6135 = vpop.f32.mrf.mxu0
        %v6136 = vadd.f32 %v6087, %v6135
        %6137 = vmatmul.bf16.gmra.mxu0 %v3941
        %v6138 = vpop.f32.mrf.mxu0
        %v6139 = vadd.f32 %v6090, %v6138
        %v6140 = vpop.f32.mrf.mxu0
        %v6141 = vadd.f32 %v6092, %v6140
        %6142 = vmatmul.bf16.gmra.mxu0 %v3949
        %v6143 = vpop.f32.mrf.mxu0
        %v6144 = vadd.f32 %v6095, %v6143
        %v6145 = vpop.f32.mrf.mxu0
        %v6146 = vadd.f32 %v6097, %v6145
        %6147 = vmatmul.bf16.gmra.mxu0 %v3957
        %v6148 = vpop.f32.mrf.mxu0
        %v6149 = vadd.f32 %v6100, %v6148
        %v6150 = vpop.f32.mrf.mxu0
        %v6151 = vadd.f32 %v6102, %v6150
        %6152 = vmatmul.bf16.gmra.mxu0 %v3965
        %v6153 = vpop.f32.mrf.mxu0
        %v6154 = vadd.f32 %v6105, %v6153
        %v6155 = vpop.f32.mrf.mxu0
        %v6156 = vadd.f32 %v6107, %v6155
        %6157 = vmatmul.bf16.gmra.mxu0 %v3973
        %v6158 = vpop.f32.mrf.mxu0
        %v6159 = vadd.f32 %v6110, %v6158
        %v6160 = vpop.f32.mrf.mxu0
        %v6161 = vadd.f32 %v6112, %v6160
        %6162 = vmatmul.bf16.gmra.mxu0 %v3981
        %v6163 = vpop.f32.mrf.mxu0
        %v6164 = vadd.f32 %v6115, %v6163
        %v6165 = vpop.f32.mrf.mxu0
        %v6166 = vadd.f32 %v6117, %v6165
        %6167 = vdwg.mxu0
        %6168 = vmatpush.bf16.msra.mxu0 %v5208
        %6169 = vmatpush.bf16.msra.mxu0 %v5204
        %6170 = vmatpush.bf16.msra.mxu0 %v5200
        %6171 = vmatpush.bf16.msra.mxu0 %v5196
        %6172 = vmatpush.bf16.msra.mxu0 %v5192
        %6173 = vmatpush.bf16.msra.mxu0 %v5188
        %6174 = vmatpush.bf16.msra.mxu0 %v5184
        %6175 = vmatpush.bf16.msra.mxu0 %v5180
        %6176 = vmatmul.bf16.gmra.mxu0 %v3926
        %v6177 = vpop.f32.mrf.mxu0
        %v6178 = vadd.f32 %v6129, %v6177
        %v6179 = vpop.f32.mrf.mxu0
        %v6180 = vadd.f32 %v6131, %v6179
        %6181 = vmatmul.bf16.gmra.mxu0 %v3934
        %v6182 = vpop.f32.mrf.mxu0
        %v6183 = vadd.f32 %v6134, %v6182
        %v6184 = vpop.f32.mrf.mxu0
        %v6185 = vadd.f32 %v6136, %v6184
        %6186 = vmatmul.bf16.gmra.mxu0 %v3942
        %v6187 = vpop.f32.mrf.mxu0
        %v6188 = vadd.f32 %v6139, %v6187
        %v6189 = vpop.f32.mrf.mxu0
        %v6190 = vadd.f32 %v6141, %v6189
        %6191 = vmatmul.bf16.gmra.mxu0 %v3950
        %v6192 = vpop.f32.mrf.mxu0
        %v6193 = vadd.f32 %v6144, %v6192
        %v6194 = vpop.f32.mrf.mxu0
        %v6195 = vadd.f32 %v6146, %v6194
        %6196 = vmatmul.bf16.gmra.mxu0 %v3958
        %v6197 = vpop.f32.mrf.mxu0
        %v6198 = vadd.f32 %v6149, %v6197
        %v6199 = vpop.f32.mrf.mxu0
        %v6200 = vadd.f32 %v6151, %v6199
        %6201 = vmatmul.bf16.gmra.mxu0 %v3966
        %v6202 = vpop.f32.mrf.mxu0
        %v6203 = vadd.f32 %v6154, %v6202
        %v6204 = vpop.f32.mrf.mxu0
        %v6205 = vadd.f32 %v6156, %v6204
        %6206 = vmatmul.bf16.gmra.mxu0 %v3974
        %v6207 = vpop.f32.mrf.mxu0
        %v6208 = vadd.f32 %v6159, %v6207
        %v6209 = vpop.f32.mrf.mxu0
        %v6210 = vadd.f32 %v6161, %v6209
        %6211 = vmatmul.bf16.gmra.mxu0 %v3982
        %v6212 = vpop.f32.mrf.mxu0
        %v6213 = vadd.f32 %v6164, %v6212
        %v6214 = vpop.f32.mrf.mxu0
        %v6215 = vadd.f32 %v6166, %v6214
        %6216 = vdwg.mxu0
        %6217 = vmatpush.bf16.msra.mxu0 %v5240
        %6218 = vmatpush.bf16.msra.mxu0 %v5236
        %6219 = vmatpush.bf16.msra.mxu0 %v5232
        %6220 = vmatpush.bf16.msra.mxu0 %v5228
        %6221 = vmatpush.bf16.msra.mxu0 %v5224
        %6222 = vmatpush.bf16.msra.mxu0 %v5220
        %6223 = vmatpush.bf16.msra.mxu0 %v5216
        %6224 = vmatpush.bf16.msra.mxu0 %v5212
        %6225 = vmatmul.bf16.gmra.mxu0 %v3927
        %v6226 = vpop.f32.mrf.mxu0
        %v6227 = vadd.f32 %v6178, %v6226
        %v6228 = vpop.f32.mrf.mxu0
        %v6229 = vadd.f32 %v6180, %v6228
        %6230 = vmatmul.bf16.gmra.mxu0 %v3935
        %v6231 = vpop.f32.mrf.mxu0
        %v6232 = vadd.f32 %v6183, %v6231
        %v6233 = vpop.f32.mrf.mxu0
        %v6234 = vadd.f32 %v6185, %v6233
        %6235 = vmatmul.bf16.gmra.mxu0 %v3943
        %v6236 = vpop.f32.mrf.mxu0
        %v6237 = vadd.f32 %v6188, %v6236
        %v6238 = vpop.f32.mrf.mxu0
        %v6239 = vadd.f32 %v6190, %v6238
        %6240 = vmatmul.bf16.gmra.mxu0 %v3951
        %v6241 = vpop.f32.mrf.mxu0
        %v6242 = vadd.f32 %v6193, %v6241
        %v6243 = vpop.f32.mrf.mxu0
        %v6244 = vadd.f32 %v6195, %v6243
        %6245 = vmatmul.bf16.gmra.mxu0 %v3959
        %v6246 = vpop.f32.mrf.mxu0
        %v6247 = vadd.f32 %v6198, %v6246
        %v6248 = vpop.f32.mrf.mxu0
        %v6249 = vadd.f32 %v6200, %v6248
        %6250 = vmatmul.bf16.gmra.mxu0 %v3967
        %v6251 = vpop.f32.mrf.mxu0
        %v6252 = vadd.f32 %v6203, %v6251
        %v6253 = vpop.f32.mrf.mxu0
        %v6254 = vadd.f32 %v6205, %v6253
        %6255 = vmatmul.bf16.gmra.mxu0 %v3975
        %v6256 = vpop.f32.mrf.mxu0
        %v6257 = vadd.f32 %v6208, %v6256
        %v6258 = vpop.f32.mrf.mxu0
        %v6259 = vadd.f32 %v6210, %v6258
        %6260 = vmatmul.bf16.gmra.mxu0 %v3983
        %v6261 = vpop.f32.mrf.mxu0
        %v6262 = vadd.f32 %v6213, %v6261
        %v6263 = vpop.f32.mrf.mxu0
        %v6264 = vadd.f32 %v6215, %v6263
        %6265 = vdwg.mxu0
        %6266 = vmatpush.bf16.msra.mxu0 %v5272
        %6267 = vmatpush.bf16.msra.mxu0 %v5268
        %6268 = vmatpush.bf16.msra.mxu0 %v5264
        %6269 = vmatpush.bf16.msra.mxu0 %v5260
        %6270 = vmatpush.bf16.msra.mxu0 %v5256
        %6271 = vmatpush.bf16.msra.mxu0 %v5252
        %6272 = vmatpush.bf16.msra.mxu0 %v5248
        %6273 = vmatpush.bf16.msra.mxu0 %v5244
        %6274 = vmatmul.bf16.gmra.mxu0 %v3928
        %v6275 = vpop.f32.mrf.mxu0
        %v6276 = vadd.f32 %v6227, %v6275
        %v6277 = vpop.f32.mrf.mxu0
        %v6278 = vadd.f32 %v6229, %v6277
        %6279 = vmatmul.bf16.gmra.mxu0 %v3936
        %v6280 = vpop.f32.mrf.mxu0
        %v6281 = vadd.f32 %v6232, %v6280
        %v6282 = vpop.f32.mrf.mxu0
        %v6283 = vadd.f32 %v6234, %v6282
        %6284 = vmatmul.bf16.gmra.mxu0 %v3944
        %v6285 = vpop.f32.mrf.mxu0
        %v6286 = vadd.f32 %v6237, %v6285
        %v6287 = vpop.f32.mrf.mxu0
        %v6288 = vadd.f32 %v6239, %v6287
        %6289 = vmatmul.bf16.gmra.mxu0 %v3952
        %v6290 = vpop.f32.mrf.mxu0
        %v6291 = vadd.f32 %v6242, %v6290
        %v6292 = vpop.f32.mrf.mxu0
        %v6293 = vadd.f32 %v6244, %v6292
        %6294 = vmatmul.bf16.gmra.mxu0 %v3960
        %v6295 = vpop.f32.mrf.mxu0
        %v6296 = vadd.f32 %v6247, %v6295
        %v6297 = vpop.f32.mrf.mxu0
        %v6298 = vadd.f32 %v6249, %v6297
        %6299 = vmatmul.bf16.gmra.mxu0 %v3968
        %v6300 = vpop.f32.mrf.mxu0
        %v6301 = vadd.f32 %v6252, %v6300
        %v6302 = vpop.f32.mrf.mxu0
        %v6303 = vadd.f32 %v6254, %v6302
        %6304 = vmatmul.bf16.gmra.mxu0 %v3976
        %v6305 = vpop.f32.mrf.mxu0
        %v6306 = vadd.f32 %v6257, %v6305
        %v6307 = vpop.f32.mrf.mxu0
        %v6308 = vadd.f32 %v6259, %v6307
        %6309 = vmatmul.bf16.gmra.mxu0 %v3984
        %v6310 = vpop.f32.mrf.mxu0
        %v6311 = vadd.f32 %v6262, %v6310
        %v6312 = vpop.f32.mrf.mxu0
        %v6313 = vadd.f32 %v6264, %v6312
        %6314 = vdwg.mxu0
        %6315 = vmatpush.bf16.msra.mxu0 %v5049
        %6316 = vmatpush.bf16.msra.mxu0 %v5045
        %6317 = vmatpush.bf16.msra.mxu0 %v5041
        %6318 = vmatpush.bf16.msra.mxu0 %v5037
        %6319 = vmatpush.bf16.msra.mxu0 %v5033
        %6320 = vmatpush.bf16.msra.mxu0 %v5029
        %6321 = vmatpush.bf16.msra.mxu0 %v5025
        %6322 = vmatpush.bf16.msra.mxu0 %v5021
        %6323 = vmatmul.bf16.gmra.mxu0 %v3921
        %v6324 = vpop.f32.mrf.mxu0
        %v6325 = vadd.f32 %v4245, %v6324
        %v6326 = vpop.f32.mrf.mxu0
        %v6327 = vadd.f32 %v4245, %v6326
        %6328 = vmatmul.bf16.gmra.mxu0 %v3929
        %v6329 = vpop.f32.mrf.mxu0
        %v6330 = vadd.f32 %v4245, %v6329
        %v6331 = vpop.f32.mrf.mxu0
        %v6332 = vadd.f32 %v4245, %v6331
        %6333 = vmatmul.bf16.gmra.mxu0 %v3937
        %v6334 = vpop.f32.mrf.mxu0
        %v6335 = vadd.f32 %v4245, %v6334
        %v6336 = vpop.f32.mrf.mxu0
        %v6337 = vadd.f32 %v4245, %v6336
        %6338 = vmatmul.bf16.gmra.mxu0 %v3945
        %v6339 = vpop.f32.mrf.mxu0
        %v6340 = vadd.f32 %v4245, %v6339
        %v6341 = vpop.f32.mrf.mxu0
        %v6342 = vadd.f32 %v4245, %v6341
        %6343 = vmatmul.bf16.gmra.mxu0 %v3953
        %v6344 = vpop.f32.mrf.mxu0
        %v6345 = vadd.f32 %v4245, %v6344
        %v6346 = vpop.f32.mrf.mxu0
        %v6347 = vadd.f32 %v4245, %v6346
        %6348 = vmatmul.bf16.gmra.mxu0 %v3961
        %v6349 = vpop.f32.mrf.mxu0
        %v6350 = vadd.f32 %v4245, %v6349
        %v6351 = vpop.f32.mrf.mxu0
        %v6352 = vadd.f32 %v4245, %v6351
        %6353 = vmatmul.bf16.gmra.mxu0 %v3969
        %v6354 = vpop.f32.mrf.mxu0
        %v6355 = vadd.f32 %v4245, %v6354
        %v6356 = vpop.f32.mrf.mxu0
        %v6357 = vadd.f32 %v4245, %v6356
        %6358 = vmatmul.bf16.gmra.mxu0 %v3977
        %v6359 = vpop.f32.mrf.mxu0
        %v6360 = vadd.f32 %v4245, %v6359
        %v6361 = vpop.f32.mrf.mxu0
        %v6362 = vadd.f32 %v4245, %v6361
        %6363 = vdwg.mxu0
        %6364 = vmatpush.bf16.msra.mxu0 %v5081
        %6365 = vmatpush.bf16.msra.mxu0 %v5077
        %6366 = vmatpush.bf16.msra.mxu0 %v5073
        %6367 = vmatpush.bf16.msra.mxu0 %v5069
        %6368 = vmatpush.bf16.msra.mxu0 %v5065
        %6369 = vmatpush.bf16.msra.mxu0 %v5061
        %6370 = vmatpush.bf16.msra.mxu0 %v5057
        %6371 = vmatpush.bf16.msra.mxu0 %v5053
        %6372 = vmatmul.bf16.gmra.mxu0 %v3922
        %v6373 = vpop.f32.mrf.mxu0
        %v6374 = vadd.f32 %v6325, %v6373
        %v6375 = vpop.f32.mrf.mxu0
        %v6376 = vadd.f32 %v6327, %v6375
        %6377 = vmatmul.bf16.gmra.mxu0 %v3930
        %v6378 = vpop.f32.mrf.mxu0
        %v6379 = vadd.f32 %v6330, %v6378
        %v6380 = vpop.f32.mrf.mxu0
        %v6381 = vadd.f32 %v6332, %v6380
        %6382 = vmatmul.bf16.gmra.mxu0 %v3938
        %v6383 = vpop.f32.mrf.mxu0
        %v6384 = vadd.f32 %v6335, %v6383
        %v6385 = vpop.f32.mrf.mxu0
        %v6386 = vadd.f32 %v6337, %v6385
        %6387 = vmatmul.bf16.gmra.mxu0 %v3946
        %v6388 = vpop.f32.mrf.mxu0
        %v6389 = vadd.f32 %v6340, %v6388
        %v6390 = vpop.f32.mrf.mxu0
        %v6391 = vadd.f32 %v6342, %v6390
        %6392 = vmatmul.bf16.gmra.mxu0 %v3954
        %v6393 = vpop.f32.mrf.mxu0
        %v6394 = vadd.f32 %v6345, %v6393
        %v6395 = vpop.f32.mrf.mxu0
        %v6396 = vadd.f32 %v6347, %v6395
        %6397 = vmatmul.bf16.gmra.mxu0 %v3962
        %v6398 = vpop.f32.mrf.mxu0
        %v6399 = vadd.f32 %v6350, %v6398
        %v6400 = vpop.f32.mrf.mxu0
        %v6401 = vadd.f32 %v6352, %v6400
        %6402 = vmatmul.bf16.gmra.mxu0 %v3970
        %v6403 = vpop.f32.mrf.mxu0
        %v6404 = vadd.f32 %v6355, %v6403
        %v6405 = vpop.f32.mrf.mxu0
        %v6406 = vadd.f32 %v6357, %v6405
        %6407 = vmatmul.bf16.gmra.mxu0 %v3978
        %v6408 = vpop.f32.mrf.mxu0
        %v6409 = vadd.f32 %v6360, %v6408
        %v6410 = vpop.f32.mrf.mxu0
        %v6411 = vadd.f32 %v6362, %v6410
        %6412 = vdwg.mxu0
        %6413 = vmatpush.bf16.msra.mxu0 %v5113
        %6414 = vmatpush.bf16.msra.mxu0 %v5109
        %6415 = vmatpush.bf16.msra.mxu0 %v5105
        %6416 = vmatpush.bf16.msra.mxu0 %v5101
        %6417 = vmatpush.bf16.msra.mxu0 %v5097
        %6418 = vmatpush.bf16.msra.mxu0 %v5093
        %6419 = vmatpush.bf16.msra.mxu0 %v5089
        %6420 = vmatpush.bf16.msra.mxu0 %v5085
        %6421 = vmatmul.bf16.gmra.mxu0 %v3923
        %v6422 = vpop.f32.mrf.mxu0
        %v6423 = vadd.f32 %v6374, %v6422
        %v6424 = vpop.f32.mrf.mxu0
        %v6425 = vadd.f32 %v6376, %v6424
        %6426 = vmatmul.bf16.gmra.mxu0 %v3931
        %v6427 = vpop.f32.mrf.mxu0
        %v6428 = vadd.f32 %v6379, %v6427
        %v6429 = vpop.f32.mrf.mxu0
        %v6430 = vadd.f32 %v6381, %v6429
        %6431 = vmatmul.bf16.gmra.mxu0 %v3939
        %v6432 = vpop.f32.mrf.mxu0
        %v6433 = vadd.f32 %v6384, %v6432
        %v6434 = vpop.f32.mrf.mxu0
        %v6435 = vadd.f32 %v6386, %v6434
        %6436 = vmatmul.bf16.gmra.mxu0 %v3947
        %v6437 = vpop.f32.mrf.mxu0
        %v6438 = vadd.f32 %v6389, %v6437
        %v6439 = vpop.f32.mrf.mxu0
        %v6440 = vadd.f32 %v6391, %v6439
        %6441 = vmatmul.bf16.gmra.mxu0 %v3955
        %v6442 = vpop.f32.mrf.mxu0
        %v6443 = vadd.f32 %v6394, %v6442
        %v6444 = vpop.f32.mrf.mxu0
        %v6445 = vadd.f32 %v6396, %v6444
        %6446 = vmatmul.bf16.gmra.mxu0 %v3963
        %v6447 = vpop.f32.mrf.mxu0
        %v6448 = vadd.f32 %v6399, %v6447
        %v6449 = vpop.f32.mrf.mxu0
        %v6450 = vadd.f32 %v6401, %v6449
        %6451 = vmatmul.bf16.gmra.mxu0 %v3971
        %v6452 = vpop.f32.mrf.mxu0
        %v6453 = vadd.f32 %v6404, %v6452
        %v6454 = vpop.f32.mrf.mxu0
        %v6455 = vadd.f32 %v6406, %v6454
        %6456 = vmatmul.bf16.gmra.mxu0 %v3979
        %v6457 = vpop.f32.mrf.mxu0
        %v6458 = vadd.f32 %v6409, %v6457
        %v6459 = vpop.f32.mrf.mxu0
        %v6460 = vadd.f32 %v6411, %v6459
        %6461 = vdwg.mxu0
        %6462 = vmatpush.bf16.msra.mxu0 %v5145
        %6463 = vmatpush.bf16.msra.mxu0 %v5141
        %6464 = vmatpush.bf16.msra.mxu0 %v5137
        %6465 = vmatpush.bf16.msra.mxu0 %v5133
        %6466 = vmatpush.bf16.msra.mxu0 %v5129
        %6467 = vmatpush.bf16.msra.mxu0 %v5125
        %6468 = vmatpush.bf16.msra.mxu0 %v5121
        %6469 = vmatpush.bf16.msra.mxu0 %v5117
        %6470 = vmatmul.bf16.gmra.mxu0 %v3924
        %v6471 = vpop.f32.mrf.mxu0
        %v6472 = vadd.f32 %v6423, %v6471
        %v6473 = vpop.f32.mrf.mxu0
        %v6474 = vadd.f32 %v6425, %v6473
        %6475 = vmatmul.bf16.gmra.mxu0 %v3932
        %v6476 = vpop.f32.mrf.mxu0
        %v6477 = vadd.f32 %v6428, %v6476
        %v6478 = vpop.f32.mrf.mxu0
        %v6479 = vadd.f32 %v6430, %v6478
        %6480 = vmatmul.bf16.gmra.mxu0 %v3940
        %v6481 = vpop.f32.mrf.mxu0
        %v6482 = vadd.f32 %v6433, %v6481
        %v6483 = vpop.f32.mrf.mxu0
        %v6484 = vadd.f32 %v6435, %v6483
        %6485 = vmatmul.bf16.gmra.mxu0 %v3948
        %v6486 = vpop.f32.mrf.mxu0
        %v6487 = vadd.f32 %v6438, %v6486
        %v6488 = vpop.f32.mrf.mxu0
        %v6489 = vadd.f32 %v6440, %v6488
        %6490 = vmatmul.bf16.gmra.mxu0 %v3956
        %v6491 = vpop.f32.mrf.mxu0
        %v6492 = vadd.f32 %v6443, %v6491
        %v6493 = vpop.f32.mrf.mxu0
        %v6494 = vadd.f32 %v6445, %v6493
        %6495 = vmatmul.bf16.gmra.mxu0 %v3964
        %v6496 = vpop.f32.mrf.mxu0
        %v6497 = vadd.f32 %v6448, %v6496
        %v6498 = vpop.f32.mrf.mxu0
        %v6499 = vadd.f32 %v6450, %v6498
        %6500 = vmatmul.bf16.gmra.mxu0 %v3972
        %v6501 = vpop.f32.mrf.mxu0
        %v6502 = vadd.f32 %v6453, %v6501
        %v6503 = vpop.f32.mrf.mxu0
        %v6504 = vadd.f32 %v6455, %v6503
        %6505 = vmatmul.bf16.gmra.mxu0 %v3980
        %v6506 = vpop.f32.mrf.mxu0
        %v6507 = vadd.f32 %v6458, %v6506
        %v6508 = vpop.f32.mrf.mxu0
        %v6509 = vadd.f32 %v6460, %v6508
        %6510 = vdwg.mxu0
        %6511 = vmatpush.bf16.msra.mxu0 %v5177
        %6512 = vmatpush.bf16.msra.mxu0 %v5173
        %6513 = vmatpush.bf16.msra.mxu0 %v5169
        %6514 = vmatpush.bf16.msra.mxu0 %v5165
        %6515 = vmatpush.bf16.msra.mxu0 %v5161
        %6516 = vmatpush.bf16.msra.mxu0 %v5157
        %6517 = vmatpush.bf16.msra.mxu0 %v5153
        %6518 = vmatpush.bf16.msra.mxu0 %v5149
        %6519 = vmatmul.bf16.gmra.mxu0 %v3925
        %v6520 = vpop.f32.mrf.mxu0
        %v6521 = vadd.f32 %v6472, %v6520
        %v6522 = vpop.f32.mrf.mxu0
        %v6523 = vadd.f32 %v6474, %v6522
        %6524 = vmatmul.bf16.gmra.mxu0 %v3933
        %v6525 = vpop.f32.mrf.mxu0
        %v6526 = vadd.f32 %v6477, %v6525
        %v6527 = vpop.f32.mrf.mxu0
        %v6528 = vadd.f32 %v6479, %v6527
        %6529 = vmatmul.bf16.gmra.mxu0 %v3941
        %v6530 = vpop.f32.mrf.mxu0
        %v6531 = vadd.f32 %v6482, %v6530
        %v6532 = vpop.f32.mrf.mxu0
        %v6533 = vadd.f32 %v6484, %v6532
        %6534 = vmatmul.bf16.gmra.mxu0 %v3949
        %v6535 = vpop.f32.mrf.mxu0
        %v6536 = vadd.f32 %v6487, %v6535
        %v6537 = vpop.f32.mrf.mxu0
        %v6538 = vadd.f32 %v6489, %v6537
        %6539 = vmatmul.bf16.gmra.mxu0 %v3957
        %v6540 = vpop.f32.mrf.mxu0
        %v6541 = vadd.f32 %v6492, %v6540
        %v6542 = vpop.f32.mrf.mxu0
        %v6543 = vadd.f32 %v6494, %v6542
        %6544 = vmatmul.bf16.gmra.mxu0 %v3965
        %v6545 = vpop.f32.mrf.mxu0
        %v6546 = vadd.f32 %v6497, %v6545
        %v6547 = vpop.f32.mrf.mxu0
        %v6548 = vadd.f32 %v6499, %v6547
        %6549 = vmatmul.bf16.gmra.mxu0 %v3973
        %v6550 = vpop.f32.mrf.mxu0
        %v6551 = vadd.f32 %v6502, %v6550
        %v6552 = vpop.f32.mrf.mxu0
        %v6553 = vadd.f32 %v6504, %v6552
        %6554 = vmatmul.bf16.gmra.mxu0 %v3981
        %v6555 = vpop.f32.mrf.mxu0
        %v6556 = vadd.f32 %v6507, %v6555
        %v6557 = vpop.f32.mrf.mxu0
        %v6558 = vadd.f32 %v6509, %v6557
        %6559 = vdwg.mxu0
        %6560 = vmatpush.bf16.msra.mxu0 %v5209
        %6561 = vmatpush.bf16.msra.mxu0 %v5205
        %6562 = vmatpush.bf16.msra.mxu0 %v5201
        %6563 = vmatpush.bf16.msra.mxu0 %v5197
        %6564 = vmatpush.bf16.msra.mxu0 %v5193
        %6565 = vmatpush.bf16.msra.mxu0 %v5189
        %6566 = vmatpush.bf16.msra.mxu0 %v5185
        %6567 = vmatpush.bf16.msra.mxu0 %v5181
        %6568 = vmatmul.bf16.gmra.mxu0 %v3926
        %v6569 = vpop.f32.mrf.mxu0
        %v6570 = vadd.f32 %v6521, %v6569
        %v6571 = vpop.f32.mrf.mxu0
        %v6572 = vadd.f32 %v6523, %v6571
        %6573 = vmatmul.bf16.gmra.mxu0 %v3934
        %v6574 = vpop.f32.mrf.mxu0
        %v6575 = vadd.f32 %v6526, %v6574
        %v6576 = vpop.f32.mrf.mxu0
        %v6577 = vadd.f32 %v6528, %v6576
        %6578 = vmatmul.bf16.gmra.mxu0 %v3942
        %v6579 = vpop.f32.mrf.mxu0
        %v6580 = vadd.f32 %v6531, %v6579
        %v6581 = vpop.f32.mrf.mxu0
        %v6582 = vadd.f32 %v6533, %v6581
        %6583 = vmatmul.bf16.gmra.mxu0 %v3950
        %v6584 = vpop.f32.mrf.mxu0
        %v6585 = vadd.f32 %v6536, %v6584
        %v6586 = vpop.f32.mrf.mxu0
        %v6587 = vadd.f32 %v6538, %v6586
        %6588 = vmatmul.bf16.gmra.mxu0 %v3958
        %v6589 = vpop.f32.mrf.mxu0
        %v6590 = vadd.f32 %v6541, %v6589
        %v6591 = vpop.f32.mrf.mxu0
        %v6592 = vadd.f32 %v6543, %v6591
        %6593 = vmatmul.bf16.gmra.mxu0 %v3966
        %v6594 = vpop.f32.mrf.mxu0
        %v6595 = vadd.f32 %v6546, %v6594
        %v6596 = vpop.f32.mrf.mxu0
        %v6597 = vadd.f32 %v6548, %v6596
        %6598 = vmatmul.bf16.gmra.mxu0 %v3974
        %v6599 = vpop.f32.mrf.mxu0
        %v6600 = vadd.f32 %v6551, %v6599
        %v6601 = vpop.f32.mrf.mxu0
        %v6602 = vadd.f32 %v6553, %v6601
        %6603 = vmatmul.bf16.gmra.mxu0 %v3982
        %v6604 = vpop.f32.mrf.mxu0
        %v6605 = vadd.f32 %v6556, %v6604
        %v6606 = vpop.f32.mrf.mxu0
        %v6607 = vadd.f32 %v6558, %v6606
        %6608 = vdwg.mxu0
        %6609 = vmatpush.bf16.msra.mxu0 %v5241
        %6610 = vmatpush.bf16.msra.mxu0 %v5237
        %6611 = vmatpush.bf16.msra.mxu0 %v5233
        %6612 = vmatpush.bf16.msra.mxu0 %v5229
        %6613 = vmatpush.bf16.msra.mxu0 %v5225
        %6614 = vmatpush.bf16.msra.mxu0 %v5221
        %6615 = vmatpush.bf16.msra.mxu0 %v5217
        %6616 = vmatpush.bf16.msra.mxu0 %v5213
        %6617 = vmatmul.bf16.gmra.mxu0 %v3927
        %v6618 = vpop.f32.mrf.mxu0
        %v6619 = vadd.f32 %v6570, %v6618
        %v6620 = vpop.f32.mrf.mxu0
        %v6621 = vadd.f32 %v6572, %v6620
        %6622 = vmatmul.bf16.gmra.mxu0 %v3935
        %v6623 = vpop.f32.mrf.mxu0
        %v6624 = vadd.f32 %v6575, %v6623
        %v6625 = vpop.f32.mrf.mxu0
        %v6626 = vadd.f32 %v6577, %v6625
        %6627 = vmatmul.bf16.gmra.mxu0 %v3943
        %v6628 = vpop.f32.mrf.mxu0
        %v6629 = vadd.f32 %v6580, %v6628
        %v6630 = vpop.f32.mrf.mxu0
        %v6631 = vadd.f32 %v6582, %v6630
        %6632 = vmatmul.bf16.gmra.mxu0 %v3951
        %v6633 = vpop.f32.mrf.mxu0
        %v6634 = vadd.f32 %v6585, %v6633
        %v6635 = vpop.f32.mrf.mxu0
        %v6636 = vadd.f32 %v6587, %v6635
        %6637 = vmatmul.bf16.gmra.mxu0 %v3959
        %v6638 = vpop.f32.mrf.mxu0
        %v6639 = vadd.f32 %v6590, %v6638
        %v6640 = vpop.f32.mrf.mxu0
        %v6641 = vadd.f32 %v6592, %v6640
        %6642 = vmatmul.bf16.gmra.mxu0 %v3967
        %v6643 = vpop.f32.mrf.mxu0
        %v6644 = vadd.f32 %v6595, %v6643
        %v6645 = vpop.f32.mrf.mxu0
        %v6646 = vadd.f32 %v6597, %v6645
        %6647 = vmatmul.bf16.gmra.mxu0 %v3975
        %v6648 = vpop.f32.mrf.mxu0
        %v6649 = vadd.f32 %v6600, %v6648
        %v6650 = vpop.f32.mrf.mxu0
        %v6651 = vadd.f32 %v6602, %v6650
        %6652 = vmatmul.bf16.gmra.mxu0 %v3983
        %v6653 = vpop.f32.mrf.mxu0
        %v6654 = vadd.f32 %v6605, %v6653
        %v6655 = vpop.f32.mrf.mxu0
        %v6656 = vadd.f32 %v6607, %v6655
        %6657 = vdwg.mxu0
        %6658 = vmatpush.bf16.msra.mxu0 %v5273
        %6659 = vmatpush.bf16.msra.mxu0 %v5269
        %6660 = vmatpush.bf16.msra.mxu0 %v5265
        %6661 = vmatpush.bf16.msra.mxu0 %v5261
        %6662 = vmatpush.bf16.msra.mxu0 %v5257
        %6663 = vmatpush.bf16.msra.mxu0 %v5253
        %6664 = vmatpush.bf16.msra.mxu0 %v5249
        %6665 = vmatpush.bf16.msra.mxu0 %v5245
        %6666 = vmatmul.bf16.gmra.mxu0 %v3928
        %v6667 = vpop.f32.mrf.mxu0
        %v6668 = vadd.f32 %v6619, %v6667
        %v6669 = vpop.f32.mrf.mxu0
        %v6670 = vadd.f32 %v6621, %v6669
        %6671 = vmatmul.bf16.gmra.mxu0 %v3936
        %v6672 = vpop.f32.mrf.mxu0
        %v6673 = vadd.f32 %v6624, %v6672
        %v6674 = vpop.f32.mrf.mxu0
        %v6675 = vadd.f32 %v6626, %v6674
        %6676 = vmatmul.bf16.gmra.mxu0 %v3944
        %v6677 = vpop.f32.mrf.mxu0
        %v6678 = vadd.f32 %v6629, %v6677
        %v6679 = vpop.f32.mrf.mxu0
        %v6680 = vadd.f32 %v6631, %v6679
        %6681 = vmatmul.bf16.gmra.mxu0 %v3952
        %v6682 = vpop.f32.mrf.mxu0
        %v6683 = vadd.f32 %v6634, %v6682
        %v6684 = vpop.f32.mrf.mxu0
        %v6685 = vadd.f32 %v6636, %v6684
        %6686 = vmatmul.bf16.gmra.mxu0 %v3960
        %v6687 = vpop.f32.mrf.mxu0
        %v6688 = vadd.f32 %v6639, %v6687
        %v6689 = vpop.f32.mrf.mxu0
        %v6690 = vadd.f32 %v6641, %v6689
        %6691 = vmatmul.bf16.gmra.mxu0 %v3968
        %v6692 = vpop.f32.mrf.mxu0
        %v6693 = vadd.f32 %v6644, %v6692
        %v6694 = vpop.f32.mrf.mxu0
        %v6695 = vadd.f32 %v6646, %v6694
        %6696 = vmatmul.bf16.gmra.mxu0 %v3976
        %v6697 = vpop.f32.mrf.mxu0
        %v6698 = vadd.f32 %v6649, %v6697
        %v6699 = vpop.f32.mrf.mxu0
        %v6700 = vadd.f32 %v6651, %v6699
        %6701 = vmatmul.bf16.gmra.mxu0 %v3984
        %v6702 = vpop.f32.mrf.mxu0
        %v6703 = vadd.f32 %v6654, %v6702
        %v6704 = vpop.f32.mrf.mxu0
        %v6705 = vadd.f32 %v6656, %v6704
        %6706 = vdwg.mxu0
        %6707 = vmatpush.bf16.msra.mxu0 %v5050
        %6708 = vmatpush.bf16.msra.mxu0 %v5046
        %6709 = vmatpush.bf16.msra.mxu0 %v5042
        %6710 = vmatpush.bf16.msra.mxu0 %v5038
        %6711 = vmatpush.bf16.msra.mxu0 %v5034
        %6712 = vmatpush.bf16.msra.mxu0 %v5030
        %6713 = vmatpush.bf16.msra.mxu0 %v5026
        %6714 = vmatpush.bf16.msra.mxu0 %v5022
        %6715 = vmatmul.bf16.gmra.mxu0 %v3921
        %v6716 = vpop.f32.mrf.mxu0
        %v6717 = vadd.f32 %v4246, %v6716
        %v6718 = vpop.f32.mrf.mxu0
        %v6719 = vadd.f32 %v4246, %v6718
        %6720 = vmatmul.bf16.gmra.mxu0 %v3929
        %v6721 = vpop.f32.mrf.mxu0
        %v6722 = vadd.f32 %v4246, %v6721
        %v6723 = vpop.f32.mrf.mxu0
        %v6724 = vadd.f32 %v4246, %v6723
        %6725 = vmatmul.bf16.gmra.mxu0 %v3937
        %v6726 = vpop.f32.mrf.mxu0
        %v6727 = vadd.f32 %v4246, %v6726
        %v6728 = vpop.f32.mrf.mxu0
        %v6729 = vadd.f32 %v4246, %v6728
        %6730 = vmatmul.bf16.gmra.mxu0 %v3945
        %v6731 = vpop.f32.mrf.mxu0
        %v6732 = vadd.f32 %v4246, %v6731
        %v6733 = vpop.f32.mrf.mxu0
        %v6734 = vadd.f32 %v4246, %v6733
        %6735 = vmatmul.bf16.gmra.mxu0 %v3953
        %v6736 = vpop.f32.mrf.mxu0
        %v6737 = vadd.f32 %v4246, %v6736
        %v6738 = vpop.f32.mrf.mxu0
        %v6739 = vadd.f32 %v4246, %v6738
        %6740 = vmatmul.bf16.gmra.mxu0 %v3961
        %v6741 = vpop.f32.mrf.mxu0
        %v6742 = vadd.f32 %v4246, %v6741
        %v6743 = vpop.f32.mrf.mxu0
        %v6744 = vadd.f32 %v4246, %v6743
        %6745 = vmatmul.bf16.gmra.mxu0 %v3969
        %v6746 = vpop.f32.mrf.mxu0
        %v6747 = vadd.f32 %v4246, %v6746
        %v6748 = vpop.f32.mrf.mxu0
        %v6749 = vadd.f32 %v4246, %v6748
        %6750 = vmatmul.bf16.gmra.mxu0 %v3977
        %v6751 = vpop.f32.mrf.mxu0
        %v6752 = vadd.f32 %v4246, %v6751
        %v6753 = vpop.f32.mrf.mxu0
        %v6754 = vadd.f32 %v4246, %v6753
        %6755 = vdwg.mxu0
        %6756 = vmatpush.bf16.msra.mxu0 %v5082
        %6757 = vmatpush.bf16.msra.mxu0 %v5078
        %6758 = vmatpush.bf16.msra.mxu0 %v5074
        %6759 = vmatpush.bf16.msra.mxu0 %v5070
        %6760 = vmatpush.bf16.msra.mxu0 %v5066
        %6761 = vmatpush.bf16.msra.mxu0 %v5062
        %6762 = vmatpush.bf16.msra.mxu0 %v5058
        %6763 = vmatpush.bf16.msra.mxu0 %v5054
        %6764 = vmatmul.bf16.gmra.mxu0 %v3922
        %v6765 = vpop.f32.mrf.mxu0
        %v6766 = vadd.f32 %v6717, %v6765
        %v6767 = vpop.f32.mrf.mxu0
        %v6768 = vadd.f32 %v6719, %v6767
        %6769 = vmatmul.bf16.gmra.mxu0 %v3930
        %v6770 = vpop.f32.mrf.mxu0
        %v6771 = vadd.f32 %v6722, %v6770
        %v6772 = vpop.f32.mrf.mxu0
        %v6773 = vadd.f32 %v6724, %v6772
        %6774 = vmatmul.bf16.gmra.mxu0 %v3938
        %v6775 = vpop.f32.mrf.mxu0
        %v6776 = vadd.f32 %v6727, %v6775
        %v6777 = vpop.f32.mrf.mxu0
        %v6778 = vadd.f32 %v6729, %v6777
        %6779 = vmatmul.bf16.gmra.mxu0 %v3946
        %v6780 = vpop.f32.mrf.mxu0
        %v6781 = vadd.f32 %v6732, %v6780
        %v6782 = vpop.f32.mrf.mxu0
        %v6783 = vadd.f32 %v6734, %v6782
        %6784 = vmatmul.bf16.gmra.mxu0 %v3954
        %v6785 = vpop.f32.mrf.mxu0
        %v6786 = vadd.f32 %v6737, %v6785
        %v6787 = vpop.f32.mrf.mxu0
        %v6788 = vadd.f32 %v6739, %v6787
        %6789 = vmatmul.bf16.gmra.mxu0 %v3962
        %v6790 = vpop.f32.mrf.mxu0
        %v6791 = vadd.f32 %v6742, %v6790
        %v6792 = vpop.f32.mrf.mxu0
        %v6793 = vadd.f32 %v6744, %v6792
        %6794 = vmatmul.bf16.gmra.mxu0 %v3970
        %v6795 = vpop.f32.mrf.mxu0
        %v6796 = vadd.f32 %v6747, %v6795
        %v6797 = vpop.f32.mrf.mxu0
        %v6798 = vadd.f32 %v6749, %v6797
        %6799 = vmatmul.bf16.gmra.mxu0 %v3978
        %v6800 = vpop.f32.mrf.mxu0
        %v6801 = vadd.f32 %v6752, %v6800
        %v6802 = vpop.f32.mrf.mxu0
        %v6803 = vadd.f32 %v6754, %v6802
        %6804 = vdwg.mxu0
        %6805 = vmatpush.bf16.msra.mxu0 %v5114
        %6806 = vmatpush.bf16.msra.mxu0 %v5110
        %6807 = vmatpush.bf16.msra.mxu0 %v5106
        %6808 = vmatpush.bf16.msra.mxu0 %v5102
        %6809 = vmatpush.bf16.msra.mxu0 %v5098
        %6810 = vmatpush.bf16.msra.mxu0 %v5094
        %6811 = vmatpush.bf16.msra.mxu0 %v5090
        %6812 = vmatpush.bf16.msra.mxu0 %v5086
        %6813 = vmatmul.bf16.gmra.mxu0 %v3923
        %v6814 = vpop.f32.mrf.mxu0
        %v6815 = vadd.f32 %v6766, %v6814
        %v6816 = vpop.f32.mrf.mxu0
        %v6817 = vadd.f32 %v6768, %v6816
        %6818 = vmatmul.bf16.gmra.mxu0 %v3931
        %v6819 = vpop.f32.mrf.mxu0
        %v6820 = vadd.f32 %v6771, %v6819
        %v6821 = vpop.f32.mrf.mxu0
        %v6822 = vadd.f32 %v6773, %v6821
        %6823 = vmatmul.bf16.gmra.mxu0 %v3939
        %v6824 = vpop.f32.mrf.mxu0
        %v6825 = vadd.f32 %v6776, %v6824
        %v6826 = vpop.f32.mrf.mxu0
        %v6827 = vadd.f32 %v6778, %v6826
        %6828 = vmatmul.bf16.gmra.mxu0 %v3947
        %v6829 = vpop.f32.mrf.mxu0
        %v6830 = vadd.f32 %v6781, %v6829
        %v6831 = vpop.f32.mrf.mxu0
        %v6832 = vadd.f32 %v6783, %v6831
        %6833 = vmatmul.bf16.gmra.mxu0 %v3955
        %v6834 = vpop.f32.mrf.mxu0
        %v6835 = vadd.f32 %v6786, %v6834
        %v6836 = vpop.f32.mrf.mxu0
        %v6837 = vadd.f32 %v6788, %v6836
        %6838 = vmatmul.bf16.gmra.mxu0 %v3963
        %v6839 = vpop.f32.mrf.mxu0
        %v6840 = vadd.f32 %v6791, %v6839
        %v6841 = vpop.f32.mrf.mxu0
        %v6842 = vadd.f32 %v6793, %v6841
        %6843 = vmatmul.bf16.gmra.mxu0 %v3971
        %v6844 = vpop.f32.mrf.mxu0
        %v6845 = vadd.f32 %v6796, %v6844
        %v6846 = vpop.f32.mrf.mxu0
        %v6847 = vadd.f32 %v6798, %v6846
        %6848 = vmatmul.bf16.gmra.mxu0 %v3979
        %v6849 = vpop.f32.mrf.mxu0
        %v6850 = vadd.f32 %v6801, %v6849
        %v6851 = vpop.f32.mrf.mxu0
        %v6852 = vadd.f32 %v6803, %v6851
        %6853 = vdwg.mxu0
        %6854 = vmatpush.bf16.msra.mxu0 %v5146
        %6855 = vmatpush.bf16.msra.mxu0 %v5142
        %6856 = vmatpush.bf16.msra.mxu0 %v5138
        %6857 = vmatpush.bf16.msra.mxu0 %v5134
        %6858 = vmatpush.bf16.msra.mxu0 %v5130
        %6859 = vmatpush.bf16.msra.mxu0 %v5126
        %6860 = vmatpush.bf16.msra.mxu0 %v5122
        %6861 = vmatpush.bf16.msra.mxu0 %v5118
        %6862 = vmatmul.bf16.gmra.mxu0 %v3924
        %v6863 = vpop.f32.mrf.mxu0
        %v6864 = vadd.f32 %v6815, %v6863
        %v6865 = vpop.f32.mrf.mxu0
        %v6866 = vadd.f32 %v6817, %v6865
        %6867 = vmatmul.bf16.gmra.mxu0 %v3932
        %v6868 = vpop.f32.mrf.mxu0
        %v6869 = vadd.f32 %v6820, %v6868
        %v6870 = vpop.f32.mrf.mxu0
        %v6871 = vadd.f32 %v6822, %v6870
        %6872 = vmatmul.bf16.gmra.mxu0 %v3940
        %v6873 = vpop.f32.mrf.mxu0
        %v6874 = vadd.f32 %v6825, %v6873
        %v6875 = vpop.f32.mrf.mxu0
        %v6876 = vadd.f32 %v6827, %v6875
        %6877 = vmatmul.bf16.gmra.mxu0 %v3948
        %v6878 = vpop.f32.mrf.mxu0
        %v6879 = vadd.f32 %v6830, %v6878
        %v6880 = vpop.f32.mrf.mxu0
        %v6881 = vadd.f32 %v6832, %v6880
        %6882 = vmatmul.bf16.gmra.mxu0 %v3956
        %v6883 = vpop.f32.mrf.mxu0
        %v6884 = vadd.f32 %v6835, %v6883
        %v6885 = vpop.f32.mrf.mxu0
        %v6886 = vadd.f32 %v6837, %v6885
        %6887 = vmatmul.bf16.gmra.mxu0 %v3964
        %v6888 = vpop.f32.mrf.mxu0
        %v6889 = vadd.f32 %v6840, %v6888
        %v6890 = vpop.f32.mrf.mxu0
        %v6891 = vadd.f32 %v6842, %v6890
        %6892 = vmatmul.bf16.gmra.mxu0 %v3972
        %v6893 = vpop.f32.mrf.mxu0
        %v6894 = vadd.f32 %v6845, %v6893
        %v6895 = vpop.f32.mrf.mxu0
        %v6896 = vadd.f32 %v6847, %v6895
        %6897 = vmatmul.bf16.gmra.mxu0 %v3980
        %v6898 = vpop.f32.mrf.mxu0
        %v6899 = vadd.f32 %v6850, %v6898
        %v6900 = vpop.f32.mrf.mxu0
        %v6901 = vadd.f32 %v6852, %v6900
        %6902 = vdwg.mxu0
        %6903 = vmatpush.bf16.msra.mxu0 %v5178
        %6904 = vmatpush.bf16.msra.mxu0 %v5174
        %6905 = vmatpush.bf16.msra.mxu0 %v5170
        %6906 = vmatpush.bf16.msra.mxu0 %v5166
        %6907 = vmatpush.bf16.msra.mxu0 %v5162
        %6908 = vmatpush.bf16.msra.mxu0 %v5158
        %6909 = vmatpush.bf16.msra.mxu0 %v5154
        %6910 = vmatpush.bf16.msra.mxu0 %v5150
        %6911 = vmatmul.bf16.gmra.mxu0 %v3925
        %v6912 = vpop.f32.mrf.mxu0
        %v6913 = vadd.f32 %v6864, %v6912
        %v6914 = vpop.f32.mrf.mxu0
        %v6915 = vadd.f32 %v6866, %v6914
        %6916 = vmatmul.bf16.gmra.mxu0 %v3933
        %v6917 = vpop.f32.mrf.mxu0
        %v6918 = vadd.f32 %v6869, %v6917
        %v6919 = vpop.f32.mrf.mxu0
        %v6920 = vadd.f32 %v6871, %v6919
        %6921 = vmatmul.bf16.gmra.mxu0 %v3941
        %v6922 = vpop.f32.mrf.mxu0
        %v6923 = vadd.f32 %v6874, %v6922
        %v6924 = vpop.f32.mrf.mxu0
        %v6925 = vadd.f32 %v6876, %v6924
        %6926 = vmatmul.bf16.gmra.mxu0 %v3949
        %v6927 = vpop.f32.mrf.mxu0
        %v6928 = vadd.f32 %v6879, %v6927
        %v6929 = vpop.f32.mrf.mxu0
        %v6930 = vadd.f32 %v6881, %v6929
        %6931 = vmatmul.bf16.gmra.mxu0 %v3957
        %v6932 = vpop.f32.mrf.mxu0
        %v6933 = vadd.f32 %v6884, %v6932
        %v6934 = vpop.f32.mrf.mxu0
        %v6935 = vadd.f32 %v6886, %v6934
        %6936 = vmatmul.bf16.gmra.mxu0 %v3965
        %v6937 = vpop.f32.mrf.mxu0
        %v6938 = vadd.f32 %v6889, %v6937
        %v6939 = vpop.f32.mrf.mxu0
        %v6940 = vadd.f32 %v6891, %v6939
        %6941 = vmatmul.bf16.gmra.mxu0 %v3973
        %v6942 = vpop.f32.mrf.mxu0
        %v6943 = vadd.f32 %v6894, %v6942
        %v6944 = vpop.f32.mrf.mxu0
        %v6945 = vadd.f32 %v6896, %v6944
        %6946 = vmatmul.bf16.gmra.mxu0 %v3981
        %v6947 = vpop.f32.mrf.mxu0
        %v6948 = vadd.f32 %v6899, %v6947
        %v6949 = vpop.f32.mrf.mxu0
        %v6950 = vadd.f32 %v6901, %v6949
        %6951 = vdwg.mxu0
        %6952 = vmatpush.bf16.msra.mxu0 %v5210
        %6953 = vmatpush.bf16.msra.mxu0 %v5206
        %6954 = vmatpush.bf16.msra.mxu0 %v5202
        %6955 = vmatpush.bf16.msra.mxu0 %v5198
        %6956 = vmatpush.bf16.msra.mxu0 %v5194
        %6957 = vmatpush.bf16.msra.mxu0 %v5190
        %6958 = vmatpush.bf16.msra.mxu0 %v5186
        %6959 = vmatpush.bf16.msra.mxu0 %v5182
        %6960 = vmatmul.bf16.gmra.mxu0 %v3926
        %v6961 = vpop.f32.mrf.mxu0
        %v6962 = vadd.f32 %v6913, %v6961
        %v6963 = vpop.f32.mrf.mxu0
        %v6964 = vadd.f32 %v6915, %v6963
        %6965 = vmatmul.bf16.gmra.mxu0 %v3934
        %v6966 = vpop.f32.mrf.mxu0
        %v6967 = vadd.f32 %v6918, %v6966
        %v6968 = vpop.f32.mrf.mxu0
        %v6969 = vadd.f32 %v6920, %v6968
        %6970 = vmatmul.bf16.gmra.mxu0 %v3942
        %v6971 = vpop.f32.mrf.mxu0
        %v6972 = vadd.f32 %v6923, %v6971
        %v6973 = vpop.f32.mrf.mxu0
        %v6974 = vadd.f32 %v6925, %v6973
        %6975 = vmatmul.bf16.gmra.mxu0 %v3950
        %v6976 = vpop.f32.mrf.mxu0
        %v6977 = vadd.f32 %v6928, %v6976
        %v6978 = vpop.f32.mrf.mxu0
        %v6979 = vadd.f32 %v6930, %v6978
        %6980 = vmatmul.bf16.gmra.mxu0 %v3958
        %v6981 = vpop.f32.mrf.mxu0
        %v6982 = vadd.f32 %v6933, %v6981
        %v6983 = vpop.f32.mrf.mxu0
        %v6984 = vadd.f32 %v6935, %v6983
        %6985 = vmatmul.bf16.gmra.mxu0 %v3966
        %v6986 = vpop.f32.mrf.mxu0
        %v6987 = vadd.f32 %v6938, %v6986
        %v6988 = vpop.f32.mrf.mxu0
        %v6989 = vadd.f32 %v6940, %v6988
        %6990 = vmatmul.bf16.gmra.mxu0 %v3974
        %v6991 = vpop.f32.mrf.mxu0
        %v6992 = vadd.f32 %v6943, %v6991
        %v6993 = vpop.f32.mrf.mxu0
        %v6994 = vadd.f32 %v6945, %v6993
        %6995 = vmatmul.bf16.gmra.mxu0 %v3982
        %v6996 = vpop.f32.mrf.mxu0
        %v6997 = vadd.f32 %v6948, %v6996
        %v6998 = vpop.f32.mrf.mxu0
        %v6999 = vadd.f32 %v6950, %v6998
        %7000 = vdwg.mxu0
        %7001 = vmatpush.bf16.msra.mxu0 %v5242
        %7002 = vmatpush.bf16.msra.mxu0 %v5238
        %7003 = vmatpush.bf16.msra.mxu0 %v5234
        %7004 = vmatpush.bf16.msra.mxu0 %v5230
        %7005 = vmatpush.bf16.msra.mxu0 %v5226
        %7006 = vmatpush.bf16.msra.mxu0 %v5222
        %7007 = vmatpush.bf16.msra.mxu0 %v5218
        %7008 = vmatpush.bf16.msra.mxu0 %v5214
        %7009 = vmatmul.bf16.gmra.mxu0 %v3927
        %v7010 = vpop.f32.mrf.mxu0
        %v7011 = vadd.f32 %v6962, %v7010
        %v7012 = vpop.f32.mrf.mxu0
        %v7013 = vadd.f32 %v6964, %v7012
        %7014 = vmatmul.bf16.gmra.mxu0 %v3935
        %v7015 = vpop.f32.mrf.mxu0
        %v7016 = vadd.f32 %v6967, %v7015
        %v7017 = vpop.f32.mrf.mxu0
        %v7018 = vadd.f32 %v6969, %v7017
        %7019 = vmatmul.bf16.gmra.mxu0 %v3943
        %v7020 = vpop.f32.mrf.mxu0
        %v7021 = vadd.f32 %v6972, %v7020
        %v7022 = vpop.f32.mrf.mxu0
        %v7023 = vadd.f32 %v6974, %v7022
        %7024 = vmatmul.bf16.gmra.mxu0 %v3951
        %v7025 = vpop.f32.mrf.mxu0
        %v7026 = vadd.f32 %v6977, %v7025
        %v7027 = vpop.f32.mrf.mxu0
        %v7028 = vadd.f32 %v6979, %v7027
        %7029 = vmatmul.bf16.gmra.mxu0 %v3959
        %v7030 = vpop.f32.mrf.mxu0
        %v7031 = vadd.f32 %v6982, %v7030
        %v7032 = vpop.f32.mrf.mxu0
        %v7033 = vadd.f32 %v6984, %v7032
        %7034 = vmatmul.bf16.gmra.mxu0 %v3967
        %v7035 = vpop.f32.mrf.mxu0
        %v7036 = vadd.f32 %v6987, %v7035
        %v7037 = vpop.f32.mrf.mxu0
        %v7038 = vadd.f32 %v6989, %v7037
        %7039 = vmatmul.bf16.gmra.mxu0 %v3975
        %v7040 = vpop.f32.mrf.mxu0
        %v7041 = vadd.f32 %v6992, %v7040
        %v7042 = vpop.f32.mrf.mxu0
        %v7043 = vadd.f32 %v6994, %v7042
        %7044 = vmatmul.bf16.gmra.mxu0 %v3983
        %v7045 = vpop.f32.mrf.mxu0
        %v7046 = vadd.f32 %v6997, %v7045
        %v7047 = vpop.f32.mrf.mxu0
        %v7048 = vadd.f32 %v6999, %v7047
        %7049 = vdwg.mxu0
        %7050 = vmatpush.bf16.msra.mxu0 %v5274
        %7051 = vmatpush.bf16.msra.mxu0 %v5270
        %7052 = vmatpush.bf16.msra.mxu0 %v5266
        %7053 = vmatpush.bf16.msra.mxu0 %v5262
        %7054 = vmatpush.bf16.msra.mxu0 %v5258
        %7055 = vmatpush.bf16.msra.mxu0 %v5254
        %7056 = vmatpush.bf16.msra.mxu0 %v5250
        %7057 = vmatpush.bf16.msra.mxu0 %v5246
        %7058 = vmatmul.bf16.gmra.mxu0 %v3928
        %v7059 = vpop.f32.mrf.mxu0
        %v7060 = vadd.f32 %v7011, %v7059
        %v7061 = vpop.f32.mrf.mxu0
        %v7062 = vadd.f32 %v7013, %v7061
        %7063 = vmatmul.bf16.gmra.mxu0 %v3936
        %v7064 = vpop.f32.mrf.mxu0
        %v7065 = vadd.f32 %v7016, %v7064
        %v7066 = vpop.f32.mrf.mxu0
        %v7067 = vadd.f32 %v7018, %v7066
        %7068 = vmatmul.bf16.gmra.mxu0 %v3944
        %v7069 = vpop.f32.mrf.mxu0
        %v7070 = vadd.f32 %v7021, %v7069
        %v7071 = vpop.f32.mrf.mxu0
        %v7072 = vadd.f32 %v7023, %v7071
        %7073 = vmatmul.bf16.gmra.mxu0 %v3952
        %v7074 = vpop.f32.mrf.mxu0
        %v7075 = vadd.f32 %v7026, %v7074
        %v7076 = vpop.f32.mrf.mxu0
        %v7077 = vadd.f32 %v7028, %v7076
        %7078 = vmatmul.bf16.gmra.mxu0 %v3960
        %v7079 = vpop.f32.mrf.mxu0
        %v7080 = vadd.f32 %v7031, %v7079
        %v7081 = vpop.f32.mrf.mxu0
        %v7082 = vadd.f32 %v7033, %v7081
        %7083 = vmatmul.bf16.gmra.mxu0 %v3968
        %v7084 = vpop.f32.mrf.mxu0
        %v7085 = vadd.f32 %v7036, %v7084
        %v7086 = vpop.f32.mrf.mxu0
        %v7087 = vadd.f32 %v7038, %v7086
        %7088 = vmatmul.bf16.gmra.mxu0 %v3976
        %v7089 = vpop.f32.mrf.mxu0
        %v7090 = vadd.f32 %v7041, %v7089
        %v7091 = vpop.f32.mrf.mxu0
        %v7092 = vadd.f32 %v7043, %v7091
        %7093 = vmatmul.bf16.gmra.mxu0 %v3984
        %v7094 = vpop.f32.mrf.mxu0
        %v7095 = vadd.f32 %v7046, %v7094
        %v7096 = vpop.f32.mrf.mxu0
        %v7097 = vadd.f32 %v7048, %v7096
        %7098 = vdwg.mxu0
        %v7099 = vmax.f32 %v5884, 0.0
        %v7100 = vmax.f32 %v6276, 0.0
        %v7101 = vmax.f32 %v6668, 0.0
        %v7102 = vmax.f32 %v7060, 0.0
        %v7103 = vmax.f32 %v5886, 0.0
        %v7104 = vmax.f32 %v6278, 0.0
        %v7105 = vmax.f32 %v6670, 0.0
        %v7106 = vmax.f32 %v7062, 0.0
        %v7107 = vmax.f32 %v5889, 0.0
        %v7108 = vmax.f32 %v6281, 0.0
        %v7109 = vmax.f32 %v6673, 0.0
        %v7110 = vmax.f32 %v7065, 0.0
        %v7111 = vmax.f32 %v5891, 0.0
        %v7112 = vmax.f32 %v6283, 0.0
        %v7113 = vmax.f32 %v6675, 0.0
        %v7114 = vmax.f32 %v7067, 0.0
        %v7115 = vmax.f32 %v5894, 0.0
        %v7116 = vmax.f32 %v6286, 0.0
        %v7117 = vmax.f32 %v6678, 0.0
        %v7118 = vmax.f32 %v7070, 0.0
        %v7119 = vmax.f32 %v5896, 0.0
        %v7120 = vmax.f32 %v6288, 0.0
        %v7121 = vmax.f32 %v6680, 0.0
        %v7122 = vmax.f32 %v7072, 0.0
        %v7123 = vmax.f32 %v5899, 0.0
        %v7124 = vmax.f32 %v6291, 0.0
        %v7125 = vmax.f32 %v6683, 0.0
        %v7126 = vmax.f32 %v7075, 0.0
        %v7127 = vmax.f32 %v5901, 0.0
        %v7128 = vmax.f32 %v6293, 0.0
        %v7129 = vmax.f32 %v6685, 0.0
        %v7130 = vmax.f32 %v7077, 0.0
        %v7131 = vmax.f32 %v5904, 0.0
        %v7132 = vmax.f32 %v6296, 0.0
        %v7133 = vmax.f32 %v6688, 0.0
        %v7134 = vmax.f32 %v7080, 0.0
        %v7135 = vmax.f32 %v5906, 0.0
        %v7136 = vmax.f32 %v6298, 0.0
        %v7137 = vmax.f32 %v6690, 0.0
        %v7138 = vmax.f32 %v7082, 0.0
        %v7139 = vmax.f32 %v5909, 0.0
        %v7140 = vmax.f32 %v6301, 0.0
        %v7141 = vmax.f32 %v6693, 0.0
        %v7142 = vmax.f32 %v7085, 0.0
        %v7143 = vmax.f32 %v5911, 0.0
        %v7144 = vmax.f32 %v6303, 0.0
        %v7145 = vmax.f32 %v6695, 0.0
        %v7146 = vmax.f32 %v7087, 0.0
        %v7147 = vmax.f32 %v5914, 0.0
        %v7148 = vmax.f32 %v6306, 0.0
        %v7149 = vmax.f32 %v6698, 0.0
        %v7150 = vmax.f32 %v7090, 0.0
        %v7151 = vmax.f32 %v5916, 0.0
        %v7152 = vmax.f32 %v6308, 0.0
        %v7153 = vmax.f32 %v6700, 0.0
        %v7154 = vmax.f32 %v7092, 0.0
        %v7155 = vmax.f32 %v5919, 0.0
        %v7156 = vmax.f32 %v6311, 0.0
        %v7157 = vmax.f32 %v6703, 0.0
        %v7158 = vmax.f32 %v7095, 0.0
        %v7159 = vmax.f32 %v5921, 0.0
        %v7160 = vmax.f32 %v6313, 0.0
        %v7161 = vmax.f32 %v6705, 0.0
        %v7162 = vmax.f32 %v7097, 0.0
        %v7163 = vpack.c.bf16 %v7103, %v7099
        %v7164 = vpack.c.bf16 %v7104, %v7100
        %v7165 = vpack.c.bf16 %v7105, %v7101
        %v7166 = vpack.c.bf16 %v7106, %v7102
        %v7167 = vpack.c.bf16 %v7111, %v7107
        %v7168 = vpack.c.bf16 %v7112, %v7108
        %v7169 = vpack.c.bf16 %v7113, %v7109
        %v7170 = vpack.c.bf16 %v7114, %v7110
        %v7171 = vpack.c.bf16 %v7119, %v7115
        %v7172 = vpack.c.bf16 %v7120, %v7116
        %v7173 = vpack.c.bf16 %v7121, %v7117
        %v7174 = vpack.c.bf16 %v7122, %v7118
        %v7175 = vpack.c.bf16 %v7127, %v7123
        %v7176 = vpack.c.bf16 %v7128, %v7124
        %v7177 = vpack.c.bf16 %v7129, %v7125
        %v7178 = vpack.c.bf16 %v7130, %v7126
        %v7179 = vpack.c.bf16 %v7135, %v7131
        %v7180 = vpack.c.bf16 %v7136, %v7132
        %v7181 = vpack.c.bf16 %v7137, %v7133
        %v7182 = vpack.c.bf16 %v7138, %v7134
        %v7183 = vpack.c.bf16 %v7143, %v7139
        %v7184 = vpack.c.bf16 %v7144, %v7140
        %v7185 = vpack.c.bf16 %v7145, %v7141
        %v7186 = vpack.c.bf16 %v7146, %v7142
        %v7187 = vpack.c.bf16 %v7151, %v7147
        %v7188 = vpack.c.bf16 %v7152, %v7148
        %v7189 = vpack.c.bf16 %v7153, %v7149
        %v7190 = vpack.c.bf16 %v7154, %v7150
        %v7191 = vpack.c.bf16 %v7159, %v7155
        %v7192 = vpack.c.bf16 %v7160, %v7156
        %v7193 = vpack.c.bf16 %v7161, %v7157
        %v7194 = vpack.c.bf16 %v7162, %v7158
        %v7195 = vld [vmem:[#allocation11] sm:$0xf]
        %v7196 = vld [vmem:[#allocation11 + $0x4] sm:$0xf]
        %v7197 = vld [vmem:[#allocation11 + $0x8] sm:$0xf]
        %v7198 = vld [vmem:[#allocation11 + $0xc] sm:$0xf]
        %v7199 = vld [vmem:[#allocation11 + $0x10] sm:$0xf]
        %v7200 = vld [vmem:[#allocation11 + $0x14] sm:$0xf]
        %v7201 = vld [vmem:[#allocation11 + $0x18] sm:$0xf]
        %v7202 = vld [vmem:[#allocation11 + $0x1c] sm:$0xf]
        %v7203 = vld [vmem:[#allocation11 + $0x20] sm:$0xf]
        %v7204 = vld [vmem:[#allocation11 + $0x24] sm:$0xf]
        %v7205 = vld [vmem:[#allocation11 + $0x28] sm:$0xf]
        %v7206 = vld [vmem:[#allocation11 + $0x2c] sm:$0xf]
        %v7207 = vld [vmem:[#allocation11 + $0x30] sm:$0xf]
        %v7208 = vld [vmem:[#allocation11 + $0x34] sm:$0xf]
        %v7209 = vld [vmem:[#allocation11 + $0x38] sm:$0xf]
        %v7210 = vld [vmem:[#allocation11 + $0x3c] sm:$0xf]
        %v7211 = vld [vmem:[#allocation11 + $0x40] sm:$0xf]
        %v7212 = vld [vmem:[#allocation11 + $0x44] sm:$0xf]
        %v7213 = vld [vmem:[#allocation11 + $0x48] sm:$0xf]
        %v7214 = vld [vmem:[#allocation11 + $0x4c] sm:$0xf]
        %v7215 = vld [vmem:[#allocation11 + $0x50] sm:$0xf]
        %v7216 = vld [vmem:[#allocation11 + $0x54] sm:$0xf]
        %v7217 = vld [vmem:[#allocation11 + $0x58] sm:$0xf]
        %v7218 = vld [vmem:[#allocation11 + $0x5c] sm:$0xf]
        %v7219 = vld [vmem:[#allocation11 + $0x60] sm:$0xf]
        %v7220 = vld [vmem:[#allocation11 + $0x64] sm:$0xf]
        %v7221 = vld [vmem:[#allocation11 + $0x68] sm:$0xf]
        %v7222 = vld [vmem:[#allocation11 + $0x6c] sm:$0xf]
        %v7223 = vld [vmem:[#allocation11 + $0x70] sm:$0xf]
        %v7224 = vld [vmem:[#allocation11 + $0x74] sm:$0xf]
        %v7225 = vld [vmem:[#allocation11 + $0x78] sm:$0xf]
        %v7226 = vld [vmem:[#allocation11 + $0x7c] sm:$0xf]
        %v7227 = vld [vmem:[#allocation11 + $0x80] sm:$0xf]
        %v7228 = vld [vmem:[#allocation11 + $0x84] sm:$0xf]
        %v7229 = vld [vmem:[#allocation11 + $0x88] sm:$0xf]
        %v7230 = vld [vmem:[#allocation11 + $0x8c] sm:$0xf]
        %v7231 = vld [vmem:[#allocation11 + $0x90] sm:$0xf]
        %v7232 = vld [vmem:[#allocation11 + $0x94] sm:$0xf]
        %v7233 = vld [vmem:[#allocation11 + $0x98] sm:$0xf]
        %v7234 = vld [vmem:[#allocation11 + $0x9c] sm:$0xf]
        %v7235 = vld [vmem:[#allocation11 + $0xa0] sm:$0xf]
        %v7236 = vld [vmem:[#allocation11 + $0xa4] sm:$0xf]
        %v7237 = vld [vmem:[#allocation11 + $0xa8] sm:$0xf]
        %v7238 = vld [vmem:[#allocation11 + $0xac] sm:$0xf]
        %v7239 = vld [vmem:[#allocation11 + $0xb0] sm:$0xf]
        %v7240 = vld [vmem:[#allocation11 + $0xb4] sm:$0xf]
        %v7241 = vld [vmem:[#allocation11 + $0xb8] sm:$0xf]
        %v7242 = vld [vmem:[#allocation11 + $0xbc] sm:$0xf]
        %v7243 = vld [vmem:[#allocation11 + $0xc0] sm:$0xf]
        %v7244 = vld [vmem:[#allocation11 + $0xc4] sm:$0xf]
        %v7245 = vld [vmem:[#allocation11 + $0xc8] sm:$0xf]
        %v7246 = vld [vmem:[#allocation11 + $0xcc] sm:$0xf]
        %v7247 = vld [vmem:[#allocation11 + $0xd0] sm:$0xf]
        %v7248 = vld [vmem:[#allocation11 + $0xd4] sm:$0xf]
        %v7249 = vld [vmem:[#allocation11 + $0xd8] sm:$0xf]
        %v7250 = vld [vmem:[#allocation11 + $0xdc] sm:$0xf]
        %v7251 = vld [vmem:[#allocation11 + $0xe0] sm:$0xf]
        %v7252 = vld [vmem:[#allocation11 + $0xe4] sm:$0xf]
        %v7253 = vld [vmem:[#allocation11 + $0xe8] sm:$0xf]
        %v7254 = vld [vmem:[#allocation11 + $0xec] sm:$0xf]
        %v7255 = vld [vmem:[#allocation11 + $0xf0] sm:$0xf]
        %v7256 = vld [vmem:[#allocation11 + $0xf4] sm:$0xf]
        %v7257 = vld [vmem:[#allocation11 + $0xf8] sm:$0xf]
        %v7258 = vld [vmem:[#allocation11 + $0xfc] sm:$0xf]
        %v7259 = vld [vmem:[#allocation13] sm:$0x1]
        %v7261 = vperm.slane %v7259, 0
        %v7327 = vunpack.c.l.b16 %v7195
        %v7328 = vunpack.c.l.b16 %v7196
        %v7329 = vunpack.c.l.b16 %v7197
        %v7330 = vunpack.c.l.b16 %v7198
        %v7331 = vunpack.c.l.b16 %v7199
        %v7332 = vunpack.c.l.b16 %v7200
        %v7333 = vunpack.c.l.b16 %v7201
        %v7334 = vunpack.c.l.b16 %v7202
        %v7335 = vunpack.c.l.b16 %v7203
        %v7336 = vunpack.c.l.b16 %v7204
        %v7337 = vunpack.c.l.b16 %v7205
        %v7338 = vunpack.c.l.b16 %v7206
        %v7339 = vunpack.c.l.b16 %v7207
        %v7340 = vunpack.c.l.b16 %v7208
        %v7341 = vunpack.c.l.b16 %v7209
        %v7342 = vunpack.c.l.b16 %v7210
        %v7343 = vunpack.c.l.b16 %v7211
        %v7344 = vunpack.c.l.b16 %v7212
        %v7345 = vunpack.c.l.b16 %v7213
        %v7346 = vunpack.c.l.b16 %v7214
        %v7347 = vunpack.c.l.b16 %v7215
        %v7348 = vunpack.c.l.b16 %v7216
        %v7349 = vunpack.c.l.b16 %v7217
        %v7350 = vunpack.c.l.b16 %v7218
        %v7351 = vunpack.c.l.b16 %v7219
        %v7352 = vunpack.c.l.b16 %v7220
        %v7353 = vunpack.c.l.b16 %v7221
        %v7354 = vunpack.c.l.b16 %v7222
        %v7355 = vunpack.c.l.b16 %v7223
        %v7356 = vunpack.c.l.b16 %v7224
        %v7357 = vunpack.c.l.b16 %v7225
        %v7358 = vunpack.c.l.b16 %v7226
        %v7359 = vunpack.c.l.b16 %v7227
        %v7360 = vunpack.c.l.b16 %v7228
        %v7361 = vunpack.c.l.b16 %v7229
        %v7362 = vunpack.c.l.b16 %v7230
        %v7363 = vunpack.c.l.b16 %v7231
        %v7364 = vunpack.c.l.b16 %v7232
        %v7365 = vunpack.c.l.b16 %v7233
        %v7366 = vunpack.c.l.b16 %v7234
        %v7367 = vunpack.c.l.b16 %v7235
        %v7368 = vunpack.c.l.b16 %v7236
        %v7369 = vunpack.c.l.b16 %v7237
        %v7370 = vunpack.c.l.b16 %v7238
        %v7371 = vunpack.c.l.b16 %v7239
        %v7372 = vunpack.c.l.b16 %v7240
        %v7373 = vunpack.c.l.b16 %v7241
        %v7374 = vunpack.c.l.b16 %v7242
        %v7375 = vunpack.c.l.b16 %v7243
        %v7376 = vunpack.c.l.b16 %v7244
        %v7377 = vunpack.c.l.b16 %v7245
        %v7378 = vunpack.c.l.b16 %v7246
        %v7379 = vunpack.c.l.b16 %v7247
        %v7380 = vunpack.c.l.b16 %v7248
        %v7381 = vunpack.c.l.b16 %v7249
        %v7382 = vunpack.c.l.b16 %v7250
        %v7383 = vunpack.c.l.b16 %v7251
        %v7384 = vunpack.c.l.b16 %v7252
        %v7385 = vunpack.c.l.b16 %v7253
        %v7386 = vunpack.c.l.b16 %v7254
        %v7387 = vunpack.c.l.b16 %v7255
        %v7388 = vunpack.c.l.b16 %v7256
        %v7389 = vunpack.c.l.b16 %v7257
        %v7390 = vunpack.c.l.b16 %v7258
        %v7391 = vpack.c.b16 %v7328, %v7327
        %v7392 = vpack.c.b16 %v7330, %v7329
        %v7393 = vpack.c.b16 %v7332, %v7331
        %v7394 = vpack.c.b16 %v7334, %v7333
        %v7395 = vpack.c.b16 %v7336, %v7335
        %v7396 = vpack.c.b16 %v7338, %v7337
        %v7397 = vpack.c.b16 %v7340, %v7339
        %v7398 = vpack.c.b16 %v7342, %v7341
        %v7399 = vpack.c.b16 %v7344, %v7343
        %v7400 = vpack.c.b16 %v7346, %v7345
        %v7401 = vpack.c.b16 %v7348, %v7347
        %v7402 = vpack.c.b16 %v7350, %v7349
        %v7403 = vpack.c.b16 %v7352, %v7351
        %v7404 = vpack.c.b16 %v7354, %v7353
        %v7405 = vpack.c.b16 %v7356, %v7355
        %v7406 = vpack.c.b16 %v7358, %v7357
        %v7407 = vpack.c.b16 %v7360, %v7359
        %v7408 = vpack.c.b16 %v7362, %v7361
        %v7409 = vpack.c.b16 %v7364, %v7363
        %v7410 = vpack.c.b16 %v7366, %v7365
        %v7411 = vpack.c.b16 %v7368, %v7367
        %v7412 = vpack.c.b16 %v7370, %v7369
        %v7413 = vpack.c.b16 %v7372, %v7371
        %v7414 = vpack.c.b16 %v7374, %v7373
        %v7415 = vpack.c.b16 %v7376, %v7375
        %v7416 = vpack.c.b16 %v7378, %v7377
        %v7417 = vpack.c.b16 %v7380, %v7379
        %v7418 = vpack.c.b16 %v7382, %v7381
        %v7419 = vpack.c.b16 %v7384, %v7383
        %v7420 = vpack.c.b16 %v7386, %v7385
        %v7421 = vpack.c.b16 %v7388, %v7387
        %v7422 = vpack.c.b16 %v7390, %v7389
        %7455 = vmatpush.bf16.msra.mxu0 %v7398
        %7456 = vmatpush.bf16.msra.mxu0 %v7397
        %7457 = vmatpush.bf16.msra.mxu0 %v7396
        %7458 = vmatpush.bf16.msra.mxu0 %v7395
        %7459 = vmatpush.bf16.msra.mxu0 %v7394
        %7460 = vmatpush.bf16.msra.mxu0 %v7393
        %7461 = vmatpush.bf16.msra.mxu0 %v7392
        %7462 = vmatpush.bf16.msra.mxu0 %v7391
        %7463 = vmatmul.bf16.gmra.mxu0 %v7163
        %v7464 = vpop.f32.mrf.mxu0
        %v7465 = vadd.f32 %v7261, %v7464
        %v7466 = vpop.f32.mrf.mxu0
        %v7467 = vadd.f32 %v7261, %v7466
        %7468 = vmatmul.bf16.gmra.mxu0 %v7167
        %v7469 = vpop.f32.mrf.mxu0
        %v7470 = vadd.f32 %v7261, %v7469
        %v7471 = vpop.f32.mrf.mxu0
        %v7472 = vadd.f32 %v7261, %v7471
        %7473 = vmatmul.bf16.gmra.mxu0 %v7171
        %v7474 = vpop.f32.mrf.mxu0
        %v7475 = vadd.f32 %v7261, %v7474
        %v7476 = vpop.f32.mrf.mxu0
        %v7477 = vadd.f32 %v7261, %v7476
        %7478 = vmatmul.bf16.gmra.mxu0 %v7175
        %v7479 = vpop.f32.mrf.mxu0
        %v7480 = vadd.f32 %v7261, %v7479
        %v7481 = vpop.f32.mrf.mxu0
        %v7482 = vadd.f32 %v7261, %v7481
        %7483 = vmatmul.bf16.gmra.mxu0 %v7179
        %v7484 = vpop.f32.mrf.mxu0
        %v7485 = vadd.f32 %v7261, %v7484
        %v7486 = vpop.f32.mrf.mxu0
        %v7487 = vadd.f32 %v7261, %v7486
        %7488 = vmatmul.bf16.gmra.mxu0 %v7183
        %v7489 = vpop.f32.mrf.mxu0
        %v7490 = vadd.f32 %v7261, %v7489
        %v7491 = vpop.f32.mrf.mxu0
        %v7492 = vadd.f32 %v7261, %v7491
        %7493 = vmatmul.bf16.gmra.mxu0 %v7187
        %v7494 = vpop.f32.mrf.mxu0
        %v7495 = vadd.f32 %v7261, %v7494
        %v7496 = vpop.f32.mrf.mxu0
        %v7497 = vadd.f32 %v7261, %v7496
        %7498 = vmatmul.bf16.gmra.mxu0 %v7191
        %v7499 = vpop.f32.mrf.mxu0
        %v7500 = vadd.f32 %v7261, %v7499
        %v7501 = vpop.f32.mrf.mxu0
        %v7502 = vadd.f32 %v7261, %v7501
        %7503 = vdwg.mxu0
        %7504 = vmatpush.bf16.msra.mxu0 %v7406
        %7505 = vmatpush.bf16.msra.mxu0 %v7405
        %7506 = vmatpush.bf16.msra.mxu0 %v7404
        %7507 = vmatpush.bf16.msra.mxu0 %v7403
        %7508 = vmatpush.bf16.msra.mxu0 %v7402
        %7509 = vmatpush.bf16.msra.mxu0 %v7401
        %7510 = vmatpush.bf16.msra.mxu0 %v7400
        %7511 = vmatpush.bf16.msra.mxu0 %v7399
        %7512 = vmatmul.bf16.gmra.mxu0 %v7164
        %v7513 = vpop.f32.mrf.mxu0
        %v7514 = vadd.f32 %v7465, %v7513
        %v7515 = vpop.f32.mrf.mxu0
        %v7516 = vadd.f32 %v7467, %v7515
        %7517 = vmatmul.bf16.gmra.mxu0 %v7168
        %v7518 = vpop.f32.mrf.mxu0
        %v7519 = vadd.f32 %v7470, %v7518
        %v7520 = vpop.f32.mrf.mxu0
        %v7521 = vadd.f32 %v7472, %v7520
        %7522 = vmatmul.bf16.gmra.mxu0 %v7172
        %v7523 = vpop.f32.mrf.mxu0
        %v7524 = vadd.f32 %v7475, %v7523
        %v7525 = vpop.f32.mrf.mxu0
        %v7526 = vadd.f32 %v7477, %v7525
        %7527 = vmatmul.bf16.gmra.mxu0 %v7176
        %v7528 = vpop.f32.mrf.mxu0
        %v7529 = vadd.f32 %v7480, %v7528
        %v7530 = vpop.f32.mrf.mxu0
        %v7531 = vadd.f32 %v7482, %v7530
        %7532 = vmatmul.bf16.gmra.mxu0 %v7180
        %v7533 = vpop.f32.mrf.mxu0
        %v7534 = vadd.f32 %v7485, %v7533
        %v7535 = vpop.f32.mrf.mxu0
        %v7536 = vadd.f32 %v7487, %v7535
        %7537 = vmatmul.bf16.gmra.mxu0 %v7184
        %v7538 = vpop.f32.mrf.mxu0
        %v7539 = vadd.f32 %v7490, %v7538
        %v7540 = vpop.f32.mrf.mxu0
        %v7541 = vadd.f32 %v7492, %v7540
        %7542 = vmatmul.bf16.gmra.mxu0 %v7188
        %v7543 = vpop.f32.mrf.mxu0
        %v7544 = vadd.f32 %v7495, %v7543
        %v7545 = vpop.f32.mrf.mxu0
        %v7546 = vadd.f32 %v7497, %v7545
        %7547 = vmatmul.bf16.gmra.mxu0 %v7192
        %v7548 = vpop.f32.mrf.mxu0
        %v7549 = vadd.f32 %v7500, %v7548
        %v7550 = vpop.f32.mrf.mxu0
        %v7551 = vadd.f32 %v7502, %v7550
        %7552 = vdwg.mxu0
        %7553 = vmatpush.bf16.msra.mxu0 %v7414
        %7554 = vmatpush.bf16.msra.mxu0 %v7413
        %7555 = vmatpush.bf16.msra.mxu0 %v7412
        %7556 = vmatpush.bf16.msra.mxu0 %v7411
        %7557 = vmatpush.bf16.msra.mxu0 %v7410
        %7558 = vmatpush.bf16.msra.mxu0 %v7409
        %7559 = vmatpush.bf16.msra.mxu0 %v7408
        %7560 = vmatpush.bf16.msra.mxu0 %v7407
        %7561 = vmatmul.bf16.gmra.mxu0 %v7165
        %v7562 = vpop.f32.mrf.mxu0
        %v7563 = vadd.f32 %v7514, %v7562
        %v7564 = vpop.f32.mrf.mxu0
        %v7565 = vadd.f32 %v7516, %v7564
        %7566 = vmatmul.bf16.gmra.mxu0 %v7169
        %v7567 = vpop.f32.mrf.mxu0
        %v7568 = vadd.f32 %v7519, %v7567
        %v7569 = vpop.f32.mrf.mxu0
        %v7570 = vadd.f32 %v7521, %v7569
        %7571 = vmatmul.bf16.gmra.mxu0 %v7173
        %v7572 = vpop.f32.mrf.mxu0
        %v7573 = vadd.f32 %v7524, %v7572
        %v7574 = vpop.f32.mrf.mxu0
        %v7575 = vadd.f32 %v7526, %v7574
        %7576 = vmatmul.bf16.gmra.mxu0 %v7177
        %v7577 = vpop.f32.mrf.mxu0
        %v7578 = vadd.f32 %v7529, %v7577
        %v7579 = vpop.f32.mrf.mxu0
        %v7580 = vadd.f32 %v7531, %v7579
        %7581 = vmatmul.bf16.gmra.mxu0 %v7181
        %v7582 = vpop.f32.mrf.mxu0
        %v7583 = vadd.f32 %v7534, %v7582
        %v7584 = vpop.f32.mrf.mxu0
        %v7585 = vadd.f32 %v7536, %v7584
        %7586 = vmatmul.bf16.gmra.mxu0 %v7185
        %v7587 = vpop.f32.mrf.mxu0
        %v7588 = vadd.f32 %v7539, %v7587
        %v7589 = vpop.f32.mrf.mxu0
        %v7590 = vadd.f32 %v7541, %v7589
        %7591 = vmatmul.bf16.gmra.mxu0 %v7189
        %v7592 = vpop.f32.mrf.mxu0
        %v7593 = vadd.f32 %v7544, %v7592
        %v7594 = vpop.f32.mrf.mxu0
        %v7595 = vadd.f32 %v7546, %v7594
        %7596 = vmatmul.bf16.gmra.mxu0 %v7193
        %v7597 = vpop.f32.mrf.mxu0
        %v7598 = vadd.f32 %v7549, %v7597
        %v7599 = vpop.f32.mrf.mxu0
        %v7600 = vadd.f32 %v7551, %v7599
        %7601 = vdwg.mxu0
        %7602 = vmatpush.bf16.msra.mxu0 %v7422
        %7603 = vmatpush.bf16.msra.mxu0 %v7421
        %7604 = vmatpush.bf16.msra.mxu0 %v7420
        %7605 = vmatpush.bf16.msra.mxu0 %v7419
        %7606 = vmatpush.bf16.msra.mxu0 %v7418
        %7607 = vmatpush.bf16.msra.mxu0 %v7417
        %7608 = vmatpush.bf16.msra.mxu0 %v7416
        %7609 = vmatpush.bf16.msra.mxu0 %v7415
        %7610 = vmatmul.bf16.gmra.mxu0 %v7166
        %v7611 = vpop.f32.mrf.mxu0
        %v7612 = vadd.f32 %v7563, %v7611
        %v7613 = vpop.f32.mrf.mxu0
        %v7614 = vadd.f32 %v7565, %v7613
        %7615 = vmatmul.bf16.gmra.mxu0 %v7170
        %v7616 = vpop.f32.mrf.mxu0
        %v7617 = vadd.f32 %v7568, %v7616
        %v7618 = vpop.f32.mrf.mxu0
        %v7619 = vadd.f32 %v7570, %v7618
        %7620 = vmatmul.bf16.gmra.mxu0 %v7174
        %v7621 = vpop.f32.mrf.mxu0
        %v7622 = vadd.f32 %v7573, %v7621
        %v7623 = vpop.f32.mrf.mxu0
        %v7624 = vadd.f32 %v7575, %v7623
        %7625 = vmatmul.bf16.gmra.mxu0 %v7178
        %v7626 = vpop.f32.mrf.mxu0
        %v7627 = vadd.f32 %v7578, %v7626
        %v7628 = vpop.f32.mrf.mxu0
        %v7629 = vadd.f32 %v7580, %v7628
        %7630 = vmatmul.bf16.gmra.mxu0 %v7182
        %v7631 = vpop.f32.mrf.mxu0
        %v7632 = vadd.f32 %v7583, %v7631
        %v7633 = vpop.f32.mrf.mxu0
        %v7634 = vadd.f32 %v7585, %v7633
        %7635 = vmatmul.bf16.gmra.mxu0 %v7186
        %v7636 = vpop.f32.mrf.mxu0
        %v7637 = vadd.f32 %v7588, %v7636
        %v7638 = vpop.f32.mrf.mxu0
        %v7639 = vadd.f32 %v7590, %v7638
        %7640 = vmatmul.bf16.gmra.mxu0 %v7190
        %v7641 = vpop.f32.mrf.mxu0
        %v7642 = vadd.f32 %v7593, %v7641
        %v7643 = vpop.f32.mrf.mxu0
        %v7644 = vadd.f32 %v7595, %v7643
        %7645 = vmatmul.bf16.gmra.mxu0 %v7194
        %v7646 = vpop.f32.mrf.mxu0
        %v7647 = vadd.f32 %v7598, %v7646
        %v7648 = vpop.f32.mrf.mxu0
        %v7649 = vadd.f32 %v7600, %v7648
        %7650 = vdwg.mxu0
        %v7651 = vlaneseq
        %v7652 = vand.u32 %v7651, 127
        %vm7653 = vcmp.lt.s32.totalorder %v7652, 20
        %v7654 = vsel %vm7653, %v7612, -1e+30
        %v7655 = vsel %vm7653, %v7614, -1e+30
        %v7656 = vsel %vm7653, %v7617, -1e+30
        %v7657 = vsel %vm7653, %v7619, -1e+30
        %v7658 = vsel %vm7653, %v7622, -1e+30
        %v7659 = vsel %vm7653, %v7624, -1e+30
        %v7660 = vsel %vm7653, %v7627, -1e+30
        %v7661 = vsel %vm7653, %v7629, -1e+30
        %v7662 = vsel %vm7653, %v7632, -1e+30
        %v7663 = vsel %vm7653, %v7634, -1e+30
        %v7664 = vsel %vm7653, %v7637, -1e+30
        %v7665 = vsel %vm7653, %v7639, -1e+30
        %v7666 = vsel %vm7653, %v7642, -1e+30
        %v7667 = vsel %vm7653, %v7644, -1e+30
        %v7668 = vsel %vm7653, %v7647, -1e+30
        %v7669 = vsel %vm7653, %v7649, -1e+30
        %7670 = vmax.xlane.f32.xlu0 %v7654
        %v7671 = vpop.xlane.xlu0 %7670
        %7672 = vmax.xlane.f32.xlu0 %v7655
        %v7673 = vpop.xlane.xlu0 %7672
        %7674 = vmax.xlane.f32.xlu0 %v7656
        %v7675 = vpop.xlane.xlu0 %7674
        %7676 = vmax.xlane.f32.xlu0 %v7657
        %v7677 = vpop.xlane.xlu0 %7676
        %7678 = vmax.xlane.f32.xlu0 %v7658
        %v7679 = vpop.xlane.xlu0 %7678
        %7680 = vmax.xlane.f32.xlu0 %v7659
        %v7681 = vpop.xlane.xlu0 %7680
        %7682 = vmax.xlane.f32.xlu0 %v7660
        %v7683 = vpop.xlane.xlu0 %7682
        %7684 = vmax.xlane.f32.xlu0 %v7661
        %v7685 = vpop.xlane.xlu0 %7684
        %7686 = vmax.xlane.f32.xlu0 %v7662
        %v7687 = vpop.xlane.xlu0 %7686
        %7688 = vmax.xlane.f32.xlu0 %v7663
        %v7689 = vpop.xlane.xlu0 %7688
        %7690 = vmax.xlane.f32.xlu0 %v7664
        %v7691 = vpop.xlane.xlu0 %7690
        %7692 = vmax.xlane.f32.xlu0 %v7665
        %v7693 = vpop.xlane.xlu0 %7692
        %7694 = vmax.xlane.f32.xlu0 %v7666
        %v7695 = vpop.xlane.xlu0 %7694
        %7696 = vmax.xlane.f32.xlu0 %v7667
        %v7697 = vpop.xlane.xlu0 %7696
        %7698 = vmax.xlane.f32.xlu0 %v7668
        %v7699 = vpop.xlane.xlu0 %7698
        %7700 = vmax.xlane.f32.xlu0 %v7669
        %v7701 = vpop.xlane.xlu0 %7700
        %v7702 = vsub.f32 %v7654, %v7671
        %v7703 = vsub.f32 %v7655, %v7673
        %v7704 = vsub.f32 %v7656, %v7675
        %v7705 = vsub.f32 %v7657, %v7677
        %v7706 = vsub.f32 %v7658, %v7679
        %v7707 = vsub.f32 %v7659, %v7681
        %v7708 = vsub.f32 %v7660, %v7683
        %v7709 = vsub.f32 %v7661, %v7685
        %v7710 = vsub.f32 %v7662, %v7687
        %v7711 = vsub.f32 %v7663, %v7689
        %v7712 = vsub.f32 %v7664, %v7691
        %v7713 = vsub.f32 %v7665, %v7693
        %v7714 = vsub.f32 %v7666, %v7695
        %v7715 = vsub.f32 %v7667, %v7697
        %v7716 = vsub.f32 %v7668, %v7699
        %v7717 = vsub.f32 %v7669, %v7701
        %v7718 = vmul.f32 %v7702, 1.442695
        %v7719 = vpow.pop %v7718
        %v7720 = vmul.f32 %v7703, 1.442695
        %v7721 = vpow.pop %v7720
        %v7722 = vmul.f32 %v7704, 1.442695
        %v7723 = vpow.pop %v7722
        %v7724 = vmul.f32 %v7705, 1.442695
        %v7725 = vpow.pop %v7724
        %v7726 = vmul.f32 %v7706, 1.442695
        %v7727 = vpow.pop %v7726
        %v7728 = vmul.f32 %v7707, 1.442695
        %v7729 = vpow.pop %v7728
        %v7730 = vmul.f32 %v7708, 1.442695
        %v7731 = vpow.pop %v7730
        %v7732 = vmul.f32 %v7709, 1.442695
        %v7733 = vpow.pop %v7732
        %v7734 = vmul.f32 %v7710, 1.442695
        %v7735 = vpow.pop %v7734
        %v7736 = vmul.f32 %v7711, 1.442695
        %v7737 = vpow.pop %v7736
        %v7738 = vmul.f32 %v7712, 1.442695
        %v7739 = vpow.pop %v7738
        %v7740 = vmul.f32 %v7713, 1.442695
        %v7741 = vpow.pop %v7740
        %v7742 = vmul.f32 %v7714, 1.442695
        %v7743 = vpow.pop %v7742
        %v7744 = vmul.f32 %v7715, 1.442695
        %v7745 = vpow.pop %v7744
        %v7746 = vmul.f32 %v7716, 1.442695
        %v7747 = vpow.pop %v7746
        %v7748 = vmul.f32 %v7717, 1.442695
        %v7749 = vpow.pop %v7748
        %7750 = vadd.xlane.f32.xlu0 %v7719
        %v7751 = vpop.xlane.xlu0 %7750
        %7752 = vadd.xlane.f32.xlu0 %v7721
        %v7753 = vpop.xlane.xlu0 %7752
        %7754 = vadd.xlane.f32.xlu0 %v7723
        %v7755 = vpop.xlane.xlu0 %7754
        %7756 = vadd.xlane.f32.xlu0 %v7725
        %v7757 = vpop.xlane.xlu0 %7756
        %7758 = vadd.xlane.f32.xlu0 %v7727
        %v7759 = vpop.xlane.xlu0 %7758
        %7760 = vadd.xlane.f32.xlu0 %v7729
        %v7761 = vpop.xlane.xlu0 %7760
        %7762 = vadd.xlane.f32.xlu0 %v7731
        %v7763 = vpop.xlane.xlu0 %7762
        %7764 = vadd.xlane.f32.xlu0 %v7733
        %v7765 = vpop.xlane.xlu0 %7764
        %7766 = vadd.xlane.f32.xlu0 %v7735
        %v7767 = vpop.xlane.xlu0 %7766
        %7768 = vadd.xlane.f32.xlu0 %v7737
        %v7769 = vpop.xlane.xlu0 %7768
        %7770 = vadd.xlane.f32.xlu0 %v7739
        %v7771 = vpop.xlane.xlu0 %7770
        %7772 = vadd.xlane.f32.xlu0 %v7741
        %v7773 = vpop.xlane.xlu0 %7772
        %7774 = vadd.xlane.f32.xlu0 %v7743
        %v7775 = vpop.xlane.xlu0 %7774
        %7776 = vadd.xlane.f32.xlu0 %v7745
        %v7777 = vpop.xlane.xlu0 %7776
        %7778 = vadd.xlane.f32.xlu0 %v7747
        %v7779 = vpop.xlane.xlu0 %7778
        %7780 = vadd.xlane.f32.xlu0 %v7749
        %v7781 = vpop.xlane.xlu0 %7780
        %v7782 = vrcp.pop %v7751
        %v7783 = vrcp.pop %v7753
        %v7784 = vrcp.pop %v7755
        %v7785 = vrcp.pop %v7757
        %v7786 = vrcp.pop %v7759
        %v7787 = vrcp.pop %v7761
        %v7788 = vrcp.pop %v7763
        %v7789 = vrcp.pop %v7765
        %v7790 = vrcp.pop %v7767
        %v7791 = vrcp.pop %v7769
        %v7792 = vrcp.pop %v7771
        %v7793 = vrcp.pop %v7773
        %v7794 = vrcp.pop %v7775
        %v7795 = vrcp.pop %v7777
        %v7796 = vrcp.pop %v7779
        %v7797 = vrcp.pop %v7781
        %v7798 = vmul.f32 %v7751, %v7782
        %v7799 = vmul.f32 %v7753, %v7783
        %v7800 = vmul.f32 %v7755, %v7784
        %v7801 = vmul.f32 %v7757, %v7785
        %v7802 = vmul.f32 %v7759, %v7786
        %v7803 = vmul.f32 %v7761, %v7787
        %v7804 = vmul.f32 %v7763, %v7788
        %v7805 = vmul.f32 %v7765, %v7789
        %v7806 = vmul.f32 %v7767, %v7790
        %v7807 = vmul.f32 %v7769, %v7791
        %v7808 = vmul.f32 %v7771, %v7792
        %v7809 = vmul.f32 %v7773, %v7793
        %v7810 = vmul.f32 %v7775, %v7794
        %v7811 = vmul.f32 %v7777, %v7795
        %v7812 = vmul.f32 %v7779, %v7796
        %v7813 = vmul.f32 %v7781, %v7797
        %v7814 = vsub.f32 2.0, %v7798
        %v7815 = vsub.f32 2.0, %v7799
        %v7816 = vsub.f32 2.0, %v7800
        %v7817 = vsub.f32 2.0, %v7801
        %v7818 = vsub.f32 2.0, %v7802
        %v7819 = vsub.f32 2.0, %v7803
        %v7820 = vsub.f32 2.0, %v7804
        %v7821 = vsub.f32 2.0, %v7805
        %v7822 = vsub.f32 2.0, %v7806
        %v7823 = vsub.f32 2.0, %v7807
        %v7824 = vsub.f32 2.0, %v7808
        %v7825 = vsub.f32 2.0, %v7809
        %v7826 = vsub.f32 2.0, %v7810
        %v7827 = vsub.f32 2.0, %v7811
        %v7828 = vsub.f32 2.0, %v7812
        %v7829 = vsub.f32 2.0, %v7813
        %v7830 = vmul.f32 %v7782, %v7814
        %v7831 = vmul.f32 %v7783, %v7815
        %v7832 = vmul.f32 %v7784, %v7816
        %v7833 = vmul.f32 %v7785, %v7817
        %v7834 = vmul.f32 %v7786, %v7818
        %v7835 = vmul.f32 %v7787, %v7819
        %v7836 = vmul.f32 %v7788, %v7820
        %v7837 = vmul.f32 %v7789, %v7821
        %v7838 = vmul.f32 %v7790, %v7822
        %v7839 = vmul.f32 %v7791, %v7823
        %v7840 = vmul.f32 %v7792, %v7824
        %v7841 = vmul.f32 %v7793, %v7825
        %v7842 = vmul.f32 %v7794, %v7826
        %v7843 = vmul.f32 %v7795, %v7827
        %v7844 = vmul.f32 %v7796, %v7828
        %v7845 = vmul.f32 %v7797, %v7829
        %v7846 = vmul.f32 %v7719, %v7830
        %v7847 = vmul.f32 %v7721, %v7831
        %v7848 = vmul.f32 %v7723, %v7832
        %v7849 = vmul.f32 %v7725, %v7833
        %v7850 = vmul.f32 %v7727, %v7834
        %v7851 = vmul.f32 %v7729, %v7835
        %v7852 = vmul.f32 %v7731, %v7836
        %v7853 = vmul.f32 %v7733, %v7837
        %v7854 = vmul.f32 %v7735, %v7838
        %v7855 = vmul.f32 %v7737, %v7839
        %v7856 = vmul.f32 %v7739, %v7840
        %v7857 = vmul.f32 %v7741, %v7841
        %v7858 = vmul.f32 %v7743, %v7842
        %v7859 = vmul.f32 %v7745, %v7843
        %v7860 = vmul.f32 %v7747, %v7844
        %v7861 = vmul.f32 %v7749, %v7845
        %v7862 = vpack.c.bf16 %v7847, %v7846
        %v7863 = vpack.c.bf16 %v7849, %v7848
        %v7864 = vpack.c.bf16 %v7851, %v7850
        %v7865 = vpack.c.bf16 %v7853, %v7852
        %v7866 = vpack.c.bf16 %v7855, %v7854
        %v7867 = vpack.c.bf16 %v7857, %v7856
        %v7868 = vpack.c.bf16 %v7859, %v7858
        %v7869 = vpack.c.bf16 %v7861, %v7860
        %v7870 = vld [vmem:[#allocation14] sm:$0xff]
        %v7871 = vld [vmem:[#allocation14 + $0x8] sm:$0xff]
        %v7872 = vld [vmem:[#allocation14 + $0x10] sm:$0xff]
        %v7873 = vld [vmem:[#allocation14 + $0x18] sm:$0xff]
        %v7874 = vld [vmem:[#allocation14 + $0x20] sm:$0xff]
        %v7875 = vld [vmem:[#allocation14 + $0x28] sm:$0xff]
        %v7876 = vld [vmem:[#allocation14 + $0x30] sm:$0xff]
        %v7877 = vld [vmem:[#allocation14 + $0x38] sm:$0xff]
        %v7878 = vld [vmem:[#allocation14 + $0x40] sm:$0xff]
        %v7879 = vld [vmem:[#allocation14 + $0x48] sm:$0xff]
        %v7880 = vld [vmem:[#allocation14 + $0x50] sm:$0xff]
        %v7881 = vld [vmem:[#allocation14 + $0x58] sm:$0xff]
        %v7882 = vld [vmem:[#allocation14 + $0x60] sm:$0xff]
        %v7883 = vld [vmem:[#allocation14 + $0x68] sm:$0xff]
        %v7884 = vld [vmem:[#allocation14 + $0x70] sm:$0xff]
        %v7885 = vld [vmem:[#allocation14 + $0x78] sm:$0xff]
        %v7886 = vld [vmem:[#allocation14 + $0x80] sm:$0xff]
        %v7887 = vld [vmem:[#allocation14 + $0x88] sm:$0xff]
        %v7888 = vld [vmem:[#allocation14 + $0x90] sm:$0xff]
        %v7889 = vld [vmem:[#allocation14 + $0x98] sm:$0xff]
        %v7890 = vld [vmem:[#allocation14 + $0xa0] sm:$0xff]
        %v7891 = vld [vmem:[#allocation14 + $0xa8] sm:$0xff]
        %v7892 = vld [vmem:[#allocation14 + $0xb0] sm:$0xff]
        %v7893 = vld [vmem:[#allocation14 + $0xb8] sm:$0xff]
        %v7894 = vld [vmem:[#allocation14 + $0xc0] sm:$0xff]
        %v7895 = vld [vmem:[#allocation14 + $0xc8] sm:$0xff]
        %v7896 = vld [vmem:[#allocation14 + $0xd0] sm:$0xff]
        %v7897 = vld [vmem:[#allocation14 + $0xd8] sm:$0xff]
        %v7898 = vld [vmem:[#allocation14 + $0xe0] sm:$0xff]
        %v7899 = vld [vmem:[#allocation14 + $0xe8] sm:$0xff]
        %v7900 = vld [vmem:[#allocation14 + $0xf0] sm:$0xff]
        %v7901 = vld [vmem:[#allocation14 + $0xf8] sm:$0xff]
        %v7902 = vld [vmem:[%s8] sm:$0xf]
        %v7904 = vperm.slane %v7902, 0
        %v7905 = vperm.slane %v7902, 1
        %v7906 = vperm.slane %v7902, 2
        %v7907 = vperm.slane %v7902, 3
        %v7944 = vunpack.c.l.b16 %v7870
        %v7945 = vunpack.c.h.b16 %v7870
        %v7946 = vunpack.c.l.b16 %v7871
        %v7947 = vunpack.c.h.b16 %v7871
        %v7948 = vunpack.c.l.b16 %v7872
        %v7949 = vunpack.c.h.b16 %v7872
        %v7950 = vunpack.c.l.b16 %v7873
        %v7951 = vunpack.c.h.b16 %v7873
        %v7952 = vunpack.c.l.b16 %v7874
        %v7953 = vunpack.c.h.b16 %v7874
        %v7954 = vunpack.c.l.b16 %v7875
        %v7955 = vunpack.c.h.b16 %v7875
        %v7956 = vunpack.c.l.b16 %v7876
        %v7957 = vunpack.c.h.b16 %v7876
        %v7958 = vunpack.c.l.b16 %v7877
        %v7959 = vunpack.c.h.b16 %v7877
        %v7960 = vunpack.c.l.b16 %v7878
        %v7961 = vunpack.c.h.b16 %v7878
        %v7962 = vunpack.c.l.b16 %v7879
        %v7963 = vunpack.c.h.b16 %v7879
        %v7964 = vunpack.c.l.b16 %v7880
        %v7965 = vunpack.c.h.b16 %v7880
        %v7966 = vunpack.c.l.b16 %v7881
        %v7967 = vunpack.c.h.b16 %v7881
        %v7968 = vunpack.c.l.b16 %v7882
        %v7969 = vunpack.c.h.b16 %v7882
        %v7970 = vunpack.c.l.b16 %v7883
        %v7971 = vunpack.c.h.b16 %v7883
        %v7972 = vunpack.c.l.b16 %v7884
        %v7973 = vunpack.c.h.b16 %v7884
        %v7974 = vunpack.c.l.b16 %v7885
        %v7975 = vunpack.c.h.b16 %v7885
        %v7976 = vunpack.c.l.b16 %v7886
        %v7977 = vunpack.c.h.b16 %v7886
        %v7978 = vunpack.c.l.b16 %v7887
        %v7979 = vunpack.c.h.b16 %v7887
        %v7980 = vunpack.c.l.b16 %v7888
        %v7981 = vunpack.c.h.b16 %v7888
        %v7982 = vunpack.c.l.b16 %v7889
        %v7983 = vunpack.c.h.b16 %v7889
        %v7984 = vunpack.c.l.b16 %v7890
        %v7985 = vunpack.c.h.b16 %v7890
        %v7986 = vunpack.c.l.b16 %v7891
        %v7987 = vunpack.c.h.b16 %v7891
        %v7988 = vunpack.c.l.b16 %v7892
        %v7989 = vunpack.c.h.b16 %v7892
        %v7990 = vunpack.c.l.b16 %v7893
        %v7991 = vunpack.c.h.b16 %v7893
        %v7992 = vunpack.c.l.b16 %v7894
        %v7993 = vunpack.c.h.b16 %v7894
        %v7994 = vunpack.c.l.b16 %v7895
        %v7995 = vunpack.c.h.b16 %v7895
        %v7996 = vunpack.c.l.b16 %v7896
        %v7997 = vunpack.c.h.b16 %v7896
        %v7998 = vunpack.c.l.b16 %v7897
        %v7999 = vunpack.c.h.b16 %v7897
        %v8000 = vunpack.c.l.b16 %v7898
        %v8001 = vunpack.c.h.b16 %v7898
        %v8002 = vunpack.c.l.b16 %v7899
        %v8003 = vunpack.c.h.b16 %v7899
        %v8004 = vunpack.c.l.b16 %v7900
        %v8005 = vunpack.c.h.b16 %v7900
        %v8006 = vunpack.c.l.b16 %v7901
        %v8007 = vunpack.c.h.b16 %v7901
        %v8008 = vpack.c.b16 %v7948, %v7944
        %v8009 = vpack.c.b16 %v7949, %v7945
        %v8010 = vpack.c.b16 %v7950, %v7946
        %v8011 = vpack.c.b16 %v7951, %v7947
        %v8012 = vpack.c.b16 %v7956, %v7952
        %v8013 = vpack.c.b16 %v7957, %v7953
        %v8014 = vpack.c.b16 %v7958, %v7954
        %v8015 = vpack.c.b16 %v7959, %v7955
        %v8016 = vpack.c.b16 %v7964, %v7960
        %v8017 = vpack.c.b16 %v7965, %v7961
        %v8018 = vpack.c.b16 %v7966, %v7962
        %v8019 = vpack.c.b16 %v7967, %v7963
        %v8020 = vpack.c.b16 %v7972, %v7968
        %v8021 = vpack.c.b16 %v7973, %v7969
        %v8022 = vpack.c.b16 %v7974, %v7970
        %v8023 = vpack.c.b16 %v7975, %v7971
        %v8024 = vpack.c.b16 %v7980, %v7976
        %v8025 = vpack.c.b16 %v7981, %v7977
        %v8026 = vpack.c.b16 %v7982, %v7978
        %v8027 = vpack.c.b16 %v7983, %v7979
        %v8028 = vpack.c.b16 %v7988, %v7984
        %v8029 = vpack.c.b16 %v7989, %v7985
        %v8030 = vpack.c.b16 %v7990, %v7986
        %v8031 = vpack.c.b16 %v7991, %v7987
        %v8032 = vpack.c.b16 %v7996, %v7992
        %v8033 = vpack.c.b16 %v7997, %v7993
        %v8034 = vpack.c.b16 %v7998, %v7994
        %v8035 = vpack.c.b16 %v7999, %v7995
        %v8036 = vpack.c.b16 %v8004, %v8000
        %v8037 = vpack.c.b16 %v8005, %v8001
        %v8038 = vpack.c.b16 %v8006, %v8002
        %v8039 = vpack.c.b16 %v8007, %v8003
        %8072 = vmatpush.bf16.msra.mxu0 %v8036
        %8073 = vmatpush.bf16.msra.mxu0 %v8032
        %8074 = vmatpush.bf16.msra.mxu0 %v8028
        %8075 = vmatpush.bf16.msra.mxu0 %v8024
        %8076 = vmatpush.bf16.msra.mxu0 %v8020
        %8077 = vmatpush.bf16.msra.mxu0 %v8016
        %8078 = vmatpush.bf16.msra.mxu0 %v8012
        %8079 = vmatpush.bf16.msra.mxu0 %v8008
        %8080 = vmatmul.bf16.gmra.mxu0 %v7862
        %v8081 = vpop.f32.mrf.mxu0
        %v8082 = vadd.f32 %v7904, %v8081
        %v8083 = vpop.f32.mrf.mxu0
        %v8084 = vadd.f32 %v7904, %v8083
        %8085 = vmatmul.bf16.gmra.mxu0 %v7863
        %v8086 = vpop.f32.mrf.mxu0
        %v8087 = vadd.f32 %v7904, %v8086
        %v8088 = vpop.f32.mrf.mxu0
        %v8089 = vadd.f32 %v7904, %v8088
        %8090 = vmatmul.bf16.gmra.mxu0 %v7864
        %v8091 = vpop.f32.mrf.mxu0
        %v8092 = vadd.f32 %v7904, %v8091
        %v8093 = vpop.f32.mrf.mxu0
        %v8094 = vadd.f32 %v7904, %v8093
        %8095 = vmatmul.bf16.gmra.mxu0 %v7865
        %v8096 = vpop.f32.mrf.mxu0
        %v8097 = vadd.f32 %v7904, %v8096
        %v8098 = vpop.f32.mrf.mxu0
        %v8099 = vadd.f32 %v7904, %v8098
        %8100 = vmatmul.bf16.gmra.mxu0 %v7866
        %v8101 = vpop.f32.mrf.mxu0
        %v8102 = vadd.f32 %v7904, %v8101
        %v8103 = vpop.f32.mrf.mxu0
        %v8104 = vadd.f32 %v7904, %v8103
        %8105 = vmatmul.bf16.gmra.mxu0 %v7867
        %v8106 = vpop.f32.mrf.mxu0
        %v8107 = vadd.f32 %v7904, %v8106
        %v8108 = vpop.f32.mrf.mxu0
        %v8109 = vadd.f32 %v7904, %v8108
        %8110 = vmatmul.bf16.gmra.mxu0 %v7868
        %v8111 = vpop.f32.mrf.mxu0
        %v8112 = vadd.f32 %v7904, %v8111
        %v8113 = vpop.f32.mrf.mxu0
        %v8114 = vadd.f32 %v7904, %v8113
        %8115 = vmatmul.bf16.gmra.mxu0 %v7869
        %v8116 = vpop.f32.mrf.mxu0
        %v8117 = vadd.f32 %v7904, %v8116
        %v8118 = vpop.f32.mrf.mxu0
        %v8119 = vadd.f32 %v7904, %v8118
        %8120 = vdwg.mxu0
        %8121 = vmatpush.bf16.msra.mxu0 %v8037
        %8122 = vmatpush.bf16.msra.mxu0 %v8033
        %8123 = vmatpush.bf16.msra.mxu0 %v8029
        %8124 = vmatpush.bf16.msra.mxu0 %v8025
        %8125 = vmatpush.bf16.msra.mxu0 %v8021
        %8126 = vmatpush.bf16.msra.mxu0 %v8017
        %8127 = vmatpush.bf16.msra.mxu0 %v8013
        %8128 = vmatpush.bf16.msra.mxu0 %v8009
        %8129 = vmatmul.bf16.gmra.mxu0 %v7862
        %v8130 = vpop.f32.mrf.mxu0
        %v8131 = vadd.f32 %v7905, %v8130
        %v8132 = vpop.f32.mrf.mxu0
        %v8133 = vadd.f32 %v7905, %v8132
        %8134 = vmatmul.bf16.gmra.mxu0 %v7863
        %v8135 = vpop.f32.mrf.mxu0
        %v8136 = vadd.f32 %v7905, %v8135
        %v8137 = vpop.f32.mrf.mxu0
        %v8138 = vadd.f32 %v7905, %v8137
        %8139 = vmatmul.bf16.gmra.mxu0 %v7864
        %v8140 = vpop.f32.mrf.mxu0
        %v8141 = vadd.f32 %v7905, %v8140
        %v8142 = vpop.f32.mrf.mxu0
        %v8143 = vadd.f32 %v7905, %v8142
        %8144 = vmatmul.bf16.gmra.mxu0 %v7865
        %v8145 = vpop.f32.mrf.mxu0
        %v8146 = vadd.f32 %v7905, %v8145
        %v8147 = vpop.f32.mrf.mxu0
        %v8148 = vadd.f32 %v7905, %v8147
        %8149 = vmatmul.bf16.gmra.mxu0 %v7866
        %v8150 = vpop.f32.mrf.mxu0
        %v8151 = vadd.f32 %v7905, %v8150
        %v8152 = vpop.f32.mrf.mxu0
        %v8153 = vadd.f32 %v7905, %v8152
        %8154 = vmatmul.bf16.gmra.mxu0 %v7867
        %v8155 = vpop.f32.mrf.mxu0
        %v8156 = vadd.f32 %v7905, %v8155
        %v8157 = vpop.f32.mrf.mxu0
        %v8158 = vadd.f32 %v7905, %v8157
        %8159 = vmatmul.bf16.gmra.mxu0 %v7868
        %v8160 = vpop.f32.mrf.mxu0
        %v8161 = vadd.f32 %v7905, %v8160
        %v8162 = vpop.f32.mrf.mxu0
        %v8163 = vadd.f32 %v7905, %v8162
        %8164 = vmatmul.bf16.gmra.mxu0 %v7869
        %v8165 = vpop.f32.mrf.mxu0
        %v8166 = vadd.f32 %v7905, %v8165
        %v8167 = vpop.f32.mrf.mxu0
        %v8168 = vadd.f32 %v7905, %v8167
        %8169 = vdwg.mxu0
        %8170 = vmatpush.bf16.msra.mxu0 %v8038
        %8171 = vmatpush.bf16.msra.mxu0 %v8034
        %8172 = vmatpush.bf16.msra.mxu0 %v8030
        %8173 = vmatpush.bf16.msra.mxu0 %v8026
        %8174 = vmatpush.bf16.msra.mxu0 %v8022
        %8175 = vmatpush.bf16.msra.mxu0 %v8018
        %8176 = vmatpush.bf16.msra.mxu0 %v8014
        %8177 = vmatpush.bf16.msra.mxu0 %v8010
        %8178 = vmatmul.bf16.gmra.mxu0 %v7862
        %v8179 = vpop.f32.mrf.mxu0
        %v8180 = vadd.f32 %v7906, %v8179
        %v8181 = vpop.f32.mrf.mxu0
        %v8182 = vadd.f32 %v7906, %v8181
        %8183 = vmatmul.bf16.gmra.mxu0 %v7863
        %v8184 = vpop.f32.mrf.mxu0
        %v8185 = vadd.f32 %v7906, %v8184
        %v8186 = vpop.f32.mrf.mxu0
        %v8187 = vadd.f32 %v7906, %v8186
        %8188 = vmatmul.bf16.gmra.mxu0 %v7864
        %v8189 = vpop.f32.mrf.mxu0
        %v8190 = vadd.f32 %v7906, %v8189
        %v8191 = vpop.f32.mrf.mxu0
        %v8192 = vadd.f32 %v7906, %v8191
        %8193 = vmatmul.bf16.gmra.mxu0 %v7865
        %v8194 = vpop.f32.mrf.mxu0
        %v8195 = vadd.f32 %v7906, %v8194
        %v8196 = vpop.f32.mrf.mxu0
        %v8197 = vadd.f32 %v7906, %v8196
        %8198 = vmatmul.bf16.gmra.mxu0 %v7866
        %v8199 = vpop.f32.mrf.mxu0
        %v8200 = vadd.f32 %v7906, %v8199
        %v8201 = vpop.f32.mrf.mxu0
        %v8202 = vadd.f32 %v7906, %v8201
        %8203 = vmatmul.bf16.gmra.mxu0 %v7867
        %v8204 = vpop.f32.mrf.mxu0
        %v8205 = vadd.f32 %v7906, %v8204
        %v8206 = vpop.f32.mrf.mxu0
        %v8207 = vadd.f32 %v7906, %v8206
        %8208 = vmatmul.bf16.gmra.mxu0 %v7868
        %v8209 = vpop.f32.mrf.mxu0
        %v8210 = vadd.f32 %v7906, %v8209
        %v8211 = vpop.f32.mrf.mxu0
        %v8212 = vadd.f32 %v7906, %v8211
        %8213 = vmatmul.bf16.gmra.mxu0 %v7869
        %v8214 = vpop.f32.mrf.mxu0
        %v8215 = vadd.f32 %v7906, %v8214
        %v8216 = vpop.f32.mrf.mxu0
        %v8217 = vadd.f32 %v7906, %v8216
        %8218 = vdwg.mxu0
        %8219 = vmatpush.bf16.msra.mxu0 %v8039
        %8220 = vmatpush.bf16.msra.mxu0 %v8035
        %8221 = vmatpush.bf16.msra.mxu0 %v8031
        %8222 = vmatpush.bf16.msra.mxu0 %v8027
        %8223 = vmatpush.bf16.msra.mxu0 %v8023
        %8224 = vmatpush.bf16.msra.mxu0 %v8019
        %8225 = vmatpush.bf16.msra.mxu0 %v8015
        %8226 = vmatpush.bf16.msra.mxu0 %v8011
        %8227 = vmatmul.bf16.gmra.mxu0 %v7862
        %v8228 = vpop.f32.mrf.mxu0
        %v8229 = vadd.f32 %v7907, %v8228
        %v8230 = vpop.f32.mrf.mxu0
        %v8231 = vadd.f32 %v7907, %v8230
        %8232 = vmatmul.bf16.gmra.mxu0 %v7863
        %v8233 = vpop.f32.mrf.mxu0
        %v8234 = vadd.f32 %v7907, %v8233
        %v8235 = vpop.f32.mrf.mxu0
        %v8236 = vadd.f32 %v7907, %v8235
        %8237 = vmatmul.bf16.gmra.mxu0 %v7864
        %v8238 = vpop.f32.mrf.mxu0
        %v8239 = vadd.f32 %v7907, %v8238
        %v8240 = vpop.f32.mrf.mxu0
        %v8241 = vadd.f32 %v7907, %v8240
        %8242 = vmatmul.bf16.gmra.mxu0 %v7865
        %v8243 = vpop.f32.mrf.mxu0
        %v8244 = vadd.f32 %v7907, %v8243
        %v8245 = vpop.f32.mrf.mxu0
        %v8246 = vadd.f32 %v7907, %v8245
        %8247 = vmatmul.bf16.gmra.mxu0 %v7866
        %v8248 = vpop.f32.mrf.mxu0
        %v8249 = vadd.f32 %v7907, %v8248
        %v8250 = vpop.f32.mrf.mxu0
        %v8251 = vadd.f32 %v7907, %v8250
        %8252 = vmatmul.bf16.gmra.mxu0 %v7867
        %v8253 = vpop.f32.mrf.mxu0
        %v8254 = vadd.f32 %v7907, %v8253
        %v8255 = vpop.f32.mrf.mxu0
        %v8256 = vadd.f32 %v7907, %v8255
        %8257 = vmatmul.bf16.gmra.mxu0 %v7868
        %v8258 = vpop.f32.mrf.mxu0
        %v8259 = vadd.f32 %v7907, %v8258
        %v8260 = vpop.f32.mrf.mxu0
        %v8261 = vadd.f32 %v7907, %v8260
        %8262 = vmatmul.bf16.gmra.mxu0 %v7869
        %v8263 = vpop.f32.mrf.mxu0
        %v8264 = vadd.f32 %v7907, %v8263
        %v8265 = vpop.f32.mrf.mxu0
        %v8266 = vadd.f32 %v7907, %v8265
        %8267 = vdwg.mxu0
        %v8268 = vmax.f32 %v8082, 0.0
        %v8269 = vmax.f32 %v8131, 0.0
        %v8270 = vmax.f32 %v8180, 0.0
        %v8271 = vmax.f32 %v8229, 0.0
        %v8272 = vmax.f32 %v8084, 0.0
        %v8273 = vmax.f32 %v8133, 0.0
        %v8274 = vmax.f32 %v8182, 0.0
        %v8275 = vmax.f32 %v8231, 0.0
        %v8276 = vmax.f32 %v8087, 0.0
        %v8277 = vmax.f32 %v8136, 0.0
        %v8278 = vmax.f32 %v8185, 0.0
        %v8279 = vmax.f32 %v8234, 0.0
        %v8280 = vmax.f32 %v8089, 0.0
        %v8281 = vmax.f32 %v8138, 0.0
        %v8282 = vmax.f32 %v8187, 0.0
        %v8283 = vmax.f32 %v8236, 0.0
        %v8284 = vmax.f32 %v8092, 0.0
        %v8285 = vmax.f32 %v8141, 0.0
        %v8286 = vmax.f32 %v8190, 0.0
        %v8287 = vmax.f32 %v8239, 0.0
        %v8288 = vmax.f32 %v8094, 0.0
        %v8289 = vmax.f32 %v8143, 0.0
        %v8290 = vmax.f32 %v8192, 0.0
        %v8291 = vmax.f32 %v8241, 0.0
        %v8292 = vmax.f32 %v8097, 0.0
        %v8293 = vmax.f32 %v8146, 0.0
        %v8294 = vmax.f32 %v8195, 0.0
        %v8295 = vmax.f32 %v8244, 0.0
        %v8296 = vmax.f32 %v8099, 0.0
        %v8297 = vmax.f32 %v8148, 0.0
        %v8298 = vmax.f32 %v8197, 0.0
        %v8299 = vmax.f32 %v8246, 0.0
        %v8300 = vmax.f32 %v8102, 0.0
        %v8301 = vmax.f32 %v8151, 0.0
        %v8302 = vmax.f32 %v8200, 0.0
        %v8303 = vmax.f32 %v8249, 0.0
        %v8304 = vmax.f32 %v8104, 0.0
        %v8305 = vmax.f32 %v8153, 0.0
        %v8306 = vmax.f32 %v8202, 0.0
        %v8307 = vmax.f32 %v8251, 0.0
        %v8308 = vmax.f32 %v8107, 0.0
        %v8309 = vmax.f32 %v8156, 0.0
        %v8310 = vmax.f32 %v8205, 0.0
        %v8311 = vmax.f32 %v8254, 0.0
        %v8312 = vmax.f32 %v8109, 0.0
        %v8313 = vmax.f32 %v8158, 0.0
        %v8314 = vmax.f32 %v8207, 0.0
        %v8315 = vmax.f32 %v8256, 0.0
        %v8316 = vmax.f32 %v8112, 0.0
        %v8317 = vmax.f32 %v8161, 0.0
        %v8318 = vmax.f32 %v8210, 0.0
        %v8319 = vmax.f32 %v8259, 0.0
        %v8320 = vmax.f32 %v8114, 0.0
        %v8321 = vmax.f32 %v8163, 0.0
        %v8322 = vmax.f32 %v8212, 0.0
        %v8323 = vmax.f32 %v8261, 0.0
        %v8324 = vmax.f32 %v8117, 0.0
        %v8325 = vmax.f32 %v8166, 0.0
        %v8326 = vmax.f32 %v8215, 0.0
        %v8327 = vmax.f32 %v8264, 0.0
        %v8328 = vmax.f32 %v8119, 0.0
        %v8329 = vmax.f32 %v8168, 0.0
        %v8330 = vmax.f32 %v8217, 0.0
        %v8331 = vmax.f32 %v8266, 0.0
        %v8332 = vpack.c.bf16 %v8272, %v8268
        %v8333 = vpack.c.bf16 %v8273, %v8269
        %v8334 = vpack.c.bf16 %v8274, %v8270
        %v8335 = vpack.c.bf16 %v8275, %v8271
        %v8336 = vpack.c.bf16 %v8280, %v8276
        %v8337 = vpack.c.bf16 %v8281, %v8277
        %v8338 = vpack.c.bf16 %v8282, %v8278
        %v8339 = vpack.c.bf16 %v8283, %v8279
        %v8340 = vpack.c.bf16 %v8288, %v8284
        %v8341 = vpack.c.bf16 %v8289, %v8285
        %v8342 = vpack.c.bf16 %v8290, %v8286
        %v8343 = vpack.c.bf16 %v8291, %v8287
        %v8344 = vpack.c.bf16 %v8296, %v8292
        %v8345 = vpack.c.bf16 %v8297, %v8293
        %v8346 = vpack.c.bf16 %v8298, %v8294
        %v8347 = vpack.c.bf16 %v8299, %v8295
        %v8348 = vpack.c.bf16 %v8304, %v8300
        %v8349 = vpack.c.bf16 %v8305, %v8301
        %v8350 = vpack.c.bf16 %v8306, %v8302
        %v8351 = vpack.c.bf16 %v8307, %v8303
        %v8352 = vpack.c.bf16 %v8312, %v8308
        %v8353 = vpack.c.bf16 %v8313, %v8309
        %v8354 = vpack.c.bf16 %v8314, %v8310
        %v8355 = vpack.c.bf16 %v8315, %v8311
        %v8356 = vpack.c.bf16 %v8320, %v8316
        %v8357 = vpack.c.bf16 %v8321, %v8317
        %v8358 = vpack.c.bf16 %v8322, %v8318
        %v8359 = vpack.c.bf16 %v8323, %v8319
        %v8360 = vpack.c.bf16 %v8328, %v8324
        %v8361 = vpack.c.bf16 %v8329, %v8325
        %v8362 = vpack.c.bf16 %v8330, %v8326
        %v8363 = vpack.c.bf16 %v8331, %v8327
        %v8364 = vld [vmem:[#allocation16] sm:$0xff]
        %v8365 = vld [vmem:[#allocation16 + $0x8] sm:$0xff]
        %v8366 = vld [vmem:[#allocation16 + $0x10] sm:$0xff]
        %v8367 = vld [vmem:[#allocation16 + $0x18] sm:$0xff]
        %v8368 = vld [vmem:[#allocation16 + $0x20] sm:$0xff]
        %v8369 = vld [vmem:[#allocation16 + $0x28] sm:$0xff]
        %v8370 = vld [vmem:[#allocation16 + $0x30] sm:$0xff]
        %v8371 = vld [vmem:[#allocation16 + $0x38] sm:$0xff]
        %v8372 = vld [vmem:[#allocation16 + $0x40] sm:$0xff]
        %v8373 = vld [vmem:[#allocation16 + $0x48] sm:$0xff]
        %v8374 = vld [vmem:[#allocation16 + $0x50] sm:$0xff]
        %v8375 = vld [vmem:[#allocation16 + $0x58] sm:$0xff]
        %v8376 = vld [vmem:[#allocation16 + $0x60] sm:$0xff]
        %v8377 = vld [vmem:[#allocation16 + $0x68] sm:$0xff]
        %v8378 = vld [vmem:[#allocation16 + $0x70] sm:$0xff]
        %v8379 = vld [vmem:[#allocation16 + $0x78] sm:$0xff]
        %v8380 = vld [vmem:[#allocation16 + $0x80] sm:$0xff]
        %v8381 = vld [vmem:[#allocation16 + $0x88] sm:$0xff]
        %v8382 = vld [vmem:[#allocation16 + $0x90] sm:$0xff]
        %v8383 = vld [vmem:[#allocation16 + $0x98] sm:$0xff]
        %v8384 = vld [vmem:[#allocation16 + $0xa0] sm:$0xff]
        %v8385 = vld [vmem:[#allocation16 + $0xa8] sm:$0xff]
        %v8386 = vld [vmem:[#allocation16 + $0xb0] sm:$0xff]
        %v8387 = vld [vmem:[#allocation16 + $0xb8] sm:$0xff]
        %v8388 = vld [vmem:[#allocation16 + $0xc0] sm:$0xff]
        %v8389 = vld [vmem:[#allocation16 + $0xc8] sm:$0xff]
        %v8390 = vld [vmem:[#allocation16 + $0xd0] sm:$0xff]
        %v8391 = vld [vmem:[#allocation16 + $0xd8] sm:$0xff]
        %v8392 = vld [vmem:[#allocation16 + $0xe0] sm:$0xff]
        %v8393 = vld [vmem:[#allocation16 + $0xe8] sm:$0xff]
        %v8394 = vld [vmem:[#allocation16 + $0xf0] sm:$0xff]
        %v8395 = vld [vmem:[#allocation16 + $0xf8] sm:$0xff]
        %v8396 = vld [vmem:[#allocation16 + $0x100] sm:$0xff]
        %v8397 = vld [vmem:[#allocation16 + $0x108] sm:$0xff]
        %v8398 = vld [vmem:[#allocation16 + $0x110] sm:$0xff]
        %v8399 = vld [vmem:[#allocation16 + $0x118] sm:$0xff]
        %v8400 = vld [vmem:[#allocation16 + $0x120] sm:$0xff]
        %v8401 = vld [vmem:[#allocation16 + $0x128] sm:$0xff]
        %v8402 = vld [vmem:[#allocation16 + $0x130] sm:$0xff]
        %v8403 = vld [vmem:[#allocation16 + $0x138] sm:$0xff]
        %v8404 = vld [vmem:[#allocation16 + $0x140] sm:$0xff]
        %v8405 = vld [vmem:[#allocation16 + $0x148] sm:$0xff]
        %v8406 = vld [vmem:[#allocation16 + $0x150] sm:$0xff]
        %v8407 = vld [vmem:[#allocation16 + $0x158] sm:$0xff]
        %v8408 = vld [vmem:[#allocation16 + $0x160] sm:$0xff]
        %v8409 = vld [vmem:[#allocation16 + $0x168] sm:$0xff]
        %v8410 = vld [vmem:[#allocation16 + $0x170] sm:$0xff]
        %v8411 = vld [vmem:[#allocation16 + $0x178] sm:$0xff]
        %v8412 = vld [vmem:[#allocation16 + $0x180] sm:$0xff]
        %v8413 = vld [vmem:[#allocation16 + $0x188] sm:$0xff]
        %v8414 = vld [vmem:[#allocation16 + $0x190] sm:$0xff]
        %v8415 = vld [vmem:[#allocation16 + $0x198] sm:$0xff]
        %v8416 = vld [vmem:[#allocation16 + $0x1a0] sm:$0xff]
        %v8417 = vld [vmem:[#allocation16 + $0x1a8] sm:$0xff]
        %v8418 = vld [vmem:[#allocation16 + $0x1b0] sm:$0xff]
        %v8419 = vld [vmem:[#allocation16 + $0x1b8] sm:$0xff]
        %v8420 = vld [vmem:[#allocation16 + $0x1c0] sm:$0xff]
        %v8421 = vld [vmem:[#allocation16 + $0x1c8] sm:$0xff]
        %v8422 = vld [vmem:[#allocation16 + $0x1d0] sm:$0xff]
        %v8423 = vld [vmem:[#allocation16 + $0x1d8] sm:$0xff]
        %v8424 = vld [vmem:[#allocation16 + $0x1e0] sm:$0xff]
        %v8425 = vld [vmem:[#allocation16 + $0x1e8] sm:$0xff]
        %v8426 = vld [vmem:[#allocation16 + $0x1f0] sm:$0xff]
        %v8427 = vld [vmem:[#allocation16 + $0x1f8] sm:$0xff]
        %v8428 = vld [vmem:[#allocation16 + $0x200] sm:$0xff]
        %v8429 = vld [vmem:[#allocation16 + $0x208] sm:$0xff]
        %v8430 = vld [vmem:[#allocation16 + $0x210] sm:$0xff]
        %v8431 = vld [vmem:[#allocation16 + $0x218] sm:$0xff]
        %v8432 = vld [vmem:[#allocation16 + $0x220] sm:$0xff]
        %v8433 = vld [vmem:[#allocation16 + $0x228] sm:$0xff]
        %v8434 = vld [vmem:[#allocation16 + $0x230] sm:$0xff]
        %v8435 = vld [vmem:[#allocation16 + $0x238] sm:$0xff]
        %v8436 = vld [vmem:[#allocation16 + $0x240] sm:$0xff]
        %v8437 = vld [vmem:[#allocation16 + $0x248] sm:$0xff]
        %v8438 = vld [vmem:[#allocation16 + $0x250] sm:$0xff]
        %v8439 = vld [vmem:[#allocation16 + $0x258] sm:$0xff]
        %v8440 = vld [vmem:[#allocation16 + $0x260] sm:$0xff]
        %v8441 = vld [vmem:[#allocation16 + $0x268] sm:$0xff]
        %v8442 = vld [vmem:[#allocation16 + $0x270] sm:$0xff]
        %v8443 = vld [vmem:[#allocation16 + $0x278] sm:$0xff]
        %v8444 = vld [vmem:[#allocation16 + $0x280] sm:$0xff]
        %v8445 = vld [vmem:[#allocation16 + $0x288] sm:$0xff]
        %v8446 = vld [vmem:[#allocation16 + $0x290] sm:$0xff]
        %v8447 = vld [vmem:[#allocation16 + $0x298] sm:$0xff]
        %v8448 = vld [vmem:[#allocation16 + $0x2a0] sm:$0xff]
        %v8449 = vld [vmem:[#allocation16 + $0x2a8] sm:$0xff]
        %v8450 = vld [vmem:[#allocation16 + $0x2b0] sm:$0xff]
        %v8451 = vld [vmem:[#allocation16 + $0x2b8] sm:$0xff]
        %v8452 = vld [vmem:[#allocation16 + $0x2c0] sm:$0xff]
        %v8453 = vld [vmem:[#allocation16 + $0x2c8] sm:$0xff]
        %v8454 = vld [vmem:[#allocation16 + $0x2d0] sm:$0xff]
        %v8455 = vld [vmem:[#allocation16 + $0x2d8] sm:$0xff]
        %v8456 = vld [vmem:[#allocation16 + $0x2e0] sm:$0xff]
        %v8457 = vld [vmem:[#allocation16 + $0x2e8] sm:$0xff]
        %v8458 = vld [vmem:[#allocation16 + $0x2f0] sm:$0xff]
        %v8459 = vld [vmem:[#allocation16 + $0x2f8] sm:$0xff]
        %v8460 = vld [vmem:[#allocation16 + $0x300] sm:$0xff]
        %v8461 = vld [vmem:[#allocation16 + $0x308] sm:$0xff]
        %v8462 = vld [vmem:[#allocation16 + $0x310] sm:$0xff]
        %v8463 = vld [vmem:[#allocation16 + $0x318] sm:$0xff]
        %v8464 = vld [vmem:[#allocation16 + $0x320] sm:$0xff]
        %v8465 = vld [vmem:[#allocation16 + $0x328] sm:$0xff]
        %v8466 = vld [vmem:[#allocation16 + $0x330] sm:$0xff]
        %v8467 = vld [vmem:[#allocation16 + $0x338] sm:$0xff]
        %v8468 = vld [vmem:[#allocation16 + $0x340] sm:$0xff]
        %v8469 = vld [vmem:[#allocation16 + $0x348] sm:$0xff]
        %v8470 = vld [vmem:[#allocation16 + $0x350] sm:$0xff]
        %v8471 = vld [vmem:[#allocation16 + $0x358] sm:$0xff]
        %v8472 = vld [vmem:[#allocation16 + $0x360] sm:$0xff]
        %v8473 = vld [vmem:[#allocation16 + $0x368] sm:$0xff]
        %v8474 = vld [vmem:[#allocation16 + $0x370] sm:$0xff]
        %v8475 = vld [vmem:[#allocation16 + $0x378] sm:$0xff]
        %v8476 = vld [vmem:[#allocation16 + $0x380] sm:$0xff]
        %v8477 = vld [vmem:[#allocation16 + $0x388] sm:$0xff]
        %v8478 = vld [vmem:[#allocation16 + $0x390] sm:$0xff]
        %v8479 = vld [vmem:[#allocation16 + $0x398] sm:$0xff]
        %v8480 = vld [vmem:[#allocation16 + $0x3a0] sm:$0xff]
        %v8481 = vld [vmem:[#allocation16 + $0x3a8] sm:$0xff]
        %v8482 = vld [vmem:[#allocation16 + $0x3b0] sm:$0xff]
        %v8483 = vld [vmem:[#allocation16 + $0x3b8] sm:$0xff]
        %v8484 = vld [vmem:[#allocation16 + $0x3c0] sm:$0xff]
        %v8485 = vld [vmem:[#allocation16 + $0x3c8] sm:$0xff]
        %v8486 = vld [vmem:[#allocation16 + $0x3d0] sm:$0xff]
        %v8487 = vld [vmem:[#allocation16 + $0x3d8] sm:$0xff]
        %v8488 = vld [vmem:[#allocation16 + $0x3e0] sm:$0xff]
        %v8489 = vld [vmem:[#allocation16 + $0x3e8] sm:$0xff]
        %v8490 = vld [vmem:[#allocation16 + $0x3f0] sm:$0xff]
        %v8491 = vld [vmem:[#allocation16 + $0x3f8] sm:$0xff]
        %v8492 = vld [vmem:[%s10] sm:$0xf]
        %v8494 = vperm.slane %v8492, 0
        %v8495 = vperm.slane %v8492, 1
        %v8496 = vperm.slane %v8492, 2
        %v8497 = vperm.slane %v8492, 3
        %v8630 = vunpack.c.l.b16 %v8364
        %v8631 = vunpack.c.h.b16 %v8364
        %v8632 = vunpack.c.l.b16 %v8365
        %v8633 = vunpack.c.h.b16 %v8365
        %v8634 = vunpack.c.l.b16 %v8366
        %v8635 = vunpack.c.h.b16 %v8366
        %v8636 = vunpack.c.l.b16 %v8367
        %v8637 = vunpack.c.h.b16 %v8367
        %v8638 = vunpack.c.l.b16 %v8368
        %v8639 = vunpack.c.h.b16 %v8368
        %v8640 = vunpack.c.l.b16 %v8369
        %v8641 = vunpack.c.h.b16 %v8369
        %v8642 = vunpack.c.l.b16 %v8370
        %v8643 = vunpack.c.h.b16 %v8370
        %v8644 = vunpack.c.l.b16 %v8371
        %v8645 = vunpack.c.h.b16 %v8371
        %v8646 = vunpack.c.l.b16 %v8372
        %v8647 = vunpack.c.h.b16 %v8372
        %v8648 = vunpack.c.l.b16 %v8373
        %v8649 = vunpack.c.h.b16 %v8373
        %v8650 = vunpack.c.l.b16 %v8374
        %v8651 = vunpack.c.h.b16 %v8374
        %v8652 = vunpack.c.l.b16 %v8375
        %v8653 = vunpack.c.h.b16 %v8375
        %v8654 = vunpack.c.l.b16 %v8376
        %v8655 = vunpack.c.h.b16 %v8376
        %v8656 = vunpack.c.l.b16 %v8377
        %v8657 = vunpack.c.h.b16 %v8377
        %v8658 = vunpack.c.l.b16 %v8378
        %v8659 = vunpack.c.h.b16 %v8378
        %v8660 = vunpack.c.l.b16 %v8379
        %v8661 = vunpack.c.h.b16 %v8379
        %v8662 = vunpack.c.l.b16 %v8380
        %v8663 = vunpack.c.h.b16 %v8380
        %v8664 = vunpack.c.l.b16 %v8381
        %v8665 = vunpack.c.h.b16 %v8381
        %v8666 = vunpack.c.l.b16 %v8382
        %v8667 = vunpack.c.h.b16 %v8382
        %v8668 = vunpack.c.l.b16 %v8383
        %v8669 = vunpack.c.h.b16 %v8383
        %v8670 = vunpack.c.l.b16 %v8384
        %v8671 = vunpack.c.h.b16 %v8384
        %v8672 = vunpack.c.l.b16 %v8385
        %v8673 = vunpack.c.h.b16 %v8385
        %v8674 = vunpack.c.l.b16 %v8386
        %v8675 = vunpack.c.h.b16 %v8386
        %v8676 = vunpack.c.l.b16 %v8387
        %v8677 = vunpack.c.h.b16 %v8387
        %v8678 = vunpack.c.l.b16 %v8388
        %v8679 = vunpack.c.h.b16 %v8388
        %v8680 = vunpack.c.l.b16 %v8389
        %v8681 = vunpack.c.h.b16 %v8389
        %v8682 = vunpack.c.l.b16 %v8390
        %v8683 = vunpack.c.h.b16 %v8390
        %v8684 = vunpack.c.l.b16 %v8391
        %v8685 = vunpack.c.h.b16 %v8391
        %v8686 = vunpack.c.l.b16 %v8392
        %v8687 = vunpack.c.h.b16 %v8392
        %v8688 = vunpack.c.l.b16 %v8393
        %v8689 = vunpack.c.h.b16 %v8393
        %v8690 = vunpack.c.l.b16 %v8394
        %v8691 = vunpack.c.h.b16 %v8394
        %v8692 = vunpack.c.l.b16 %v8395
        %v8693 = vunpack.c.h.b16 %v8395
        %v8694 = vunpack.c.l.b16 %v8396
        %v8695 = vunpack.c.h.b16 %v8396
        %v8696 = vunpack.c.l.b16 %v8397
        %v8697 = vunpack.c.h.b16 %v8397
        %v8698 = vunpack.c.l.b16 %v8398
        %v8699 = vunpack.c.h.b16 %v8398
        %v8700 = vunpack.c.l.b16 %v8399
        %v8701 = vunpack.c.h.b16 %v8399
        %v8702 = vunpack.c.l.b16 %v8400
        %v8703 = vunpack.c.h.b16 %v8400
        %v8704 = vunpack.c.l.b16 %v8401
        %v8705 = vunpack.c.h.b16 %v8401
        %v8706 = vunpack.c.l.b16 %v8402
        %v8707 = vunpack.c.h.b16 %v8402
        %v8708 = vunpack.c.l.b16 %v8403
        %v8709 = vunpack.c.h.b16 %v8403
        %v8710 = vunpack.c.l.b16 %v8404
        %v8711 = vunpack.c.h.b16 %v8404
        %v8712 = vunpack.c.l.b16 %v8405
        %v8713 = vunpack.c.h.b16 %v8405
        %v8714 = vunpack.c.l.b16 %v8406
        %v8715 = vunpack.c.h.b16 %v8406
        %v8716 = vunpack.c.l.b16 %v8407
        %v8717 = vunpack.c.h.b16 %v8407
        %v8718 = vunpack.c.l.b16 %v8408
        %v8719 = vunpack.c.h.b16 %v8408
        %v8720 = vunpack.c.l.b16 %v8409
        %v8721 = vunpack.c.h.b16 %v8409
        %v8722 = vunpack.c.l.b16 %v8410
        %v8723 = vunpack.c.h.b16 %v8410
        %v8724 = vunpack.c.l.b16 %v8411
        %v8725 = vunpack.c.h.b16 %v8411
        %v8726 = vunpack.c.l.b16 %v8412
        %v8727 = vunpack.c.h.b16 %v8412
        %v8728 = vunpack.c.l.b16 %v8413
        %v8729 = vunpack.c.h.b16 %v8413
        %v8730 = vunpack.c.l.b16 %v8414
        %v8731 = vunpack.c.h.b16 %v8414
        %v8732 = vunpack.c.l.b16 %v8415
        %v8733 = vunpack.c.h.b16 %v8415
        %v8734 = vunpack.c.l.b16 %v8416
        %v8735 = vunpack.c.h.b16 %v8416
        %v8736 = vunpack.c.l.b16 %v8417
        %v8737 = vunpack.c.h.b16 %v8417
        %v8738 = vunpack.c.l.b16 %v8418
        %v8739 = vunpack.c.h.b16 %v8418
        %v8740 = vunpack.c.l.b16 %v8419
        %v8741 = vunpack.c.h.b16 %v8419
        %v8742 = vunpack.c.l.b16 %v8420
        %v8743 = vunpack.c.h.b16 %v8420
        %v8744 = vunpack.c.l.b16 %v8421
        %v8745 = vunpack.c.h.b16 %v8421
        %v8746 = vunpack.c.l.b16 %v8422
        %v8747 = vunpack.c.h.b16 %v8422
        %v8748 = vunpack.c.l.b16 %v8423
        %v8749 = vunpack.c.h.b16 %v8423
        %v8750 = vunpack.c.l.b16 %v8424
        %v8751 = vunpack.c.h.b16 %v8424
        %v8752 = vunpack.c.l.b16 %v8425
        %v8753 = vunpack.c.h.b16 %v8425
        %v8754 = vunpack.c.l.b16 %v8426
        %v8755 = vunpack.c.h.b16 %v8426
        %v8756 = vunpack.c.l.b16 %v8427
        %v8757 = vunpack.c.h.b16 %v8427
        %v8758 = vunpack.c.l.b16 %v8428
        %v8759 = vunpack.c.h.b16 %v8428
        %v8760 = vunpack.c.l.b16 %v8429
        %v8761 = vunpack.c.h.b16 %v8429
        %v8762 = vunpack.c.l.b16 %v8430
        %v8763 = vunpack.c.h.b16 %v8430
        %v8764 = vunpack.c.l.b16 %v8431
        %v8765 = vunpack.c.h.b16 %v8431
        %v8766 = vunpack.c.l.b16 %v8432
        %v8767 = vunpack.c.h.b16 %v8432
        %v8768 = vunpack.c.l.b16 %v8433
        %v8769 = vunpack.c.h.b16 %v8433
        %v8770 = vunpack.c.l.b16 %v8434
        %v8771 = vunpack.c.h.b16 %v8434
        %v8772 = vunpack.c.l.b16 %v8435
        %v8773 = vunpack.c.h.b16 %v8435
        %v8774 = vunpack.c.l.b16 %v8436
        %v8775 = vunpack.c.h.b16 %v8436
        %v8776 = vunpack.c.l.b16 %v8437
        %v8777 = vunpack.c.h.b16 %v8437
        %v8778 = vunpack.c.l.b16 %v8438
        %v8779 = vunpack.c.h.b16 %v8438
        %v8780 = vunpack.c.l.b16 %v8439
        %v8781 = vunpack.c.h.b16 %v8439
        %v8782 = vunpack.c.l.b16 %v8440
        %v8783 = vunpack.c.h.b16 %v8440
        %v8784 = vunpack.c.l.b16 %v8441
        %v8785 = vunpack.c.h.b16 %v8441
        %v8786 = vunpack.c.l.b16 %v8442
        %v8787 = vunpack.c.h.b16 %v8442
        %v8788 = vunpack.c.l.b16 %v8443
        %v8789 = vunpack.c.h.b16 %v8443
        %v8790 = vunpack.c.l.b16 %v8444
        %v8791 = vunpack.c.h.b16 %v8444
        %v8792 = vunpack.c.l.b16 %v8445
        %v8793 = vunpack.c.h.b16 %v8445
        %v8794 = vunpack.c.l.b16 %v8446
        %v8795 = vunpack.c.h.b16 %v8446
        %v8796 = vunpack.c.l.b16 %v8447
        %v8797 = vunpack.c.h.b16 %v8447
        %v8798 = vunpack.c.l.b16 %v8448
        %v8799 = vunpack.c.h.b16 %v8448
        %v8800 = vunpack.c.l.b16 %v8449
        %v8801 = vunpack.c.h.b16 %v8449
        %v8802 = vunpack.c.l.b16 %v8450
        %v8803 = vunpack.c.h.b16 %v8450
        %v8804 = vunpack.c.l.b16 %v8451
        %v8805 = vunpack.c.h.b16 %v8451
        %v8806 = vunpack.c.l.b16 %v8452
        %v8807 = vunpack.c.h.b16 %v8452
        %v8808 = vunpack.c.l.b16 %v8453
        %v8809 = vunpack.c.h.b16 %v8453
        %v8810 = vunpack.c.l.b16 %v8454
        %v8811 = vunpack.c.h.b16 %v8454
        %v8812 = vunpack.c.l.b16 %v8455
        %v8813 = vunpack.c.h.b16 %v8455
        %v8814 = vunpack.c.l.b16 %v8456
        %v8815 = vunpack.c.h.b16 %v8456
        %v8816 = vunpack.c.l.b16 %v8457
        %v8817 = vunpack.c.h.b16 %v8457
        %v8818 = vunpack.c.l.b16 %v8458
        %v8819 = vunpack.c.h.b16 %v8458
        %v8820 = vunpack.c.l.b16 %v8459
        %v8821 = vunpack.c.h.b16 %v8459
        %v8822 = vunpack.c.l.b16 %v8460
        %v8823 = vunpack.c.h.b16 %v8460
        %v8824 = vunpack.c.l.b16 %v8461
        %v8825 = vunpack.c.h.b16 %v8461
        %v8826 = vunpack.c.l.b16 %v8462
        %v8827 = vunpack.c.h.b16 %v8462
        %v8828 = vunpack.c.l.b16 %v8463
        %v8829 = vunpack.c.h.b16 %v8463
        %v8830 = vunpack.c.l.b16 %v8464
        %v8831 = vunpack.c.h.b16 %v8464
        %v8832 = vunpack.c.l.b16 %v8465
        %v8833 = vunpack.c.h.b16 %v8465
        %v8834 = vunpack.c.l.b16 %v8466
        %v8835 = vunpack.c.h.b16 %v8466
        %v8836 = vunpack.c.l.b16 %v8467
        %v8837 = vunpack.c.h.b16 %v8467
        %v8838 = vunpack.c.l.b16 %v8468
        %v8839 = vunpack.c.h.b16 %v8468
        %v8840 = vunpack.c.l.b16 %v8469
        %v8841 = vunpack.c.h.b16 %v8469
        %v8842 = vunpack.c.l.b16 %v8470
        %v8843 = vunpack.c.h.b16 %v8470
        %v8844 = vunpack.c.l.b16 %v8471
        %v8845 = vunpack.c.h.b16 %v8471
        %v8846 = vunpack.c.l.b16 %v8472
        %v8847 = vunpack.c.h.b16 %v8472
        %v8848 = vunpack.c.l.b16 %v8473
        %v8849 = vunpack.c.h.b16 %v8473
        %v8850 = vunpack.c.l.b16 %v8474
        %v8851 = vunpack.c.h.b16 %v8474
        %v8852 = vunpack.c.l.b16 %v8475
        %v8853 = vunpack.c.h.b16 %v8475
        %v8854 = vunpack.c.l.b16 %v8476
        %v8855 = vunpack.c.h.b16 %v8476
        %v8856 = vunpack.c.l.b16 %v8477
        %v8857 = vunpack.c.h.b16 %v8477
        %v8858 = vunpack.c.l.b16 %v8478
        %v8859 = vunpack.c.h.b16 %v8478
        %v8860 = vunpack.c.l.b16 %v8479
        %v8861 = vunpack.c.h.b16 %v8479
        %v8862 = vunpack.c.l.b16 %v8480
        %v8863 = vunpack.c.h.b16 %v8480
        %v8864 = vunpack.c.l.b16 %v8481
        %v8865 = vunpack.c.h.b16 %v8481
        %v8866 = vunpack.c.l.b16 %v8482
        %v8867 = vunpack.c.h.b16 %v8482
        %v8868 = vunpack.c.l.b16 %v8483
        %v8869 = vunpack.c.h.b16 %v8483
        %v8870 = vunpack.c.l.b16 %v8484
        %v8871 = vunpack.c.h.b16 %v8484
        %v8872 = vunpack.c.l.b16 %v8485
        %v8873 = vunpack.c.h.b16 %v8485
        %v8874 = vunpack.c.l.b16 %v8486
        %v8875 = vunpack.c.h.b16 %v8486
        %v8876 = vunpack.c.l.b16 %v8487
        %v8877 = vunpack.c.h.b16 %v8487
        %v8878 = vunpack.c.l.b16 %v8488
        %v8879 = vunpack.c.h.b16 %v8488
        %v8880 = vunpack.c.l.b16 %v8489
        %v8881 = vunpack.c.h.b16 %v8489
        %v8882 = vunpack.c.l.b16 %v8490
        %v8883 = vunpack.c.h.b16 %v8490
        %v8884 = vunpack.c.l.b16 %v8491
        %v8885 = vunpack.c.h.b16 %v8491
        %v8886 = vpack.c.b16 %v8634, %v8630
        %v8887 = vpack.c.b16 %v8635, %v8631
        %v8888 = vpack.c.b16 %v8636, %v8632
        %v8889 = vpack.c.b16 %v8637, %v8633
        %v8890 = vpack.c.b16 %v8642, %v8638
        %v8891 = vpack.c.b16 %v8643, %v8639
        %v8892 = vpack.c.b16 %v8644, %v8640
        %v8893 = vpack.c.b16 %v8645, %v8641
        %v8894 = vpack.c.b16 %v8650, %v8646
        %v8895 = vpack.c.b16 %v8651, %v8647
        %v8896 = vpack.c.b16 %v8652, %v8648
        %v8897 = vpack.c.b16 %v8653, %v8649
        %v8898 = vpack.c.b16 %v8658, %v8654
        %v8899 = vpack.c.b16 %v8659, %v8655
        %v8900 = vpack.c.b16 %v8660, %v8656
        %v8901 = vpack.c.b16 %v8661, %v8657
        %v8902 = vpack.c.b16 %v8666, %v8662
        %v8903 = vpack.c.b16 %v8667, %v8663
        %v8904 = vpack.c.b16 %v8668, %v8664
        %v8905 = vpack.c.b16 %v8669, %v8665
        %v8906 = vpack.c.b16 %v8674, %v8670
        %v8907 = vpack.c.b16 %v8675, %v8671
        %v8908 = vpack.c.b16 %v8676, %v8672
        %v8909 = vpack.c.b16 %v8677, %v8673
        %v8910 = vpack.c.b16 %v8682, %v8678
        %v8911 = vpack.c.b16 %v8683, %v8679
        %v8912 = vpack.c.b16 %v8684, %v8680
        %v8913 = vpack.c.b16 %v8685, %v8681
        %v8914 = vpack.c.b16 %v8690, %v8686
        %v8915 = vpack.c.b16 %v8691, %v8687
        %v8916 = vpack.c.b16 %v8692, %v8688
        %v8917 = vpack.c.b16 %v8693, %v8689
        %v8918 = vpack.c.b16 %v8698, %v8694
        %v8919 = vpack.c.b16 %v8699, %v8695
        %v8920 = vpack.c.b16 %v8700, %v8696
        %v8921 = vpack.c.b16 %v8701, %v8697
        %v8922 = vpack.c.b16 %v8706, %v8702
        %v8923 = vpack.c.b16 %v8707, %v8703
        %v8924 = vpack.c.b16 %v8708, %v8704
        %v8925 = vpack.c.b16 %v8709, %v8705
        %v8926 = vpack.c.b16 %v8714, %v8710
        %v8927 = vpack.c.b16 %v8715, %v8711
        %v8928 = vpack.c.b16 %v8716, %v8712
        %v8929 = vpack.c.b16 %v8717, %v8713
        %v8930 = vpack.c.b16 %v8722, %v8718
        %v8931 = vpack.c.b16 %v8723, %v8719
        %v8932 = vpack.c.b16 %v8724, %v8720
        %v8933 = vpack.c.b16 %v8725, %v8721
        %v8934 = vpack.c.b16 %v8730, %v8726
        %v8935 = vpack.c.b16 %v8731, %v8727
        %v8936 = vpack.c.b16 %v8732, %v8728
        %v8937 = vpack.c.b16 %v8733, %v8729
        %v8938 = vpack.c.b16 %v8738, %v8734
        %v8939 = vpack.c.b16 %v8739, %v8735
        %v8940 = vpack.c.b16 %v8740, %v8736
        %v8941 = vpack.c.b16 %v8741, %v8737
        %v8942 = vpack.c.b16 %v8746, %v8742
        %v8943 = vpack.c.b16 %v8747, %v8743
        %v8944 = vpack.c.b16 %v8748, %v8744
        %v8945 = vpack.c.b16 %v8749, %v8745
        %v8946 = vpack.c.b16 %v8754, %v8750
        %v8947 = vpack.c.b16 %v8755, %v8751
        %v8948 = vpack.c.b16 %v8756, %v8752
        %v8949 = vpack.c.b16 %v8757, %v8753
        %v8950 = vpack.c.b16 %v8762, %v8758
        %v8951 = vpack.c.b16 %v8763, %v8759
        %v8952 = vpack.c.b16 %v8764, %v8760
        %v8953 = vpack.c.b16 %v8765, %v8761
        %v8954 = vpack.c.b16 %v8770, %v8766
        %v8955 = vpack.c.b16 %v8771, %v8767
        %v8956 = vpack.c.b16 %v8772, %v8768
        %v8957 = vpack.c.b16 %v8773, %v8769
        %v8958 = vpack.c.b16 %v8778, %v8774
        %v8959 = vpack.c.b16 %v8779, %v8775
        %v8960 = vpack.c.b16 %v8780, %v8776
        %v8961 = vpack.c.b16 %v8781, %v8777
        %v8962 = vpack.c.b16 %v8786, %v8782
        %v8963 = vpack.c.b16 %v8787, %v8783
        %v8964 = vpack.c.b16 %v8788, %v8784
        %v8965 = vpack.c.b16 %v8789, %v8785
        %v8966 = vpack.c.b16 %v8794, %v8790
        %v8967 = vpack.c.b16 %v8795, %v8791
        %v8968 = vpack.c.b16 %v8796, %v8792
        %v8969 = vpack.c.b16 %v8797, %v8793
        %v8970 = vpack.c.b16 %v8802, %v8798
        %v8971 = vpack.c.b16 %v8803, %v8799
        %v8972 = vpack.c.b16 %v8804, %v8800
        %v8973 = vpack.c.b16 %v8805, %v8801
        %v8974 = vpack.c.b16 %v8810, %v8806
        %v8975 = vpack.c.b16 %v8811, %v8807
        %v8976 = vpack.c.b16 %v8812, %v8808
        %v8977 = vpack.c.b16 %v8813, %v8809
        %v8978 = vpack.c.b16 %v8818, %v8814
        %v8979 = vpack.c.b16 %v8819, %v8815
        %v8980 = vpack.c.b16 %v8820, %v8816
        %v8981 = vpack.c.b16 %v8821, %v8817
        %v8982 = vpack.c.b16 %v8826, %v8822
        %v8983 = vpack.c.b16 %v8827, %v8823
        %v8984 = vpack.c.b16 %v8828, %v8824
        %v8985 = vpack.c.b16 %v8829, %v8825
        %v8986 = vpack.c.b16 %v8834, %v8830
        %v8987 = vpack.c.b16 %v8835, %v8831
        %v8988 = vpack.c.b16 %v8836, %v8832
        %v8989 = vpack.c.b16 %v8837, %v8833
        %v8990 = vpack.c.b16 %v8842, %v8838
        %v8991 = vpack.c.b16 %v8843, %v8839
        %v8992 = vpack.c.b16 %v8844, %v8840
        %v8993 = vpack.c.b16 %v8845, %v8841
        %v8994 = vpack.c.b16 %v8850, %v8846
        %v8995 = vpack.c.b16 %v8851, %v8847
        %v8996 = vpack.c.b16 %v8852, %v8848
        %v8997 = vpack.c.b16 %v8853, %v8849
        %v8998 = vpack.c.b16 %v8858, %v8854
        %v8999 = vpack.c.b16 %v8859, %v8855
        %v9000 = vpack.c.b16 %v8860, %v8856
        %v9001 = vpack.c.b16 %v8861, %v8857
        %v9002 = vpack.c.b16 %v8866, %v8862
        %v9003 = vpack.c.b16 %v8867, %v8863
        %v9004 = vpack.c.b16 %v8868, %v8864
        %v9005 = vpack.c.b16 %v8869, %v8865
        %v9006 = vpack.c.b16 %v8874, %v8870
        %v9007 = vpack.c.b16 %v8875, %v8871
        %v9008 = vpack.c.b16 %v8876, %v8872
        %v9009 = vpack.c.b16 %v8877, %v8873
        %v9010 = vpack.c.b16 %v8882, %v8878
        %v9011 = vpack.c.b16 %v8883, %v8879
        %v9012 = vpack.c.b16 %v8884, %v8880
        %v9013 = vpack.c.b16 %v8885, %v8881
        %9142 = vmatpush.bf16.msra.mxu0 %v8914
        %9143 = vmatpush.bf16.msra.mxu0 %v8910
        %9144 = vmatpush.bf16.msra.mxu0 %v8906
        %9145 = vmatpush.bf16.msra.mxu0 %v8902
        %9146 = vmatpush.bf16.msra.mxu0 %v8898
        %9147 = vmatpush.bf16.msra.mxu0 %v8894
        %9148 = vmatpush.bf16.msra.mxu0 %v8890
        %9149 = vmatpush.bf16.msra.mxu0 %v8886
        %9150 = vmatmul.bf16.gmra.mxu0 %v8332
        %v9151 = vpop.f32.mrf.mxu0
        %v9152 = vadd.f32 %v8494, %v9151
        %v9153 = vpop.f32.mrf.mxu0
        %v9154 = vadd.f32 %v8494, %v9153
        %9155 = vmatmul.bf16.gmra.mxu0 %v8336
        %v9156 = vpop.f32.mrf.mxu0
        %v9157 = vadd.f32 %v8494, %v9156
        %v9158 = vpop.f32.mrf.mxu0
        %v9159 = vadd.f32 %v8494, %v9158
        %9160 = vmatmul.bf16.gmra.mxu0 %v8340
        %v9161 = vpop.f32.mrf.mxu0
        %v9162 = vadd.f32 %v8494, %v9161
        %v9163 = vpop.f32.mrf.mxu0
        %v9164 = vadd.f32 %v8494, %v9163
        %9165 = vmatmul.bf16.gmra.mxu0 %v8344
        %v9166 = vpop.f32.mrf.mxu0
        %v9167 = vadd.f32 %v8494, %v9166
        %v9168 = vpop.f32.mrf.mxu0
        %v9169 = vadd.f32 %v8494, %v9168
        %9170 = vmatmul.bf16.gmra.mxu0 %v8348
        %v9171 = vpop.f32.mrf.mxu0
        %v9172 = vadd.f32 %v8494, %v9171
        %v9173 = vpop.f32.mrf.mxu0
        %v9174 = vadd.f32 %v8494, %v9173
        %9175 = vmatmul.bf16.gmra.mxu0 %v8352
        %v9176 = vpop.f32.mrf.mxu0
        %v9177 = vadd.f32 %v8494, %v9176
        %v9178 = vpop.f32.mrf.mxu0
        %v9179 = vadd.f32 %v8494, %v9178
        %9180 = vmatmul.bf16.gmra.mxu0 %v8356
        %v9181 = vpop.f32.mrf.mxu0
        %v9182 = vadd.f32 %v8494, %v9181
        %v9183 = vpop.f32.mrf.mxu0
        %v9184 = vadd.f32 %v8494, %v9183
        %9185 = vmatmul.bf16.gmra.mxu0 %v8360
        %v9186 = vpop.f32.mrf.mxu0
        %v9187 = vadd.f32 %v8494, %v9186
        %v9188 = vpop.f32.mrf.mxu0
        %v9189 = vadd.f32 %v8494, %v9188
        %9190 = vdwg.mxu0
        %9191 = vmatpush.bf16.msra.mxu0 %v8946
        %9192 = vmatpush.bf16.msra.mxu0 %v8942
        %9193 = vmatpush.bf16.msra.mxu0 %v8938
        %9194 = vmatpush.bf16.msra.mxu0 %v8934
        %9195 = vmatpush.bf16.msra.mxu0 %v8930
        %9196 = vmatpush.bf16.msra.mxu0 %v8926
        %9197 = vmatpush.bf16.msra.mxu0 %v8922
        %9198 = vmatpush.bf16.msra.mxu0 %v8918
        %9199 = vmatmul.bf16.gmra.mxu0 %v8333
        %v9200 = vpop.f32.mrf.mxu0
        %v9201 = vadd.f32 %v9152, %v9200
        %v9202 = vpop.f32.mrf.mxu0
        %v9203 = vadd.f32 %v9154, %v9202
        %9204 = vmatmul.bf16.gmra.mxu0 %v8337
        %v9205 = vpop.f32.mrf.mxu0
        %v9206 = vadd.f32 %v9157, %v9205
        %v9207 = vpop.f32.mrf.mxu0
        %v9208 = vadd.f32 %v9159, %v9207
        %9209 = vmatmul.bf16.gmra.mxu0 %v8341
        %v9210 = vpop.f32.mrf.mxu0
        %v9211 = vadd.f32 %v9162, %v9210
        %v9212 = vpop.f32.mrf.mxu0
        %v9213 = vadd.f32 %v9164, %v9212
        %9214 = vmatmul.bf16.gmra.mxu0 %v8345
        %v9215 = vpop.f32.mrf.mxu0
        %v9216 = vadd.f32 %v9167, %v9215
        %v9217 = vpop.f32.mrf.mxu0
        %v9218 = vadd.f32 %v9169, %v9217
        %9219 = vmatmul.bf16.gmra.mxu0 %v8349
        %v9220 = vpop.f32.mrf.mxu0
        %v9221 = vadd.f32 %v9172, %v9220
        %v9222 = vpop.f32.mrf.mxu0
        %v9223 = vadd.f32 %v9174, %v9222
        %9224 = vmatmul.bf16.gmra.mxu0 %v8353
        %v9225 = vpop.f32.mrf.mxu0
        %v9226 = vadd.f32 %v9177, %v9225
        %v9227 = vpop.f32.mrf.mxu0
        %v9228 = vadd.f32 %v9179, %v9227
        %9229 = vmatmul.bf16.gmra.mxu0 %v8357
        %v9230 = vpop.f32.mrf.mxu0
        %v9231 = vadd.f32 %v9182, %v9230
        %v9232 = vpop.f32.mrf.mxu0
        %v9233 = vadd.f32 %v9184, %v9232
        %9234 = vmatmul.bf16.gmra.mxu0 %v8361
        %v9235 = vpop.f32.mrf.mxu0
        %v9236 = vadd.f32 %v9187, %v9235
        %v9237 = vpop.f32.mrf.mxu0
        %v9238 = vadd.f32 %v9189, %v9237
        %9239 = vdwg.mxu0
        %9240 = vmatpush.bf16.msra.mxu0 %v8978
        %9241 = vmatpush.bf16.msra.mxu0 %v8974
        %9242 = vmatpush.bf16.msra.mxu0 %v8970
        %9243 = vmatpush.bf16.msra.mxu0 %v8966
        %9244 = vmatpush.bf16.msra.mxu0 %v8962
        %9245 = vmatpush.bf16.msra.mxu0 %v8958
        %9246 = vmatpush.bf16.msra.mxu0 %v8954
        %9247 = vmatpush.bf16.msra.mxu0 %v8950
        %9248 = vmatmul.bf16.gmra.mxu0 %v8334
        %v9249 = vpop.f32.mrf.mxu0
        %v9250 = vadd.f32 %v9201, %v9249
        %v9251 = vpop.f32.mrf.mxu0
        %v9252 = vadd.f32 %v9203, %v9251
        %9253 = vmatmul.bf16.gmra.mxu0 %v8338
        %v9254 = vpop.f32.mrf.mxu0
        %v9255 = vadd.f32 %v9206, %v9254
        %v9256 = vpop.f32.mrf.mxu0
        %v9257 = vadd.f32 %v9208, %v9256
        %9258 = vmatmul.bf16.gmra.mxu0 %v8342
        %v9259 = vpop.f32.mrf.mxu0
        %v9260 = vadd.f32 %v9211, %v9259
        %v9261 = vpop.f32.mrf.mxu0
        %v9262 = vadd.f32 %v9213, %v9261
        %9263 = vmatmul.bf16.gmra.mxu0 %v8346
        %v9264 = vpop.f32.mrf.mxu0
        %v9265 = vadd.f32 %v9216, %v9264
        %v9266 = vpop.f32.mrf.mxu0
        %v9267 = vadd.f32 %v9218, %v9266
        %9268 = vmatmul.bf16.gmra.mxu0 %v8350
        %v9269 = vpop.f32.mrf.mxu0
        %v9270 = vadd.f32 %v9221, %v9269
        %v9271 = vpop.f32.mrf.mxu0
        %v9272 = vadd.f32 %v9223, %v9271
        %9273 = vmatmul.bf16.gmra.mxu0 %v8354
        %v9274 = vpop.f32.mrf.mxu0
        %v9275 = vadd.f32 %v9226, %v9274
        %v9276 = vpop.f32.mrf.mxu0
        %v9277 = vadd.f32 %v9228, %v9276
        %9278 = vmatmul.bf16.gmra.mxu0 %v8358
        %v9279 = vpop.f32.mrf.mxu0
        %v9280 = vadd.f32 %v9231, %v9279
        %v9281 = vpop.f32.mrf.mxu0
        %v9282 = vadd.f32 %v9233, %v9281
        %9283 = vmatmul.bf16.gmra.mxu0 %v8362
        %v9284 = vpop.f32.mrf.mxu0
        %v9285 = vadd.f32 %v9236, %v9284
        %v9286 = vpop.f32.mrf.mxu0
        %v9287 = vadd.f32 %v9238, %v9286
        %9288 = vdwg.mxu0
        %9289 = vmatpush.bf16.msra.mxu0 %v9010
        %9290 = vmatpush.bf16.msra.mxu0 %v9006
        %9291 = vmatpush.bf16.msra.mxu0 %v9002
        %9292 = vmatpush.bf16.msra.mxu0 %v8998
        %9293 = vmatpush.bf16.msra.mxu0 %v8994
        %9294 = vmatpush.bf16.msra.mxu0 %v8990
        %9295 = vmatpush.bf16.msra.mxu0 %v8986
        %9296 = vmatpush.bf16.msra.mxu0 %v8982
        %9297 = vmatmul.bf16.gmra.mxu0 %v8335
        %v9298 = vpop.f32.mrf.mxu0
        %v9299 = vadd.f32 %v9250, %v9298
        %v9300 = vpop.f32.mrf.mxu0
        %v9301 = vadd.f32 %v9252, %v9300
        %9302 = vmatmul.bf16.gmra.mxu0 %v8339
        %v9303 = vpop.f32.mrf.mxu0
        %v9304 = vadd.f32 %v9255, %v9303
        %v9305 = vpop.f32.mrf.mxu0
        %v9306 = vadd.f32 %v9257, %v9305
        %9307 = vmatmul.bf16.gmra.mxu0 %v8343
        %v9308 = vpop.f32.mrf.mxu0
        %v9309 = vadd.f32 %v9260, %v9308
        %v9310 = vpop.f32.mrf.mxu0
        %v9311 = vadd.f32 %v9262, %v9310
        %9312 = vmatmul.bf16.gmra.mxu0 %v8347
        %v9313 = vpop.f32.mrf.mxu0
        %v9314 = vadd.f32 %v9265, %v9313
        %v9315 = vpop.f32.mrf.mxu0
        %v9316 = vadd.f32 %v9267, %v9315
        %9317 = vmatmul.bf16.gmra.mxu0 %v8351
        %v9318 = vpop.f32.mrf.mxu0
        %v9319 = vadd.f32 %v9270, %v9318
        %v9320 = vpop.f32.mrf.mxu0
        %v9321 = vadd.f32 %v9272, %v9320
        %9322 = vmatmul.bf16.gmra.mxu0 %v8355
        %v9323 = vpop.f32.mrf.mxu0
        %v9324 = vadd.f32 %v9275, %v9323
        %v9325 = vpop.f32.mrf.mxu0
        %v9326 = vadd.f32 %v9277, %v9325
        %9327 = vmatmul.bf16.gmra.mxu0 %v8359
        %v9328 = vpop.f32.mrf.mxu0
        %v9329 = vadd.f32 %v9280, %v9328
        %v9330 = vpop.f32.mrf.mxu0
        %v9331 = vadd.f32 %v9282, %v9330
        %9332 = vmatmul.bf16.gmra.mxu0 %v8363
        %v9333 = vpop.f32.mrf.mxu0
        %v9334 = vadd.f32 %v9285, %v9333
        %v9335 = vpop.f32.mrf.mxu0
        %v9336 = vadd.f32 %v9287, %v9335
        %9337 = vdwg.mxu0
        %9338 = vmatpush.bf16.msra.mxu0 %v8915
        %9339 = vmatpush.bf16.msra.mxu0 %v8911
        %9340 = vmatpush.bf16.msra.mxu0 %v8907
        %9341 = vmatpush.bf16.msra.mxu0 %v8903
        %9342 = vmatpush.bf16.msra.mxu0 %v8899
        %9343 = vmatpush.bf16.msra.mxu0 %v8895
        %9344 = vmatpush.bf16.msra.mxu0 %v8891
        %9345 = vmatpush.bf16.msra.mxu0 %v8887
        %9346 = vmatmul.bf16.gmra.mxu0 %v8332
        %v9347 = vpop.f32.mrf.mxu0
        %v9348 = vadd.f32 %v8495, %v9347
        %v9349 = vpop.f32.mrf.mxu0
        %v9350 = vadd.f32 %v8495, %v9349
        %9351 = vmatmul.bf16.gmra.mxu0 %v8336
        %v9352 = vpop.f32.mrf.mxu0
        %v9353 = vadd.f32 %v8495, %v9352
        %v9354 = vpop.f32.mrf.mxu0
        %v9355 = vadd.f32 %v8495, %v9354
        %9356 = vmatmul.bf16.gmra.mxu0 %v8340
        %v9357 = vpop.f32.mrf.mxu0
        %v9358 = vadd.f32 %v8495, %v9357
        %v9359 = vpop.f32.mrf.mxu0
        %v9360 = vadd.f32 %v8495, %v9359
        %9361 = vmatmul.bf16.gmra.mxu0 %v8344
        %v9362 = vpop.f32.mrf.mxu0
        %v9363 = vadd.f32 %v8495, %v9362
        %v9364 = vpop.f32.mrf.mxu0
        %v9365 = vadd.f32 %v8495, %v9364
        %9366 = vmatmul.bf16.gmra.mxu0 %v8348
        %v9367 = vpop.f32.mrf.mxu0
        %v9368 = vadd.f32 %v8495, %v9367
        %v9369 = vpop.f32.mrf.mxu0
        %v9370 = vadd.f32 %v8495, %v9369
        %9371 = vmatmul.bf16.gmra.mxu0 %v8352
        %v9372 = vpop.f32.mrf.mxu0
        %v9373 = vadd.f32 %v8495, %v9372
        %v9374 = vpop.f32.mrf.mxu0
        %v9375 = vadd.f32 %v8495, %v9374
        %9376 = vmatmul.bf16.gmra.mxu0 %v8356
        %v9377 = vpop.f32.mrf.mxu0
        %v9378 = vadd.f32 %v8495, %v9377
        %v9379 = vpop.f32.mrf.mxu0
        %v9380 = vadd.f32 %v8495, %v9379
        %9381 = vmatmul.bf16.gmra.mxu0 %v8360
        %v9382 = vpop.f32.mrf.mxu0
        %v9383 = vadd.f32 %v8495, %v9382
        %v9384 = vpop.f32.mrf.mxu0
        %v9385 = vadd.f32 %v8495, %v9384
        %9386 = vdwg.mxu0
        %9387 = vmatpush.bf16.msra.mxu0 %v8947
        %9388 = vmatpush.bf16.msra.mxu0 %v8943
        %9389 = vmatpush.bf16.msra.mxu0 %v8939
        %9390 = vmatpush.bf16.msra.mxu0 %v8935
        %9391 = vmatpush.bf16.msra.mxu0 %v8931
        %9392 = vmatpush.bf16.msra.mxu0 %v8927
        %9393 = vmatpush.bf16.msra.mxu0 %v8923
        %9394 = vmatpush.bf16.msra.mxu0 %v8919
        %9395 = vmatmul.bf16.gmra.mxu0 %v8333
        %v9396 = vpop.f32.mrf.mxu0
        %v9397 = vadd.f32 %v9348, %v9396
        %v9398 = vpop.f32.mrf.mxu0
        %v9399 = vadd.f32 %v9350, %v9398
        %9400 = vmatmul.bf16.gmra.mxu0 %v8337
        %v9401 = vpop.f32.mrf.mxu0
        %v9402 = vadd.f32 %v9353, %v9401
        %v9403 = vpop.f32.mrf.mxu0
        %v9404 = vadd.f32 %v9355, %v9403
        %9405 = vmatmul.bf16.gmra.mxu0 %v8341
        %v9406 = vpop.f32.mrf.mxu0
        %v9407 = vadd.f32 %v9358, %v9406
        %v9408 = vpop.f32.mrf.mxu0
        %v9409 = vadd.f32 %v9360, %v9408
        %9410 = vmatmul.bf16.gmra.mxu0 %v8345
        %v9411 = vpop.f32.mrf.mxu0
        %v9412 = vadd.f32 %v9363, %v9411
        %v9413 = vpop.f32.mrf.mxu0
        %v9414 = vadd.f32 %v9365, %v9413
        %9415 = vmatmul.bf16.gmra.mxu0 %v8349
        %v9416 = vpop.f32.mrf.mxu0
        %v9417 = vadd.f32 %v9368, %v9416
        %v9418 = vpop.f32.mrf.mxu0
        %v9419 = vadd.f32 %v9370, %v9418
        %9420 = vmatmul.bf16.gmra.mxu0 %v8353
        %v9421 = vpop.f32.mrf.mxu0
        %v9422 = vadd.f32 %v9373, %v9421
        %v9423 = vpop.f32.mrf.mxu0
        %v9424 = vadd.f32 %v9375, %v9423
        %9425 = vmatmul.bf16.gmra.mxu0 %v8357
        %v9426 = vpop.f32.mrf.mxu0
        %v9427 = vadd.f32 %v9378, %v9426
        %v9428 = vpop.f32.mrf.mxu0
        %v9429 = vadd.f32 %v9380, %v9428
        %9430 = vmatmul.bf16.gmra.mxu0 %v8361
        %v9431 = vpop.f32.mrf.mxu0
        %v9432 = vadd.f32 %v9383, %v9431
        %v9433 = vpop.f32.mrf.mxu0
        %v9434 = vadd.f32 %v9385, %v9433
        %9435 = vdwg.mxu0
        %9436 = vmatpush.bf16.msra.mxu0 %v8979
        %9437 = vmatpush.bf16.msra.mxu0 %v8975
        %9438 = vmatpush.bf16.msra.mxu0 %v8971
        %9439 = vmatpush.bf16.msra.mxu0 %v8967
        %9440 = vmatpush.bf16.msra.mxu0 %v8963
        %9441 = vmatpush.bf16.msra.mxu0 %v8959
        %9442 = vmatpush.bf16.msra.mxu0 %v8955
        %9443 = vmatpush.bf16.msra.mxu0 %v8951
        %9444 = vmatmul.bf16.gmra.mxu0 %v8334
        %v9445 = vpop.f32.mrf.mxu0
        %v9446 = vadd.f32 %v9397, %v9445
        %v9447 = vpop.f32.mrf.mxu0
        %v9448 = vadd.f32 %v9399, %v9447
        %9449 = vmatmul.bf16.gmra.mxu0 %v8338
        %v9450 = vpop.f32.mrf.mxu0
        %v9451 = vadd.f32 %v9402, %v9450
        %v9452 = vpop.f32.mrf.mxu0
        %v9453 = vadd.f32 %v9404, %v9452
        %9454 = vmatmul.bf16.gmra.mxu0 %v8342
        %v9455 = vpop.f32.mrf.mxu0
        %v9456 = vadd.f32 %v9407, %v9455
        %v9457 = vpop.f32.mrf.mxu0
        %v9458 = vadd.f32 %v9409, %v9457
        %9459 = vmatmul.bf16.gmra.mxu0 %v8346
        %v9460 = vpop.f32.mrf.mxu0
        %v9461 = vadd.f32 %v9412, %v9460
        %v9462 = vpop.f32.mrf.mxu0
        %v9463 = vadd.f32 %v9414, %v9462
        %9464 = vmatmul.bf16.gmra.mxu0 %v8350
        %v9465 = vpop.f32.mrf.mxu0
        %v9466 = vadd.f32 %v9417, %v9465
        %v9467 = vpop.f32.mrf.mxu0
        %v9468 = vadd.f32 %v9419, %v9467
        %9469 = vmatmul.bf16.gmra.mxu0 %v8354
        %v9470 = vpop.f32.mrf.mxu0
        %v9471 = vadd.f32 %v9422, %v9470
        %v9472 = vpop.f32.mrf.mxu0
        %v9473 = vadd.f32 %v9424, %v9472
        %9474 = vmatmul.bf16.gmra.mxu0 %v8358
        %v9475 = vpop.f32.mrf.mxu0
        %v9476 = vadd.f32 %v9427, %v9475
        %v9477 = vpop.f32.mrf.mxu0
        %v9478 = vadd.f32 %v9429, %v9477
        %9479 = vmatmul.bf16.gmra.mxu0 %v8362
        %v9480 = vpop.f32.mrf.mxu0
        %v9481 = vadd.f32 %v9432, %v9480
        %v9482 = vpop.f32.mrf.mxu0
        %v9483 = vadd.f32 %v9434, %v9482
        %9484 = vdwg.mxu0
        %9485 = vmatpush.bf16.msra.mxu0 %v9011
        %9486 = vmatpush.bf16.msra.mxu0 %v9007
        %9487 = vmatpush.bf16.msra.mxu0 %v9003
        %9488 = vmatpush.bf16.msra.mxu0 %v8999
        %9489 = vmatpush.bf16.msra.mxu0 %v8995
        %9490 = vmatpush.bf16.msra.mxu0 %v8991
        %9491 = vmatpush.bf16.msra.mxu0 %v8987
        %9492 = vmatpush.bf16.msra.mxu0 %v8983
        %9493 = vmatmul.bf16.gmra.mxu0 %v8335
        %v9494 = vpop.f32.mrf.mxu0
        %v9495 = vadd.f32 %v9446, %v9494
        %v9496 = vpop.f32.mrf.mxu0
        %v9497 = vadd.f32 %v9448, %v9496
        %9498 = vmatmul.bf16.gmra.mxu0 %v8339
        %v9499 = vpop.f32.mrf.mxu0
        %v9500 = vadd.f32 %v9451, %v9499
        %v9501 = vpop.f32.mrf.mxu0
        %v9502 = vadd.f32 %v9453, %v9501
        %9503 = vmatmul.bf16.gmra.mxu0 %v8343
        %v9504 = vpop.f32.mrf.mxu0
        %v9505 = vadd.f32 %v9456, %v9504
        %v9506 = vpop.f32.mrf.mxu0
        %v9507 = vadd.f32 %v9458, %v9506
        %9508 = vmatmul.bf16.gmra.mxu0 %v8347
        %v9509 = vpop.f32.mrf.mxu0
        %v9510 = vadd.f32 %v9461, %v9509
        %v9511 = vpop.f32.mrf.mxu0
        %v9512 = vadd.f32 %v9463, %v9511
        %9513 = vmatmul.bf16.gmra.mxu0 %v8351
        %v9514 = vpop.f32.mrf.mxu0
        %v9515 = vadd.f32 %v9466, %v9514
        %v9516 = vpop.f32.mrf.mxu0
        %v9517 = vadd.f32 %v9468, %v9516
        %9518 = vmatmul.bf16.gmra.mxu0 %v8355
        %v9519 = vpop.f32.mrf.mxu0
        %v9520 = vadd.f32 %v9471, %v9519
        %v9521 = vpop.f32.mrf.mxu0
        %v9522 = vadd.f32 %v9473, %v9521
        %9523 = vmatmul.bf16.gmra.mxu0 %v8359
        %v9524 = vpop.f32.mrf.mxu0
        %v9525 = vadd.f32 %v9476, %v9524
        %v9526 = vpop.f32.mrf.mxu0
        %v9527 = vadd.f32 %v9478, %v9526
        %9528 = vmatmul.bf16.gmra.mxu0 %v8363
        %v9529 = vpop.f32.mrf.mxu0
        %v9530 = vadd.f32 %v9481, %v9529
        %v9531 = vpop.f32.mrf.mxu0
        %v9532 = vadd.f32 %v9483, %v9531
        %9533 = vdwg.mxu0
        %9534 = vmatpush.bf16.msra.mxu0 %v8916
        %9535 = vmatpush.bf16.msra.mxu0 %v8912
        %9536 = vmatpush.bf16.msra.mxu0 %v8908
        %9537 = vmatpush.bf16.msra.mxu0 %v8904
        %9538 = vmatpush.bf16.msra.mxu0 %v8900
        %9539 = vmatpush.bf16.msra.mxu0 %v8896
        %9540 = vmatpush.bf16.msra.mxu0 %v8892
        %9541 = vmatpush.bf16.msra.mxu0 %v8888
        %9542 = vmatmul.bf16.gmra.mxu0 %v8332
        %v9543 = vpop.f32.mrf.mxu0
        %v9544 = vadd.f32 %v8496, %v9543
        %v9545 = vpop.f32.mrf.mxu0
        %v9546 = vadd.f32 %v8496, %v9545
        %9547 = vmatmul.bf16.gmra.mxu0 %v8336
        %v9548 = vpop.f32.mrf.mxu0
        %v9549 = vadd.f32 %v8496, %v9548
        %v9550 = vpop.f32.mrf.mxu0
        %v9551 = vadd.f32 %v8496, %v9550
        %9552 = vmatmul.bf16.gmra.mxu0 %v8340
        %v9553 = vpop.f32.mrf.mxu0
        %v9554 = vadd.f32 %v8496, %v9553
        %v9555 = vpop.f32.mrf.mxu0
        %v9556 = vadd.f32 %v8496, %v9555
        %9557 = vmatmul.bf16.gmra.mxu0 %v8344
        %v9558 = vpop.f32.mrf.mxu0
        %v9559 = vadd.f32 %v8496, %v9558
        %v9560 = vpop.f32.mrf.mxu0
        %v9561 = vadd.f32 %v8496, %v9560
        %9562 = vmatmul.bf16.gmra.mxu0 %v8348
        %v9563 = vpop.f32.mrf.mxu0
        %v9564 = vadd.f32 %v8496, %v9563
        %v9565 = vpop.f32.mrf.mxu0
        %v9566 = vadd.f32 %v8496, %v9565
        %9567 = vmatmul.bf16.gmra.mxu0 %v8352
        %v9568 = vpop.f32.mrf.mxu0
        %v9569 = vadd.f32 %v8496, %v9568
        %v9570 = vpop.f32.mrf.mxu0
        %v9571 = vadd.f32 %v8496, %v9570
        %9572 = vmatmul.bf16.gmra.mxu0 %v8356
        %v9573 = vpop.f32.mrf.mxu0
        %v9574 = vadd.f32 %v8496, %v9573
        %v9575 = vpop.f32.mrf.mxu0
        %v9576 = vadd.f32 %v8496, %v9575
        %9577 = vmatmul.bf16.gmra.mxu0 %v8360
        %v9578 = vpop.f32.mrf.mxu0
        %v9579 = vadd.f32 %v8496, %v9578
        %v9580 = vpop.f32.mrf.mxu0
        %v9581 = vadd.f32 %v8496, %v9580
        %9582 = vdwg.mxu0
        %9583 = vmatpush.bf16.msra.mxu0 %v8948
        %9584 = vmatpush.bf16.msra.mxu0 %v8944
        %9585 = vmatpush.bf16.msra.mxu0 %v8940
        %9586 = vmatpush.bf16.msra.mxu0 %v8936
        %9587 = vmatpush.bf16.msra.mxu0 %v8932
        %9588 = vmatpush.bf16.msra.mxu0 %v8928
        %9589 = vmatpush.bf16.msra.mxu0 %v8924
        %9590 = vmatpush.bf16.msra.mxu0 %v8920
        %9591 = vmatmul.bf16.gmra.mxu0 %v8333
        %v9592 = vpop.f32.mrf.mxu0
        %v9593 = vadd.f32 %v9544, %v9592
        %v9594 = vpop.f32.mrf.mxu0
        %v9595 = vadd.f32 %v9546, %v9594
        %9596 = vmatmul.bf16.gmra.mxu0 %v8337
        %v9597 = vpop.f32.mrf.mxu0
        %v9598 = vadd.f32 %v9549, %v9597
        %v9599 = vpop.f32.mrf.mxu0
        %v9600 = vadd.f32 %v9551, %v9599
        %9601 = vmatmul.bf16.gmra.mxu0 %v8341
        %v9602 = vpop.f32.mrf.mxu0
        %v9603 = vadd.f32 %v9554, %v9602
        %v9604 = vpop.f32.mrf.mxu0
        %v9605 = vadd.f32 %v9556, %v9604
        %9606 = vmatmul.bf16.gmra.mxu0 %v8345
        %v9607 = vpop.f32.mrf.mxu0
        %v9608 = vadd.f32 %v9559, %v9607
        %v9609 = vpop.f32.mrf.mxu0
        %v9610 = vadd.f32 %v9561, %v9609
        %9611 = vmatmul.bf16.gmra.mxu0 %v8349
        %v9612 = vpop.f32.mrf.mxu0
        %v9613 = vadd.f32 %v9564, %v9612
        %v9614 = vpop.f32.mrf.mxu0
        %v9615 = vadd.f32 %v9566, %v9614
        %9616 = vmatmul.bf16.gmra.mxu0 %v8353
        %v9617 = vpop.f32.mrf.mxu0
        %v9618 = vadd.f32 %v9569, %v9617
        %v9619 = vpop.f32.mrf.mxu0
        %v9620 = vadd.f32 %v9571, %v9619
        %9621 = vmatmul.bf16.gmra.mxu0 %v8357
        %v9622 = vpop.f32.mrf.mxu0
        %v9623 = vadd.f32 %v9574, %v9622
        %v9624 = vpop.f32.mrf.mxu0
        %v9625 = vadd.f32 %v9576, %v9624
        %9626 = vmatmul.bf16.gmra.mxu0 %v8361
        %v9627 = vpop.f32.mrf.mxu0
        %v9628 = vadd.f32 %v9579, %v9627
        %v9629 = vpop.f32.mrf.mxu0
        %v9630 = vadd.f32 %v9581, %v9629
        %9631 = vdwg.mxu0
        %9632 = vmatpush.bf16.msra.mxu0 %v8980
        %9633 = vmatpush.bf16.msra.mxu0 %v8976
        %9634 = vmatpush.bf16.msra.mxu0 %v8972
        %9635 = vmatpush.bf16.msra.mxu0 %v8968
        %9636 = vmatpush.bf16.msra.mxu0 %v8964
        %9637 = vmatpush.bf16.msra.mxu0 %v8960
        %9638 = vmatpush.bf16.msra.mxu0 %v8956
        %9639 = vmatpush.bf16.msra.mxu0 %v8952
        %9640 = vmatmul.bf16.gmra.mxu0 %v8334
        %v9641 = vpop.f32.mrf.mxu0
        %v9642 = vadd.f32 %v9593, %v9641
        %v9643 = vpop.f32.mrf.mxu0
        %v9644 = vadd.f32 %v9595, %v9643
        %9645 = vmatmul.bf16.gmra.mxu0 %v8338
        %v9646 = vpop.f32.mrf.mxu0
        %v9647 = vadd.f32 %v9598, %v9646
        %v9648 = vpop.f32.mrf.mxu0
        %v9649 = vadd.f32 %v9600, %v9648
        %9650 = vmatmul.bf16.gmra.mxu0 %v8342
        %v9651 = vpop.f32.mrf.mxu0
        %v9652 = vadd.f32 %v9603, %v9651
        %v9653 = vpop.f32.mrf.mxu0
        %v9654 = vadd.f32 %v9605, %v9653
        %9655 = vmatmul.bf16.gmra.mxu0 %v8346
        %v9656 = vpop.f32.mrf.mxu0
        %v9657 = vadd.f32 %v9608, %v9656
        %v9658 = vpop.f32.mrf.mxu0
        %v9659 = vadd.f32 %v9610, %v9658
        %9660 = vmatmul.bf16.gmra.mxu0 %v8350
        %v9661 = vpop.f32.mrf.mxu0
        %v9662 = vadd.f32 %v9613, %v9661
        %v9663 = vpop.f32.mrf.mxu0
        %v9664 = vadd.f32 %v9615, %v9663
        %9665 = vmatmul.bf16.gmra.mxu0 %v8354
        %v9666 = vpop.f32.mrf.mxu0
        %v9667 = vadd.f32 %v9618, %v9666
        %v9668 = vpop.f32.mrf.mxu0
        %v9669 = vadd.f32 %v9620, %v9668
        %9670 = vmatmul.bf16.gmra.mxu0 %v8358
        %v9671 = vpop.f32.mrf.mxu0
        %v9672 = vadd.f32 %v9623, %v9671
        %v9673 = vpop.f32.mrf.mxu0
        %v9674 = vadd.f32 %v9625, %v9673
        %9675 = vmatmul.bf16.gmra.mxu0 %v8362
        %v9676 = vpop.f32.mrf.mxu0
        %v9677 = vadd.f32 %v9628, %v9676
        %v9678 = vpop.f32.mrf.mxu0
        %v9679 = vadd.f32 %v9630, %v9678
        %9680 = vdwg.mxu0
        %9681 = vmatpush.bf16.msra.mxu0 %v9012
        %9682 = vmatpush.bf16.msra.mxu0 %v9008
        %9683 = vmatpush.bf16.msra.mxu0 %v9004
        %9684 = vmatpush.bf16.msra.mxu0 %v9000
        %9685 = vmatpush.bf16.msra.mxu0 %v8996
        %9686 = vmatpush.bf16.msra.mxu0 %v8992
        %9687 = vmatpush.bf16.msra.mxu0 %v8988
        %9688 = vmatpush.bf16.msra.mxu0 %v8984
        %9689 = vmatmul.bf16.gmra.mxu0 %v8335
        %v9690 = vpop.f32.mrf.mxu0
        %v9691 = vadd.f32 %v9642, %v9690
        %v9692 = vpop.f32.mrf.mxu0
        %v9693 = vadd.f32 %v9644, %v9692
        %9694 = vmatmul.bf16.gmra.mxu0 %v8339
        %v9695 = vpop.f32.mrf.mxu0
        %v9696 = vadd.f32 %v9647, %v9695
        %v9697 = vpop.f32.mrf.mxu0
        %v9698 = vadd.f32 %v9649, %v9697
        %9699 = vmatmul.bf16.gmra.mxu0 %v8343
        %v9700 = vpop.f32.mrf.mxu0
        %v9701 = vadd.f32 %v9652, %v9700
        %v9702 = vpop.f32.mrf.mxu0
        %v9703 = vadd.f32 %v9654, %v9702
        %9704 = vmatmul.bf16.gmra.mxu0 %v8347
        %v9705 = vpop.f32.mrf.mxu0
        %v9706 = vadd.f32 %v9657, %v9705
        %v9707 = vpop.f32.mrf.mxu0
        %v9708 = vadd.f32 %v9659, %v9707
        %9709 = vmatmul.bf16.gmra.mxu0 %v8351
        %v9710 = vpop.f32.mrf.mxu0
        %v9711 = vadd.f32 %v9662, %v9710
        %v9712 = vpop.f32.mrf.mxu0
        %v9713 = vadd.f32 %v9664, %v9712
        %9714 = vmatmul.bf16.gmra.mxu0 %v8355
        %v9715 = vpop.f32.mrf.mxu0
        %v9716 = vadd.f32 %v9667, %v9715
        %v9717 = vpop.f32.mrf.mxu0
        %v9718 = vadd.f32 %v9669, %v9717
        %9719 = vmatmul.bf16.gmra.mxu0 %v8359
        %v9720 = vpop.f32.mrf.mxu0
        %v9721 = vadd.f32 %v9672, %v9720
        %v9722 = vpop.f32.mrf.mxu0
        %v9723 = vadd.f32 %v9674, %v9722
        %9724 = vmatmul.bf16.gmra.mxu0 %v8363
        %v9725 = vpop.f32.mrf.mxu0
        %v9726 = vadd.f32 %v9677, %v9725
        %v9727 = vpop.f32.mrf.mxu0
        %v9728 = vadd.f32 %v9679, %v9727
        %9729 = vdwg.mxu0
        %9730 = vmatpush.bf16.msra.mxu0 %v8917
        %9731 = vmatpush.bf16.msra.mxu0 %v8913
        %9732 = vmatpush.bf16.msra.mxu0 %v8909
        %9733 = vmatpush.bf16.msra.mxu0 %v8905
        %9734 = vmatpush.bf16.msra.mxu0 %v8901
        %9735 = vmatpush.bf16.msra.mxu0 %v8897
        %9736 = vmatpush.bf16.msra.mxu0 %v8893
        %9737 = vmatpush.bf16.msra.mxu0 %v8889
        %9738 = vmatmul.bf16.gmra.mxu0 %v8332
        %v9739 = vpop.f32.mrf.mxu0
        %v9740 = vadd.f32 %v8497, %v9739
        %v9741 = vpop.f32.mrf.mxu0
        %v9742 = vadd.f32 %v8497, %v9741
        %9743 = vmatmul.bf16.gmra.mxu0 %v8336
        %v9744 = vpop.f32.mrf.mxu0
        %v9745 = vadd.f32 %v8497, %v9744
        %v9746 = vpop.f32.mrf.mxu0
        %v9747 = vadd.f32 %v8497, %v9746
        %9748 = vmatmul.bf16.gmra.mxu0 %v8340
        %v9749 = vpop.f32.mrf.mxu0
        %v9750 = vadd.f32 %v8497, %v9749
        %v9751 = vpop.f32.mrf.mxu0
        %v9752 = vadd.f32 %v8497, %v9751
        %9753 = vmatmul.bf16.gmra.mxu0 %v8344
        %v9754 = vpop.f32.mrf.mxu0
        %v9755 = vadd.f32 %v8497, %v9754
        %v9756 = vpop.f32.mrf.mxu0
        %v9757 = vadd.f32 %v8497, %v9756
        %9758 = vmatmul.bf16.gmra.mxu0 %v8348
        %v9759 = vpop.f32.mrf.mxu0
        %v9760 = vadd.f32 %v8497, %v9759
        %v9761 = vpop.f32.mrf.mxu0
        %v9762 = vadd.f32 %v8497, %v9761
        %9763 = vmatmul.bf16.gmra.mxu0 %v8352
        %v9764 = vpop.f32.mrf.mxu0
        %v9765 = vadd.f32 %v8497, %v9764
        %v9766 = vpop.f32.mrf.mxu0
        %v9767 = vadd.f32 %v8497, %v9766
        %9768 = vmatmul.bf16.gmra.mxu0 %v8356
        %v9769 = vpop.f32.mrf.mxu0
        %v9770 = vadd.f32 %v8497, %v9769
        %v9771 = vpop.f32.mrf.mxu0
        %v9772 = vadd.f32 %v8497, %v9771
        %9773 = vmatmul.bf16.gmra.mxu0 %v8360
        %v9774 = vpop.f32.mrf.mxu0
        %v9775 = vadd.f32 %v8497, %v9774
        %v9776 = vpop.f32.mrf.mxu0
        %v9777 = vadd.f32 %v8497, %v9776
        %9778 = vdwg.mxu0
        %9779 = vmatpush.bf16.msra.mxu0 %v8949
        %9780 = vmatpush.bf16.msra.mxu0 %v8945
        %9781 = vmatpush.bf16.msra.mxu0 %v8941
        %9782 = vmatpush.bf16.msra.mxu0 %v8937
        %9783 = vmatpush.bf16.msra.mxu0 %v8933
        %9784 = vmatpush.bf16.msra.mxu0 %v8929
        %9785 = vmatpush.bf16.msra.mxu0 %v8925
        %9786 = vmatpush.bf16.msra.mxu0 %v8921
        %9787 = vmatmul.bf16.gmra.mxu0 %v8333
        %v9788 = vpop.f32.mrf.mxu0
        %v9789 = vadd.f32 %v9740, %v9788
        %v9790 = vpop.f32.mrf.mxu0
        %v9791 = vadd.f32 %v9742, %v9790
        %9792 = vmatmul.bf16.gmra.mxu0 %v8337
        %v9793 = vpop.f32.mrf.mxu0
        %v9794 = vadd.f32 %v9745, %v9793
        %v9795 = vpop.f32.mrf.mxu0
        %v9796 = vadd.f32 %v9747, %v9795
        %9797 = vmatmul.bf16.gmra.mxu0 %v8341
        %v9798 = vpop.f32.mrf.mxu0
        %v9799 = vadd.f32 %v9750, %v9798
        %v9800 = vpop.f32.mrf.mxu0
        %v9801 = vadd.f32 %v9752, %v9800
        %9802 = vmatmul.bf16.gmra.mxu0 %v8345
        %v9803 = vpop.f32.mrf.mxu0
        %v9804 = vadd.f32 %v9755, %v9803
        %v9805 = vpop.f32.mrf.mxu0
        %v9806 = vadd.f32 %v9757, %v9805
        %9807 = vmatmul.bf16.gmra.mxu0 %v8349
        %v9808 = vpop.f32.mrf.mxu0
        %v9809 = vadd.f32 %v9760, %v9808
        %v9810 = vpop.f32.mrf.mxu0
        %v9811 = vadd.f32 %v9762, %v9810
        %9812 = vmatmul.bf16.gmra.mxu0 %v8353
        %v9813 = vpop.f32.mrf.mxu0
        %v9814 = vadd.f32 %v9765, %v9813
        %v9815 = vpop.f32.mrf.mxu0
        %v9816 = vadd.f32 %v9767, %v9815
        %9817 = vmatmul.bf16.gmra.mxu0 %v8357
        %v9818 = vpop.f32.mrf.mxu0
        %v9819 = vadd.f32 %v9770, %v9818
        %v9820 = vpop.f32.mrf.mxu0
        %v9821 = vadd.f32 %v9772, %v9820
        %9822 = vmatmul.bf16.gmra.mxu0 %v8361
        %v9823 = vpop.f32.mrf.mxu0
        %v9824 = vadd.f32 %v9775, %v9823
        %v9825 = vpop.f32.mrf.mxu0
        %v9826 = vadd.f32 %v9777, %v9825
        %9827 = vdwg.mxu0
        %9828 = vmatpush.bf16.msra.mxu0 %v8981
        %9829 = vmatpush.bf16.msra.mxu0 %v8977
        %9830 = vmatpush.bf16.msra.mxu0 %v8973
        %9831 = vmatpush.bf16.msra.mxu0 %v8969
        %9832 = vmatpush.bf16.msra.mxu0 %v8965
        %9833 = vmatpush.bf16.msra.mxu0 %v8961
        %9834 = vmatpush.bf16.msra.mxu0 %v8957
        %9835 = vmatpush.bf16.msra.mxu0 %v8953
        %9836 = vmatmul.bf16.gmra.mxu0 %v8334
        %v9837 = vpop.f32.mrf.mxu0
        %v9838 = vadd.f32 %v9789, %v9837
        %v9839 = vpop.f32.mrf.mxu0
        %v9840 = vadd.f32 %v9791, %v9839
        %9841 = vmatmul.bf16.gmra.mxu0 %v8338
        %v9842 = vpop.f32.mrf.mxu0
        %v9843 = vadd.f32 %v9794, %v9842
        %v9844 = vpop.f32.mrf.mxu0
        %v9845 = vadd.f32 %v9796, %v9844
        %9846 = vmatmul.bf16.gmra.mxu0 %v8342
        %v9847 = vpop.f32.mrf.mxu0
        %v9848 = vadd.f32 %v9799, %v9847
        %v9849 = vpop.f32.mrf.mxu0
        %v9850 = vadd.f32 %v9801, %v9849
        %9851 = vmatmul.bf16.gmra.mxu0 %v8346
        %v9852 = vpop.f32.mrf.mxu0
        %v9853 = vadd.f32 %v9804, %v9852
        %v9854 = vpop.f32.mrf.mxu0
        %v9855 = vadd.f32 %v9806, %v9854
        %9856 = vmatmul.bf16.gmra.mxu0 %v8350
        %v9857 = vpop.f32.mrf.mxu0
        %v9858 = vadd.f32 %v9809, %v9857
        %v9859 = vpop.f32.mrf.mxu0
        %v9860 = vadd.f32 %v9811, %v9859
        %9861 = vmatmul.bf16.gmra.mxu0 %v8354
        %v9862 = vpop.f32.mrf.mxu0
        %v9863 = vadd.f32 %v9814, %v9862
        %v9864 = vpop.f32.mrf.mxu0
        %v9865 = vadd.f32 %v9816, %v9864
        %9866 = vmatmul.bf16.gmra.mxu0 %v8358
        %v9867 = vpop.f32.mrf.mxu0
        %v9868 = vadd.f32 %v9819, %v9867
        %v9869 = vpop.f32.mrf.mxu0
        %v9870 = vadd.f32 %v9821, %v9869
        %9871 = vmatmul.bf16.gmra.mxu0 %v8362
        %v9872 = vpop.f32.mrf.mxu0
        %v9873 = vadd.f32 %v9824, %v9872
        %v9874 = vpop.f32.mrf.mxu0
        %v9875 = vadd.f32 %v9826, %v9874
        %9876 = vdwg.mxu0
        %9877 = vmatpush.bf16.msra.mxu0 %v9013
        %9878 = vmatpush.bf16.msra.mxu0 %v9009
        %9879 = vmatpush.bf16.msra.mxu0 %v9005
        %9880 = vmatpush.bf16.msra.mxu0 %v9001
        %9881 = vmatpush.bf16.msra.mxu0 %v8997
        %9882 = vmatpush.bf16.msra.mxu0 %v8993
        %9883 = vmatpush.bf16.msra.mxu0 %v8989
        %9884 = vmatpush.bf16.msra.mxu0 %v8985
        %9885 = vmatmul.bf16.gmra.mxu0 %v8335
        %v9886 = vpop.f32.mrf.mxu0
        %v9887 = vadd.f32 %v9838, %v9886
        %v9888 = vpop.f32.mrf.mxu0
        %v9889 = vadd.f32 %v9840, %v9888
        %9890 = vmatmul.bf16.gmra.mxu0 %v8339
        %v9891 = vpop.f32.mrf.mxu0
        %v9892 = vadd.f32 %v9843, %v9891
        %v9893 = vpop.f32.mrf.mxu0
        %v9894 = vadd.f32 %v9845, %v9893
        %9895 = vmatmul.bf16.gmra.mxu0 %v8343
        %v9896 = vpop.f32.mrf.mxu0
        %v9897 = vadd.f32 %v9848, %v9896
        %v9898 = vpop.f32.mrf.mxu0
        %v9899 = vadd.f32 %v9850, %v9898
        %9900 = vmatmul.bf16.gmra.mxu0 %v8347
        %v9901 = vpop.f32.mrf.mxu0
        %v9902 = vadd.f32 %v9853, %v9901
        %v9903 = vpop.f32.mrf.mxu0
        %v9904 = vadd.f32 %v9855, %v9903
        %9905 = vmatmul.bf16.gmra.mxu0 %v8351
        %v9906 = vpop.f32.mrf.mxu0
        %v9907 = vadd.f32 %v9858, %v9906
        %v9908 = vpop.f32.mrf.mxu0
        %v9909 = vadd.f32 %v9860, %v9908
        %9910 = vmatmul.bf16.gmra.mxu0 %v8355
        %v9911 = vpop.f32.mrf.mxu0
        %v9912 = vadd.f32 %v9863, %v9911
        %v9913 = vpop.f32.mrf.mxu0
        %v9914 = vadd.f32 %v9865, %v9913
        %9915 = vmatmul.bf16.gmra.mxu0 %v8359
        %v9916 = vpop.f32.mrf.mxu0
        %v9917 = vadd.f32 %v9868, %v9916
        %v9918 = vpop.f32.mrf.mxu0
        %v9919 = vadd.f32 %v9870, %v9918
        %9920 = vmatmul.bf16.gmra.mxu0 %v8363
        %v9921 = vpop.f32.mrf.mxu0
        %v9922 = vadd.f32 %v9873, %v9921
        %v9923 = vpop.f32.mrf.mxu0
        %v9924 = vadd.f32 %v9875, %v9923
        %9925 = vdwg.mxu0
        %9926 = vst [vmem:[%s564] sm:$0xff] %v9299
        %9927 = vst [vmem:[%s564 + $0x8] sm:$0xff] %v9495
        %9928 = vst [vmem:[%s564 + $0x10] sm:$0xff] %v9691
        %9929 = vst [vmem:[%s564 + $0x18] sm:$0xff] %v9887
        %9930 = vst [vmem:[%s564 + $0x20] sm:$0xff] %v9301
        %9931 = vst [vmem:[%s564 + $0x28] sm:$0xff] %v9497
        %9932 = vst [vmem:[%s564 + $0x30] sm:$0xff] %v9693
        %9933 = vst [vmem:[%s564 + $0x38] sm:$0xff] %v9889
        %9934 = vst [vmem:[%s564 + $0x40] sm:$0xff] %v9304
        %9935 = vst [vmem:[%s564 + $0x48] sm:$0xff] %v9500
        %9936 = vst [vmem:[%s564 + $0x50] sm:$0xff] %v9696
        %9937 = vst [vmem:[%s564 + $0x58] sm:$0xff] %v9892
        %9938 = vst [vmem:[%s564 + $0x60] sm:$0xff] %v9306
        %9939 = vst [vmem:[%s564 + $0x68] sm:$0xff] %v9502
        %9940 = vst [vmem:[%s564 + $0x70] sm:$0xff] %v9698
        %9941 = vst [vmem:[%s564 + $0x78] sm:$0xff] %v9894
        %9942 = vst [vmem:[%s564 + $0x80] sm:$0xff] %v9309
        %9943 = vst [vmem:[%s564 + $0x88] sm:$0xff] %v9505
        %9944 = vst [vmem:[%s564 + $0x90] sm:$0xff] %v9701
        %9945 = vst [vmem:[%s564 + $0x98] sm:$0xff] %v9897
        %9946 = vst [vmem:[%s564 + $0xa0] sm:$0xff] %v9311
        %9947 = vst [vmem:[%s564 + $0xa8] sm:$0xff] %v9507
        %9948 = vst [vmem:[%s564 + $0xb0] sm:$0xff] %v9703
        %9949 = vst [vmem:[%s564 + $0xb8] sm:$0xff] %v9899
        %9950 = vst [vmem:[%s564 + $0xc0] sm:$0xff] %v9314
        %9951 = vst [vmem:[%s564 + $0xc8] sm:$0xff] %v9510
        %9952 = vst [vmem:[%s564 + $0xd0] sm:$0xff] %v9706
        %9953 = vst [vmem:[%s564 + $0xd8] sm:$0xff] %v9902
        %9954 = vst [vmem:[%s564 + $0xe0] sm:$0xff] %v9316
        %9955 = vst [vmem:[%s564 + $0xe8] sm:$0xff] %v9512
        %9956 = vst [vmem:[%s564 + $0xf0] sm:$0xff] %v9708
        %9957 = vst [vmem:[%s564 + $0xf8] sm:$0xff] %v9904
        %9958 = vst [vmem:[%s564 + $0x100] sm:$0xff] %v9319
        %9959 = vst [vmem:[%s564 + $0x108] sm:$0xff] %v9515
        %9960 = vst [vmem:[%s564 + $0x110] sm:$0xff] %v9711
        %9961 = vst [vmem:[%s564 + $0x118] sm:$0xff] %v9907
        %9962 = vst [vmem:[%s564 + $0x120] sm:$0xff] %v9321
        %9963 = vst [vmem:[%s564 + $0x128] sm:$0xff] %v9517
        %9964 = vst [vmem:[%s564 + $0x130] sm:$0xff] %v9713
        %9965 = vst [vmem:[%s564 + $0x138] sm:$0xff] %v9909
        %9966 = vst [vmem:[%s564 + $0x140] sm:$0xff] %v9324
        %9967 = vst [vmem:[%s564 + $0x148] sm:$0xff] %v9520
        %9968 = vst [vmem:[%s564 + $0x150] sm:$0xff] %v9716
        %9969 = vst [vmem:[%s564 + $0x158] sm:$0xff] %v9912
        %9970 = vst [vmem:[%s564 + $0x160] sm:$0xff] %v9326
        %9971 = vst [vmem:[%s564 + $0x168] sm:$0xff] %v9522
        %9972 = vst [vmem:[%s564 + $0x170] sm:$0xff] %v9718
        %9973 = vst [vmem:[%s564 + $0x178] sm:$0xff] %v9914
        %9974 = vst [vmem:[%s564 + $0x180] sm:$0xff] %v9329
        %9975 = vst [vmem:[%s564 + $0x188] sm:$0xff] %v9525
        %9976 = vst [vmem:[%s564 + $0x190] sm:$0xff] %v9721
        %9977 = vst [vmem:[%s564 + $0x198] sm:$0xff] %v9917
        %9978 = vst [vmem:[%s564 + $0x1a0] sm:$0xff] %v9331
        %9979 = vst [vmem:[%s564 + $0x1a8] sm:$0xff] %v9527
        %9980 = vst [vmem:[%s564 + $0x1b0] sm:$0xff] %v9723
        %9981 = vst [vmem:[%s564 + $0x1b8] sm:$0xff] %v9919
        %9982 = vst [vmem:[%s564 + $0x1c0] sm:$0xff] %v9334
        %9983 = vst [vmem:[%s564 + $0x1c8] sm:$0xff] %v9530
        %9984 = vst [vmem:[%s564 + $0x1d0] sm:$0xff] %v9726
        %9985 = vst [vmem:[%s564 + $0x1d8] sm:$0xff] %v9922
        %9986 = vst [vmem:[%s564 + $0x1e0] sm:$0xff] %v9336
        %9987 = vst [vmem:[%s564 + $0x1e8] sm:$0xff] %v9532
        %9988 = vst [vmem:[%s564 + $0x1f0] sm:$0xff] %v9728
        %9989 = vst [vmem:[%s564 + $0x1f8] sm:$0xff] %v9924
        %9990 = vst [vmem:[%s571] sm:$0xff] %v7846
        %9991 = vst [vmem:[%s571 + $0x8] sm:$0xff] %v7847
        %9992 = vst [vmem:[%s571 + $0x10] sm:$0xff] %v7848
        %9993 = vst [vmem:[%s571 + $0x18] sm:$0xff] %v7849
        %9994 = vst [vmem:[%s571 + $0x20] sm:$0xff] %v7850
        %9995 = vst [vmem:[%s571 + $0x28] sm:$0xff] %v7851
        %9996 = vst [vmem:[%s571 + $0x30] sm:$0xff] %v7852
        %9997 = vst [vmem:[%s571 + $0x38] sm:$0xff] %v7853
        %9998 = vst [vmem:[%s571 + $0x40] sm:$0xff] %v7854
        %9999 = vst [vmem:[%s571 + $0x48] sm:$0xff] %v7855
        %10000 = vst [vmem:[%s571 + $0x50] sm:$0xff] %v7856
        %10001 = vst [vmem:[%s571 + $0x58] sm:$0xff] %v7857
        %10002 = vst [vmem:[%s571 + $0x60] sm:$0xff] %v7858
        %10003 = vst [vmem:[%s571 + $0x68] sm:$0xff] %v7859
        %10004 = vst [vmem:[%s571 + $0x70] sm:$0xff] %v7860
        %10005 = vst [vmem:[%s571 + $0x78] sm:$0xff] %v7861
        %s10006 = sand.u32 %s281, 1
        %s10007 = scalar_lea.sflag [#allocation4], %s10006
        %s10008 = sand.u32 %s281, 1
        %s10009 = smul.addr %s10008, 512
        %s10010 = scalar_lea.vmem [#allocation17], %s10009
        %s10011 = sand.u32 %s307, 1
        %s10012 = scalar_lea.sflag [#allocation19], %s10011
        %s10013 = sand.u32 %s307, 1
        %s10014 = smul.addr %s10013, 128
        %s10015 = scalar_lea.vmem [#allocation18], %s10014
        // Predicated region
        $region101: #{tpu_custom_call.1} parent=63 // pred_check
          %p10016 = pneg %p291
        $region102: #{tpu_custom_call.1} parent=63 // pred_check_branch
          %10018 = sbr.rel (%p10016) target = $region104
        $region103: #{tpu_custom_call.1} parent=63 // pred_region
          %s10019 = smul.u32 16, %s37
          %10021 = vsyncadd %s10007, 0
          %s10022 = smul.addr %s10019, 4
          %s10023 = smul.addr %s10022, 8
          %s10024 = scalar_lea.hbm %s11, %s10023
          %s10025 = sshll.u32 %s10010, 4
          %s10026 = int_to_ptr.vmem [resolvable:$true] %s10025
          %s10027 = sshll.u32 %s10024, 4
          %s10028 = int_to_ptr.hbm [resolvable:$true] %s10027
          %10033 = dma.vmem_to_hbm [thread:$0]  %s10026, 8192, %s10028, %s10007, 512, 512, 32
        $region104: #{tpu_custom_call.1} parent=63 // pred_fallthru
          _
        // Predicated region
        $region105: #{tpu_custom_call.1} parent=63 // pred_check
          %p10034 = pneg %p317
        $region106: #{tpu_custom_call.1} parent=63 // pred_check_branch
          %10036 = sbr.rel (%p10034) target = $region108
        $region107: #{tpu_custom_call.1} parent=63 // pred_region
          %s10037 = smul.u32 16, %s37
          %10039 = vsyncadd %s10012, 0
          %s10040 = smul.addr %s10037, 8
          %s10041 = scalar_lea.hbm %s12, %s10040
          %s10042 = sshll.u32 %s10015, 4
          %s10043 = int_to_ptr.vmem [resolvable:$true] %s10042
          %s10044 = sshll.u32 %s10041, 4
          %s10045 = int_to_ptr.hbm [resolvable:$true] %s10044
          %10050 = dma.vmem_to_hbm [thread:$0]  %s10043, 2048, %s10045, %s10012, 128, 128, 8
        $region108: #{tpu_custom_call.1} parent=63 // pred_fallthru
          _
      $region64: #{tpu_custom_call.1} parent=5 // pred_fallthru
        _
      %p10051 = scmp.le.s32.totalorder 2, %s32
      // Predicated region
      $region109: #{tpu_custom_call.1} parent=5 // pred_check
        %p10052 = pneg %p10051
      $region110: #{tpu_custom_call.1} parent=5 // pred_check_branch
        %10054 = sbr.rel (%p10052) target = $region112
      $region111: #{tpu_custom_call.1} parent=5 // pred_region
        %s10055 = ssub.s32 %s32, 2
        // Predicated region
        $region113: #{tpu_custom_call.1} parent=111 // pred_check
          %p10056 = pneg %p297
        $region114: #{tpu_custom_call.1} parent=111 // pred_check_branch
          %10058 = sbr.rel (%p10056) target = $region116
        $region115: #{tpu_custom_call.1} parent=111 // pred_region
          %s10059 = sand.u32 %s282, 1
          %s10060 = scalar_lea.sflag [#allocation4], %s10059
          %s10061 = sand.u32 %s282, 1
          %s10062 = smul.addr %s10061, 512
          %s10063 = scalar_lea.vmem [#allocation17], %s10062
          %10065 = dma.done %s10060, 8192
        $region116: #{tpu_custom_call.1} parent=111 // pred_fallthru
          _
        // Predicated region
        $region117: #{tpu_custom_call.1} parent=111 // pred_check
          %p10066 = pneg %p323
        $region118: #{tpu_custom_call.1} parent=111 // pred_check_branch
          %10068 = sbr.rel (%p10066) target = $region120
        $region119: #{tpu_custom_call.1} parent=111 // pred_region
          %s10069 = sand.u32 %s308, 1
          %s10070 = scalar_lea.sflag [#allocation19], %s10069
          %s10071 = sand.u32 %s308, 1
          %s10072 = smul.addr %s10071, 128
          %s10073 = scalar_lea.vmem [#allocation18], %s10072
          %10075 = dma.done %s10070, 2048
        $region120: #{tpu_custom_call.1} parent=111 // pred_fallthru
          _
      $region112: #{tpu_custom_call.1} parent=5 // pred_fallthru
        _
    $region6: #{tpu_custom_call.1} parent=1 // loop_footer
      %s36 = sadd.s32 1, %s32
    $region7: #{tpu_custom_call.1} parent=1 // loop_footer_branch
      %31 = sbr.rel target = $region3
    $region8: #{tpu_custom_call.1} parent=1 // loop_exit
      _
    %10076 = vsyncpa [#allocation3], 1
    %s10077 = scalar_lea.sflag [#allocation3], 1
    %10078 = vsyncpa %s10077, 1
    %10079 = vsyncpa [#allocation6], 1
    %10080 = vsyncpa [#allocation9], 1
    %10081 = vsyncpa [#allocation12], 1
    %10082 = vsyncpa [#allocation15], 1
    %10083 = vsyncpa [#allocation4], 1
    %s10084 = scalar_lea.sflag [#allocation4], 1
    %10085 = vsyncpa %s10084, 1
    %10086 = vsyncpa [#allocation19], 1
    %s10087 = scalar_lea.sflag [#allocation19], 1
    %10088 = vsyncpa %s10087, 1

</llo_original>
